<compile_context>
chip_gen: v6e
topology: v6e:2x2x1
jax: 0.10.0
libtpu: 0.0.40
codegen_flags: <defaults>
</compile_context>

<pallas_src>
import functools

import jax
import jax.numpy as jnp
import numpy as np
from jax import lax
from jax.experimental import pallas as pl
from jax.experimental.pallas import tpu as pltpu

EPS = 1e-5  # InstanceNorm3d default eps

# Row layout of the constant table (N_CONST_ROWS, 2*H*W):
R_SAME = 0     # 27 rows: w[c, c,    kd, kh, kw] * mask(kh,kw), row kd*9+kh*3+kw
R_CROSS = 27   # 27 rows: w[c, 1-c,  kd, kh, kw] * mask(kh,kw)
R_BCELL = 54   # conv3d bias per lane half
R_W1 = 55      # head conv1 weight per half
R_B1 = 56      # head conv1 bias per half
R_W2A = 57     # head conv2 same-channel weight  w2[c, c]
R_W2B = 58     # head conv2 cross-channel weight w2[c, 1-c]
R_B2 = 59      # head conv2 bias per half
R_HALF0 = 60   # 1.0 on lane half 0, 0.0 on half 1
N_CONST_ROWS = 61


# ------------------------------ fused kernel --------------------------------

def _fused_gru_kernel(c_ref, x_ref, h_ref, o_ref, *, D, H, W, num_layers, b_tile):
    """Whole GRUModel forward for b_tile batch samples.

    c_ref : VMEM (N_CONST_ROWS, 2*H*W)  masked conv weights + head params rows
    x_ref : (b_tile, D, 2*H*W)  raw input, duplicated into both lane halves
    h_ref : (b_tile, D, 2*H*W)  packed hidden state (lane = c*H*W + h*W + w)
    o_ref : (b_tile, D, 2*H*W)  packed output hidden state
    """
    HW = H * W
    L = 2 * HW
    f32 = jnp.float32
    inv_cnt = 1.0 / float(D * HW)

    def row(r):                       # (1, L) weight/param row, static index
        return c_ref[pl.ds(r, 1), :]

    def shift_sublanes(t, dd):
        # out[d, :] = t[d + dd, :] with zero fill (zero padding along depth).
        # Must stay zero-fill: no mask covers the depth edge (per review).
        if dd == 0:
            return t
        pad = jnp.zeros((1, L), f32)
        if dd > 0:
            return jnp.concatenate([t[1:, :], pad], axis=0)
        return jnp.concatenate([pad, t[:-1, :]], axis=0)

    def conv3d(xp):
        """Conv3d(2,2,3,stride=1,padding=1) on a packed (D, 2*H*W) activation."""
        # 9 same-channel + 9 cross-channel (h,w) taps via XLU lane rolls.
        # The (h,w) validity masks are folded into the weight rows host-side,
        # so lanes that wrapped around (h/w or channel boundary) are zeroed.
        taps_s, taps_c = [], []
        for kh in range(3):
            for kw in range(3):
                delta = W * (kh - 1) + (kw - 1)
                taps_s.append(xp if delta == 0
                              else pltpu.roll(xp, (-delta) % L, axis=1))
                taps_c.append(pltpu.roll(xp, (HW - delta) % L, axis=1))
        acc = None
        for kd in range(3):
            part = None
            for t in range(9):
                r = kd * 9 + t
                term = row(R_SAME + r) * taps_s[t] + row(R_CROSS + r) * taps_c[t]
                part = term if part is None else part + term
            part = shift_sublanes(part, kd - 1)
            acc = part if acc is None else acc + part
        return acc + row(R_BCELL)

    for b in range(b_tile):
        # ---- head: Conv3d(1,2,1) -> InstanceNorm3d(2) -> ReLU -> Conv3d(2,2,1)
        x = x_ref[b]                                   # (D, L), dup halves
        y = row(R_W1) * x + row(R_B1)
        half0 = row(R_HALF0)
        s_all = jnp.sum(y)
        s0 = jnp.sum(y * half0)
        mu = (s0 * inv_cnt) * half0 + ((s_all - s0) * inv_cnt) * (1.0 - half0)
        d = y - mu
        dsq = d * d
        t_all = jnp.sum(dsq)
        t0 = jnp.sum(dsq * half0)
        var = (t0 * inv_cnt) * half0 + ((t_all - t0) * inv_cnt) * (1.0 - half0)
        hr = jnp.maximum(d * lax.rsqrt(var + EPS), 0.0)          # IN + ReLU
        inp = (row(R_W2A) * hr
               + row(R_W2B) * pltpu.roll(hr, HW, axis=1)         # half swap
               + row(R_B2))                                      # packed (D, L)

        # ---- GRU layers; conv3d(input) is loop-invariant (shared conv) ------
        conv_in = conv3d(inp)
        h = h_ref[b]
        for _ in range(num_layers):
            conv_h = conv3d(h)
            r = jnp.tanh(conv_in + conv_h)             # reset_1 == reset_2
            u1 = inp + r * (conv_in - inp)             # r*conv_in + (1-r)*inp
            conv_u1 = conv3d(u1)
            u2 = u1 + r * (conv_u1 - u1)               # r*conv_u1 + (1-r)*u1
            conv_u2 = conv3d(u2)
            # 2-channel softmax == sigmoid of channel difference, via EUP tanh
            diff = conv_u2 - pltpu.roll(conv_u2, HW, axis=1)
            h = 0.5 * (jnp.tanh(0.5 * diff) + 1.0)
        o_ref[b] = h


# ------------------------------ Pallas wrapper -------------------------------

def _build_const_table(params, H, W):
    """(N_CONST_ROWS, 2*H*W) per-lane table: masked conv weights + head params."""
    HW = H * W
    L = 2 * HW
    lane = np.arange(L)
    c_of = lane // HW
    hh = (lane % HW) // W
    ww = lane % W

    # (h,w) tap validity masks, replicated per kd -> (27, L), numpy (static)
    mask27 = np.zeros((27, L), np.float32)
    for kd in range(3):
        for kh in range(3):
            for kw in range(3):
                dh, dw = kh - 1, kw - 1
                valid = ((hh + dh >= 0) & (hh + dh < H)
                         & (ww + dw >= 0) & (ww + dw < W))
                mask27[kd * 9 + kh * 3 + kw] = valid
    mask27 = jnp.asarray(mask27)

    w_cell = params["w_cell"].astype(jnp.float32)             # (2,2,3,3,3)
    idx = jnp.arange(2)
    w_same = w_cell[idx, idx].reshape(2, 27)                  # w[c, c]
    w_cross = w_cell[idx, idx[::-1]].reshape(2, 27)           # w[c, 1-c]
    rows_same = w_same[c_of].T * mask27                       # (27, L)
    rows_cross = w_cross[c_of].T * mask27                     # (27, L)

    def per_lane(v2):                                         # (2,) -> (1, L)
        return v2.astype(jnp.float32)[c_of][None, :]

    w1 = params["w1"].reshape(2)
    w2 = params["w2"].reshape(2, 2)
    table = jnp.concatenate([
        rows_same, rows_cross,
        per_lane(params["b_cell"]),
        per_lane(w1), per_lane(params["b1"]),
        per_lane(w2[idx, idx]), per_lane(w2[idx, idx[::-1]]),
        per_lane(params["b2"]),
        jnp.asarray((c_of == 0).astype(np.float32))[None, :],
    ], axis=0)
    return table.astype(jnp.float32)


def _pick_b_tile(N):
    # <=4 samples per grid step, and keep the grid length >= 2 when possible
    # so both TensorCores stay busy on v7x.
    cap = min(4, max(1, N // 2))
    for b in range(cap, 0, -1):
        if N % b == 0:
            return b
    return 1


def gru_model_forward(x, hidden, params, num_layers=4):
    N, _, D, H, W = x.shape
    HW, L = H * W, 2 * H * W

    consts = _build_const_table(params, H, W)

    # pack activations: lane index = c*H*W + h*W + w, sublane = d
    xr = x.reshape(N, D, HW).astype(jnp.float32)
    x_dup = jnp.concatenate([xr, xr], axis=-1)                        # (N, D, L)
    h_p = jnp.transpose(hidden, (0, 2, 1, 3, 4)).reshape(N, D, L).astype(jnp.float32)

    b_tile = _pick_b_tile(N)
    kernel = functools.partial(_fused_gru_kernel, D=D, H=H, W=W,
                               num_layers=num_layers, b_tile=b_tile)
    out_p = pl.pallas_call(
        kernel,
        out_shape=jax.ShapeDtypeStruct((N, D, L), jnp.float32),
        grid=(N // b_tile,),
        in_specs=[
            pl.BlockSpec((N_CONST_ROWS, L), lambda n: (0, 0)),        # constants
            pl.BlockSpec((b_tile, D, L), lambda n: (n, 0, 0)),        # x (dup halves)
            pl.BlockSpec((b_tile, D, L), lambda n: (n, 0, 0)),        # hidden (packed)
        ],
        out_specs=pl.BlockSpec((b_tile, D, L), lambda n: (n, 0, 0)),
        compiler_params=pltpu.CompilerParams(dimension_semantics=("parallel",)),
    )(consts, x_dup, h_p)

    return jnp.transpose(out_p.reshape(N, D, 2, H, W), (0, 2, 1, 3, 4))


# ------------------------------- parameters ----------------------------------

def init_params(key):
    """Deterministic parameter init mirroring PyTorch's default Conv3d init ranges."""
    k1, k2, k3, k4, k5, k6 = jax.random.split(key, 6)

    def u(k, shape, bound):
        return jax.random.uniform(k, shape, jnp.float32, -bound, bound)

    bnd_cell = 1.0 / np.sqrt(2 * 27)       # Conv3d(2, 2, 3): fan_in = 54
    bnd_in1 = 1.0                          # Conv3d(1, 2, 1): fan_in = 1
    bnd_in2 = 1.0 / np.sqrt(2.0)           # Conv3d(2, 2, 1): fan_in = 2
    return dict(
        w_cell=u(k1, (2, 2, 3, 3, 3), bnd_cell),
        b_cell=u(k2, (2,), bnd_cell),
        w1=u(k3, (2, 1, 1, 1, 1), bnd_in1),
        b1=u(k4, (2,), bnd_in1),
        w2=u(k5, (2, 2, 1, 1, 1), bnd_in2),
        b2=u(k6, (2,), bnd_in2),
    )


# ------------------------------ pure-JAX reference ---------------------------

def _conv3d_ref(x, w, b):
    out = lax.conv_general_dilated(
        x, w, window_strides=(1, 1, 1), padding=((1, 1), (1, 1), (1, 1)),
        dimension_numbers=("NCDHW", "OIDHW", "NCDHW"),
        precision=lax.Precision.HIGHEST)
    return out + b.reshape(1, -1, 1, 1, 1)


def ref_forward(x, hidden, params, num_layers=4):
    w1 = params["w1"].reshape(2)
    b1 = params["b1"]
    w2 = params["w2"].reshape(2, 2)
    b2 = params["b2"]

    y = w1.reshape(1, 2, 1, 1, 1) * x + b1.reshape(1, 2, 1, 1, 1)
    mu = y.mean(axis=(2, 3, 4), keepdims=True)
    var = ((y - mu) ** 2).mean(axis=(2, 3, 4), keepdims=True)
    yn = (y - mu) / jnp.sqrt(var + EPS)
    hr = jnp.maximum(yn, 0.0)
    inp = jnp.einsum("ncdhw,oc->nodhw", hr, w2,
                     precision=lax.Precision.HIGHEST) + b2.reshape(1, 2, 1, 1, 1)

    h = hidden
    for _ in range(num_layers):
        ci = _conv3d_ref(inp, params["w_cell"], params["b_cell"])
        ch = _conv3d_ref(h, params["w_cell"], params["b_cell"])
        r = jnp.tanh(ci + ch)
        u1 = r * ci + (1.0 - r) * inp
        cu1 = _conv3d_ref(u1, params["w_cell"], params["b_cell"])
        u2 = r * cu1 + (1.0 - r) * u1
        cu2 = _conv3d_ref(u2, params["w_cell"], params["b_cell"])
        h = jax.nn.softmax(cu2, axis=1)
    return h


# ----------------------------------- main -------------------------------------

if __name__ == "__main__":
    key = jax.random.PRNGKey(0)
    kp, kx, kh = jax.random.split(key, 3)
    params = init_params(kp)

    N, D, H, W = 2, 8, 8, 8
    x = jax.random.normal(kx, (N, 1, D, H, W), jnp.float32)
    hidden = jax.random.normal(kh, (N, 2, D, H, W), jnp.float32)

    fwd = jax.jit(gru_model_forward, static_argnames=("num_layers",))
    out = jax.block_until_ready(fwd(x, hidden, params, num_layers=4))

    ref = jax.block_until_ready(ref_forward(x, hidden, params, num_layers=4))
    np.testing.assert_allclose(np.asarray(out), np.asarray(ref), rtol=1e-3, atol=1e-4)

    print("KERNEL_OK")
</pallas_src>

<mosaic_0001>
module attributes {stable_mosaic.version = 11 : i64} {
  func.func @_fused_gru_kernel(%arg0: i32, %arg1: memref<61x128xf32, #tpu.memory_space<vmem>>, %arg2: memref<1x8x128xf32, #tpu.memory_space<vmem>>, %arg3: memref<1x8x128xf32, #tpu.memory_space<vmem>>, %arg4: memref<1x8x128xf32, #tpu.memory_space<vmem>>) attributes {dimension_semantics = [#tpu.dimension_semantics<parallel>], iteration_bounds = array<i64: 2>, scalar_prefetch = 0 : i64, scratch_operands = 0 : i64, tpu.core_type = #tpu.core_type<tc>, window_params = [{pipeline_mode = #tpu.pipeline_mode<synchronous>, transform_indices = @transform_0, window_bounds = array<i64: 61, 128>}, {transform_indices = @transform_1, window_bounds = array<i64: 1, 8, 128>}, {transform_indices = @transform_2, window_bounds = array<i64: 1, 8, 128>}, {transform_indices = @transform_3, window_bounds = array<i64: 1, 8, 128>}]} {
    %c0 = arith.constant 0 : index
    %c0_0 = arith.constant 0 : index
    %c0_1 = arith.constant 0 : index
    %0 = vector.load %arg2[%c0, %c0_0, %c0_1] : memref<1x8x128xf32, #tpu.memory_space<vmem>>, vector<1x8x128xf32>
    %1 = vector.shape_cast %0 : vector<1x8x128xf32> to vector<8x128xf32>
    %c55 = arith.constant 55 : index
    %c0_2 = arith.constant 0 : index
    %2 = vector.load %arg1[%c55, %c0_2] : memref<61x128xf32, #tpu.memory_space<vmem>>, vector<1x128xf32>
    %3 = vector.broadcast %2 : vector<1x128xf32> to vector<8x128xf32>
    %4 = arith.mulf %3, %1 : vector<8x128xf32>
    %c56 = arith.constant 56 : index
    %c0_3 = arith.constant 0 : index
    %5 = vector.load %arg1[%c56, %c0_3] : memref<61x128xf32, #tpu.memory_space<vmem>>, vector<1x128xf32>
    %6 = vector.broadcast %5 : vector<1x128xf32> to vector<8x128xf32>
    %7 = arith.addf %4, %6 : vector<8x128xf32>
    %c60 = arith.constant 60 : index
    %c0_4 = arith.constant 0 : index
    %8 = vector.load %arg1[%c60, %c0_4] : memref<61x128xf32, #tpu.memory_space<vmem>>, vector<1x128xf32>
    %9 = vector.shape_cast %7 : vector<8x128xf32> to vector<1x8x128xf32>
    %cst = arith.constant dense<0.000000e+00> : vector<1xf32>
    %10 = vector.multi_reduction <add>, %9, %cst [1, 2] : vector<1x8x128xf32> to vector<1xf32>
    %11 = vector.shape_cast %10 : vector<1xf32> to vector<1x1x1xf32>
    %12 = vector.extract %11[0, 0, 0] : f32 from vector<1x1x1xf32>
    %13 = vector.broadcast %8 : vector<1x128xf32> to vector<8x128xf32>
    %14 = arith.mulf %7, %13 : vector<8x128xf32>
    %15 = vector.shape_cast %14 : vector<8x128xf32> to vector<1x8x128xf32>
    %cst_5 = arith.constant dense<0.000000e+00> : vector<1xf32>
    %16 = vector.multi_reduction <add>, %15, %cst_5 [1, 2] : vector<1x8x128xf32> to vector<1xf32>
    %17 = vector.shape_cast %16 : vector<1xf32> to vector<1x1x1xf32>
    %18 = vector.extract %17[0, 0, 0] : f32 from vector<1x1x1xf32>
    %cst_6 = arith.constant 0.001953125 : f32
    %19 = arith.mulf %18, %cst_6 : f32
    %20 = vector.broadcast %19 : f32 to vector<1x128xf32>
    %21 = arith.mulf %20, %8 : vector<1x128xf32>
    %22 = arith.subf %12, %18 : f32
    %cst_7 = arith.constant 0.001953125 : f32
    %23 = arith.mulf %22, %cst_7 : f32
    %cst_8 = arith.constant 1.000000e+00 : f32
    %24 = vector.broadcast %cst_8 : f32 to vector<1x128xf32>
    %25 = arith.subf %24, %8 : vector<1x128xf32>
    %26 = vector.broadcast %23 : f32 to vector<1x128xf32>
    %27 = arith.mulf %26, %25 : vector<1x128xf32>
    %28 = arith.addf %21, %27 : vector<1x128xf32>
    %29 = vector.broadcast %28 : vector<1x128xf32> to vector<8x128xf32>
    %30 = arith.subf %7, %29 : vector<8x128xf32>
    %31 = arith.mulf %30, %30 : vector<8x128xf32>
    %32 = vector.shape_cast %31 : vector<8x128xf32> to vector<1x8x128xf32>
    %cst_9 = arith.constant dense<0.000000e+00> : vector<1xf32>
    %33 = vector.multi_reduction <add>, %32, %cst_9 [1, 2] : vector<1x8x128xf32> to vector<1xf32>
    %34 = vector.shape_cast %33 : vector<1xf32> to vector<1x1x1xf32>
    %35 = vector.extract %34[0, 0, 0] : f32 from vector<1x1x1xf32>
    %36 = vector.broadcast %8 : vector<1x128xf32> to vector<8x128xf32>
    %37 = arith.mulf %31, %36 : vector<8x128xf32>
    %38 = vector.shape_cast %37 : vector<8x128xf32> to vector<1x8x128xf32>
    %cst_10 = arith.constant dense<0.000000e+00> : vector<1xf32>
    %39 = vector.multi_reduction <add>, %38, %cst_10 [1, 2] : vector<1x8x128xf32> to vector<1xf32>
    %40 = vector.shape_cast %39 : vector<1xf32> to vector<1x1x1xf32>
    %41 = vector.extract %40[0, 0, 0] : f32 from vector<1x1x1xf32>
    %cst_11 = arith.constant 0.001953125 : f32
    %42 = arith.mulf %41, %cst_11 : f32
    %43 = vector.broadcast %42 : f32 to vector<1x128xf32>
    %44 = arith.mulf %43, %8 : vector<1x128xf32>
    %45 = arith.subf %35, %41 : f32
    %cst_12 = arith.constant 0.001953125 : f32
    %46 = arith.mulf %45, %cst_12 : f32
    %cst_13 = arith.constant 1.000000e+00 : f32
    %47 = vector.broadcast %cst_13 : f32 to vector<1x128xf32>
    %48 = arith.subf %47, %8 : vector<1x128xf32>
    %49 = vector.broadcast %46 : f32 to vector<1x128xf32>
    %50 = arith.mulf %49, %48 : vector<1x128xf32>
    %51 = arith.addf %44, %50 : vector<1x128xf32>
    %cst_14 = arith.constant 9.99999974E-6 : f32
    %52 = vector.broadcast %cst_14 : f32 to vector<1x128xf32>
    %53 = arith.addf %51, %52 : vector<1x128xf32>
    %54 = math.rsqrt %53 : vector<1x128xf32>
    %55 = vector.broadcast %54 : vector<1x128xf32> to vector<8x128xf32>
    %56 = arith.mulf %30, %55 : vector<8x128xf32>
    %cst_15 = arith.constant 0.000000e+00 : f32
    %57 = vector.broadcast %cst_15 : f32 to vector<8x128xf32>
    %58 = arith.maximumf %56, %57 : vector<8x128xf32>
    %c57 = arith.constant 57 : index
    %c0_16 = arith.constant 0 : index
    %59 = vector.load %arg1[%c57, %c0_16] : memref<61x128xf32, #tpu.memory_space<vmem>>, vector<1x128xf32>
    %60 = vector.broadcast %59 : vector<1x128xf32> to vector<8x128xf32>
    %61 = arith.mulf %60, %58 : vector<8x128xf32>
    %c58 = arith.constant 58 : index
    %c0_17 = arith.constant 0 : index
    %62 = vector.load %arg1[%c58, %c0_17] : memref<61x128xf32, #tpu.memory_space<vmem>>, vector<1x128xf32>
    %c64_i32 = arith.constant 64 : i32
    %63 = tpu.dynamic_rotate %58 by %c64_i32 dim 1 : vector<8x128xf32>, i32 -> vector<8x128xf32>
    %64 = vector.broadcast %62 : vector<1x128xf32> to vector<8x128xf32>
    %65 = arith.mulf %64, %63 : vector<8x128xf32>
    %66 = arith.addf %61, %65 : vector<8x128xf32>
    %c59 = arith.constant 59 : index
    %c0_18 = arith.constant 0 : index
    %67 = vector.load %arg1[%c59, %c0_18] : memref<61x128xf32, #tpu.memory_space<vmem>>, vector<1x128xf32>
    %68 = vector.broadcast %67 : vector<1x128xf32> to vector<8x128xf32>
    %69 = arith.addf %66, %68 : vector<8x128xf32>
    %c9_i32 = arith.constant 9 : i32
    %70 = tpu.dynamic_rotate %69 by %c9_i32 dim 1 : vector<8x128xf32>, i32 -> vector<8x128xf32>
    %c73_i32 = arith.constant 73 : i32
    %71 = tpu.dynamic_rotate %69 by %c73_i32 dim 1 : vector<8x128xf32>, i32 -> vector<8x128xf32>
    %c8_i32 = arith.constant 8 : i32
    %72 = tpu.dynamic_rotate %69 by %c8_i32 dim 1 : vector<8x128xf32>, i32 -> vector<8x128xf32>
    %c72_i32 = arith.constant 72 : i32
    %73 = tpu.dynamic_rotate %69 by %c72_i32 dim 1 : vector<8x128xf32>, i32 -> vector<8x128xf32>
    %c7_i32 = arith.constant 7 : i32
    %74 = tpu.dynamic_rotate %69 by %c7_i32 dim 1 : vector<8x128xf32>, i32 -> vector<8x128xf32>
    %c71_i32 = arith.constant 71 : i32
    %75 = tpu.dynamic_rotate %69 by %c71_i32 dim 1 : vector<8x128xf32>, i32 -> vector<8x128xf32>
    %c1_i32 = arith.constant 1 : i32
    %76 = tpu.dynamic_rotate %69 by %c1_i32 dim 1 : vector<8x128xf32>, i32 -> vector<8x128xf32>
    %c65_i32 = arith.constant 65 : i32
    %77 = tpu.dynamic_rotate %69 by %c65_i32 dim 1 : vector<8x128xf32>, i32 -> vector<8x128xf32>
    %c64_i32_19 = arith.constant 64 : i32
    %78 = tpu.dynamic_rotate %69 by %c64_i32_19 dim 1 : vector<8x128xf32>, i32 -> vector<8x128xf32>
    %c127_i32 = arith.constant 127 : i32
    %79 = tpu.dynamic_rotate %69 by %c127_i32 dim 1 : vector<8x128xf32>, i32 -> vector<8x128xf32>
    %c63_i32 = arith.constant 63 : i32
    %80 = tpu.dynamic_rotate %69 by %c63_i32 dim 1 : vector<8x128xf32>, i32 -> vector<8x128xf32>
    %c121_i32 = arith.constant 121 : i32
    %81 = tpu.dynamic_rotate %69 by %c121_i32 dim 1 : vector<8x128xf32>, i32 -> vector<8x128xf32>
    %c57_i32 = arith.constant 57 : i32
    %82 = tpu.dynamic_rotate %69 by %c57_i32 dim 1 : vector<8x128xf32>, i32 -> vector<8x128xf32>
    %c120_i32 = arith.constant 120 : i32
    %83 = tpu.dynamic_rotate %69 by %c120_i32 dim 1 : vector<8x128xf32>, i32 -> vector<8x128xf32>
    %c56_i32 = arith.constant 56 : i32
    %84 = tpu.dynamic_rotate %69 by %c56_i32 dim 1 : vector<8x128xf32>, i32 -> vector<8x128xf32>
    %c119_i32 = arith.constant 119 : i32
    %85 = tpu.dynamic_rotate %69 by %c119_i32 dim 1 : vector<8x128xf32>, i32 -> vector<8x128xf32>
    %c55_i32 = arith.constant 55 : i32
    %86 = tpu.dynamic_rotate %69 by %c55_i32 dim 1 : vector<8x128xf32>, i32 -> vector<8x128xf32>
    %c0_20 = arith.constant 0 : index
    %c0_21 = arith.constant 0 : index
    %87 = vector.load %arg1[%c0_20, %c0_21] : memref<61x128xf32, #tpu.memory_space<vmem>>, vector<1x128xf32>
    %88 = vector.broadcast %87 : vector<1x128xf32> to vector<8x128xf32>
    %89 = arith.mulf %88, %70 : vector<8x128xf32>
    %c27 = arith.constant 27 : index
    %c0_22 = arith.constant 0 : index
    %90 = vector.load %arg1[%c27, %c0_22] : memref<61x128xf32, #tpu.memory_space<vmem>>, vector<1x128xf32>
    %91 = vector.broadcast %90 : vector<1x128xf32> to vector<8x128xf32>
    %92 = arith.mulf %91, %71 : vector<8x128xf32>
    %93 = arith.addf %89, %92 : vector<8x128xf32>
    %c1 = arith.constant 1 : index
    %c0_23 = arith.constant 0 : index
    %94 = vector.load %arg1[%c1, %c0_23] : memref<61x128xf32, #tpu.memory_space<vmem>>, vector<1x128xf32>
    %95 = vector.broadcast %94 : vector<1x128xf32> to vector<8x128xf32>
    %96 = arith.mulf %95, %72 : vector<8x128xf32>
    %c28 = arith.constant 28 : index
    %c0_24 = arith.constant 0 : index
    %97 = vector.load %arg1[%c28, %c0_24] : memref<61x128xf32, #tpu.memory_space<vmem>>, vector<1x128xf32>
    %98 = vector.broadcast %97 : vector<1x128xf32> to vector<8x128xf32>
    %99 = arith.mulf %98, %73 : vector<8x128xf32>
    %100 = arith.addf %96, %99 : vector<8x128xf32>
    %101 = arith.addf %93, %100 : vector<8x128xf32>
    %c2 = arith.constant 2 : index
    %c0_25 = arith.constant 0 : index
    %102 = vector.load %arg1[%c2, %c0_25] : memref<61x128xf32, #tpu.memory_space<vmem>>, vector<1x128xf32>
    %103 = vector.broadcast %102 : vector<1x128xf32> to vector<8x128xf32>
    %104 = arith.mulf %103, %74 : vector<8x128xf32>
    %c29 = arith.constant 29 : index
    %c0_26 = arith.constant 0 : index
    %105 = vector.load %arg1[%c29, %c0_26] : memref<61x128xf32, #tpu.memory_space<vmem>>, vector<1x128xf32>
    %106 = vector.broadcast %105 : vector<1x128xf32> to vector<8x128xf32>
    %107 = arith.mulf %106, %75 : vector<8x128xf32>
    %108 = arith.addf %104, %107 : vector<8x128xf32>
    %109 = arith.addf %101, %108 : vector<8x128xf32>
    %c3 = arith.constant 3 : index
    %c0_27 = arith.constant 0 : index
    %110 = vector.load %arg1[%c3, %c0_27] : memref<61x128xf32, #tpu.memory_space<vmem>>, vector<1x128xf32>
    %111 = vector.broadcast %110 : vector<1x128xf32> to vector<8x128xf32>
    %112 = arith.mulf %111, %76 : vector<8x128xf32>
    %c30 = arith.constant 30 : index
    %c0_28 = arith.constant 0 : index
    %113 = vector.load %arg1[%c30, %c0_28] : memref<61x128xf32, #tpu.memory_space<vmem>>, vector<1x128xf32>
    %114 = vector.broadcast %113 : vector<1x128xf32> to vector<8x128xf32>
    %115 = arith.mulf %114, %77 : vector<8x128xf32>
    %116 = arith.addf %112, %115 : vector<8x128xf32>
    %117 = arith.addf %109, %116 : vector<8x128xf32>
    %c4 = arith.constant 4 : index
    %c0_29 = arith.constant 0 : index
    %118 = vector.load %arg1[%c4, %c0_29] : memref<61x128xf32, #tpu.memory_space<vmem>>, vector<1x128xf32>
    %119 = vector.broadcast %118 : vector<1x128xf32> to vector<8x128xf32>
    %120 = arith.mulf %119, %69 : vector<8x128xf32>
    %c31 = arith.constant 31 : index
    %c0_30 = arith.constant 0 : index
    %121 = vector.load %arg1[%c31, %c0_30] : memref<61x128xf32, #tpu.memory_space<vmem>>, vector<1x128xf32>
    %122 = vector.broadcast %121 : vector<1x128xf32> to vector<8x128xf32>
    %123 = arith.mulf %122, %78 : vector<8x128xf32>
    %124 = arith.addf %120, %123 : vector<8x128xf32>
    %125 = arith.addf %117, %124 : vector<8x128xf32>
    %c5 = arith.constant 5 : index
    %c0_31 = arith.constant 0 : index
    %126 = vector.load %arg1[%c5, %c0_31] : memref<61x128xf32, #tpu.memory_space<vmem>>, vector<1x128xf32>
    %127 = vector.broadcast %126 : vector<1x128xf32> to vector<8x128xf32>
    %128 = arith.mulf %127, %79 : vector<8x128xf32>
    %c32 = arith.constant 32 : index
    %c0_32 = arith.constant 0 : index
    %129 = vector.load %arg1[%c32, %c0_32] : memref<61x128xf32, #tpu.memory_space<vmem>>, vector<1x128xf32>
    %130 = vector.broadcast %129 : vector<1x128xf32> to vector<8x128xf32>
    %131 = arith.mulf %130, %80 : vector<8x128xf32>
    %132 = arith.addf %128, %131 : vector<8x128xf32>
    %133 = arith.addf %125, %132 : vector<8x128xf32>
    %c6 = arith.constant 6 : index
    %c0_33 = arith.constant 0 : index
    %134 = vector.load %arg1[%c6, %c0_33] : memref<61x128xf32, #tpu.memory_space<vmem>>, vector<1x128xf32>
    %135 = vector.broadcast %134 : vector<1x128xf32> to vector<8x128xf32>
    %136 = arith.mulf %135, %81 : vector<8x128xf32>
    %c33 = arith.constant 33 : index
    %c0_34 = arith.constant 0 : index
    %137 = vector.load %arg1[%c33, %c0_34] : memref<61x128xf32, #tpu.memory_space<vmem>>, vector<1x128xf32>
    %138 = vector.broadcast %137 : vector<1x128xf32> to vector<8x128xf32>
    %139 = arith.mulf %138, %82 : vector<8x128xf32>
    %140 = arith.addf %136, %139 : vector<8x128xf32>
    %141 = arith.addf %133, %140 : vector<8x128xf32>
    %c7 = arith.constant 7 : index
    %c0_35 = arith.constant 0 : index
    %142 = vector.load %arg1[%c7, %c0_35] : memref<61x128xf32, #tpu.memory_space<vmem>>, vector<1x128xf32>
    %143 = vector.broadcast %142 : vector<1x128xf32> to vector<8x128xf32>
    %144 = arith.mulf %143, %83 : vector<8x128xf32>
    %c34 = arith.constant 34 : index
    %c0_36 = arith.constant 0 : index
    %145 = vector.load %arg1[%c34, %c0_36] : memref<61x128xf32, #tpu.memory_space<vmem>>, vector<1x128xf32>
    %146 = vector.broadcast %145 : vector<1x128xf32> to vector<8x128xf32>
    %147 = arith.mulf %146, %84 : vector<8x128xf32>
    %148 = arith.addf %144, %147 : vector<8x128xf32>
    %149 = arith.addf %141, %148 : vector<8x128xf32>
    %c8 = arith.constant 8 : index
    %c0_37 = arith.constant 0 : index
    %150 = vector.load %arg1[%c8, %c0_37] : memref<61x128xf32, #tpu.memory_space<vmem>>, vector<1x128xf32>
    %151 = vector.broadcast %150 : vector<1x128xf32> to vector<8x128xf32>
    %152 = arith.mulf %151, %85 : vector<8x128xf32>
    %c35 = arith.constant 35 : index
    %c0_38 = arith.constant 0 : index
    %153 = vector.load %arg1[%c35, %c0_38] : memref<61x128xf32, #tpu.memory_space<vmem>>, vector<1x128xf32>
    %154 = vector.broadcast %153 : vector<1x128xf32> to vector<8x128xf32>
    %155 = arith.mulf %154, %86 : vector<8x128xf32>
    %156 = arith.addf %152, %155 : vector<8x128xf32>
    %157 = arith.addf %149, %156 : vector<8x128xf32>
    %cst_39 = arith.constant 0.000000e+00 : f32
    %158 = vector.broadcast %cst_39 : f32 to vector<1x128xf32>
    %159 = vector.extract_strided_slice %157 {offsets = [0, 0], sizes = [7, 128], strides = [1, 1]} : vector<8x128xf32> to vector<7x128xf32>
    %160 = tpu.concatenate %158, %159 in 0 : vector<1x128xf32>, vector<7x128xf32> -> vector<8x128xf32>
    %c9 = arith.constant 9 : index
    %c0_40 = arith.constant 0 : index
    %161 = vector.load %arg1[%c9, %c0_40] : memref<61x128xf32, #tpu.memory_space<vmem>>, vector<1x128xf32>
    %162 = vector.broadcast %161 : vector<1x128xf32> to vector<8x128xf32>
    %163 = arith.mulf %162, %70 : vector<8x128xf32>
    %c36 = arith.constant 36 : index
    %c0_41 = arith.constant 0 : index
    %164 = vector.load %arg1[%c36, %c0_41] : memref<61x128xf32, #tpu.memory_space<vmem>>, vector<1x128xf32>
    %165 = vector.broadcast %164 : vector<1x128xf32> to vector<8x128xf32>
    %166 = arith.mulf %165, %71 : vector<8x128xf32>
    %167 = arith.addf %163, %166 : vector<8x128xf32>
    %c10 = arith.constant 10 : index
    %c0_42 = arith.constant 0 : index
    %168 = vector.load %arg1[%c10, %c0_42] : memref<61x128xf32, #tpu.memory_space<vmem>>, vector<1x128xf32>
    %169 = vector.broadcast %168 : vector<1x128xf32> to vector<8x128xf32>
    %170 = arith.mulf %169, %72 : vector<8x128xf32>
    %c37 = arith.constant 37 : index
    %c0_43 = arith.constant 0 : index
    %171 = vector.load %arg1[%c37, %c0_43] : memref<61x128xf32, #tpu.memory_space<vmem>>, vector<1x128xf32>
    %172 = vector.broadcast %171 : vector<1x128xf32> to vector<8x128xf32>
    %173 = arith.mulf %172, %73 : vector<8x128xf32>
    %174 = arith.addf %170, %173 : vector<8x128xf32>
    %175 = arith.addf %167, %174 : vector<8x128xf32>
    %c11 = arith.constant 11 : index
    %c0_44 = arith.constant 0 : index
    %176 = vector.load %arg1[%c11, %c0_44] : memref<61x128xf32, #tpu.memory_space<vmem>>, vector<1x128xf32>
    %177 = vector.broadcast %176 : vector<1x128xf32> to vector<8x128xf32>
    %178 = arith.mulf %177, %74 : vector<8x128xf32>
    %c38 = arith.constant 38 : index
    %c0_45 = arith.constant 0 : index
    %179 = vector.load %arg1[%c38, %c0_45] : memref<61x128xf32, #tpu.memory_space<vmem>>, vector<1x128xf32>
    %180 = vector.broadcast %179 : vector<1x128xf32> to vector<8x128xf32>
    %181 = arith.mulf %180, %75 : vector<8x128xf32>
    %182 = arith.addf %178, %181 : vector<8x128xf32>
    %183 = arith.addf %175, %182 : vector<8x128xf32>
    %c12 = arith.constant 12 : index
    %c0_46 = arith.constant 0 : index
    %184 = vector.load %arg1[%c12, %c0_46] : memref<61x128xf32, #tpu.memory_space<vmem>>, vector<1x128xf32>
    %185 = vector.broadcast %184 : vector<1x128xf32> to vector<8x128xf32>
    %186 = arith.mulf %185, %76 : vector<8x128xf32>
    %c39 = arith.constant 39 : index
    %c0_47 = arith.constant 0 : index
    %187 = vector.load %arg1[%c39, %c0_47] : memref<61x128xf32, #tpu.memory_space<vmem>>, vector<1x128xf32>
    %188 = vector.broadcast %187 : vector<1x128xf32> to vector<8x128xf32>
    %189 = arith.mulf %188, %77 : vector<8x128xf32>
    %190 = arith.addf %186, %189 : vector<8x128xf32>
    %191 = arith.addf %183, %190 : vector<8x128xf32>
    %c13 = arith.constant 13 : index
    %c0_48 = arith.constant 0 : index
    %192 = vector.load %arg1[%c13, %c0_48] : memref<61x128xf32, #tpu.memory_space<vmem>>, vector<1x128xf32>
    %193 = vector.broadcast %192 : vector<1x128xf32> to vector<8x128xf32>
    %194 = arith.mulf %193, %69 : vector<8x128xf32>
    %c40 = arith.constant 40 : index
    %c0_49 = arith.constant 0 : index
    %195 = vector.load %arg1[%c40, %c0_49] : memref<61x128xf32, #tpu.memory_space<vmem>>, vector<1x128xf32>
    %196 = vector.broadcast %195 : vector<1x128xf32> to vector<8x128xf32>
    %197 = arith.mulf %196, %78 : vector<8x128xf32>
    %198 = arith.addf %194, %197 : vector<8x128xf32>
    %199 = arith.addf %191, %198 : vector<8x128xf32>
    %c14 = arith.constant 14 : index
    %c0_50 = arith.constant 0 : index
    %200 = vector.load %arg1[%c14, %c0_50] : memref<61x128xf32, #tpu.memory_space<vmem>>, vector<1x128xf32>
    %201 = vector.broadcast %200 : vector<1x128xf32> to vector<8x128xf32>
    %202 = arith.mulf %201, %79 : vector<8x128xf32>
    %c41 = arith.constant 41 : index
    %c0_51 = arith.constant 0 : index
    %203 = vector.load %arg1[%c41, %c0_51] : memref<61x128xf32, #tpu.memory_space<vmem>>, vector<1x128xf32>
    %204 = vector.broadcast %203 : vector<1x128xf32> to vector<8x128xf32>
    %205 = arith.mulf %204, %80 : vector<8x128xf32>
    %206 = arith.addf %202, %205 : vector<8x128xf32>
    %207 = arith.addf %199, %206 : vector<8x128xf32>
    %c15 = arith.constant 15 : index
    %c0_52 = arith.constant 0 : index
    %208 = vector.load %arg1[%c15, %c0_52] : memref<61x128xf32, #tpu.memory_space<vmem>>, vector<1x128xf32>
    %209 = vector.broadcast %208 : vector<1x128xf32> to vector<8x128xf32>
    %210 = arith.mulf %209, %81 : vector<8x128xf32>
    %c42 = arith.constant 42 : index
    %c0_53 = arith.constant 0 : index
    %211 = vector.load %arg1[%c42, %c0_53] : memref<61x128xf32, #tpu.memory_space<vmem>>, vector<1x128xf32>
    %212 = vector.broadcast %211 : vector<1x128xf32> to vector<8x128xf32>
    %213 = arith.mulf %212, %82 : vector<8x128xf32>
    %214 = arith.addf %210, %213 : vector<8x128xf32>
    %215 = arith.addf %207, %214 : vector<8x128xf32>
    %c16 = arith.constant 16 : index
    %c0_54 = arith.constant 0 : index
    %216 = vector.load %arg1[%c16, %c0_54] : memref<61x128xf32, #tpu.memory_space<vmem>>, vector<1x128xf32>
    %217 = vector.broadcast %216 : vector<1x128xf32> to vector<8x128xf32>
    %218 = arith.mulf %217, %83 : vector<8x128xf32>
    %c43 = arith.constant 43 : index
    %c0_55 = arith.constant 0 : index
    %219 = vector.load %arg1[%c43, %c0_55] : memref<61x128xf32, #tpu.memory_space<vmem>>, vector<1x128xf32>
    %220 = vector.broadcast %219 : vector<1x128xf32> to vector<8x128xf32>
    %221 = arith.mulf %220, %84 : vector<8x128xf32>
    %222 = arith.addf %218, %221 : vector<8x128xf32>
    %223 = arith.addf %215, %222 : vector<8x128xf32>
    %c17 = arith.constant 17 : index
    %c0_56 = arith.constant 0 : index
    %224 = vector.load %arg1[%c17, %c0_56] : memref<61x128xf32, #tpu.memory_space<vmem>>, vector<1x128xf32>
    %225 = vector.broadcast %224 : vector<1x128xf32> to vector<8x128xf32>
    %226 = arith.mulf %225, %85 : vector<8x128xf32>
    %c44 = arith.constant 44 : index
    %c0_57 = arith.constant 0 : index
    %227 = vector.load %arg1[%c44, %c0_57] : memref<61x128xf32, #tpu.memory_space<vmem>>, vector<1x128xf32>
    %228 = vector.broadcast %227 : vector<1x128xf32> to vector<8x128xf32>
    %229 = arith.mulf %228, %86 : vector<8x128xf32>
    %230 = arith.addf %226, %229 : vector<8x128xf32>
    %231 = arith.addf %223, %230 : vector<8x128xf32>
    %232 = arith.addf %160, %231 : vector<8x128xf32>
    %c18 = arith.constant 18 : index
    %c0_58 = arith.constant 0 : index
    %233 = vector.load %arg1[%c18, %c0_58] : memref<61x128xf32, #tpu.memory_space<vmem>>, vector<1x128xf32>
    %234 = vector.broadcast %233 : vector<1x128xf32> to vector<8x128xf32>
    %235 = arith.mulf %234, %70 : vector<8x128xf32>
    %c45 = arith.constant 45 : index
    %c0_59 = arith.constant 0 : index
    %236 = vector.load %arg1[%c45, %c0_59] : memref<61x128xf32, #tpu.memory_space<vmem>>, vector<1x128xf32>
    %237 = vector.broadcast %236 : vector<1x128xf32> to vector<8x128xf32>
    %238 = arith.mulf %237, %71 : vector<8x128xf32>
    %239 = arith.addf %235, %238 : vector<8x128xf32>
    %c19 = arith.constant 19 : index
    %c0_60 = arith.constant 0 : index
    %240 = vector.load %arg1[%c19, %c0_60] : memref<61x128xf32, #tpu.memory_space<vmem>>, vector<1x128xf32>
    %241 = vector.broadcast %240 : vector<1x128xf32> to vector<8x128xf32>
    %242 = arith.mulf %241, %72 : vector<8x128xf32>
    %c46 = arith.constant 46 : index
    %c0_61 = arith.constant 0 : index
    %243 = vector.load %arg1[%c46, %c0_61] : memref<61x128xf32, #tpu.memory_space<vmem>>, vector<1x128xf32>
    %244 = vector.broadcast %243 : vector<1x128xf32> to vector<8x128xf32>
    %245 = arith.mulf %244, %73 : vector<8x128xf32>
    %246 = arith.addf %242, %245 : vector<8x128xf32>
    %247 = arith.addf %239, %246 : vector<8x128xf32>
    %c20 = arith.constant 20 : index
    %c0_62 = arith.constant 0 : index
    %248 = vector.load %arg1[%c20, %c0_62] : memref<61x128xf32, #tpu.memory_space<vmem>>, vector<1x128xf32>
    %249 = vector.broadcast %248 : vector<1x128xf32> to vector<8x128xf32>
    %250 = arith.mulf %249, %74 : vector<8x128xf32>
    %c47 = arith.constant 47 : index
    %c0_63 = arith.constant 0 : index
    %251 = vector.load %arg1[%c47, %c0_63] : memref<61x128xf32, #tpu.memory_space<vmem>>, vector<1x128xf32>
    %252 = vector.broadcast %251 : vector<1x128xf32> to vector<8x128xf32>
    %253 = arith.mulf %252, %75 : vector<8x128xf32>
    %254 = arith.addf %250, %253 : vector<8x128xf32>
    %255 = arith.addf %247, %254 : vector<8x128xf32>
    %c21 = arith.constant 21 : index
    %c0_64 = arith.constant 0 : index
    %256 = vector.load %arg1[%c21, %c0_64] : memref<61x128xf32, #tpu.memory_space<vmem>>, vector<1x128xf32>
    %257 = vector.broadcast %256 : vector<1x128xf32> to vector<8x128xf32>
    %258 = arith.mulf %257, %76 : vector<8x128xf32>
    %c48 = arith.constant 48 : index
    %c0_65 = arith.constant 0 : index
    %259 = vector.load %arg1[%c48, %c0_65] : memref<61x128xf32, #tpu.memory_space<vmem>>, vector<1x128xf32>
    %260 = vector.broadcast %259 : vector<1x128xf32> to vector<8x128xf32>
    %261 = arith.mulf %260, %77 : vector<8x128xf32>
    %262 = arith.addf %258, %261 : vector<8x128xf32>
    %263 = arith.addf %255, %262 : vector<8x128xf32>
    %c22 = arith.constant 22 : index
    %c0_66 = arith.constant 0 : index
    %264 = vector.load %arg1[%c22, %c0_66] : memref<61x128xf32, #tpu.memory_space<vmem>>, vector<1x128xf32>
    %265 = vector.broadcast %264 : vector<1x128xf32> to vector<8x128xf32>
    %266 = arith.mulf %265, %69 : vector<8x128xf32>
    %c49 = arith.constant 49 : index
    %c0_67 = arith.constant 0 : index
    %267 = vector.load %arg1[%c49, %c0_67] : memref<61x128xf32, #tpu.memory_space<vmem>>, vector<1x128xf32>
    %268 = vector.broadcast %267 : vector<1x128xf32> to vector<8x128xf32>
    %269 = arith.mulf %268, %78 : vector<8x128xf32>
    %270 = arith.addf %266, %269 : vector<8x128xf32>
    %271 = arith.addf %263, %270 : vector<8x128xf32>
    %c23 = arith.constant 23 : index
    %c0_68 = arith.constant 0 : index
    %272 = vector.load %arg1[%c23, %c0_68] : memref<61x128xf32, #tpu.memory_space<vmem>>, vector<1x128xf32>
    %273 = vector.broadcast %272 : vector<1x128xf32> to vector<8x128xf32>
    %274 = arith.mulf %273, %79 : vector<8x128xf32>
    %c50 = arith.constant 50 : index
    %c0_69 = arith.constant 0 : index
    %275 = vector.load %arg1[%c50, %c0_69] : memref<61x128xf32, #tpu.memory_space<vmem>>, vector<1x128xf32>
    %276 = vector.broadcast %275 : vector<1x128xf32> to vector<8x128xf32>
    %277 = arith.mulf %276, %80 : vector<8x128xf32>
    %278 = arith.addf %274, %277 : vector<8x128xf32>
    %279 = arith.addf %271, %278 : vector<8x128xf32>
    %c24 = arith.constant 24 : index
    %c0_70 = arith.constant 0 : index
    %280 = vector.load %arg1[%c24, %c0_70] : memref<61x128xf32, #tpu.memory_space<vmem>>, vector<1x128xf32>
    %281 = vector.broadcast %280 : vector<1x128xf32> to vector<8x128xf32>
    %282 = arith.mulf %281, %81 : vector<8x128xf32>
    %c51 = arith.constant 51 : index
    %c0_71 = arith.constant 0 : index
    %283 = vector.load %arg1[%c51, %c0_71] : memref<61x128xf32, #tpu.memory_space<vmem>>, vector<1x128xf32>
    %284 = vector.broadcast %283 : vector<1x128xf32> to vector<8x128xf32>
    %285 = arith.mulf %284, %82 : vector<8x128xf32>
    %286 = arith.addf %282, %285 : vector<8x128xf32>
    %287 = arith.addf %279, %286 : vector<8x128xf32>
    %c25 = arith.constant 25 : index
    %c0_72 = arith.constant 0 : index
    %288 = vector.load %arg1[%c25, %c0_72] : memref<61x128xf32, #tpu.memory_space<vmem>>, vector<1x128xf32>
    %289 = vector.broadcast %288 : vector<1x128xf32> to vector<8x128xf32>
    %290 = arith.mulf %289, %83 : vector<8x128xf32>
    %c52 = arith.constant 52 : index
    %c0_73 = arith.constant 0 : index
    %291 = vector.load %arg1[%c52, %c0_73] : memref<61x128xf32, #tpu.memory_space<vmem>>, vector<1x128xf32>
    %292 = vector.broadcast %291 : vector<1x128xf32> to vector<8x128xf32>
    %293 = arith.mulf %292, %84 : vector<8x128xf32>
    %294 = arith.addf %290, %293 : vector<8x128xf32>
    %295 = arith.addf %287, %294 : vector<8x128xf32>
    %c26 = arith.constant 26 : index
    %c0_74 = arith.constant 0 : index
    %296 = vector.load %arg1[%c26, %c0_74] : memref<61x128xf32, #tpu.memory_space<vmem>>, vector<1x128xf32>
    %297 = vector.broadcast %296 : vector<1x128xf32> to vector<8x128xf32>
    %298 = arith.mulf %297, %85 : vector<8x128xf32>
    %c53 = arith.constant 53 : index
    %c0_75 = arith.constant 0 : index
    %299 = vector.load %arg1[%c53, %c0_75] : memref<61x128xf32, #tpu.memory_space<vmem>>, vector<1x128xf32>
    %300 = vector.broadcast %299 : vector<1x128xf32> to vector<8x128xf32>
    %301 = arith.mulf %300, %86 : vector<8x128xf32>
    %302 = arith.addf %298, %301 : vector<8x128xf32>
    %303 = arith.addf %295, %302 : vector<8x128xf32>
    %cst_76 = arith.constant 0.000000e+00 : f32
    %304 = vector.broadcast %cst_76 : f32 to vector<1x128xf32>
    %305 = vector.extract_strided_slice %303 {offsets = [1, 0], sizes = [7, 128], strides = [1, 1]} : vector<8x128xf32> to vector<7x128xf32>
    %306 = tpu.concatenate %305, %304 in 0 : vector<7x128xf32>, vector<1x128xf32> -> vector<8x128xf32>
    %307 = arith.addf %232, %306 : vector<8x128xf32>
    %c54 = arith.constant 54 : index
    %c0_77 = arith.constant 0 : index
    %308 = vector.load %arg1[%c54, %c0_77] : memref<61x128xf32, #tpu.memory_space<vmem>>, vector<1x128xf32>
    %309 = vector.broadcast %308 : vector<1x128xf32> to vector<8x128xf32>
    %310 = arith.addf %307, %309 : vector<8x128xf32>
    %c0_78 = arith.constant 0 : index
    %c0_79 = arith.constant 0 : index
    %c0_80 = arith.constant 0 : index
    %311 = vector.load %arg3[%c0_78, %c0_79, %c0_80] : memref<1x8x128xf32, #tpu.memory_space<vmem>>, vector<1x8x128xf32>
    %312 = vector.shape_cast %311 : vector<1x8x128xf32> to vector<8x128xf32>
    %c9_i32_81 = arith.constant 9 : i32
    %313 = tpu.dynamic_rotate %312 by %c9_i32_81 dim 1 : vector<8x128xf32>, i32 -> vector<8x128xf32>
    %c73_i32_82 = arith.constant 73 : i32
    %314 = tpu.dynamic_rotate %312 by %c73_i32_82 dim 1 : vector<8x128xf32>, i32 -> vector<8x128xf32>
    %c8_i32_83 = arith.constant 8 : i32
    %315 = tpu.dynamic_rotate %312 by %c8_i32_83 dim 1 : vector<8x128xf32>, i32 -> vector<8x128xf32>
    %c72_i32_84 = arith.constant 72 : i32
    %316 = tpu.dynamic_rotate %312 by %c72_i32_84 dim 1 : vector<8x128xf32>, i32 -> vector<8x128xf32>
    %c7_i32_85 = arith.constant 7 : i32
    %317 = tpu.dynamic_rotate %312 by %c7_i32_85 dim 1 : vector<8x128xf32>, i32 -> vector<8x128xf32>
    %c71_i32_86 = arith.constant 71 : i32
    %318 = tpu.dynamic_rotate %312 by %c71_i32_86 dim 1 : vector<8x128xf32>, i32 -> vector<8x128xf32>
    %c1_i32_87 = arith.constant 1 : i32
    %319 = tpu.dynamic_rotate %312 by %c1_i32_87 dim 1 : vector<8x128xf32>, i32 -> vector<8x128xf32>
    %c65_i32_88 = arith.constant 65 : i32
    %320 = tpu.dynamic_rotate %312 by %c65_i32_88 dim 1 : vector<8x128xf32>, i32 -> vector<8x128xf32>
    %c64_i32_89 = arith.constant 64 : i32
    %321 = tpu.dynamic_rotate %312 by %c64_i32_89 dim 1 : vector<8x128xf32>, i32 -> vector<8x128xf32>
    %c127_i32_90 = arith.constant 127 : i32
    %322 = tpu.dynamic_rotate %312 by %c127_i32_90 dim 1 : vector<8x128xf32>, i32 -> vector<8x128xf32>
    %c63_i32_91 = arith.constant 63 : i32
    %323 = tpu.dynamic_rotate %312 by %c63_i32_91 dim 1 : vector<8x128xf32>, i32 -> vector<8x128xf32>
    %c121_i32_92 = arith.constant 121 : i32
    %324 = tpu.dynamic_rotate %312 by %c121_i32_92 dim 1 : vector<8x128xf32>, i32 -> vector<8x128xf32>
    %c57_i32_93 = arith.constant 57 : i32
    %325 = tpu.dynamic_rotate %312 by %c57_i32_93 dim 1 : vector<8x128xf32>, i32 -> vector<8x128xf32>
    %c120_i32_94 = arith.constant 120 : i32
    %326 = tpu.dynamic_rotate %312 by %c120_i32_94 dim 1 : vector<8x128xf32>, i32 -> vector<8x128xf32>
    %c56_i32_95 = arith.constant 56 : i32
    %327 = tpu.dynamic_rotate %312 by %c56_i32_95 dim 1 : vector<8x128xf32>, i32 -> vector<8x128xf32>
    %c119_i32_96 = arith.constant 119 : i32
    %328 = tpu.dynamic_rotate %312 by %c119_i32_96 dim 1 : vector<8x128xf32>, i32 -> vector<8x128xf32>
    %c55_i32_97 = arith.constant 55 : i32
    %329 = tpu.dynamic_rotate %312 by %c55_i32_97 dim 1 : vector<8x128xf32>, i32 -> vector<8x128xf32>
    %c0_98 = arith.constant 0 : index
    %c0_99 = arith.constant 0 : index
    %330 = vector.load %arg1[%c0_98, %c0_99] : memref<61x128xf32, #tpu.memory_space<vmem>>, vector<1x128xf32>
    %331 = vector.broadcast %330 : vector<1x128xf32> to vector<8x128xf32>
    %332 = arith.mulf %331, %313 : vector<8x128xf32>
    %c27_100 = arith.constant 27 : index
    %c0_101 = arith.constant 0 : index
    %333 = vector.load %arg1[%c27_100, %c0_101] : memref<61x128xf32, #tpu.memory_space<vmem>>, vector<1x128xf32>
    %334 = vector.broadcast %333 : vector<1x128xf32> to vector<8x128xf32>
    %335 = arith.mulf %334, %314 : vector<8x128xf32>
    %336 = arith.addf %332, %335 : vector<8x128xf32>
    %c1_102 = arith.constant 1 : index
    %c0_103 = arith.constant 0 : index
    %337 = vector.load %arg1[%c1_102, %c0_103] : memref<61x128xf32, #tpu.memory_space<vmem>>, vector<1x128xf32>
    %338 = vector.broadcast %337 : vector<1x128xf32> to vector<8x128xf32>
    %339 = arith.mulf %338, %315 : vector<8x128xf32>
    %c28_104 = arith.constant 28 : index
    %c0_105 = arith.constant 0 : index
    %340 = vector.load %arg1[%c28_104, %c0_105] : memref<61x128xf32, #tpu.memory_space<vmem>>, vector<1x128xf32>
    %341 = vector.broadcast %340 : vector<1x128xf32> to vector<8x128xf32>
    %342 = arith.mulf %341, %316 : vector<8x128xf32>
    %343 = arith.addf %339, %342 : vector<8x128xf32>
    %344 = arith.addf %336, %343 : vector<8x128xf32>
    %c2_106 = arith.constant 2 : index
    %c0_107 = arith.constant 0 : index
    %345 = vector.load %arg1[%c2_106, %c0_107] : memref<61x128xf32, #tpu.memory_space<vmem>>, vector<1x128xf32>
    %346 = vector.broadcast %345 : vector<1x128xf32> to vector<8x128xf32>
    %347 = arith.mulf %346, %317 : vector<8x128xf32>
    %c29_108 = arith.constant 29 : index
    %c0_109 = arith.constant 0 : index
    %348 = vector.load %arg1[%c29_108, %c0_109] : memref<61x128xf32, #tpu.memory_space<vmem>>, vector<1x128xf32>
    %349 = vector.broadcast %348 : vector<1x128xf32> to vector<8x128xf32>
    %350 = arith.mulf %349, %318 : vector<8x128xf32>
    %351 = arith.addf %347, %350 : vector<8x128xf32>
    %352 = arith.addf %344, %351 : vector<8x128xf32>
    %c3_110 = arith.constant 3 : index
    %c0_111 = arith.constant 0 : index
    %353 = vector.load %arg1[%c3_110, %c0_111] : memref<61x128xf32, #tpu.memory_space<vmem>>, vector<1x128xf32>
    %354 = vector.broadcast %353 : vector<1x128xf32> to vector<8x128xf32>
    %355 = arith.mulf %354, %319 : vector<8x128xf32>
    %c30_112 = arith.constant 30 : index
    %c0_113 = arith.constant 0 : index
    %356 = vector.load %arg1[%c30_112, %c0_113] : memref<61x128xf32, #tpu.memory_space<vmem>>, vector<1x128xf32>
    %357 = vector.broadcast %356 : vector<1x128xf32> to vector<8x128xf32>
    %358 = arith.mulf %357, %320 : vector<8x128xf32>
    %359 = arith.addf %355, %358 : vector<8x128xf32>
    %360 = arith.addf %352, %359 : vector<8x128xf32>
    %c4_114 = arith.constant 4 : index
    %c0_115 = arith.constant 0 : index
    %361 = vector.load %arg1[%c4_114, %c0_115] : memref<61x128xf32, #tpu.memory_space<vmem>>, vector<1x128xf32>
    %362 = vector.broadcast %361 : vector<1x128xf32> to vector<8x128xf32>
    %363 = arith.mulf %362, %312 : vector<8x128xf32>
    %c31_116 = arith.constant 31 : index
    %c0_117 = arith.constant 0 : index
    %364 = vector.load %arg1[%c31_116, %c0_117] : memref<61x128xf32, #tpu.memory_space<vmem>>, vector<1x128xf32>
    %365 = vector.broadcast %364 : vector<1x128xf32> to vector<8x128xf32>
    %366 = arith.mulf %365, %321 : vector<8x128xf32>
    %367 = arith.addf %363, %366 : vector<8x128xf32>
    %368 = arith.addf %360, %367 : vector<8x128xf32>
    %c5_118 = arith.constant 5 : index
    %c0_119 = arith.constant 0 : index
    %369 = vector.load %arg1[%c5_118, %c0_119] : memref<61x128xf32, #tpu.memory_space<vmem>>, vector<1x128xf32>
    %370 = vector.broadcast %369 : vector<1x128xf32> to vector<8x128xf32>
    %371 = arith.mulf %370, %322 : vector<8x128xf32>
    %c32_120 = arith.constant 32 : index
    %c0_121 = arith.constant 0 : index
    %372 = vector.load %arg1[%c32_120, %c0_121] : memref<61x128xf32, #tpu.memory_space<vmem>>, vector<1x128xf32>
    %373 = vector.broadcast %372 : vector<1x128xf32> to vector<8x128xf32>
    %374 = arith.mulf %373, %323 : vector<8x128xf32>
    %375 = arith.addf %371, %374 : vector<8x128xf32>
    %376 = arith.addf %368, %375 : vector<8x128xf32>
    %c6_122 = arith.constant 6 : index
    %c0_123 = arith.constant 0 : index
    %377 = vector.load %arg1[%c6_122, %c0_123] : memref<61x128xf32, #tpu.memory_space<vmem>>, vector<1x128xf32>
    %378 = vector.broadcast %377 : vector<1x128xf32> to vector<8x128xf32>
    %379 = arith.mulf %378, %324 : vector<8x128xf32>
    %c33_124 = arith.constant 33 : index
    %c0_125 = arith.constant 0 : index
    %380 = vector.load %arg1[%c33_124, %c0_125] : memref<61x128xf32, #tpu.memory_space<vmem>>, vector<1x128xf32>
    %381 = vector.broadcast %380 : vector<1x128xf32> to vector<8x128xf32>
    %382 = arith.mulf %381, %325 : vector<8x128xf32>
    %383 = arith.addf %379, %382 : vector<8x128xf32>
    %384 = arith.addf %376, %383 : vector<8x128xf32>
    %c7_126 = arith.constant 7 : index
    %c0_127 = arith.constant 0 : index
    %385 = vector.load %arg1[%c7_126, %c0_127] : memref<61x128xf32, #tpu.memory_space<vmem>>, vector<1x128xf32>
    %386 = vector.broadcast %385 : vector<1x128xf32> to vector<8x128xf32>
    %387 = arith.mulf %386, %326 : vector<8x128xf32>
    %c34_128 = arith.constant 34 : index
    %c0_129 = arith.constant 0 : index
    %388 = vector.load %arg1[%c34_128, %c0_129] : memref<61x128xf32, #tpu.memory_space<vmem>>, vector<1x128xf32>
    %389 = vector.broadcast %388 : vector<1x128xf32> to vector<8x128xf32>
    %390 = arith.mulf %389, %327 : vector<8x128xf32>
    %391 = arith.addf %387, %390 : vector<8x128xf32>
    %392 = arith.addf %384, %391 : vector<8x128xf32>
    %c8_130 = arith.constant 8 : index
    %c0_131 = arith.constant 0 : index
    %393 = vector.load %arg1[%c8_130, %c0_131] : memref<61x128xf32, #tpu.memory_space<vmem>>, vector<1x128xf32>
    %394 = vector.broadcast %393 : vector<1x128xf32> to vector<8x128xf32>
    %395 = arith.mulf %394, %328 : vector<8x128xf32>
    %c35_132 = arith.constant 35 : index
    %c0_133 = arith.constant 0 : index
    %396 = vector.load %arg1[%c35_132, %c0_133] : memref<61x128xf32, #tpu.memory_space<vmem>>, vector<1x128xf32>
    %397 = vector.broadcast %396 : vector<1x128xf32> to vector<8x128xf32>
    %398 = arith.mulf %397, %329 : vector<8x128xf32>
    %399 = arith.addf %395, %398 : vector<8x128xf32>
    %400 = arith.addf %392, %399 : vector<8x128xf32>
    %cst_134 = arith.constant 0.000000e+00 : f32
    %401 = vector.broadcast %cst_134 : f32 to vector<1x128xf32>
    %402 = vector.extract_strided_slice %400 {offsets = [0, 0], sizes = [7, 128], strides = [1, 1]} : vector<8x128xf32> to vector<7x128xf32>
    %403 = tpu.concatenate %401, %402 in 0 : vector<1x128xf32>, vector<7x128xf32> -> vector<8x128xf32>
    %c9_135 = arith.constant 9 : index
    %c0_136 = arith.constant 0 : index
    %404 = vector.load %arg1[%c9_135, %c0_136] : memref<61x128xf32, #tpu.memory_space<vmem>>, vector<1x128xf32>
    %405 = vector.broadcast %404 : vector<1x128xf32> to vector<8x128xf32>
    %406 = arith.mulf %405, %313 : vector<8x128xf32>
    %c36_137 = arith.constant 36 : index
    %c0_138 = arith.constant 0 : index
    %407 = vector.load %arg1[%c36_137, %c0_138] : memref<61x128xf32, #tpu.memory_space<vmem>>, vector<1x128xf32>
    %408 = vector.broadcast %407 : vector<1x128xf32> to vector<8x128xf32>
    %409 = arith.mulf %408, %314 : vector<8x128xf32>
    %410 = arith.addf %406, %409 : vector<8x128xf32>
    %c10_139 = arith.constant 10 : index
    %c0_140 = arith.constant 0 : index
    %411 = vector.load %arg1[%c10_139, %c0_140] : memref<61x128xf32, #tpu.memory_space<vmem>>, vector<1x128xf32>
    %412 = vector.broadcast %411 : vector<1x128xf32> to vector<8x128xf32>
    %413 = arith.mulf %412, %315 : vector<8x128xf32>
    %c37_141 = arith.constant 37 : index
    %c0_142 = arith.constant 0 : index
    %414 = vector.load %arg1[%c37_141, %c0_142] : memref<61x128xf32, #tpu.memory_space<vmem>>, vector<1x128xf32>
    %415 = vector.broadcast %414 : vector<1x128xf32> to vector<8x128xf32>
    %416 = arith.mulf %415, %316 : vector<8x128xf32>
    %417 = arith.addf %413, %416 : vector<8x128xf32>
    %418 = arith.addf %410, %417 : vector<8x128xf32>
    %c11_143 = arith.constant 11 : index
    %c0_144 = arith.constant 0 : index
    %419 = vector.load %arg1[%c11_143, %c0_144] : memref<61x128xf32, #tpu.memory_space<vmem>>, vector<1x128xf32>
    %420 = vector.broadcast %419 : vector<1x128xf32> to vector<8x128xf32>
    %421 = arith.mulf %420, %317 : vector<8x128xf32>
    %c38_145 = arith.constant 38 : index
    %c0_146 = arith.constant 0 : index
    %422 = vector.load %arg1[%c38_145, %c0_146] : memref<61x128xf32, #tpu.memory_space<vmem>>, vector<1x128xf32>
    %423 = vector.broadcast %422 : vector<1x128xf32> to vector<8x128xf32>
    %424 = arith.mulf %423, %318 : vector<8x128xf32>
    %425 = arith.addf %421, %424 : vector<8x128xf32>
    %426 = arith.addf %418, %425 : vector<8x128xf32>
    %c12_147 = arith.constant 12 : index
    %c0_148 = arith.constant 0 : index
    %427 = vector.load %arg1[%c12_147, %c0_148] : memref<61x128xf32, #tpu.memory_space<vmem>>, vector<1x128xf32>
    %428 = vector.broadcast %427 : vector<1x128xf32> to vector<8x128xf32>
    %429 = arith.mulf %428, %319 : vector<8x128xf32>
    %c39_149 = arith.constant 39 : index
    %c0_150 = arith.constant 0 : index
    %430 = vector.load %arg1[%c39_149, %c0_150] : memref<61x128xf32, #tpu.memory_space<vmem>>, vector<1x128xf32>
    %431 = vector.broadcast %430 : vector<1x128xf32> to vector<8x128xf32>
    %432 = arith.mulf %431, %320 : vector<8x128xf32>
    %433 = arith.addf %429, %432 : vector<8x128xf32>
    %434 = arith.addf %426, %433 : vector<8x128xf32>
    %c13_151 = arith.constant 13 : index
    %c0_152 = arith.constant 0 : index
    %435 = vector.load %arg1[%c13_151, %c0_152] : memref<61x128xf32, #tpu.memory_space<vmem>>, vector<1x128xf32>
    %436 = vector.broadcast %435 : vector<1x128xf32> to vector<8x128xf32>
    %437 = arith.mulf %436, %312 : vector<8x128xf32>
    %c40_153 = arith.constant 40 : index
    %c0_154 = arith.constant 0 : index
    %438 = vector.load %arg1[%c40_153, %c0_154] : memref<61x128xf32, #tpu.memory_space<vmem>>, vector<1x128xf32>
    %439 = vector.broadcast %438 : vector<1x128xf32> to vector<8x128xf32>
    %440 = arith.mulf %439, %321 : vector<8x128xf32>
    %441 = arith.addf %437, %440 : vector<8x128xf32>
    %442 = arith.addf %434, %441 : vector<8x128xf32>
    %c14_155 = arith.constant 14 : index
    %c0_156 = arith.constant 0 : index
    %443 = vector.load %arg1[%c14_155, %c0_156] : memref<61x128xf32, #tpu.memory_space<vmem>>, vector<1x128xf32>
    %444 = vector.broadcast %443 : vector<1x128xf32> to vector<8x128xf32>
    %445 = arith.mulf %444, %322 : vector<8x128xf32>
    %c41_157 = arith.constant 41 : index
    %c0_158 = arith.constant 0 : index
    %446 = vector.load %arg1[%c41_157, %c0_158] : memref<61x128xf32, #tpu.memory_space<vmem>>, vector<1x128xf32>
    %447 = vector.broadcast %446 : vector<1x128xf32> to vector<8x128xf32>
    %448 = arith.mulf %447, %323 : vector<8x128xf32>
    %449 = arith.addf %445, %448 : vector<8x128xf32>
    %450 = arith.addf %442, %449 : vector<8x128xf32>
    %c15_159 = arith.constant 15 : index
    %c0_160 = arith.constant 0 : index
    %451 = vector.load %arg1[%c15_159, %c0_160] : memref<61x128xf32, #tpu.memory_space<vmem>>, vector<1x128xf32>
    %452 = vector.broadcast %451 : vector<1x128xf32> to vector<8x128xf32>
    %453 = arith.mulf %452, %324 : vector<8x128xf32>
    %c42_161 = arith.constant 42 : index
    %c0_162 = arith.constant 0 : index
    %454 = vector.load %arg1[%c42_161, %c0_162] : memref<61x128xf32, #tpu.memory_space<vmem>>, vector<1x128xf32>
    %455 = vector.broadcast %454 : vector<1x128xf32> to vector<8x128xf32>
    %456 = arith.mulf %455, %325 : vector<8x128xf32>
    %457 = arith.addf %453, %456 : vector<8x128xf32>
    %458 = arith.addf %450, %457 : vector<8x128xf32>
    %c16_163 = arith.constant 16 : index
    %c0_164 = arith.constant 0 : index
    %459 = vector.load %arg1[%c16_163, %c0_164] : memref<61x128xf32, #tpu.memory_space<vmem>>, vector<1x128xf32>
    %460 = vector.broadcast %459 : vector<1x128xf32> to vector<8x128xf32>
    %461 = arith.mulf %460, %326 : vector<8x128xf32>
    %c43_165 = arith.constant 43 : index
    %c0_166 = arith.constant 0 : index
    %462 = vector.load %arg1[%c43_165, %c0_166] : memref<61x128xf32, #tpu.memory_space<vmem>>, vector<1x128xf32>
    %463 = vector.broadcast %462 : vector<1x128xf32> to vector<8x128xf32>
    %464 = arith.mulf %463, %327 : vector<8x128xf32>
    %465 = arith.addf %461, %464 : vector<8x128xf32>
    %466 = arith.addf %458, %465 : vector<8x128xf32>
    %c17_167 = arith.constant 17 : index
    %c0_168 = arith.constant 0 : index
    %467 = vector.load %arg1[%c17_167, %c0_168] : memref<61x128xf32, #tpu.memory_space<vmem>>, vector<1x128xf32>
    %468 = vector.broadcast %467 : vector<1x128xf32> to vector<8x128xf32>
    %469 = arith.mulf %468, %328 : vector<8x128xf32>
    %c44_169 = arith.constant 44 : index
    %c0_170 = arith.constant 0 : index
    %470 = vector.load %arg1[%c44_169, %c0_170] : memref<61x128xf32, #tpu.memory_space<vmem>>, vector<1x128xf32>
    %471 = vector.broadcast %470 : vector<1x128xf32> to vector<8x128xf32>
    %472 = arith.mulf %471, %329 : vector<8x128xf32>
    %473 = arith.addf %469, %472 : vector<8x128xf32>
    %474 = arith.addf %466, %473 : vector<8x128xf32>
    %475 = arith.addf %403, %474 : vector<8x128xf32>
    %c18_171 = arith.constant 18 : index
    %c0_172 = arith.constant 0 : index
    %476 = vector.load %arg1[%c18_171, %c0_172] : memref<61x128xf32, #tpu.memory_space<vmem>>, vector<1x128xf32>
    %477 = vector.broadcast %476 : vector<1x128xf32> to vector<8x128xf32>
    %478 = arith.mulf %477, %313 : vector<8x128xf32>
    %c45_173 = arith.constant 45 : index
    %c0_174 = arith.constant 0 : index
    %479 = vector.load %arg1[%c45_173, %c0_174] : memref<61x128xf32, #tpu.memory_space<vmem>>, vector<1x128xf32>
    %480 = vector.broadcast %479 : vector<1x128xf32> to vector<8x128xf32>
    %481 = arith.mulf %480, %314 : vector<8x128xf32>
    %482 = arith.addf %478, %481 : vector<8x128xf32>
    %c19_175 = arith.constant 19 : index
    %c0_176 = arith.constant 0 : index
    %483 = vector.load %arg1[%c19_175, %c0_176] : memref<61x128xf32, #tpu.memory_space<vmem>>, vector<1x128xf32>
    %484 = vector.broadcast %483 : vector<1x128xf32> to vector<8x128xf32>
    %485 = arith.mulf %484, %315 : vector<8x128xf32>
    %c46_177 = arith.constant 46 : index
    %c0_178 = arith.constant 0 : index
    %486 = vector.load %arg1[%c46_177, %c0_178] : memref<61x128xf32, #tpu.memory_space<vmem>>, vector<1x128xf32>
    %487 = vector.broadcast %486 : vector<1x128xf32> to vector<8x128xf32>
    %488 = arith.mulf %487, %316 : vector<8x128xf32>
    %489 = arith.addf %485, %488 : vector<8x128xf32>
    %490 = arith.addf %482, %489 : vector<8x128xf32>
    %c20_179 = arith.constant 20 : index
    %c0_180 = arith.constant 0 : index
    %491 = vector.load %arg1[%c20_179, %c0_180] : memref<61x128xf32, #tpu.memory_space<vmem>>, vector<1x128xf32>
    %492 = vector.broadcast %491 : vector<1x128xf32> to vector<8x128xf32>
    %493 = arith.mulf %492, %317 : vector<8x128xf32>
    %c47_181 = arith.constant 47 : index
    %c0_182 = arith.constant 0 : index
    %494 = vector.load %arg1[%c47_181, %c0_182] : memref<61x128xf32, #tpu.memory_space<vmem>>, vector<1x128xf32>
    %495 = vector.broadcast %494 : vector<1x128xf32> to vector<8x128xf32>
    %496 = arith.mulf %495, %318 : vector<8x128xf32>
    %497 = arith.addf %493, %496 : vector<8x128xf32>
    %498 = arith.addf %490, %497 : vector<8x128xf32>
    %c21_183 = arith.constant 21 : index
    %c0_184 = arith.constant 0 : index
    %499 = vector.load %arg1[%c21_183, %c0_184] : memref<61x128xf32, #tpu.memory_space<vmem>>, vector<1x128xf32>
    %500 = vector.broadcast %499 : vector<1x128xf32> to vector<8x128xf32>
    %501 = arith.mulf %500, %319 : vector<8x128xf32>
    %c48_185 = arith.constant 48 : index
    %c0_186 = arith.constant 0 : index
    %502 = vector.load %arg1[%c48_185, %c0_186] : memref<61x128xf32, #tpu.memory_space<vmem>>, vector<1x128xf32>
    %503 = vector.broadcast %502 : vector<1x128xf32> to vector<8x128xf32>
    %504 = arith.mulf %503, %320 : vector<8x128xf32>
    %505 = arith.addf %501, %504 : vector<8x128xf32>
    %506 = arith.addf %498, %505 : vector<8x128xf32>
    %c22_187 = arith.constant 22 : index
    %c0_188 = arith.constant 0 : index
    %507 = vector.load %arg1[%c22_187, %c0_188] : memref<61x128xf32, #tpu.memory_space<vmem>>, vector<1x128xf32>
    %508 = vector.broadcast %507 : vector<1x128xf32> to vector<8x128xf32>
    %509 = arith.mulf %508, %312 : vector<8x128xf32>
    %c49_189 = arith.constant 49 : index
    %c0_190 = arith.constant 0 : index
    %510 = vector.load %arg1[%c49_189, %c0_190] : memref<61x128xf32, #tpu.memory_space<vmem>>, vector<1x128xf32>
    %511 = vector.broadcast %510 : vector<1x128xf32> to vector<8x128xf32>
    %512 = arith.mulf %511, %321 : vector<8x128xf32>
    %513 = arith.addf %509, %512 : vector<8x128xf32>
    %514 = arith.addf %506, %513 : vector<8x128xf32>
    %c23_191 = arith.constant 23 : index
    %c0_192 = arith.constant 0 : index
    %515 = vector.load %arg1[%c23_191, %c0_192] : memref<61x128xf32, #tpu.memory_space<vmem>>, vector<1x128xf32>
    %516 = vector.broadcast %515 : vector<1x128xf32> to vector<8x128xf32>
    %517 = arith.mulf %516, %322 : vector<8x128xf32>
    %c50_193 = arith.constant 50 : index
    %c0_194 = arith.constant 0 : index
    %518 = vector.load %arg1[%c50_193, %c0_194] : memref<61x128xf32, #tpu.memory_space<vmem>>, vector<1x128xf32>
    %519 = vector.broadcast %518 : vector<1x128xf32> to vector<8x128xf32>
    %520 = arith.mulf %519, %323 : vector<8x128xf32>
    %521 = arith.addf %517, %520 : vector<8x128xf32>
    %522 = arith.addf %514, %521 : vector<8x128xf32>
    %c24_195 = arith.constant 24 : index
    %c0_196 = arith.constant 0 : index
    %523 = vector.load %arg1[%c24_195, %c0_196] : memref<61x128xf32, #tpu.memory_space<vmem>>, vector<1x128xf32>
    %524 = vector.broadcast %523 : vector<1x128xf32> to vector<8x128xf32>
    %525 = arith.mulf %524, %324 : vector<8x128xf32>
    %c51_197 = arith.constant 51 : index
    %c0_198 = arith.constant 0 : index
    %526 = vector.load %arg1[%c51_197, %c0_198] : memref<61x128xf32, #tpu.memory_space<vmem>>, vector<1x128xf32>
    %527 = vector.broadcast %526 : vector<1x128xf32> to vector<8x128xf32>
    %528 = arith.mulf %527, %325 : vector<8x128xf32>
    %529 = arith.addf %525, %528 : vector<8x128xf32>
    %530 = arith.addf %522, %529 : vector<8x128xf32>
    %c25_199 = arith.constant 25 : index
    %c0_200 = arith.constant 0 : index
    %531 = vector.load %arg1[%c25_199, %c0_200] : memref<61x128xf32, #tpu.memory_space<vmem>>, vector<1x128xf32>
    %532 = vector.broadcast %531 : vector<1x128xf32> to vector<8x128xf32>
    %533 = arith.mulf %532, %326 : vector<8x128xf32>
    %c52_201 = arith.constant 52 : index
    %c0_202 = arith.constant 0 : index
    %534 = vector.load %arg1[%c52_201, %c0_202] : memref<61x128xf32, #tpu.memory_space<vmem>>, vector<1x128xf32>
    %535 = vector.broadcast %534 : vector<1x128xf32> to vector<8x128xf32>
    %536 = arith.mulf %535, %327 : vector<8x128xf32>
    %537 = arith.addf %533, %536 : vector<8x128xf32>
    %538 = arith.addf %530, %537 : vector<8x128xf32>
    %c26_203 = arith.constant 26 : index
    %c0_204 = arith.constant 0 : index
    %539 = vector.load %arg1[%c26_203, %c0_204] : memref<61x128xf32, #tpu.memory_space<vmem>>, vector<1x128xf32>
    %540 = vector.broadcast %539 : vector<1x128xf32> to vector<8x128xf32>
    %541 = arith.mulf %540, %328 : vector<8x128xf32>
    %c53_205 = arith.constant 53 : index
    %c0_206 = arith.constant 0 : index
    %542 = vector.load %arg1[%c53_205, %c0_206] : memref<61x128xf32, #tpu.memory_space<vmem>>, vector<1x128xf32>
    %543 = vector.broadcast %542 : vector<1x128xf32> to vector<8x128xf32>
    %544 = arith.mulf %543, %329 : vector<8x128xf32>
    %545 = arith.addf %541, %544 : vector<8x128xf32>
    %546 = arith.addf %538, %545 : vector<8x128xf32>
    %cst_207 = arith.constant 0.000000e+00 : f32
    %547 = vector.broadcast %cst_207 : f32 to vector<1x128xf32>
    %548 = vector.extract_strided_slice %546 {offsets = [1, 0], sizes = [7, 128], strides = [1, 1]} : vector<8x128xf32> to vector<7x128xf32>
    %549 = tpu.concatenate %548, %547 in 0 : vector<7x128xf32>, vector<1x128xf32> -> vector<8x128xf32>
    %550 = arith.addf %475, %549 : vector<8x128xf32>
    %c54_208 = arith.constant 54 : index
    %c0_209 = arith.constant 0 : index
    %551 = vector.load %arg1[%c54_208, %c0_209] : memref<61x128xf32, #tpu.memory_space<vmem>>, vector<1x128xf32>
    %552 = vector.broadcast %551 : vector<1x128xf32> to vector<8x128xf32>
    %553 = arith.addf %550, %552 : vector<8x128xf32>
    %554 = arith.addf %310, %553 : vector<8x128xf32>
    %555 = math.tanh %554 : vector<8x128xf32>
    %556 = arith.subf %310, %69 : vector<8x128xf32>
    %557 = arith.mulf %555, %556 : vector<8x128xf32>
    %558 = arith.addf %69, %557 : vector<8x128xf32>
    %c9_i32_210 = arith.constant 9 : i32
    %559 = tpu.dynamic_rotate %558 by %c9_i32_210 dim 1 : vector<8x128xf32>, i32 -> vector<8x128xf32>
    %c73_i32_211 = arith.constant 73 : i32
    %560 = tpu.dynamic_rotate %558 by %c73_i32_211 dim 1 : vector<8x128xf32>, i32 -> vector<8x128xf32>
    %c8_i32_212 = arith.constant 8 : i32
    %561 = tpu.dynamic_rotate %558 by %c8_i32_212 dim 1 : vector<8x128xf32>, i32 -> vector<8x128xf32>
    %c72_i32_213 = arith.constant 72 : i32
    %562 = tpu.dynamic_rotate %558 by %c72_i32_213 dim 1 : vector<8x128xf32>, i32 -> vector<8x128xf32>
    %c7_i32_214 = arith.constant 7 : i32
    %563 = tpu.dynamic_rotate %558 by %c7_i32_214 dim 1 : vector<8x128xf32>, i32 -> vector<8x128xf32>
    %c71_i32_215 = arith.constant 71 : i32
    %564 = tpu.dynamic_rotate %558 by %c71_i32_215 dim 1 : vector<8x128xf32>, i32 -> vector<8x128xf32>
    %c1_i32_216 = arith.constant 1 : i32
    %565 = tpu.dynamic_rotate %558 by %c1_i32_216 dim 1 : vector<8x128xf32>, i32 -> vector<8x128xf32>
    %c65_i32_217 = arith.constant 65 : i32
    %566 = tpu.dynamic_rotate %558 by %c65_i32_217 dim 1 : vector<8x128xf32>, i32 -> vector<8x128xf32>
    %c64_i32_218 = arith.constant 64 : i32
    %567 = tpu.dynamic_rotate %558 by %c64_i32_218 dim 1 : vector<8x128xf32>, i32 -> vector<8x128xf32>
    %c127_i32_219 = arith.constant 127 : i32
    %568 = tpu.dynamic_rotate %558 by %c127_i32_219 dim 1 : vector<8x128xf32>, i32 -> vector<8x128xf32>
    %c63_i32_220 = arith.constant 63 : i32
    %569 = tpu.dynamic_rotate %558 by %c63_i32_220 dim 1 : vector<8x128xf32>, i32 -> vector<8x128xf32>
    %c121_i32_221 = arith.constant 121 : i32
    %570 = tpu.dynamic_rotate %558 by %c121_i32_221 dim 1 : vector<8x128xf32>, i32 -> vector<8x128xf32>
    %c57_i32_222 = arith.constant 57 : i32
    %571 = tpu.dynamic_rotate %558 by %c57_i32_222 dim 1 : vector<8x128xf32>, i32 -> vector<8x128xf32>
    %c120_i32_223 = arith.constant 120 : i32
    %572 = tpu.dynamic_rotate %558 by %c120_i32_223 dim 1 : vector<8x128xf32>, i32 -> vector<8x128xf32>
    %c56_i32_224 = arith.constant 56 : i32
    %573 = tpu.dynamic_rotate %558 by %c56_i32_224 dim 1 : vector<8x128xf32>, i32 -> vector<8x128xf32>
    %c119_i32_225 = arith.constant 119 : i32
    %574 = tpu.dynamic_rotate %558 by %c119_i32_225 dim 1 : vector<8x128xf32>, i32 -> vector<8x128xf32>
    %c55_i32_226 = arith.constant 55 : i32
    %575 = tpu.dynamic_rotate %558 by %c55_i32_226 dim 1 : vector<8x128xf32>, i32 -> vector<8x128xf32>
    %c0_227 = arith.constant 0 : index
    %c0_228 = arith.constant 0 : index
    %576 = vector.load %arg1[%c0_227, %c0_228] : memref<61x128xf32, #tpu.memory_space<vmem>>, vector<1x128xf32>
    %577 = vector.broadcast %576 : vector<1x128xf32> to vector<8x128xf32>
    %578 = arith.mulf %577, %559 : vector<8x128xf32>
    %c27_229 = arith.constant 27 : index
    %c0_230 = arith.constant 0 : index
    %579 = vector.load %arg1[%c27_229, %c0_230] : memref<61x128xf32, #tpu.memory_space<vmem>>, vector<1x128xf32>
    %580 = vector.broadcast %579 : vector<1x128xf32> to vector<8x128xf32>
    %581 = arith.mulf %580, %560 : vector<8x128xf32>
    %582 = arith.addf %578, %581 : vector<8x128xf32>
    %c1_231 = arith.constant 1 : index
    %c0_232 = arith.constant 0 : index
    %583 = vector.load %arg1[%c1_231, %c0_232] : memref<61x128xf32, #tpu.memory_space<vmem>>, vector<1x128xf32>
    %584 = vector.broadcast %583 : vector<1x128xf32> to vector<8x128xf32>
    %585 = arith.mulf %584, %561 : vector<8x128xf32>
    %c28_233 = arith.constant 28 : index
    %c0_234 = arith.constant 0 : index
    %586 = vector.load %arg1[%c28_233, %c0_234] : memref<61x128xf32, #tpu.memory_space<vmem>>, vector<1x128xf32>
    %587 = vector.broadcast %586 : vector<1x128xf32> to vector<8x128xf32>
    %588 = arith.mulf %587, %562 : vector<8x128xf32>
    %589 = arith.addf %585, %588 : vector<8x128xf32>
    %590 = arith.addf %582, %589 : vector<8x128xf32>
    %c2_235 = arith.constant 2 : index
    %c0_236 = arith.constant 0 : index
    %591 = vector.load %arg1[%c2_235, %c0_236] : memref<61x128xf32, #tpu.memory_space<vmem>>, vector<1x128xf32>
    %592 = vector.broadcast %591 : vector<1x128xf32> to vector<8x128xf32>
    %593 = arith.mulf %592, %563 : vector<8x128xf32>
    %c29_237 = arith.constant 29 : index
    %c0_238 = arith.constant 0 : index
    %594 = vector.load %arg1[%c29_237, %c0_238] : memref<61x128xf32, #tpu.memory_space<vmem>>, vector<1x128xf32>
    %595 = vector.broadcast %594 : vector<1x128xf32> to vector<8x128xf32>
    %596 = arith.mulf %595, %564 : vector<8x128xf32>
    %597 = arith.addf %593, %596 : vector<8x128xf32>
    %598 = arith.addf %590, %597 : vector<8x128xf32>
    %c3_239 = arith.constant 3 : index
    %c0_240 = arith.constant 0 : index
    %599 = vector.load %arg1[%c3_239, %c0_240] : memref<61x128xf32, #tpu.memory_space<vmem>>, vector<1x128xf32>
    %600 = vector.broadcast %599 : vector<1x128xf32> to vector<8x128xf32>
    %601 = arith.mulf %600, %565 : vector<8x128xf32>
    %c30_241 = arith.constant 30 : index
    %c0_242 = arith.constant 0 : index
    %602 = vector.load %arg1[%c30_241, %c0_242] : memref<61x128xf32, #tpu.memory_space<vmem>>, vector<1x128xf32>
    %603 = vector.broadcast %602 : vector<1x128xf32> to vector<8x128xf32>
    %604 = arith.mulf %603, %566 : vector<8x128xf32>
    %605 = arith.addf %601, %604 : vector<8x128xf32>
    %606 = arith.addf %598, %605 : vector<8x128xf32>
    %c4_243 = arith.constant 4 : index
    %c0_244 = arith.constant 0 : index
    %607 = vector.load %arg1[%c4_243, %c0_244] : memref<61x128xf32, #tpu.memory_space<vmem>>, vector<1x128xf32>
    %608 = vector.broadcast %607 : vector<1x128xf32> to vector<8x128xf32>
    %609 = arith.mulf %608, %558 : vector<8x128xf32>
    %c31_245 = arith.constant 31 : index
    %c0_246 = arith.constant 0 : index
    %610 = vector.load %arg1[%c31_245, %c0_246] : memref<61x128xf32, #tpu.memory_space<vmem>>, vector<1x128xf32>
    %611 = vector.broadcast %610 : vector<1x128xf32> to vector<8x128xf32>
    %612 = arith.mulf %611, %567 : vector<8x128xf32>
    %613 = arith.addf %609, %612 : vector<8x128xf32>
    %614 = arith.addf %606, %613 : vector<8x128xf32>
    %c5_247 = arith.constant 5 : index
    %c0_248 = arith.constant 0 : index
    %615 = vector.load %arg1[%c5_247, %c0_248] : memref<61x128xf32, #tpu.memory_space<vmem>>, vector<1x128xf32>
    %616 = vector.broadcast %615 : vector<1x128xf32> to vector<8x128xf32>
    %617 = arith.mulf %616, %568 : vector<8x128xf32>
    %c32_249 = arith.constant 32 : index
    %c0_250 = arith.constant 0 : index
    %618 = vector.load %arg1[%c32_249, %c0_250] : memref<61x128xf32, #tpu.memory_space<vmem>>, vector<1x128xf32>
    %619 = vector.broadcast %618 : vector<1x128xf32> to vector<8x128xf32>
    %620 = arith.mulf %619, %569 : vector<8x128xf32>
    %621 = arith.addf %617, %620 : vector<8x128xf32>
    %622 = arith.addf %614, %621 : vector<8x128xf32>
    %c6_251 = arith.constant 6 : index
    %c0_252 = arith.constant 0 : index
    %623 = vector.load %arg1[%c6_251, %c0_252] : memref<61x128xf32, #tpu.memory_space<vmem>>, vector<1x128xf32>
    %624 = vector.broadcast %623 : vector<1x128xf32> to vector<8x128xf32>
    %625 = arith.mulf %624, %570 : vector<8x128xf32>
    %c33_253 = arith.constant 33 : index
    %c0_254 = arith.constant 0 : index
    %626 = vector.load %arg1[%c33_253, %c0_254] : memref<61x128xf32, #tpu.memory_space<vmem>>, vector<1x128xf32>
    %627 = vector.broadcast %626 : vector<1x128xf32> to vector<8x128xf32>
    %628 = arith.mulf %627, %571 : vector<8x128xf32>
    %629 = arith.addf %625, %628 : vector<8x128xf32>
    %630 = arith.addf %622, %629 : vector<8x128xf32>
    %c7_255 = arith.constant 7 : index
    %c0_256 = arith.constant 0 : index
    %631 = vector.load %arg1[%c7_255, %c0_256] : memref<61x128xf32, #tpu.memory_space<vmem>>, vector<1x128xf32>
    %632 = vector.broadcast %631 : vector<1x128xf32> to vector<8x128xf32>
    %633 = arith.mulf %632, %572 : vector<8x128xf32>
    %c34_257 = arith.constant 34 : index
    %c0_258 = arith.constant 0 : index
    %634 = vector.load %arg1[%c34_257, %c0_258] : memref<61x128xf32, #tpu.memory_space<vmem>>, vector<1x128xf32>
    %635 = vector.broadcast %634 : vector<1x128xf32> to vector<8x128xf32>
    %636 = arith.mulf %635, %573 : vector<8x128xf32>
    %637 = arith.addf %633, %636 : vector<8x128xf32>
    %638 = arith.addf %630, %637 : vector<8x128xf32>
    %c8_259 = arith.constant 8 : index
    %c0_260 = arith.constant 0 : index
    %639 = vector.load %arg1[%c8_259, %c0_260] : memref<61x128xf32, #tpu.memory_space<vmem>>, vector<1x128xf32>
    %640 = vector.broadcast %639 : vector<1x128xf32> to vector<8x128xf32>
    %641 = arith.mulf %640, %574 : vector<8x128xf32>
    %c35_261 = arith.constant 35 : index
    %c0_262 = arith.constant 0 : index
    %642 = vector.load %arg1[%c35_261, %c0_262] : memref<61x128xf32, #tpu.memory_space<vmem>>, vector<1x128xf32>
    %643 = vector.broadcast %642 : vector<1x128xf32> to vector<8x128xf32>
    %644 = arith.mulf %643, %575 : vector<8x128xf32>
    %645 = arith.addf %641, %644 : vector<8x128xf32>
    %646 = arith.addf %638, %645 : vector<8x128xf32>
    %cst_263 = arith.constant 0.000000e+00 : f32
    %647 = vector.broadcast %cst_263 : f32 to vector<1x128xf32>
    %648 = vector.extract_strided_slice %646 {offsets = [0, 0], sizes = [7, 128], strides = [1, 1]} : vector<8x128xf32> to vector<7x128xf32>
    %649 = tpu.concatenate %647, %648 in 0 : vector<1x128xf32>, vector<7x128xf32> -> vector<8x128xf32>
    %c9_264 = arith.constant 9 : index
    %c0_265 = arith.constant 0 : index
    %650 = vector.load %arg1[%c9_264, %c0_265] : memref<61x128xf32, #tpu.memory_space<vmem>>, vector<1x128xf32>
    %651 = vector.broadcast %650 : vector<1x128xf32> to vector<8x128xf32>
    %652 = arith.mulf %651, %559 : vector<8x128xf32>
    %c36_266 = arith.constant 36 : index
    %c0_267 = arith.constant 0 : index
    %653 = vector.load %arg1[%c36_266, %c0_267] : memref<61x128xf32, #tpu.memory_space<vmem>>, vector<1x128xf32>
    %654 = vector.broadcast %653 : vector<1x128xf32> to vector<8x128xf32>
    %655 = arith.mulf %654, %560 : vector<8x128xf32>
    %656 = arith.addf %652, %655 : vector<8x128xf32>
    %c10_268 = arith.constant 10 : index
    %c0_269 = arith.constant 0 : index
    %657 = vector.load %arg1[%c10_268, %c0_269] : memref<61x128xf32, #tpu.memory_space<vmem>>, vector<1x128xf32>
    %658 = vector.broadcast %657 : vector<1x128xf32> to vector<8x128xf32>
    %659 = arith.mulf %658, %561 : vector<8x128xf32>
    %c37_270 = arith.constant 37 : index
    %c0_271 = arith.constant 0 : index
    %660 = vector.load %arg1[%c37_270, %c0_271] : memref<61x128xf32, #tpu.memory_space<vmem>>, vector<1x128xf32>
    %661 = vector.broadcast %660 : vector<1x128xf32> to vector<8x128xf32>
    %662 = arith.mulf %661, %562 : vector<8x128xf32>
    %663 = arith.addf %659, %662 : vector<8x128xf32>
    %664 = arith.addf %656, %663 : vector<8x128xf32>
    %c11_272 = arith.constant 11 : index
    %c0_273 = arith.constant 0 : index
    %665 = vector.load %arg1[%c11_272, %c0_273] : memref<61x128xf32, #tpu.memory_space<vmem>>, vector<1x128xf32>
    %666 = vector.broadcast %665 : vector<1x128xf32> to vector<8x128xf32>
    %667 = arith.mulf %666, %563 : vector<8x128xf32>
    %c38_274 = arith.constant 38 : index
    %c0_275 = arith.constant 0 : index
    %668 = vector.load %arg1[%c38_274, %c0_275] : memref<61x128xf32, #tpu.memory_space<vmem>>, vector<1x128xf32>
    %669 = vector.broadcast %668 : vector<1x128xf32> to vector<8x128xf32>
    %670 = arith.mulf %669, %564 : vector<8x128xf32>
    %671 = arith.addf %667, %670 : vector<8x128xf32>
    %672 = arith.addf %664, %671 : vector<8x128xf32>
    %c12_276 = arith.constant 12 : index
    %c0_277 = arith.constant 0 : index
    %673 = vector.load %arg1[%c12_276, %c0_277] : memref<61x128xf32, #tpu.memory_space<vmem>>, vector<1x128xf32>
    %674 = vector.broadcast %673 : vector<1x128xf32> to vector<8x128xf32>
    %675 = arith.mulf %674, %565 : vector<8x128xf32>
    %c39_278 = arith.constant 39 : index
    %c0_279 = arith.constant 0 : index
    %676 = vector.load %arg1[%c39_278, %c0_279] : memref<61x128xf32, #tpu.memory_space<vmem>>, vector<1x128xf32>
    %677 = vector.broadcast %676 : vector<1x128xf32> to vector<8x128xf32>
    %678 = arith.mulf %677, %566 : vector<8x128xf32>
    %679 = arith.addf %675, %678 : vector<8x128xf32>
    %680 = arith.addf %672, %679 : vector<8x128xf32>
    %c13_280 = arith.constant 13 : index
    %c0_281 = arith.constant 0 : index
    %681 = vector.load %arg1[%c13_280, %c0_281] : memref<61x128xf32, #tpu.memory_space<vmem>>, vector<1x128xf32>
    %682 = vector.broadcast %681 : vector<1x128xf32> to vector<8x128xf32>
    %683 = arith.mulf %682, %558 : vector<8x128xf32>
    %c40_282 = arith.constant 40 : index
    %c0_283 = arith.constant 0 : index
    %684 = vector.load %arg1[%c40_282, %c0_283] : memref<61x128xf32, #tpu.memory_space<vmem>>, vector<1x128xf32>
    %685 = vector.broadcast %684 : vector<1x128xf32> to vector<8x128xf32>
    %686 = arith.mulf %685, %567 : vector<8x128xf32>
    %687 = arith.addf %683, %686 : vector<8x128xf32>
    %688 = arith.addf %680, %687 : vector<8x128xf32>
    %c14_284 = arith.constant 14 : index
    %c0_285 = arith.constant 0 : index
    %689 = vector.load %arg1[%c14_284, %c0_285] : memref<61x128xf32, #tpu.memory_space<vmem>>, vector<1x128xf32>
    %690 = vector.broadcast %689 : vector<1x128xf32> to vector<8x128xf32>
    %691 = arith.mulf %690, %568 : vector<8x128xf32>
    %c41_286 = arith.constant 41 : index
    %c0_287 = arith.constant 0 : index
    %692 = vector.load %arg1[%c41_286, %c0_287] : memref<61x128xf32, #tpu.memory_space<vmem>>, vector<1x128xf32>
    %693 = vector.broadcast %692 : vector<1x128xf32> to vector<8x128xf32>
    %694 = arith.mulf %693, %569 : vector<8x128xf32>
    %695 = arith.addf %691, %694 : vector<8x128xf32>
    %696 = arith.addf %688, %695 : vector<8x128xf32>
    %c15_288 = arith.constant 15 : index
    %c0_289 = arith.constant 0 : index
    %697 = vector.load %arg1[%c15_288, %c0_289] : memref<61x128xf32, #tpu.memory_space<vmem>>, vector<1x128xf32>
    %698 = vector.broadcast %697 : vector<1x128xf32> to vector<8x128xf32>
    %699 = arith.mulf %698, %570 : vector<8x128xf32>
    %c42_290 = arith.constant 42 : index
    %c0_291 = arith.constant 0 : index
    %700 = vector.load %arg1[%c42_290, %c0_291] : memref<61x128xf32, #tpu.memory_space<vmem>>, vector<1x128xf32>
    %701 = vector.broadcast %700 : vector<1x128xf32> to vector<8x128xf32>
    %702 = arith.mulf %701, %571 : vector<8x128xf32>
    %703 = arith.addf %699, %702 : vector<8x128xf32>
    %704 = arith.addf %696, %703 : vector<8x128xf32>
    %c16_292 = arith.constant 16 : index
    %c0_293 = arith.constant 0 : index
    %705 = vector.load %arg1[%c16_292, %c0_293] : memref<61x128xf32, #tpu.memory_space<vmem>>, vector<1x128xf32>
    %706 = vector.broadcast %705 : vector<1x128xf32> to vector<8x128xf32>
    %707 = arith.mulf %706, %572 : vector<8x128xf32>
    %c43_294 = arith.constant 43 : index
    %c0_295 = arith.constant 0 : index
    %708 = vector.load %arg1[%c43_294, %c0_295] : memref<61x128xf32, #tpu.memory_space<vmem>>, vector<1x128xf32>
    %709 = vector.broadcast %708 : vector<1x128xf32> to vector<8x128xf32>
    %710 = arith.mulf %709, %573 : vector<8x128xf32>
    %711 = arith.addf %707, %710 : vector<8x128xf32>
    %712 = arith.addf %704, %711 : vector<8x128xf32>
    %c17_296 = arith.constant 17 : index
    %c0_297 = arith.constant 0 : index
    %713 = vector.load %arg1[%c17_296, %c0_297] : memref<61x128xf32, #tpu.memory_space<vmem>>, vector<1x128xf32>
    %714 = vector.broadcast %713 : vector<1x128xf32> to vector<8x128xf32>
    %715 = arith.mulf %714, %574 : vector<8x128xf32>
    %c44_298 = arith.constant 44 : index
    %c0_299 = arith.constant 0 : index
    %716 = vector.load %arg1[%c44_298, %c0_299] : memref<61x128xf32, #tpu.memory_space<vmem>>, vector<1x128xf32>
    %717 = vector.broadcast %716 : vector<1x128xf32> to vector<8x128xf32>
    %718 = arith.mulf %717, %575 : vector<8x128xf32>
    %719 = arith.addf %715, %718 : vector<8x128xf32>
    %720 = arith.addf %712, %719 : vector<8x128xf32>
    %721 = arith.addf %649, %720 : vector<8x128xf32>
    %c18_300 = arith.constant 18 : index
    %c0_301 = arith.constant 0 : index
    %722 = vector.load %arg1[%c18_300, %c0_301] : memref<61x128xf32, #tpu.memory_space<vmem>>, vector<1x128xf32>
    %723 = vector.broadcast %722 : vector<1x128xf32> to vector<8x128xf32>
    %724 = arith.mulf %723, %559 : vector<8x128xf32>
    %c45_302 = arith.constant 45 : index
    %c0_303 = arith.constant 0 : index
    %725 = vector.load %arg1[%c45_302, %c0_303] : memref<61x128xf32, #tpu.memory_space<vmem>>, vector<1x128xf32>
    %726 = vector.broadcast %725 : vector<1x128xf32> to vector<8x128xf32>
    %727 = arith.mulf %726, %560 : vector<8x128xf32>
    %728 = arith.addf %724, %727 : vector<8x128xf32>
    %c19_304 = arith.constant 19 : index
    %c0_305 = arith.constant 0 : index
    %729 = vector.load %arg1[%c19_304, %c0_305] : memref<61x128xf32, #tpu.memory_space<vmem>>, vector<1x128xf32>
    %730 = vector.broadcast %729 : vector<1x128xf32> to vector<8x128xf32>
    %731 = arith.mulf %730, %561 : vector<8x128xf32>
    %c46_306 = arith.constant 46 : index
    %c0_307 = arith.constant 0 : index
    %732 = vector.load %arg1[%c46_306, %c0_307] : memref<61x128xf32, #tpu.memory_space<vmem>>, vector<1x128xf32>
    %733 = vector.broadcast %732 : vector<1x128xf32> to vector<8x128xf32>
    %734 = arith.mulf %733, %562 : vector<8x128xf32>
    %735 = arith.addf %731, %734 : vector<8x128xf32>
    %736 = arith.addf %728, %735 : vector<8x128xf32>
    %c20_308 = arith.constant 20 : index
    %c0_309 = arith.constant 0 : index
    %737 = vector.load %arg1[%c20_308, %c0_309] : memref<61x128xf32, #tpu.memory_space<vmem>>, vector<1x128xf32>
    %738 = vector.broadcast %737 : vector<1x128xf32> to vector<8x128xf32>
    %739 = arith.mulf %738, %563 : vector<8x128xf32>
    %c47_310 = arith.constant 47 : index
    %c0_311 = arith.constant 0 : index
    %740 = vector.load %arg1[%c47_310, %c0_311] : memref<61x128xf32, #tpu.memory_space<vmem>>, vector<1x128xf32>
    %741 = vector.broadcast %740 : vector<1x128xf32> to vector<8x128xf32>
    %742 = arith.mulf %741, %564 : vector<8x128xf32>
    %743 = arith.addf %739, %742 : vector<8x128xf32>
    %744 = arith.addf %736, %743 : vector<8x128xf32>
    %c21_312 = arith.constant 21 : index
    %c0_313 = arith.constant 0 : index
    %745 = vector.load %arg1[%c21_312, %c0_313] : memref<61x128xf32, #tpu.memory_space<vmem>>, vector<1x128xf32>
    %746 = vector.broadcast %745 : vector<1x128xf32> to vector<8x128xf32>
    %747 = arith.mulf %746, %565 : vector<8x128xf32>
    %c48_314 = arith.constant 48 : index
    %c0_315 = arith.constant 0 : index
    %748 = vector.load %arg1[%c48_314, %c0_315] : memref<61x128xf32, #tpu.memory_space<vmem>>, vector<1x128xf32>
    %749 = vector.broadcast %748 : vector<1x128xf32> to vector<8x128xf32>
    %750 = arith.mulf %749, %566 : vector<8x128xf32>
    %751 = arith.addf %747, %750 : vector<8x128xf32>
    %752 = arith.addf %744, %751 : vector<8x128xf32>
    %c22_316 = arith.constant 22 : index
    %c0_317 = arith.constant 0 : index
    %753 = vector.load %arg1[%c22_316, %c0_317] : memref<61x128xf32, #tpu.memory_space<vmem>>, vector<1x128xf32>
    %754 = vector.broadcast %753 : vector<1x128xf32> to vector<8x128xf32>
    %755 = arith.mulf %754, %558 : vector<8x128xf32>
    %c49_318 = arith.constant 49 : index
    %c0_319 = arith.constant 0 : index
    %756 = vector.load %arg1[%c49_318, %c0_319] : memref<61x128xf32, #tpu.memory_space<vmem>>, vector<1x128xf32>
    %757 = vector.broadcast %756 : vector<1x128xf32> to vector<8x128xf32>
    %758 = arith.mulf %757, %567 : vector<8x128xf32>
    %759 = arith.addf %755, %758 : vector<8x128xf32>
    %760 = arith.addf %752, %759 : vector<8x128xf32>
    %c23_320 = arith.constant 23 : index
    %c0_321 = arith.constant 0 : index
    %761 = vector.load %arg1[%c23_320, %c0_321] : memref<61x128xf32, #tpu.memory_space<vmem>>, vector<1x128xf32>
    %762 = vector.broadcast %761 : vector<1x128xf32> to vector<8x128xf32>
    %763 = arith.mulf %762, %568 : vector<8x128xf32>
    %c50_322 = arith.constant 50 : index
    %c0_323 = arith.constant 0 : index
    %764 = vector.load %arg1[%c50_322, %c0_323] : memref<61x128xf32, #tpu.memory_space<vmem>>, vector<1x128xf32>
    %765 = vector.broadcast %764 : vector<1x128xf32> to vector<8x128xf32>
    %766 = arith.mulf %765, %569 : vector<8x128xf32>
    %767 = arith.addf %763, %766 : vector<8x128xf32>
    %768 = arith.addf %760, %767 : vector<8x128xf32>
    %c24_324 = arith.constant 24 : index
    %c0_325 = arith.constant 0 : index
    %769 = vector.load %arg1[%c24_324, %c0_325] : memref<61x128xf32, #tpu.memory_space<vmem>>, vector<1x128xf32>
    %770 = vector.broadcast %769 : vector<1x128xf32> to vector<8x128xf32>
    %771 = arith.mulf %770, %570 : vector<8x128xf32>
    %c51_326 = arith.constant 51 : index
    %c0_327 = arith.constant 0 : index
    %772 = vector.load %arg1[%c51_326, %c0_327] : memref<61x128xf32, #tpu.memory_space<vmem>>, vector<1x128xf32>
    %773 = vector.broadcast %772 : vector<1x128xf32> to vector<8x128xf32>
    %774 = arith.mulf %773, %571 : vector<8x128xf32>
    %775 = arith.addf %771, %774 : vector<8x128xf32>
    %776 = arith.addf %768, %775 : vector<8x128xf32>
    %c25_328 = arith.constant 25 : index
    %c0_329 = arith.constant 0 : index
    %777 = vector.load %arg1[%c25_328, %c0_329] : memref<61x128xf32, #tpu.memory_space<vmem>>, vector<1x128xf32>
    %778 = vector.broadcast %777 : vector<1x128xf32> to vector<8x128xf32>
    %779 = arith.mulf %778, %572 : vector<8x128xf32>
    %c52_330 = arith.constant 52 : index
    %c0_331 = arith.constant 0 : index
    %780 = vector.load %arg1[%c52_330, %c0_331] : memref<61x128xf32, #tpu.memory_space<vmem>>, vector<1x128xf32>
    %781 = vector.broadcast %780 : vector<1x128xf32> to vector<8x128xf32>
    %782 = arith.mulf %781, %573 : vector<8x128xf32>
    %783 = arith.addf %779, %782 : vector<8x128xf32>
    %784 = arith.addf %776, %783 : vector<8x128xf32>
    %c26_332 = arith.constant 26 : index
    %c0_333 = arith.constant 0 : index
    %785 = vector.load %arg1[%c26_332, %c0_333] : memref<61x128xf32, #tpu.memory_space<vmem>>, vector<1x128xf32>
    %786 = vector.broadcast %785 : vector<1x128xf32> to vector<8x128xf32>
    %787 = arith.mulf %786, %574 : vector<8x128xf32>
    %c53_334 = arith.constant 53 : index
    %c0_335 = arith.constant 0 : index
    %788 = vector.load %arg1[%c53_334, %c0_335] : memref<61x128xf32, #tpu.memory_space<vmem>>, vector<1x128xf32>
    %789 = vector.broadcast %788 : vector<1x128xf32> to vector<8x128xf32>
    %790 = arith.mulf %789, %575 : vector<8x128xf32>
    %791 = arith.addf %787, %790 : vector<8x128xf32>
    %792 = arith.addf %784, %791 : vector<8x128xf32>
    %cst_336 = arith.constant 0.000000e+00 : f32
    %793 = vector.broadcast %cst_336 : f32 to vector<1x128xf32>
    %794 = vector.extract_strided_slice %792 {offsets = [1, 0], sizes = [7, 128], strides = [1, 1]} : vector<8x128xf32> to vector<7x128xf32>
    %795 = tpu.concatenate %794, %793 in 0 : vector<7x128xf32>, vector<1x128xf32> -> vector<8x128xf32>
    %796 = arith.addf %721, %795 : vector<8x128xf32>
    %c54_337 = arith.constant 54 : index
    %c0_338 = arith.constant 0 : index
    %797 = vector.load %arg1[%c54_337, %c0_338] : memref<61x128xf32, #tpu.memory_space<vmem>>, vector<1x128xf32>
    %798 = vector.broadcast %797 : vector<1x128xf32> to vector<8x128xf32>
    %799 = arith.addf %796, %798 : vector<8x128xf32>
    %800 = arith.subf %799, %558 : vector<8x128xf32>
    %801 = arith.mulf %555, %800 : vector<8x128xf32>
    %802 = arith.addf %558, %801 : vector<8x128xf32>
    %c9_i32_339 = arith.constant 9 : i32
    %803 = tpu.dynamic_rotate %802 by %c9_i32_339 dim 1 : vector<8x128xf32>, i32 -> vector<8x128xf32>
    %c73_i32_340 = arith.constant 73 : i32
    %804 = tpu.dynamic_rotate %802 by %c73_i32_340 dim 1 : vector<8x128xf32>, i32 -> vector<8x128xf32>
    %c8_i32_341 = arith.constant 8 : i32
    %805 = tpu.dynamic_rotate %802 by %c8_i32_341 dim 1 : vector<8x128xf32>, i32 -> vector<8x128xf32>
    %c72_i32_342 = arith.constant 72 : i32
    %806 = tpu.dynamic_rotate %802 by %c72_i32_342 dim 1 : vector<8x128xf32>, i32 -> vector<8x128xf32>
    %c7_i32_343 = arith.constant 7 : i32
    %807 = tpu.dynamic_rotate %802 by %c7_i32_343 dim 1 : vector<8x128xf32>, i32 -> vector<8x128xf32>
    %c71_i32_344 = arith.constant 71 : i32
    %808 = tpu.dynamic_rotate %802 by %c71_i32_344 dim 1 : vector<8x128xf32>, i32 -> vector<8x128xf32>
    %c1_i32_345 = arith.constant 1 : i32
    %809 = tpu.dynamic_rotate %802 by %c1_i32_345 dim 1 : vector<8x128xf32>, i32 -> vector<8x128xf32>
    %c65_i32_346 = arith.constant 65 : i32
    %810 = tpu.dynamic_rotate %802 by %c65_i32_346 dim 1 : vector<8x128xf32>, i32 -> vector<8x128xf32>
    %c64_i32_347 = arith.constant 64 : i32
    %811 = tpu.dynamic_rotate %802 by %c64_i32_347 dim 1 : vector<8x128xf32>, i32 -> vector<8x128xf32>
    %c127_i32_348 = arith.constant 127 : i32
    %812 = tpu.dynamic_rotate %802 by %c127_i32_348 dim 1 : vector<8x128xf32>, i32 -> vector<8x128xf32>
    %c63_i32_349 = arith.constant 63 : i32
    %813 = tpu.dynamic_rotate %802 by %c63_i32_349 dim 1 : vector<8x128xf32>, i32 -> vector<8x128xf32>
    %c121_i32_350 = arith.constant 121 : i32
    %814 = tpu.dynamic_rotate %802 by %c121_i32_350 dim 1 : vector<8x128xf32>, i32 -> vector<8x128xf32>
    %c57_i32_351 = arith.constant 57 : i32
    %815 = tpu.dynamic_rotate %802 by %c57_i32_351 dim 1 : vector<8x128xf32>, i32 -> vector<8x128xf32>
    %c120_i32_352 = arith.constant 120 : i32
    %816 = tpu.dynamic_rotate %802 by %c120_i32_352 dim 1 : vector<8x128xf32>, i32 -> vector<8x128xf32>
    %c56_i32_353 = arith.constant 56 : i32
    %817 = tpu.dynamic_rotate %802 by %c56_i32_353 dim 1 : vector<8x128xf32>, i32 -> vector<8x128xf32>
    %c119_i32_354 = arith.constant 119 : i32
    %818 = tpu.dynamic_rotate %802 by %c119_i32_354 dim 1 : vector<8x128xf32>, i32 -> vector<8x128xf32>
    %c55_i32_355 = arith.constant 55 : i32
    %819 = tpu.dynamic_rotate %802 by %c55_i32_355 dim 1 : vector<8x128xf32>, i32 -> vector<8x128xf32>
    %c0_356 = arith.constant 0 : index
    %c0_357 = arith.constant 0 : index
    %820 = vector.load %arg1[%c0_356, %c0_357] : memref<61x128xf32, #tpu.memory_space<vmem>>, vector<1x128xf32>
    %821 = vector.broadcast %820 : vector<1x128xf32> to vector<8x128xf32>
    %822 = arith.mulf %821, %803 : vector<8x128xf32>
    %c27_358 = arith.constant 27 : index
    %c0_359 = arith.constant 0 : index
    %823 = vector.load %arg1[%c27_358, %c0_359] : memref<61x128xf32, #tpu.memory_space<vmem>>, vector<1x128xf32>
    %824 = vector.broadcast %823 : vector<1x128xf32> to vector<8x128xf32>
    %825 = arith.mulf %824, %804 : vector<8x128xf32>
    %826 = arith.addf %822, %825 : vector<8x128xf32>
    %c1_360 = arith.constant 1 : index
    %c0_361 = arith.constant 0 : index
    %827 = vector.load %arg1[%c1_360, %c0_361] : memref<61x128xf32, #tpu.memory_space<vmem>>, vector<1x128xf32>
    %828 = vector.broadcast %827 : vector<1x128xf32> to vector<8x128xf32>
    %829 = arith.mulf %828, %805 : vector<8x128xf32>
    %c28_362 = arith.constant 28 : index
    %c0_363 = arith.constant 0 : index
    %830 = vector.load %arg1[%c28_362, %c0_363] : memref<61x128xf32, #tpu.memory_space<vmem>>, vector<1x128xf32>
    %831 = vector.broadcast %830 : vector<1x128xf32> to vector<8x128xf32>
    %832 = arith.mulf %831, %806 : vector<8x128xf32>
    %833 = arith.addf %829, %832 : vector<8x128xf32>
    %834 = arith.addf %826, %833 : vector<8x128xf32>
    %c2_364 = arith.constant 2 : index
    %c0_365 = arith.constant 0 : index
    %835 = vector.load %arg1[%c2_364, %c0_365] : memref<61x128xf32, #tpu.memory_space<vmem>>, vector<1x128xf32>
    %836 = vector.broadcast %835 : vector<1x128xf32> to vector<8x128xf32>
    %837 = arith.mulf %836, %807 : vector<8x128xf32>
    %c29_366 = arith.constant 29 : index
    %c0_367 = arith.constant 0 : index
    %838 = vector.load %arg1[%c29_366, %c0_367] : memref<61x128xf32, #tpu.memory_space<vmem>>, vector<1x128xf32>
    %839 = vector.broadcast %838 : vector<1x128xf32> to vector<8x128xf32>
    %840 = arith.mulf %839, %808 : vector<8x128xf32>
    %841 = arith.addf %837, %840 : vector<8x128xf32>
    %842 = arith.addf %834, %841 : vector<8x128xf32>
    %c3_368 = arith.constant 3 : index
    %c0_369 = arith.constant 0 : index
    %843 = vector.load %arg1[%c3_368, %c0_369] : memref<61x128xf32, #tpu.memory_space<vmem>>, vector<1x128xf32>
    %844 = vector.broadcast %843 : vector<1x128xf32> to vector<8x128xf32>
    %845 = arith.mulf %844, %809 : vector<8x128xf32>
    %c30_370 = arith.constant 30 : index
    %c0_371 = arith.constant 0 : index
    %846 = vector.load %arg1[%c30_370, %c0_371] : memref<61x128xf32, #tpu.memory_space<vmem>>, vector<1x128xf32>
    %847 = vector.broadcast %846 : vector<1x128xf32> to vector<8x128xf32>
    %848 = arith.mulf %847, %810 : vector<8x128xf32>
    %849 = arith.addf %845, %848 : vector<8x128xf32>
    %850 = arith.addf %842, %849 : vector<8x128xf32>
    %c4_372 = arith.constant 4 : index
    %c0_373 = arith.constant 0 : index
    %851 = vector.load %arg1[%c4_372, %c0_373] : memref<61x128xf32, #tpu.memory_space<vmem>>, vector<1x128xf32>
    %852 = vector.broadcast %851 : vector<1x128xf32> to vector<8x128xf32>
    %853 = arith.mulf %852, %802 : vector<8x128xf32>
    %c31_374 = arith.constant 31 : index
    %c0_375 = arith.constant 0 : index
    %854 = vector.load %arg1[%c31_374, %c0_375] : memref<61x128xf32, #tpu.memory_space<vmem>>, vector<1x128xf32>
    %855 = vector.broadcast %854 : vector<1x128xf32> to vector<8x128xf32>
    %856 = arith.mulf %855, %811 : vector<8x128xf32>
    %857 = arith.addf %853, %856 : vector<8x128xf32>
    %858 = arith.addf %850, %857 : vector<8x128xf32>
    %c5_376 = arith.constant 5 : index
    %c0_377 = arith.constant 0 : index
    %859 = vector.load %arg1[%c5_376, %c0_377] : memref<61x128xf32, #tpu.memory_space<vmem>>, vector<1x128xf32>
    %860 = vector.broadcast %859 : vector<1x128xf32> to vector<8x128xf32>
    %861 = arith.mulf %860, %812 : vector<8x128xf32>
    %c32_378 = arith.constant 32 : index
    %c0_379 = arith.constant 0 : index
    %862 = vector.load %arg1[%c32_378, %c0_379] : memref<61x128xf32, #tpu.memory_space<vmem>>, vector<1x128xf32>
    %863 = vector.broadcast %862 : vector<1x128xf32> to vector<8x128xf32>
    %864 = arith.mulf %863, %813 : vector<8x128xf32>
    %865 = arith.addf %861, %864 : vector<8x128xf32>
    %866 = arith.addf %858, %865 : vector<8x128xf32>
    %c6_380 = arith.constant 6 : index
    %c0_381 = arith.constant 0 : index
    %867 = vector.load %arg1[%c6_380, %c0_381] : memref<61x128xf32, #tpu.memory_space<vmem>>, vector<1x128xf32>
    %868 = vector.broadcast %867 : vector<1x128xf32> to vector<8x128xf32>
    %869 = arith.mulf %868, %814 : vector<8x128xf32>
    %c33_382 = arith.constant 33 : index
    %c0_383 = arith.constant 0 : index
    %870 = vector.load %arg1[%c33_382, %c0_383] : memref<61x128xf32, #tpu.memory_space<vmem>>, vector<1x128xf32>
    %871 = vector.broadcast %870 : vector<1x128xf32> to vector<8x128xf32>
    %872 = arith.mulf %871, %815 : vector<8x128xf32>
    %873 = arith.addf %869, %872 : vector<8x128xf32>
    %874 = arith.addf %866, %873 : vector<8x128xf32>
    %c7_384 = arith.constant 7 : index
    %c0_385 = arith.constant 0 : index
    %875 = vector.load %arg1[%c7_384, %c0_385] : memref<61x128xf32, #tpu.memory_space<vmem>>, vector<1x128xf32>
    %876 = vector.broadcast %875 : vector<1x128xf32> to vector<8x128xf32>
    %877 = arith.mulf %876, %816 : vector<8x128xf32>
    %c34_386 = arith.constant 34 : index
    %c0_387 = arith.constant 0 : index
    %878 = vector.load %arg1[%c34_386, %c0_387] : memref<61x128xf32, #tpu.memory_space<vmem>>, vector<1x128xf32>
    %879 = vector.broadcast %878 : vector<1x128xf32> to vector<8x128xf32>
    %880 = arith.mulf %879, %817 : vector<8x128xf32>
    %881 = arith.addf %877, %880 : vector<8x128xf32>
    %882 = arith.addf %874, %881 : vector<8x128xf32>
    %c8_388 = arith.constant 8 : index
    %c0_389 = arith.constant 0 : index
    %883 = vector.load %arg1[%c8_388, %c0_389] : memref<61x128xf32, #tpu.memory_space<vmem>>, vector<1x128xf32>
    %884 = vector.broadcast %883 : vector<1x128xf32> to vector<8x128xf32>
    %885 = arith.mulf %884, %818 : vector<8x128xf32>
    %c35_390 = arith.constant 35 : index
    %c0_391 = arith.constant 0 : index
    %886 = vector.load %arg1[%c35_390, %c0_391] : memref<61x128xf32, #tpu.memory_space<vmem>>, vector<1x128xf32>
    %887 = vector.broadcast %886 : vector<1x128xf32> to vector<8x128xf32>
    %888 = arith.mulf %887, %819 : vector<8x128xf32>
    %889 = arith.addf %885, %888 : vector<8x128xf32>
    %890 = arith.addf %882, %889 : vector<8x128xf32>
    %cst_392 = arith.constant 0.000000e+00 : f32
    %891 = vector.broadcast %cst_392 : f32 to vector<1x128xf32>
    %892 = vector.extract_strided_slice %890 {offsets = [0, 0], sizes = [7, 128], strides = [1, 1]} : vector<8x128xf32> to vector<7x128xf32>
    %893 = tpu.concatenate %891, %892 in 0 : vector<1x128xf32>, vector<7x128xf32> -> vector<8x128xf32>
    %c9_393 = arith.constant 9 : index
    %c0_394 = arith.constant 0 : index
    %894 = vector.load %arg1[%c9_393, %c0_394] : memref<61x128xf32, #tpu.memory_space<vmem>>, vector<1x128xf32>
    %895 = vector.broadcast %894 : vector<1x128xf32> to vector<8x128xf32>
    %896 = arith.mulf %895, %803 : vector<8x128xf32>
    %c36_395 = arith.constant 36 : index
    %c0_396 = arith.constant 0 : index
    %897 = vector.load %arg1[%c36_395, %c0_396] : memref<61x128xf32, #tpu.memory_space<vmem>>, vector<1x128xf32>
    %898 = vector.broadcast %897 : vector<1x128xf32> to vector<8x128xf32>
    %899 = arith.mulf %898, %804 : vector<8x128xf32>
    %900 = arith.addf %896, %899 : vector<8x128xf32>
    %c10_397 = arith.constant 10 : index
    %c0_398 = arith.constant 0 : index
    %901 = vector.load %arg1[%c10_397, %c0_398] : memref<61x128xf32, #tpu.memory_space<vmem>>, vector<1x128xf32>
    %902 = vector.broadcast %901 : vector<1x128xf32> to vector<8x128xf32>
    %903 = arith.mulf %902, %805 : vector<8x128xf32>
    %c37_399 = arith.constant 37 : index
    %c0_400 = arith.constant 0 : index
    %904 = vector.load %arg1[%c37_399, %c0_400] : memref<61x128xf32, #tpu.memory_space<vmem>>, vector<1x128xf32>
    %905 = vector.broadcast %904 : vector<1x128xf32> to vector<8x128xf32>
    %906 = arith.mulf %905, %806 : vector<8x128xf32>
    %907 = arith.addf %903, %906 : vector<8x128xf32>
    %908 = arith.addf %900, %907 : vector<8x128xf32>
    %c11_401 = arith.constant 11 : index
    %c0_402 = arith.constant 0 : index
    %909 = vector.load %arg1[%c11_401, %c0_402] : memref<61x128xf32, #tpu.memory_space<vmem>>, vector<1x128xf32>
    %910 = vector.broadcast %909 : vector<1x128xf32> to vector<8x128xf32>
    %911 = arith.mulf %910, %807 : vector<8x128xf32>
    %c38_403 = arith.constant 38 : index
    %c0_404 = arith.constant 0 : index
    %912 = vector.load %arg1[%c38_403, %c0_404] : memref<61x128xf32, #tpu.memory_space<vmem>>, vector<1x128xf32>
    %913 = vector.broadcast %912 : vector<1x128xf32> to vector<8x128xf32>
    %914 = arith.mulf %913, %808 : vector<8x128xf32>
    %915 = arith.addf %911, %914 : vector<8x128xf32>
    %916 = arith.addf %908, %915 : vector<8x128xf32>
    %c12_405 = arith.constant 12 : index
    %c0_406 = arith.constant 0 : index
    %917 = vector.load %arg1[%c12_405, %c0_406] : memref<61x128xf32, #tpu.memory_space<vmem>>, vector<1x128xf32>
    %918 = vector.broadcast %917 : vector<1x128xf32> to vector<8x128xf32>
    %919 = arith.mulf %918, %809 : vector<8x128xf32>
    %c39_407 = arith.constant 39 : index
    %c0_408 = arith.constant 0 : index
    %920 = vector.load %arg1[%c39_407, %c0_408] : memref<61x128xf32, #tpu.memory_space<vmem>>, vector<1x128xf32>
    %921 = vector.broadcast %920 : vector<1x128xf32> to vector<8x128xf32>
    %922 = arith.mulf %921, %810 : vector<8x128xf32>
    %923 = arith.addf %919, %922 : vector<8x128xf32>
    %924 = arith.addf %916, %923 : vector<8x128xf32>
    %c13_409 = arith.constant 13 : index
    %c0_410 = arith.constant 0 : index
    %925 = vector.load %arg1[%c13_409, %c0_410] : memref<61x128xf32, #tpu.memory_space<vmem>>, vector<1x128xf32>
    %926 = vector.broadcast %925 : vector<1x128xf32> to vector<8x128xf32>
    %927 = arith.mulf %926, %802 : vector<8x128xf32>
    %c40_411 = arith.constant 40 : index
    %c0_412 = arith.constant 0 : index
    %928 = vector.load %arg1[%c40_411, %c0_412] : memref<61x128xf32, #tpu.memory_space<vmem>>, vector<1x128xf32>
    %929 = vector.broadcast %928 : vector<1x128xf32> to vector<8x128xf32>
    %930 = arith.mulf %929, %811 : vector<8x128xf32>
    %931 = arith.addf %927, %930 : vector<8x128xf32>
    %932 = arith.addf %924, %931 : vector<8x128xf32>
    %c14_413 = arith.constant 14 : index
    %c0_414 = arith.constant 0 : index
    %933 = vector.load %arg1[%c14_413, %c0_414] : memref<61x128xf32, #tpu.memory_space<vmem>>, vector<1x128xf32>
    %934 = vector.broadcast %933 : vector<1x128xf32> to vector<8x128xf32>
    %935 = arith.mulf %934, %812 : vector<8x128xf32>
    %c41_415 = arith.constant 41 : index
    %c0_416 = arith.constant 0 : index
    %936 = vector.load %arg1[%c41_415, %c0_416] : memref<61x128xf32, #tpu.memory_space<vmem>>, vector<1x128xf32>
    %937 = vector.broadcast %936 : vector<1x128xf32> to vector<8x128xf32>
    %938 = arith.mulf %937, %813 : vector<8x128xf32>
    %939 = arith.addf %935, %938 : vector<8x128xf32>
    %940 = arith.addf %932, %939 : vector<8x128xf32>
    %c15_417 = arith.constant 15 : index
    %c0_418 = arith.constant 0 : index
    %941 = vector.load %arg1[%c15_417, %c0_418] : memref<61x128xf32, #tpu.memory_space<vmem>>, vector<1x128xf32>
    %942 = vector.broadcast %941 : vector<1x128xf32> to vector<8x128xf32>
    %943 = arith.mulf %942, %814 : vector<8x128xf32>
    %c42_419 = arith.constant 42 : index
    %c0_420 = arith.constant 0 : index
    %944 = vector.load %arg1[%c42_419, %c0_420] : memref<61x128xf32, #tpu.memory_space<vmem>>, vector<1x128xf32>
    %945 = vector.broadcast %944 : vector<1x128xf32> to vector<8x128xf32>
    %946 = arith.mulf %945, %815 : vector<8x128xf32>
    %947 = arith.addf %943, %946 : vector<8x128xf32>
    %948 = arith.addf %940, %947 : vector<8x128xf32>
    %c16_421 = arith.constant 16 : index
    %c0_422 = arith.constant 0 : index
    %949 = vector.load %arg1[%c16_421, %c0_422] : memref<61x128xf32, #tpu.memory_space<vmem>>, vector<1x128xf32>
    %950 = vector.broadcast %949 : vector<1x128xf32> to vector<8x128xf32>
    %951 = arith.mulf %950, %816 : vector<8x128xf32>
    %c43_423 = arith.constant 43 : index
    %c0_424 = arith.constant 0 : index
    %952 = vector.load %arg1[%c43_423, %c0_424] : memref<61x128xf32, #tpu.memory_space<vmem>>, vector<1x128xf32>
    %953 = vector.broadcast %952 : vector<1x128xf32> to vector<8x128xf32>
    %954 = arith.mulf %953, %817 : vector<8x128xf32>
    %955 = arith.addf %951, %954 : vector<8x128xf32>
    %956 = arith.addf %948, %955 : vector<8x128xf32>
    %c17_425 = arith.constant 17 : index
    %c0_426 = arith.constant 0 : index
    %957 = vector.load %arg1[%c17_425, %c0_426] : memref<61x128xf32, #tpu.memory_space<vmem>>, vector<1x128xf32>
    %958 = vector.broadcast %957 : vector<1x128xf32> to vector<8x128xf32>
    %959 = arith.mulf %958, %818 : vector<8x128xf32>
    %c44_427 = arith.constant 44 : index
    %c0_428 = arith.constant 0 : index
    %960 = vector.load %arg1[%c44_427, %c0_428] : memref<61x128xf32, #tpu.memory_space<vmem>>, vector<1x128xf32>
    %961 = vector.broadcast %960 : vector<1x128xf32> to vector<8x128xf32>
    %962 = arith.mulf %961, %819 : vector<8x128xf32>
    %963 = arith.addf %959, %962 : vector<8x128xf32>
    %964 = arith.addf %956, %963 : vector<8x128xf32>
    %965 = arith.addf %893, %964 : vector<8x128xf32>
    %c18_429 = arith.constant 18 : index
    %c0_430 = arith.constant 0 : index
    %966 = vector.load %arg1[%c18_429, %c0_430] : memref<61x128xf32, #tpu.memory_space<vmem>>, vector<1x128xf32>
    %967 = vector.broadcast %966 : vector<1x128xf32> to vector<8x128xf32>
    %968 = arith.mulf %967, %803 : vector<8x128xf32>
    %c45_431 = arith.constant 45 : index
    %c0_432 = arith.constant 0 : index
    %969 = vector.load %arg1[%c45_431, %c0_432] : memref<61x128xf32, #tpu.memory_space<vmem>>, vector<1x128xf32>
    %970 = vector.broadcast %969 : vector<1x128xf32> to vector<8x128xf32>
    %971 = arith.mulf %970, %804 : vector<8x128xf32>
    %972 = arith.addf %968, %971 : vector<8x128xf32>
    %c19_433 = arith.constant 19 : index
    %c0_434 = arith.constant 0 : index
    %973 = vector.load %arg1[%c19_433, %c0_434] : memref<61x128xf32, #tpu.memory_space<vmem>>, vector<1x128xf32>
    %974 = vector.broadcast %973 : vector<1x128xf32> to vector<8x128xf32>
    %975 = arith.mulf %974, %805 : vector<8x128xf32>
    %c46_435 = arith.constant 46 : index
    %c0_436 = arith.constant 0 : index
    %976 = vector.load %arg1[%c46_435, %c0_436] : memref<61x128xf32, #tpu.memory_space<vmem>>, vector<1x128xf32>
    %977 = vector.broadcast %976 : vector<1x128xf32> to vector<8x128xf32>
    %978 = arith.mulf %977, %806 : vector<8x128xf32>
    %979 = arith.addf %975, %978 : vector<8x128xf32>
    %980 = arith.addf %972, %979 : vector<8x128xf32>
    %c20_437 = arith.constant 20 : index
    %c0_438 = arith.constant 0 : index
    %981 = vector.load %arg1[%c20_437, %c0_438] : memref<61x128xf32, #tpu.memory_space<vmem>>, vector<1x128xf32>
    %982 = vector.broadcast %981 : vector<1x128xf32> to vector<8x128xf32>
    %983 = arith.mulf %982, %807 : vector<8x128xf32>
    %c47_439 = arith.constant 47 : index
    %c0_440 = arith.constant 0 : index
    %984 = vector.load %arg1[%c47_439, %c0_440] : memref<61x128xf32, #tpu.memory_space<vmem>>, vector<1x128xf32>
    %985 = vector.broadcast %984 : vector<1x128xf32> to vector<8x128xf32>
    %986 = arith.mulf %985, %808 : vector<8x128xf32>
    %987 = arith.addf %983, %986 : vector<8x128xf32>
    %988 = arith.addf %980, %987 : vector<8x128xf32>
    %c21_441 = arith.constant 21 : index
    %c0_442 = arith.constant 0 : index
    %989 = vector.load %arg1[%c21_441, %c0_442] : memref<61x128xf32, #tpu.memory_space<vmem>>, vector<1x128xf32>
    %990 = vector.broadcast %989 : vector<1x128xf32> to vector<8x128xf32>
    %991 = arith.mulf %990, %809 : vector<8x128xf32>
    %c48_443 = arith.constant 48 : index
    %c0_444 = arith.constant 0 : index
    %992 = vector.load %arg1[%c48_443, %c0_444] : memref<61x128xf32, #tpu.memory_space<vmem>>, vector<1x128xf32>
    %993 = vector.broadcast %992 : vector<1x128xf32> to vector<8x128xf32>
    %994 = arith.mulf %993, %810 : vector<8x128xf32>
    %995 = arith.addf %991, %994 : vector<8x128xf32>
    %996 = arith.addf %988, %995 : vector<8x128xf32>
    %c22_445 = arith.constant 22 : index
    %c0_446 = arith.constant 0 : index
    %997 = vector.load %arg1[%c22_445, %c0_446] : memref<61x128xf32, #tpu.memory_space<vmem>>, vector<1x128xf32>
    %998 = vector.broadcast %997 : vector<1x128xf32> to vector<8x128xf32>
    %999 = arith.mulf %998, %802 : vector<8x128xf32>
    %c49_447 = arith.constant 49 : index
    %c0_448 = arith.constant 0 : index
    %1000 = vector.load %arg1[%c49_447, %c0_448] : memref<61x128xf32, #tpu.memory_space<vmem>>, vector<1x128xf32>
    %1001 = vector.broadcast %1000 : vector<1x128xf32> to vector<8x128xf32>
    %1002 = arith.mulf %1001, %811 : vector<8x128xf32>
    %1003 = arith.addf %999, %1002 : vector<8x128xf32>
    %1004 = arith.addf %996, %1003 : vector<8x128xf32>
    %c23_449 = arith.constant 23 : index
    %c0_450 = arith.constant 0 : index
    %1005 = vector.load %arg1[%c23_449, %c0_450] : memref<61x128xf32, #tpu.memory_space<vmem>>, vector<1x128xf32>
    %1006 = vector.broadcast %1005 : vector<1x128xf32> to vector<8x128xf32>
    %1007 = arith.mulf %1006, %812 : vector<8x128xf32>
    %c50_451 = arith.constant 50 : index
    %c0_452 = arith.constant 0 : index
    %1008 = vector.load %arg1[%c50_451, %c0_452] : memref<61x128xf32, #tpu.memory_space<vmem>>, vector<1x128xf32>
    %1009 = vector.broadcast %1008 : vector<1x128xf32> to vector<8x128xf32>
    %1010 = arith.mulf %1009, %813 : vector<8x128xf32>
    %1011 = arith.addf %1007, %1010 : vector<8x128xf32>
    %1012 = arith.addf %1004, %1011 : vector<8x128xf32>
    %c24_453 = arith.constant 24 : index
    %c0_454 = arith.constant 0 : index
    %1013 = vector.load %arg1[%c24_453, %c0_454] : memref<61x128xf32, #tpu.memory_space<vmem>>, vector<1x128xf32>
    %1014 = vector.broadcast %1013 : vector<1x128xf32> to vector<8x128xf32>
    %1015 = arith.mulf %1014, %814 : vector<8x128xf32>
    %c51_455 = arith.constant 51 : index
    %c0_456 = arith.constant 0 : index
    %1016 = vector.load %arg1[%c51_455, %c0_456] : memref<61x128xf32, #tpu.memory_space<vmem>>, vector<1x128xf32>
    %1017 = vector.broadcast %1016 : vector<1x128xf32> to vector<8x128xf32>
    %1018 = arith.mulf %1017, %815 : vector<8x128xf32>
    %1019 = arith.addf %1015, %1018 : vector<8x128xf32>
    %1020 = arith.addf %1012, %1019 : vector<8x128xf32>
    %c25_457 = arith.constant 25 : index
    %c0_458 = arith.constant 0 : index
    %1021 = vector.load %arg1[%c25_457, %c0_458] : memref<61x128xf32, #tpu.memory_space<vmem>>, vector<1x128xf32>
    %1022 = vector.broadcast %1021 : vector<1x128xf32> to vector<8x128xf32>
    %1023 = arith.mulf %1022, %816 : vector<8x128xf32>
    %c52_459 = arith.constant 52 : index
    %c0_460 = arith.constant 0 : index
    %1024 = vector.load %arg1[%c52_459, %c0_460] : memref<61x128xf32, #tpu.memory_space<vmem>>, vector<1x128xf32>
    %1025 = vector.broadcast %1024 : vector<1x128xf32> to vector<8x128xf32>
    %1026 = arith.mulf %1025, %817 : vector<8x128xf32>
    %1027 = arith.addf %1023, %1026 : vector<8x128xf32>
    %1028 = arith.addf %1020, %1027 : vector<8x128xf32>
    %c26_461 = arith.constant 26 : index
    %c0_462 = arith.constant 0 : index
    %1029 = vector.load %arg1[%c26_461, %c0_462] : memref<61x128xf32, #tpu.memory_space<vmem>>, vector<1x128xf32>
    %1030 = vector.broadcast %1029 : vector<1x128xf32> to vector<8x128xf32>
    %1031 = arith.mulf %1030, %818 : vector<8x128xf32>
    %c53_463 = arith.constant 53 : index
    %c0_464 = arith.constant 0 : index
    %1032 = vector.load %arg1[%c53_463, %c0_464] : memref<61x128xf32, #tpu.memory_space<vmem>>, vector<1x128xf32>
    %1033 = vector.broadcast %1032 : vector<1x128xf32> to vector<8x128xf32>
    %1034 = arith.mulf %1033, %819 : vector<8x128xf32>
    %1035 = arith.addf %1031, %1034 : vector<8x128xf32>
    %1036 = arith.addf %1028, %1035 : vector<8x128xf32>
    %cst_465 = arith.constant 0.000000e+00 : f32
    %1037 = vector.broadcast %cst_465 : f32 to vector<1x128xf32>
    %1038 = vector.extract_strided_slice %1036 {offsets = [1, 0], sizes = [7, 128], strides = [1, 1]} : vector<8x128xf32> to vector<7x128xf32>
    %1039 = tpu.concatenate %1038, %1037 in 0 : vector<7x128xf32>, vector<1x128xf32> -> vector<8x128xf32>
    %1040 = arith.addf %965, %1039 : vector<8x128xf32>
    %c54_466 = arith.constant 54 : index
    %c0_467 = arith.constant 0 : index
    %1041 = vector.load %arg1[%c54_466, %c0_467] : memref<61x128xf32, #tpu.memory_space<vmem>>, vector<1x128xf32>
    %1042 = vector.broadcast %1041 : vector<1x128xf32> to vector<8x128xf32>
    %1043 = arith.addf %1040, %1042 : vector<8x128xf32>
    %c64_i32_468 = arith.constant 64 : i32
    %1044 = tpu.dynamic_rotate %1043 by %c64_i32_468 dim 1 : vector<8x128xf32>, i32 -> vector<8x128xf32>
    %1045 = arith.subf %1043, %1044 : vector<8x128xf32>
    %cst_469 = arith.constant 5.000000e-01 : f32
    %1046 = vector.broadcast %cst_469 : f32 to vector<8x128xf32>
    %1047 = arith.mulf %1046, %1045 : vector<8x128xf32>
    %1048 = math.tanh %1047 : vector<8x128xf32>
    %cst_470 = arith.constant 1.000000e+00 : f32
    %1049 = vector.broadcast %cst_470 : f32 to vector<8x128xf32>
    %1050 = arith.addf %1048, %1049 : vector<8x128xf32>
    %cst_471 = arith.constant 5.000000e-01 : f32
    %1051 = vector.broadcast %cst_471 : f32 to vector<8x128xf32>
    %1052 = arith.mulf %1051, %1050 : vector<8x128xf32>
    %c9_i32_472 = arith.constant 9 : i32
    %1053 = tpu.dynamic_rotate %1052 by %c9_i32_472 dim 1 : vector<8x128xf32>, i32 -> vector<8x128xf32>
    %c73_i32_473 = arith.constant 73 : i32
    %1054 = tpu.dynamic_rotate %1052 by %c73_i32_473 dim 1 : vector<8x128xf32>, i32 -> vector<8x128xf32>
    %c8_i32_474 = arith.constant 8 : i32
    %1055 = tpu.dynamic_rotate %1052 by %c8_i32_474 dim 1 : vector<8x128xf32>, i32 -> vector<8x128xf32>
    %c72_i32_475 = arith.constant 72 : i32
    %1056 = tpu.dynamic_rotate %1052 by %c72_i32_475 dim 1 : vector<8x128xf32>, i32 -> vector<8x128xf32>
    %c7_i32_476 = arith.constant 7 : i32
    %1057 = tpu.dynamic_rotate %1052 by %c7_i32_476 dim 1 : vector<8x128xf32>, i32 -> vector<8x128xf32>
    %c71_i32_477 = arith.constant 71 : i32
    %1058 = tpu.dynamic_rotate %1052 by %c71_i32_477 dim 1 : vector<8x128xf32>, i32 -> vector<8x128xf32>
    %c1_i32_478 = arith.constant 1 : i32
    %1059 = tpu.dynamic_rotate %1052 by %c1_i32_478 dim 1 : vector<8x128xf32>, i32 -> vector<8x128xf32>
    %c65_i32_479 = arith.constant 65 : i32
    %1060 = tpu.dynamic_rotate %1052 by %c65_i32_479 dim 1 : vector<8x128xf32>, i32 -> vector<8x128xf32>
    %c64_i32_480 = arith.constant 64 : i32
    %1061 = tpu.dynamic_rotate %1052 by %c64_i32_480 dim 1 : vector<8x128xf32>, i32 -> vector<8x128xf32>
    %c127_i32_481 = arith.constant 127 : i32
    %1062 = tpu.dynamic_rotate %1052 by %c127_i32_481 dim 1 : vector<8x128xf32>, i32 -> vector<8x128xf32>
    %c63_i32_482 = arith.constant 63 : i32
    %1063 = tpu.dynamic_rotate %1052 by %c63_i32_482 dim 1 : vector<8x128xf32>, i32 -> vector<8x128xf32>
    %c121_i32_483 = arith.constant 121 : i32
    %1064 = tpu.dynamic_rotate %1052 by %c121_i32_483 dim 1 : vector<8x128xf32>, i32 -> vector<8x128xf32>
    %c57_i32_484 = arith.constant 57 : i32
    %1065 = tpu.dynamic_rotate %1052 by %c57_i32_484 dim 1 : vector<8x128xf32>, i32 -> vector<8x128xf32>
    %c120_i32_485 = arith.constant 120 : i32
    %1066 = tpu.dynamic_rotate %1052 by %c120_i32_485 dim 1 : vector<8x128xf32>, i32 -> vector<8x128xf32>
    %c56_i32_486 = arith.constant 56 : i32
    %1067 = tpu.dynamic_rotate %1052 by %c56_i32_486 dim 1 : vector<8x128xf32>, i32 -> vector<8x128xf32>
    %c119_i32_487 = arith.constant 119 : i32
    %1068 = tpu.dynamic_rotate %1052 by %c119_i32_487 dim 1 : vector<8x128xf32>, i32 -> vector<8x128xf32>
    %c55_i32_488 = arith.constant 55 : i32
    %1069 = tpu.dynamic_rotate %1052 by %c55_i32_488 dim 1 : vector<8x128xf32>, i32 -> vector<8x128xf32>
    %c0_489 = arith.constant 0 : index
    %c0_490 = arith.constant 0 : index
    %1070 = vector.load %arg1[%c0_489, %c0_490] : memref<61x128xf32, #tpu.memory_space<vmem>>, vector<1x128xf32>
    %1071 = vector.broadcast %1070 : vector<1x128xf32> to vector<8x128xf32>
    %1072 = arith.mulf %1071, %1053 : vector<8x128xf32>
    %c27_491 = arith.constant 27 : index
    %c0_492 = arith.constant 0 : index
    %1073 = vector.load %arg1[%c27_491, %c0_492] : memref<61x128xf32, #tpu.memory_space<vmem>>, vector<1x128xf32>
    %1074 = vector.broadcast %1073 : vector<1x128xf32> to vector<8x128xf32>
    %1075 = arith.mulf %1074, %1054 : vector<8x128xf32>
    %1076 = arith.addf %1072, %1075 : vector<8x128xf32>
    %c1_493 = arith.constant 1 : index
    %c0_494 = arith.constant 0 : index
    %1077 = vector.load %arg1[%c1_493, %c0_494] : memref<61x128xf32, #tpu.memory_space<vmem>>, vector<1x128xf32>
    %1078 = vector.broadcast %1077 : vector<1x128xf32> to vector<8x128xf32>
    %1079 = arith.mulf %1078, %1055 : vector<8x128xf32>
    %c28_495 = arith.constant 28 : index
    %c0_496 = arith.constant 0 : index
    %1080 = vector.load %arg1[%c28_495, %c0_496] : memref<61x128xf32, #tpu.memory_space<vmem>>, vector<1x128xf32>
    %1081 = vector.broadcast %1080 : vector<1x128xf32> to vector<8x128xf32>
    %1082 = arith.mulf %1081, %1056 : vector<8x128xf32>
    %1083 = arith.addf %1079, %1082 : vector<8x128xf32>
    %1084 = arith.addf %1076, %1083 : vector<8x128xf32>
    %c2_497 = arith.constant 2 : index
    %c0_498 = arith.constant 0 : index
    %1085 = vector.load %arg1[%c2_497, %c0_498] : memref<61x128xf32, #tpu.memory_space<vmem>>, vector<1x128xf32>
    %1086 = vector.broadcast %1085 : vector<1x128xf32> to vector<8x128xf32>
    %1087 = arith.mulf %1086, %1057 : vector<8x128xf32>
    %c29_499 = arith.constant 29 : index
    %c0_500 = arith.constant 0 : index
    %1088 = vector.load %arg1[%c29_499, %c0_500] : memref<61x128xf32, #tpu.memory_space<vmem>>, vector<1x128xf32>
    %1089 = vector.broadcast %1088 : vector<1x128xf32> to vector<8x128xf32>
    %1090 = arith.mulf %1089, %1058 : vector<8x128xf32>
    %1091 = arith.addf %1087, %1090 : vector<8x128xf32>
    %1092 = arith.addf %1084, %1091 : vector<8x128xf32>
    %c3_501 = arith.constant 3 : index
    %c0_502 = arith.constant 0 : index
    %1093 = vector.load %arg1[%c3_501, %c0_502] : memref<61x128xf32, #tpu.memory_space<vmem>>, vector<1x128xf32>
    %1094 = vector.broadcast %1093 : vector<1x128xf32> to vector<8x128xf32>
    %1095 = arith.mulf %1094, %1059 : vector<8x128xf32>
    %c30_503 = arith.constant 30 : index
    %c0_504 = arith.constant 0 : index
    %1096 = vector.load %arg1[%c30_503, %c0_504] : memref<61x128xf32, #tpu.memory_space<vmem>>, vector<1x128xf32>
    %1097 = vector.broadcast %1096 : vector<1x128xf32> to vector<8x128xf32>
    %1098 = arith.mulf %1097, %1060 : vector<8x128xf32>
    %1099 = arith.addf %1095, %1098 : vector<8x128xf32>
    %1100 = arith.addf %1092, %1099 : vector<8x128xf32>
    %c4_505 = arith.constant 4 : index
    %c0_506 = arith.constant 0 : index
    %1101 = vector.load %arg1[%c4_505, %c0_506] : memref<61x128xf32, #tpu.memory_space<vmem>>, vector<1x128xf32>
    %1102 = vector.broadcast %1101 : vector<1x128xf32> to vector<8x128xf32>
    %1103 = arith.mulf %1102, %1052 : vector<8x128xf32>
    %c31_507 = arith.constant 31 : index
    %c0_508 = arith.constant 0 : index
    %1104 = vector.load %arg1[%c31_507, %c0_508] : memref<61x128xf32, #tpu.memory_space<vmem>>, vector<1x128xf32>
    %1105 = vector.broadcast %1104 : vector<1x128xf32> to vector<8x128xf32>
    %1106 = arith.mulf %1105, %1061 : vector<8x128xf32>
    %1107 = arith.addf %1103, %1106 : vector<8x128xf32>
    %1108 = arith.addf %1100, %1107 : vector<8x128xf32>
    %c5_509 = arith.constant 5 : index
    %c0_510 = arith.constant 0 : index
    %1109 = vector.load %arg1[%c5_509, %c0_510] : memref<61x128xf32, #tpu.memory_space<vmem>>, vector<1x128xf32>
    %1110 = vector.broadcast %1109 : vector<1x128xf32> to vector<8x128xf32>
    %1111 = arith.mulf %1110, %1062 : vector<8x128xf32>
    %c32_511 = arith.constant 32 : index
    %c0_512 = arith.constant 0 : index
    %1112 = vector.load %arg1[%c32_511, %c0_512] : memref<61x128xf32, #tpu.memory_space<vmem>>, vector<1x128xf32>
    %1113 = vector.broadcast %1112 : vector<1x128xf32> to vector<8x128xf32>
    %1114 = arith.mulf %1113, %1063 : vector<8x128xf32>
    %1115 = arith.addf %1111, %1114 : vector<8x128xf32>
    %1116 = arith.addf %1108, %1115 : vector<8x128xf32>
    %c6_513 = arith.constant 6 : index
    %c0_514 = arith.constant 0 : index
    %1117 = vector.load %arg1[%c6_513, %c0_514] : memref<61x128xf32, #tpu.memory_space<vmem>>, vector<1x128xf32>
    %1118 = vector.broadcast %1117 : vector<1x128xf32> to vector<8x128xf32>
    %1119 = arith.mulf %1118, %1064 : vector<8x128xf32>
    %c33_515 = arith.constant 33 : index
    %c0_516 = arith.constant 0 : index
    %1120 = vector.load %arg1[%c33_515, %c0_516] : memref<61x128xf32, #tpu.memory_space<vmem>>, vector<1x128xf32>
    %1121 = vector.broadcast %1120 : vector<1x128xf32> to vector<8x128xf32>
    %1122 = arith.mulf %1121, %1065 : vector<8x128xf32>
    %1123 = arith.addf %1119, %1122 : vector<8x128xf32>
    %1124 = arith.addf %1116, %1123 : vector<8x128xf32>
    %c7_517 = arith.constant 7 : index
    %c0_518 = arith.constant 0 : index
    %1125 = vector.load %arg1[%c7_517, %c0_518] : memref<61x128xf32, #tpu.memory_space<vmem>>, vector<1x128xf32>
    %1126 = vector.broadcast %1125 : vector<1x128xf32> to vector<8x128xf32>
    %1127 = arith.mulf %1126, %1066 : vector<8x128xf32>
    %c34_519 = arith.constant 34 : index
    %c0_520 = arith.constant 0 : index
    %1128 = vector.load %arg1[%c34_519, %c0_520] : memref<61x128xf32, #tpu.memory_space<vmem>>, vector<1x128xf32>
    %1129 = vector.broadcast %1128 : vector<1x128xf32> to vector<8x128xf32>
    %1130 = arith.mulf %1129, %1067 : vector<8x128xf32>
    %1131 = arith.addf %1127, %1130 : vector<8x128xf32>
    %1132 = arith.addf %1124, %1131 : vector<8x128xf32>
    %c8_521 = arith.constant 8 : index
    %c0_522 = arith.constant 0 : index
    %1133 = vector.load %arg1[%c8_521, %c0_522] : memref<61x128xf32, #tpu.memory_space<vmem>>, vector<1x128xf32>
    %1134 = vector.broadcast %1133 : vector<1x128xf32> to vector<8x128xf32>
    %1135 = arith.mulf %1134, %1068 : vector<8x128xf32>
    %c35_523 = arith.constant 35 : index
    %c0_524 = arith.constant 0 : index
    %1136 = vector.load %arg1[%c35_523, %c0_524] : memref<61x128xf32, #tpu.memory_space<vmem>>, vector<1x128xf32>
    %1137 = vector.broadcast %1136 : vector<1x128xf32> to vector<8x128xf32>
    %1138 = arith.mulf %1137, %1069 : vector<8x128xf32>
    %1139 = arith.addf %1135, %1138 : vector<8x128xf32>
    %1140 = arith.addf %1132, %1139 : vector<8x128xf32>
    %cst_525 = arith.constant 0.000000e+00 : f32
    %1141 = vector.broadcast %cst_525 : f32 to vector<1x128xf32>
    %1142 = vector.extract_strided_slice %1140 {offsets = [0, 0], sizes = [7, 128], strides = [1, 1]} : vector<8x128xf32> to vector<7x128xf32>
    %1143 = tpu.concatenate %1141, %1142 in 0 : vector<1x128xf32>, vector<7x128xf32> -> vector<8x128xf32>
    %c9_526 = arith.constant 9 : index
    %c0_527 = arith.constant 0 : index
    %1144 = vector.load %arg1[%c9_526, %c0_527] : memref<61x128xf32, #tpu.memory_space<vmem>>, vector<1x128xf32>
    %1145 = vector.broadcast %1144 : vector<1x128xf32> to vector<8x128xf32>
    %1146 = arith.mulf %1145, %1053 : vector<8x128xf32>
    %c36_528 = arith.constant 36 : index
    %c0_529 = arith.constant 0 : index
    %1147 = vector.load %arg1[%c36_528, %c0_529] : memref<61x128xf32, #tpu.memory_space<vmem>>, vector<1x128xf32>
    %1148 = vector.broadcast %1147 : vector<1x128xf32> to vector<8x128xf32>
    %1149 = arith.mulf %1148, %1054 : vector<8x128xf32>
    %1150 = arith.addf %1146, %1149 : vector<8x128xf32>
    %c10_530 = arith.constant 10 : index
    %c0_531 = arith.constant 0 : index
    %1151 = vector.load %arg1[%c10_530, %c0_531] : memref<61x128xf32, #tpu.memory_space<vmem>>, vector<1x128xf32>
    %1152 = vector.broadcast %1151 : vector<1x128xf32> to vector<8x128xf32>
    %1153 = arith.mulf %1152, %1055 : vector<8x128xf32>
    %c37_532 = arith.constant 37 : index
    %c0_533 = arith.constant 0 : index
    %1154 = vector.load %arg1[%c37_532, %c0_533] : memref<61x128xf32, #tpu.memory_space<vmem>>, vector<1x128xf32>
    %1155 = vector.broadcast %1154 : vector<1x128xf32> to vector<8x128xf32>
    %1156 = arith.mulf %1155, %1056 : vector<8x128xf32>
    %1157 = arith.addf %1153, %1156 : vector<8x128xf32>
    %1158 = arith.addf %1150, %1157 : vector<8x128xf32>
    %c11_534 = arith.constant 11 : index
    %c0_535 = arith.constant 0 : index
    %1159 = vector.load %arg1[%c11_534, %c0_535] : memref<61x128xf32, #tpu.memory_space<vmem>>, vector<1x128xf32>
    %1160 = vector.broadcast %1159 : vector<1x128xf32> to vector<8x128xf32>
    %1161 = arith.mulf %1160, %1057 : vector<8x128xf32>
    %c38_536 = arith.constant 38 : index
    %c0_537 = arith.constant 0 : index
    %1162 = vector.load %arg1[%c38_536, %c0_537] : memref<61x128xf32, #tpu.memory_space<vmem>>, vector<1x128xf32>
    %1163 = vector.broadcast %1162 : vector<1x128xf32> to vector<8x128xf32>
    %1164 = arith.mulf %1163, %1058 : vector<8x128xf32>
    %1165 = arith.addf %1161, %1164 : vector<8x128xf32>
    %1166 = arith.addf %1158, %1165 : vector<8x128xf32>
    %c12_538 = arith.constant 12 : index
    %c0_539 = arith.constant 0 : index
    %1167 = vector.load %arg1[%c12_538, %c0_539] : memref<61x128xf32, #tpu.memory_space<vmem>>, vector<1x128xf32>
    %1168 = vector.broadcast %1167 : vector<1x128xf32> to vector<8x128xf32>
    %1169 = arith.mulf %1168, %1059 : vector<8x128xf32>
    %c39_540 = arith.constant 39 : index
    %c0_541 = arith.constant 0 : index
    %1170 = vector.load %arg1[%c39_540, %c0_541] : memref<61x128xf32, #tpu.memory_space<vmem>>, vector<1x128xf32>
    %1171 = vector.broadcast %1170 : vector<1x128xf32> to vector<8x128xf32>
    %1172 = arith.mulf %1171, %1060 : vector<8x128xf32>
    %1173 = arith.addf %1169, %1172 : vector<8x128xf32>
    %1174 = arith.addf %1166, %1173 : vector<8x128xf32>
    %c13_542 = arith.constant 13 : index
    %c0_543 = arith.constant 0 : index
    %1175 = vector.load %arg1[%c13_542, %c0_543] : memref<61x128xf32, #tpu.memory_space<vmem>>, vector<1x128xf32>
    %1176 = vector.broadcast %1175 : vector<1x128xf32> to vector<8x128xf32>
    %1177 = arith.mulf %1176, %1052 : vector<8x128xf32>
    %c40_544 = arith.constant 40 : index
    %c0_545 = arith.constant 0 : index
    %1178 = vector.load %arg1[%c40_544, %c0_545] : memref<61x128xf32, #tpu.memory_space<vmem>>, vector<1x128xf32>
    %1179 = vector.broadcast %1178 : vector<1x128xf32> to vector<8x128xf32>
    %1180 = arith.mulf %1179, %1061 : vector<8x128xf32>
    %1181 = arith.addf %1177, %1180 : vector<8x128xf32>
    %1182 = arith.addf %1174, %1181 : vector<8x128xf32>
    %c14_546 = arith.constant 14 : index
    %c0_547 = arith.constant 0 : index
    %1183 = vector.load %arg1[%c14_546, %c0_547] : memref<61x128xf32, #tpu.memory_space<vmem>>, vector<1x128xf32>
    %1184 = vector.broadcast %1183 : vector<1x128xf32> to vector<8x128xf32>
    %1185 = arith.mulf %1184, %1062 : vector<8x128xf32>
    %c41_548 = arith.constant 41 : index
    %c0_549 = arith.constant 0 : index
    %1186 = vector.load %arg1[%c41_548, %c0_549] : memref<61x128xf32, #tpu.memory_space<vmem>>, vector<1x128xf32>
    %1187 = vector.broadcast %1186 : vector<1x128xf32> to vector<8x128xf32>
    %1188 = arith.mulf %1187, %1063 : vector<8x128xf32>
    %1189 = arith.addf %1185, %1188 : vector<8x128xf32>
    %1190 = arith.addf %1182, %1189 : vector<8x128xf32>
    %c15_550 = arith.constant 15 : index
    %c0_551 = arith.constant 0 : index
    %1191 = vector.load %arg1[%c15_550, %c0_551] : memref<61x128xf32, #tpu.memory_space<vmem>>, vector<1x128xf32>
    %1192 = vector.broadcast %1191 : vector<1x128xf32> to vector<8x128xf32>
    %1193 = arith.mulf %1192, %1064 : vector<8x128xf32>
    %c42_552 = arith.constant 42 : index
    %c0_553 = arith.constant 0 : index
    %1194 = vector.load %arg1[%c42_552, %c0_553] : memref<61x128xf32, #tpu.memory_space<vmem>>, vector<1x128xf32>
    %1195 = vector.broadcast %1194 : vector<1x128xf32> to vector<8x128xf32>
    %1196 = arith.mulf %1195, %1065 : vector<8x128xf32>
    %1197 = arith.addf %1193, %1196 : vector<8x128xf32>
    %1198 = arith.addf %1190, %1197 : vector<8x128xf32>
    %c16_554 = arith.constant 16 : index
    %c0_555 = arith.constant 0 : index
    %1199 = vector.load %arg1[%c16_554, %c0_555] : memref<61x128xf32, #tpu.memory_space<vmem>>, vector<1x128xf32>
    %1200 = vector.broadcast %1199 : vector<1x128xf32> to vector<8x128xf32>
    %1201 = arith.mulf %1200, %1066 : vector<8x128xf32>
    %c43_556 = arith.constant 43 : index
    %c0_557 = arith.constant 0 : index
    %1202 = vector.load %arg1[%c43_556, %c0_557] : memref<61x128xf32, #tpu.memory_space<vmem>>, vector<1x128xf32>
    %1203 = vector.broadcast %1202 : vector<1x128xf32> to vector<8x128xf32>
    %1204 = arith.mulf %1203, %1067 : vector<8x128xf32>
    %1205 = arith.addf %1201, %1204 : vector<8x128xf32>
    %1206 = arith.addf %1198, %1205 : vector<8x128xf32>
    %c17_558 = arith.constant 17 : index
    %c0_559 = arith.constant 0 : index
    %1207 = vector.load %arg1[%c17_558, %c0_559] : memref<61x128xf32, #tpu.memory_space<vmem>>, vector<1x128xf32>
    %1208 = vector.broadcast %1207 : vector<1x128xf32> to vector<8x128xf32>
    %1209 = arith.mulf %1208, %1068 : vector<8x128xf32>
    %c44_560 = arith.constant 44 : index
    %c0_561 = arith.constant 0 : index
    %1210 = vector.load %arg1[%c44_560, %c0_561] : memref<61x128xf32, #tpu.memory_space<vmem>>, vector<1x128xf32>
    %1211 = vector.broadcast %1210 : vector<1x128xf32> to vector<8x128xf32>
    %1212 = arith.mulf %1211, %1069 : vector<8x128xf32>
    %1213 = arith.addf %1209, %1212 : vector<8x128xf32>
    %1214 = arith.addf %1206, %1213 : vector<8x128xf32>
    %1215 = arith.addf %1143, %1214 : vector<8x128xf32>
    %c18_562 = arith.constant 18 : index
    %c0_563 = arith.constant 0 : index
    %1216 = vector.load %arg1[%c18_562, %c0_563] : memref<61x128xf32, #tpu.memory_space<vmem>>, vector<1x128xf32>
    %1217 = vector.broadcast %1216 : vector<1x128xf32> to vector<8x128xf32>
    %1218 = arith.mulf %1217, %1053 : vector<8x128xf32>
    %c45_564 = arith.constant 45 : index
    %c0_565 = arith.constant 0 : index
    %1219 = vector.load %arg1[%c45_564, %c0_565] : memref<61x128xf32, #tpu.memory_space<vmem>>, vector<1x128xf32>
    %1220 = vector.broadcast %1219 : vector<1x128xf32> to vector<8x128xf32>
    %1221 = arith.mulf %1220, %1054 : vector<8x128xf32>
    %1222 = arith.addf %1218, %1221 : vector<8x128xf32>
    %c19_566 = arith.constant 19 : index
    %c0_567 = arith.constant 0 : index
    %1223 = vector.load %arg1[%c19_566, %c0_567] : memref<61x128xf32, #tpu.memory_space<vmem>>, vector<1x128xf32>
    %1224 = vector.broadcast %1223 : vector<1x128xf32> to vector<8x128xf32>
    %1225 = arith.mulf %1224, %1055 : vector<8x128xf32>
    %c46_568 = arith.constant 46 : index
    %c0_569 = arith.constant 0 : index
    %1226 = vector.load %arg1[%c46_568, %c0_569] : memref<61x128xf32, #tpu.memory_space<vmem>>, vector<1x128xf32>
    %1227 = vector.broadcast %1226 : vector<1x128xf32> to vector<8x128xf32>
    %1228 = arith.mulf %1227, %1056 : vector<8x128xf32>
    %1229 = arith.addf %1225, %1228 : vector<8x128xf32>
    %1230 = arith.addf %1222, %1229 : vector<8x128xf32>
    %c20_570 = arith.constant 20 : index
    %c0_571 = arith.constant 0 : index
    %1231 = vector.load %arg1[%c20_570, %c0_571] : memref<61x128xf32, #tpu.memory_space<vmem>>, vector<1x128xf32>
    %1232 = vector.broadcast %1231 : vector<1x128xf32> to vector<8x128xf32>
    %1233 = arith.mulf %1232, %1057 : vector<8x128xf32>
    %c47_572 = arith.constant 47 : index
    %c0_573 = arith.constant 0 : index
    %1234 = vector.load %arg1[%c47_572, %c0_573] : memref<61x128xf32, #tpu.memory_space<vmem>>, vector<1x128xf32>
    %1235 = vector.broadcast %1234 : vector<1x128xf32> to vector<8x128xf32>
    %1236 = arith.mulf %1235, %1058 : vector<8x128xf32>
    %1237 = arith.addf %1233, %1236 : vector<8x128xf32>
    %1238 = arith.addf %1230, %1237 : vector<8x128xf32>
    %c21_574 = arith.constant 21 : index
    %c0_575 = arith.constant 0 : index
    %1239 = vector.load %arg1[%c21_574, %c0_575] : memref<61x128xf32, #tpu.memory_space<vmem>>, vector<1x128xf32>
    %1240 = vector.broadcast %1239 : vector<1x128xf32> to vector<8x128xf32>
    %1241 = arith.mulf %1240, %1059 : vector<8x128xf32>
    %c48_576 = arith.constant 48 : index
    %c0_577 = arith.constant 0 : index
    %1242 = vector.load %arg1[%c48_576, %c0_577] : memref<61x128xf32, #tpu.memory_space<vmem>>, vector<1x128xf32>
    %1243 = vector.broadcast %1242 : vector<1x128xf32> to vector<8x128xf32>
    %1244 = arith.mulf %1243, %1060 : vector<8x128xf32>
    %1245 = arith.addf %1241, %1244 : vector<8x128xf32>
    %1246 = arith.addf %1238, %1245 : vector<8x128xf32>
    %c22_578 = arith.constant 22 : index
    %c0_579 = arith.constant 0 : index
    %1247 = vector.load %arg1[%c22_578, %c0_579] : memref<61x128xf32, #tpu.memory_space<vmem>>, vector<1x128xf32>
    %1248 = vector.broadcast %1247 : vector<1x128xf32> to vector<8x128xf32>
    %1249 = arith.mulf %1248, %1052 : vector<8x128xf32>
    %c49_580 = arith.constant 49 : index
    %c0_581 = arith.constant 0 : index
    %1250 = vector.load %arg1[%c49_580, %c0_581] : memref<61x128xf32, #tpu.memory_space<vmem>>, vector<1x128xf32>
    %1251 = vector.broadcast %1250 : vector<1x128xf32> to vector<8x128xf32>
    %1252 = arith.mulf %1251, %1061 : vector<8x128xf32>
    %1253 = arith.addf %1249, %1252 : vector<8x128xf32>
    %1254 = arith.addf %1246, %1253 : vector<8x128xf32>
    %c23_582 = arith.constant 23 : index
    %c0_583 = arith.constant 0 : index
    %1255 = vector.load %arg1[%c23_582, %c0_583] : memref<61x128xf32, #tpu.memory_space<vmem>>, vector<1x128xf32>
    %1256 = vector.broadcast %1255 : vector<1x128xf32> to vector<8x128xf32>
    %1257 = arith.mulf %1256, %1062 : vector<8x128xf32>
    %c50_584 = arith.constant 50 : index
    %c0_585 = arith.constant 0 : index
    %1258 = vector.load %arg1[%c50_584, %c0_585] : memref<61x128xf32, #tpu.memory_space<vmem>>, vector<1x128xf32>
    %1259 = vector.broadcast %1258 : vector<1x128xf32> to vector<8x128xf32>
    %1260 = arith.mulf %1259, %1063 : vector<8x128xf32>
    %1261 = arith.addf %1257, %1260 : vector<8x128xf32>
    %1262 = arith.addf %1254, %1261 : vector<8x128xf32>
    %c24_586 = arith.constant 24 : index
    %c0_587 = arith.constant 0 : index
    %1263 = vector.load %arg1[%c24_586, %c0_587] : memref<61x128xf32, #tpu.memory_space<vmem>>, vector<1x128xf32>
    %1264 = vector.broadcast %1263 : vector<1x128xf32> to vector<8x128xf32>
    %1265 = arith.mulf %1264, %1064 : vector<8x128xf32>
    %c51_588 = arith.constant 51 : index
    %c0_589 = arith.constant 0 : index
    %1266 = vector.load %arg1[%c51_588, %c0_589] : memref<61x128xf32, #tpu.memory_space<vmem>>, vector<1x128xf32>
    %1267 = vector.broadcast %1266 : vector<1x128xf32> to vector<8x128xf32>
    %1268 = arith.mulf %1267, %1065 : vector<8x128xf32>
    %1269 = arith.addf %1265, %1268 : vector<8x128xf32>
    %1270 = arith.addf %1262, %1269 : vector<8x128xf32>
    %c25_590 = arith.constant 25 : index
    %c0_591 = arith.constant 0 : index
    %1271 = vector.load %arg1[%c25_590, %c0_591] : memref<61x128xf32, #tpu.memory_space<vmem>>, vector<1x128xf32>
    %1272 = vector.broadcast %1271 : vector<1x128xf32> to vector<8x128xf32>
    %1273 = arith.mulf %1272, %1066 : vector<8x128xf32>
    %c52_592 = arith.constant 52 : index
    %c0_593 = arith.constant 0 : index
    %1274 = vector.load %arg1[%c52_592, %c0_593] : memref<61x128xf32, #tpu.memory_space<vmem>>, vector<1x128xf32>
    %1275 = vector.broadcast %1274 : vector<1x128xf32> to vector<8x128xf32>
    %1276 = arith.mulf %1275, %1067 : vector<8x128xf32>
    %1277 = arith.addf %1273, %1276 : vector<8x128xf32>
    %1278 = arith.addf %1270, %1277 : vector<8x128xf32>
    %c26_594 = arith.constant 26 : index
    %c0_595 = arith.constant 0 : index
    %1279 = vector.load %arg1[%c26_594, %c0_595] : memref<61x128xf32, #tpu.memory_space<vmem>>, vector<1x128xf32>
    %1280 = vector.broadcast %1279 : vector<1x128xf32> to vector<8x128xf32>
    %1281 = arith.mulf %1280, %1068 : vector<8x128xf32>
    %c53_596 = arith.constant 53 : index
    %c0_597 = arith.constant 0 : index
    %1282 = vector.load %arg1[%c53_596, %c0_597] : memref<61x128xf32, #tpu.memory_space<vmem>>, vector<1x128xf32>
    %1283 = vector.broadcast %1282 : vector<1x128xf32> to vector<8x128xf32>
    %1284 = arith.mulf %1283, %1069 : vector<8x128xf32>
    %1285 = arith.addf %1281, %1284 : vector<8x128xf32>
    %1286 = arith.addf %1278, %1285 : vector<8x128xf32>
    %cst_598 = arith.constant 0.000000e+00 : f32
    %1287 = vector.broadcast %cst_598 : f32 to vector<1x128xf32>
    %1288 = vector.extract_strided_slice %1286 {offsets = [1, 0], sizes = [7, 128], strides = [1, 1]} : vector<8x128xf32> to vector<7x128xf32>
    %1289 = tpu.concatenate %1288, %1287 in 0 : vector<7x128xf32>, vector<1x128xf32> -> vector<8x128xf32>
    %1290 = arith.addf %1215, %1289 : vector<8x128xf32>
    %c54_599 = arith.constant 54 : index
    %c0_600 = arith.constant 0 : index
    %1291 = vector.load %arg1[%c54_599, %c0_600] : memref<61x128xf32, #tpu.memory_space<vmem>>, vector<1x128xf32>
    %1292 = vector.broadcast %1291 : vector<1x128xf32> to vector<8x128xf32>
    %1293 = arith.addf %1290, %1292 : vector<8x128xf32>
    %1294 = arith.addf %310, %1293 : vector<8x128xf32>
    %1295 = math.tanh %1294 : vector<8x128xf32>
    %1296 = arith.subf %310, %69 : vector<8x128xf32>
    %1297 = arith.mulf %1295, %1296 : vector<8x128xf32>
    %1298 = arith.addf %69, %1297 : vector<8x128xf32>
    %c9_i32_601 = arith.constant 9 : i32
    %1299 = tpu.dynamic_rotate %1298 by %c9_i32_601 dim 1 : vector<8x128xf32>, i32 -> vector<8x128xf32>
    %c73_i32_602 = arith.constant 73 : i32
    %1300 = tpu.dynamic_rotate %1298 by %c73_i32_602 dim 1 : vector<8x128xf32>, i32 -> vector<8x128xf32>
    %c8_i32_603 = arith.constant 8 : i32
    %1301 = tpu.dynamic_rotate %1298 by %c8_i32_603 dim 1 : vector<8x128xf32>, i32 -> vector<8x128xf32>
    %c72_i32_604 = arith.constant 72 : i32
    %1302 = tpu.dynamic_rotate %1298 by %c72_i32_604 dim 1 : vector<8x128xf32>, i32 -> vector<8x128xf32>
    %c7_i32_605 = arith.constant 7 : i32
    %1303 = tpu.dynamic_rotate %1298 by %c7_i32_605 dim 1 : vector<8x128xf32>, i32 -> vector<8x128xf32>
    %c71_i32_606 = arith.constant 71 : i32
    %1304 = tpu.dynamic_rotate %1298 by %c71_i32_606 dim 1 : vector<8x128xf32>, i32 -> vector<8x128xf32>
    %c1_i32_607 = arith.constant 1 : i32
    %1305 = tpu.dynamic_rotate %1298 by %c1_i32_607 dim 1 : vector<8x128xf32>, i32 -> vector<8x128xf32>
    %c65_i32_608 = arith.constant 65 : i32
    %1306 = tpu.dynamic_rotate %1298 by %c65_i32_608 dim 1 : vector<8x128xf32>, i32 -> vector<8x128xf32>
    %c64_i32_609 = arith.constant 64 : i32
    %1307 = tpu.dynamic_rotate %1298 by %c64_i32_609 dim 1 : vector<8x128xf32>, i32 -> vector<8x128xf32>
    %c127_i32_610 = arith.constant 127 : i32
    %1308 = tpu.dynamic_rotate %1298 by %c127_i32_610 dim 1 : vector<8x128xf32>, i32 -> vector<8x128xf32>
    %c63_i32_611 = arith.constant 63 : i32
    %1309 = tpu.dynamic_rotate %1298 by %c63_i32_611 dim 1 : vector<8x128xf32>, i32 -> vector<8x128xf32>
    %c121_i32_612 = arith.constant 121 : i32
    %1310 = tpu.dynamic_rotate %1298 by %c121_i32_612 dim 1 : vector<8x128xf32>, i32 -> vector<8x128xf32>
    %c57_i32_613 = arith.constant 57 : i32
    %1311 = tpu.dynamic_rotate %1298 by %c57_i32_613 dim 1 : vector<8x128xf32>, i32 -> vector<8x128xf32>
    %c120_i32_614 = arith.constant 120 : i32
    %1312 = tpu.dynamic_rotate %1298 by %c120_i32_614 dim 1 : vector<8x128xf32>, i32 -> vector<8x128xf32>
    %c56_i32_615 = arith.constant 56 : i32
    %1313 = tpu.dynamic_rotate %1298 by %c56_i32_615 dim 1 : vector<8x128xf32>, i32 -> vector<8x128xf32>
    %c119_i32_616 = arith.constant 119 : i32
    %1314 = tpu.dynamic_rotate %1298 by %c119_i32_616 dim 1 : vector<8x128xf32>, i32 -> vector<8x128xf32>
    %c55_i32_617 = arith.constant 55 : i32
    %1315 = tpu.dynamic_rotate %1298 by %c55_i32_617 dim 1 : vector<8x128xf32>, i32 -> vector<8x128xf32>
    %c0_618 = arith.constant 0 : index
    %c0_619 = arith.constant 0 : index
    %1316 = vector.load %arg1[%c0_618, %c0_619] : memref<61x128xf32, #tpu.memory_space<vmem>>, vector<1x128xf32>
    %1317 = vector.broadcast %1316 : vector<1x128xf32> to vector<8x128xf32>
    %1318 = arith.mulf %1317, %1299 : vector<8x128xf32>
    %c27_620 = arith.constant 27 : index
    %c0_621 = arith.constant 0 : index
    %1319 = vector.load %arg1[%c27_620, %c0_621] : memref<61x128xf32, #tpu.memory_space<vmem>>, vector<1x128xf32>
    %1320 = vector.broadcast %1319 : vector<1x128xf32> to vector<8x128xf32>
    %1321 = arith.mulf %1320, %1300 : vector<8x128xf32>
    %1322 = arith.addf %1318, %1321 : vector<8x128xf32>
    %c1_622 = arith.constant 1 : index
    %c0_623 = arith.constant 0 : index
    %1323 = vector.load %arg1[%c1_622, %c0_623] : memref<61x128xf32, #tpu.memory_space<vmem>>, vector<1x128xf32>
    %1324 = vector.broadcast %1323 : vector<1x128xf32> to vector<8x128xf32>
    %1325 = arith.mulf %1324, %1301 : vector<8x128xf32>
    %c28_624 = arith.constant 28 : index
    %c0_625 = arith.constant 0 : index
    %1326 = vector.load %arg1[%c28_624, %c0_625] : memref<61x128xf32, #tpu.memory_space<vmem>>, vector<1x128xf32>
    %1327 = vector.broadcast %1326 : vector<1x128xf32> to vector<8x128xf32>
    %1328 = arith.mulf %1327, %1302 : vector<8x128xf32>
    %1329 = arith.addf %1325, %1328 : vector<8x128xf32>
    %1330 = arith.addf %1322, %1329 : vector<8x128xf32>
    %c2_626 = arith.constant 2 : index
    %c0_627 = arith.constant 0 : index
    %1331 = vector.load %arg1[%c2_626, %c0_627] : memref<61x128xf32, #tpu.memory_space<vmem>>, vector<1x128xf32>
    %1332 = vector.broadcast %1331 : vector<1x128xf32> to vector<8x128xf32>
    %1333 = arith.mulf %1332, %1303 : vector<8x128xf32>
    %c29_628 = arith.constant 29 : index
    %c0_629 = arith.constant 0 : index
    %1334 = vector.load %arg1[%c29_628, %c0_629] : memref<61x128xf32, #tpu.memory_space<vmem>>, vector<1x128xf32>
    %1335 = vector.broadcast %1334 : vector<1x128xf32> to vector<8x128xf32>
    %1336 = arith.mulf %1335, %1304 : vector<8x128xf32>
    %1337 = arith.addf %1333, %1336 : vector<8x128xf32>
    %1338 = arith.addf %1330, %1337 : vector<8x128xf32>
    %c3_630 = arith.constant 3 : index
    %c0_631 = arith.constant 0 : index
    %1339 = vector.load %arg1[%c3_630, %c0_631] : memref<61x128xf32, #tpu.memory_space<vmem>>, vector<1x128xf32>
    %1340 = vector.broadcast %1339 : vector<1x128xf32> to vector<8x128xf32>
    %1341 = arith.mulf %1340, %1305 : vector<8x128xf32>
    %c30_632 = arith.constant 30 : index
    %c0_633 = arith.constant 0 : index
    %1342 = vector.load %arg1[%c30_632, %c0_633] : memref<61x128xf32, #tpu.memory_space<vmem>>, vector<1x128xf32>
    %1343 = vector.broadcast %1342 : vector<1x128xf32> to vector<8x128xf32>
    %1344 = arith.mulf %1343, %1306 : vector<8x128xf32>
    %1345 = arith.addf %1341, %1344 : vector<8x128xf32>
    %1346 = arith.addf %1338, %1345 : vector<8x128xf32>
    %c4_634 = arith.constant 4 : index
    %c0_635 = arith.constant 0 : index
    %1347 = vector.load %arg1[%c4_634, %c0_635] : memref<61x128xf32, #tpu.memory_space<vmem>>, vector<1x128xf32>
    %1348 = vector.broadcast %1347 : vector<1x128xf32> to vector<8x128xf32>
    %1349 = arith.mulf %1348, %1298 : vector<8x128xf32>
    %c31_636 = arith.constant 31 : index
    %c0_637 = arith.constant 0 : index
    %1350 = vector.load %arg1[%c31_636, %c0_637] : memref<61x128xf32, #tpu.memory_space<vmem>>, vector<1x128xf32>
    %1351 = vector.broadcast %1350 : vector<1x128xf32> to vector<8x128xf32>
    %1352 = arith.mulf %1351, %1307 : vector<8x128xf32>
    %1353 = arith.addf %1349, %1352 : vector<8x128xf32>
    %1354 = arith.addf %1346, %1353 : vector<8x128xf32>
    %c5_638 = arith.constant 5 : index
    %c0_639 = arith.constant 0 : index
    %1355 = vector.load %arg1[%c5_638, %c0_639] : memref<61x128xf32, #tpu.memory_space<vmem>>, vector<1x128xf32>
    %1356 = vector.broadcast %1355 : vector<1x128xf32> to vector<8x128xf32>
    %1357 = arith.mulf %1356, %1308 : vector<8x128xf32>
    %c32_640 = arith.constant 32 : index
    %c0_641 = arith.constant 0 : index
    %1358 = vector.load %arg1[%c32_640, %c0_641] : memref<61x128xf32, #tpu.memory_space<vmem>>, vector<1x128xf32>
    %1359 = vector.broadcast %1358 : vector<1x128xf32> to vector<8x128xf32>
    %1360 = arith.mulf %1359, %1309 : vector<8x128xf32>
    %1361 = arith.addf %1357, %1360 : vector<8x128xf32>
    %1362 = arith.addf %1354, %1361 : vector<8x128xf32>
    %c6_642 = arith.constant 6 : index
    %c0_643 = arith.constant 0 : index
    %1363 = vector.load %arg1[%c6_642, %c0_643] : memref<61x128xf32, #tpu.memory_space<vmem>>, vector<1x128xf32>
    %1364 = vector.broadcast %1363 : vector<1x128xf32> to vector<8x128xf32>
    %1365 = arith.mulf %1364, %1310 : vector<8x128xf32>
    %c33_644 = arith.constant 33 : index
    %c0_645 = arith.constant 0 : index
    %1366 = vector.load %arg1[%c33_644, %c0_645] : memref<61x128xf32, #tpu.memory_space<vmem>>, vector<1x128xf32>
    %1367 = vector.broadcast %1366 : vector<1x128xf32> to vector<8x128xf32>
    %1368 = arith.mulf %1367, %1311 : vector<8x128xf32>
    %1369 = arith.addf %1365, %1368 : vector<8x128xf32>
    %1370 = arith.addf %1362, %1369 : vector<8x128xf32>
    %c7_646 = arith.constant 7 : index
    %c0_647 = arith.constant 0 : index
    %1371 = vector.load %arg1[%c7_646, %c0_647] : memref<61x128xf32, #tpu.memory_space<vmem>>, vector<1x128xf32>
    %1372 = vector.broadcast %1371 : vector<1x128xf32> to vector<8x128xf32>
    %1373 = arith.mulf %1372, %1312 : vector<8x128xf32>
    %c34_648 = arith.constant 34 : index
    %c0_649 = arith.constant 0 : index
    %1374 = vector.load %arg1[%c34_648, %c0_649] : memref<61x128xf32, #tpu.memory_space<vmem>>, vector<1x128xf32>
    %1375 = vector.broadcast %1374 : vector<1x128xf32> to vector<8x128xf32>
    %1376 = arith.mulf %1375, %1313 : vector<8x128xf32>
    %1377 = arith.addf %1373, %1376 : vector<8x128xf32>
    %1378 = arith.addf %1370, %1377 : vector<8x128xf32>
    %c8_650 = arith.constant 8 : index
    %c0_651 = arith.constant 0 : index
    %1379 = vector.load %arg1[%c8_650, %c0_651] : memref<61x128xf32, #tpu.memory_space<vmem>>, vector<1x128xf32>
    %1380 = vector.broadcast %1379 : vector<1x128xf32> to vector<8x128xf32>
    %1381 = arith.mulf %1380, %1314 : vector<8x128xf32>
    %c35_652 = arith.constant 35 : index
    %c0_653 = arith.constant 0 : index
    %1382 = vector.load %arg1[%c35_652, %c0_653] : memref<61x128xf32, #tpu.memory_space<vmem>>, vector<1x128xf32>
    %1383 = vector.broadcast %1382 : vector<1x128xf32> to vector<8x128xf32>
    %1384 = arith.mulf %1383, %1315 : vector<8x128xf32>
    %1385 = arith.addf %1381, %1384 : vector<8x128xf32>
    %1386 = arith.addf %1378, %1385 : vector<8x128xf32>
    %cst_654 = arith.constant 0.000000e+00 : f32
    %1387 = vector.broadcast %cst_654 : f32 to vector<1x128xf32>
    %1388 = vector.extract_strided_slice %1386 {offsets = [0, 0], sizes = [7, 128], strides = [1, 1]} : vector<8x128xf32> to vector<7x128xf32>
    %1389 = tpu.concatenate %1387, %1388 in 0 : vector<1x128xf32>, vector<7x128xf32> -> vector<8x128xf32>
    %c9_655 = arith.constant 9 : index
    %c0_656 = arith.constant 0 : index
    %1390 = vector.load %arg1[%c9_655, %c0_656] : memref<61x128xf32, #tpu.memory_space<vmem>>, vector<1x128xf32>
    %1391 = vector.broadcast %1390 : vector<1x128xf32> to vector<8x128xf32>
    %1392 = arith.mulf %1391, %1299 : vector<8x128xf32>
    %c36_657 = arith.constant 36 : index
    %c0_658 = arith.constant 0 : index
    %1393 = vector.load %arg1[%c36_657, %c0_658] : memref<61x128xf32, #tpu.memory_space<vmem>>, vector<1x128xf32>
    %1394 = vector.broadcast %1393 : vector<1x128xf32> to vector<8x128xf32>
    %1395 = arith.mulf %1394, %1300 : vector<8x128xf32>
    %1396 = arith.addf %1392, %1395 : vector<8x128xf32>
    %c10_659 = arith.constant 10 : index
    %c0_660 = arith.constant 0 : index
    %1397 = vector.load %arg1[%c10_659, %c0_660] : memref<61x128xf32, #tpu.memory_space<vmem>>, vector<1x128xf32>
    %1398 = vector.broadcast %1397 : vector<1x128xf32> to vector<8x128xf32>
    %1399 = arith.mulf %1398, %1301 : vector<8x128xf32>
    %c37_661 = arith.constant 37 : index
    %c0_662 = arith.constant 0 : index
    %1400 = vector.load %arg1[%c37_661, %c0_662] : memref<61x128xf32, #tpu.memory_space<vmem>>, vector<1x128xf32>
    %1401 = vector.broadcast %1400 : vector<1x128xf32> to vector<8x128xf32>
    %1402 = arith.mulf %1401, %1302 : vector<8x128xf32>
    %1403 = arith.addf %1399, %1402 : vector<8x128xf32>
    %1404 = arith.addf %1396, %1403 : vector<8x128xf32>
    %c11_663 = arith.constant 11 : index
    %c0_664 = arith.constant 0 : index
    %1405 = vector.load %arg1[%c11_663, %c0_664] : memref<61x128xf32, #tpu.memory_space<vmem>>, vector<1x128xf32>
    %1406 = vector.broadcast %1405 : vector<1x128xf32> to vector<8x128xf32>
    %1407 = arith.mulf %1406, %1303 : vector<8x128xf32>
    %c38_665 = arith.constant 38 : index
    %c0_666 = arith.constant 0 : index
    %1408 = vector.load %arg1[%c38_665, %c0_666] : memref<61x128xf32, #tpu.memory_space<vmem>>, vector<1x128xf32>
    %1409 = vector.broadcast %1408 : vector<1x128xf32> to vector<8x128xf32>
    %1410 = arith.mulf %1409, %1304 : vector<8x128xf32>
    %1411 = arith.addf %1407, %1410 : vector<8x128xf32>
    %1412 = arith.addf %1404, %1411 : vector<8x128xf32>
    %c12_667 = arith.constant 12 : index
    %c0_668 = arith.constant 0 : index
    %1413 = vector.load %arg1[%c12_667, %c0_668] : memref<61x128xf32, #tpu.memory_space<vmem>>, vector<1x128xf32>
    %1414 = vector.broadcast %1413 : vector<1x128xf32> to vector<8x128xf32>
    %1415 = arith.mulf %1414, %1305 : vector<8x128xf32>
    %c39_669 = arith.constant 39 : index
    %c0_670 = arith.constant 0 : index
    %1416 = vector.load %arg1[%c39_669, %c0_670] : memref<61x128xf32, #tpu.memory_space<vmem>>, vector<1x128xf32>
    %1417 = vector.broadcast %1416 : vector<1x128xf32> to vector<8x128xf32>
    %1418 = arith.mulf %1417, %1306 : vector<8x128xf32>
    %1419 = arith.addf %1415, %1418 : vector<8x128xf32>
    %1420 = arith.addf %1412, %1419 : vector<8x128xf32>
    %c13_671 = arith.constant 13 : index
    %c0_672 = arith.constant 0 : index
    %1421 = vector.load %arg1[%c13_671, %c0_672] : memref<61x128xf32, #tpu.memory_space<vmem>>, vector<1x128xf32>
    %1422 = vector.broadcast %1421 : vector<1x128xf32> to vector<8x128xf32>
    %1423 = arith.mulf %1422, %1298 : vector<8x128xf32>
    %c40_673 = arith.constant 40 : index
    %c0_674 = arith.constant 0 : index
    %1424 = vector.load %arg1[%c40_673, %c0_674] : memref<61x128xf32, #tpu.memory_space<vmem>>, vector<1x128xf32>
    %1425 = vector.broadcast %1424 : vector<1x128xf32> to vector<8x128xf32>
    %1426 = arith.mulf %1425, %1307 : vector<8x128xf32>
    %1427 = arith.addf %1423, %1426 : vector<8x128xf32>
    %1428 = arith.addf %1420, %1427 : vector<8x128xf32>
    %c14_675 = arith.constant 14 : index
    %c0_676 = arith.constant 0 : index
    %1429 = vector.load %arg1[%c14_675, %c0_676] : memref<61x128xf32, #tpu.memory_space<vmem>>, vector<1x128xf32>
    %1430 = vector.broadcast %1429 : vector<1x128xf32> to vector<8x128xf32>
    %1431 = arith.mulf %1430, %1308 : vector<8x128xf32>
    %c41_677 = arith.constant 41 : index
    %c0_678 = arith.constant 0 : index
    %1432 = vector.load %arg1[%c41_677, %c0_678] : memref<61x128xf32, #tpu.memory_space<vmem>>, vector<1x128xf32>
    %1433 = vector.broadcast %1432 : vector<1x128xf32> to vector<8x128xf32>
    %1434 = arith.mulf %1433, %1309 : vector<8x128xf32>
    %1435 = arith.addf %1431, %1434 : vector<8x128xf32>
    %1436 = arith.addf %1428, %1435 : vector<8x128xf32>
    %c15_679 = arith.constant 15 : index
    %c0_680 = arith.constant 0 : index
    %1437 = vector.load %arg1[%c15_679, %c0_680] : memref<61x128xf32, #tpu.memory_space<vmem>>, vector<1x128xf32>
    %1438 = vector.broadcast %1437 : vector<1x128xf32> to vector<8x128xf32>
    %1439 = arith.mulf %1438, %1310 : vector<8x128xf32>
    %c42_681 = arith.constant 42 : index
    %c0_682 = arith.constant 0 : index
    %1440 = vector.load %arg1[%c42_681, %c0_682] : memref<61x128xf32, #tpu.memory_space<vmem>>, vector<1x128xf32>
    %1441 = vector.broadcast %1440 : vector<1x128xf32> to vector<8x128xf32>
    %1442 = arith.mulf %1441, %1311 : vector<8x128xf32>
    %1443 = arith.addf %1439, %1442 : vector<8x128xf32>
    %1444 = arith.addf %1436, %1443 : vector<8x128xf32>
    %c16_683 = arith.constant 16 : index
    %c0_684 = arith.constant 0 : index
    %1445 = vector.load %arg1[%c16_683, %c0_684] : memref<61x128xf32, #tpu.memory_space<vmem>>, vector<1x128xf32>
    %1446 = vector.broadcast %1445 : vector<1x128xf32> to vector<8x128xf32>
    %1447 = arith.mulf %1446, %1312 : vector<8x128xf32>
    %c43_685 = arith.constant 43 : index
    %c0_686 = arith.constant 0 : index
    %1448 = vector.load %arg1[%c43_685, %c0_686] : memref<61x128xf32, #tpu.memory_space<vmem>>, vector<1x128xf32>
    %1449 = vector.broadcast %1448 : vector<1x128xf32> to vector<8x128xf32>
    %1450 = arith.mulf %1449, %1313 : vector<8x128xf32>
    %1451 = arith.addf %1447, %1450 : vector<8x128xf32>
    %1452 = arith.addf %1444, %1451 : vector<8x128xf32>
    %c17_687 = arith.constant 17 : index
    %c0_688 = arith.constant 0 : index
    %1453 = vector.load %arg1[%c17_687, %c0_688] : memref<61x128xf32, #tpu.memory_space<vmem>>, vector<1x128xf32>
    %1454 = vector.broadcast %1453 : vector<1x128xf32> to vector<8x128xf32>
    %1455 = arith.mulf %1454, %1314 : vector<8x128xf32>
    %c44_689 = arith.constant 44 : index
    %c0_690 = arith.constant 0 : index
    %1456 = vector.load %arg1[%c44_689, %c0_690] : memref<61x128xf32, #tpu.memory_space<vmem>>, vector<1x128xf32>
    %1457 = vector.broadcast %1456 : vector<1x128xf32> to vector<8x128xf32>
    %1458 = arith.mulf %1457, %1315 : vector<8x128xf32>
    %1459 = arith.addf %1455, %1458 : vector<8x128xf32>
    %1460 = arith.addf %1452, %1459 : vector<8x128xf32>
    %1461 = arith.addf %1389, %1460 : vector<8x128xf32>
    %c18_691 = arith.constant 18 : index
    %c0_692 = arith.constant 0 : index
    %1462 = vector.load %arg1[%c18_691, %c0_692] : memref<61x128xf32, #tpu.memory_space<vmem>>, vector<1x128xf32>
    %1463 = vector.broadcast %1462 : vector<1x128xf32> to vector<8x128xf32>
    %1464 = arith.mulf %1463, %1299 : vector<8x128xf32>
    %c45_693 = arith.constant 45 : index
    %c0_694 = arith.constant 0 : index
    %1465 = vector.load %arg1[%c45_693, %c0_694] : memref<61x128xf32, #tpu.memory_space<vmem>>, vector<1x128xf32>
    %1466 = vector.broadcast %1465 : vector<1x128xf32> to vector<8x128xf32>
    %1467 = arith.mulf %1466, %1300 : vector<8x128xf32>
    %1468 = arith.addf %1464, %1467 : vector<8x128xf32>
    %c19_695 = arith.constant 19 : index
    %c0_696 = arith.constant 0 : index
    %1469 = vector.load %arg1[%c19_695, %c0_696] : memref<61x128xf32, #tpu.memory_space<vmem>>, vector<1x128xf32>
    %1470 = vector.broadcast %1469 : vector<1x128xf32> to vector<8x128xf32>
    %1471 = arith.mulf %1470, %1301 : vector<8x128xf32>
    %c46_697 = arith.constant 46 : index
    %c0_698 = arith.constant 0 : index
    %1472 = vector.load %arg1[%c46_697, %c0_698] : memref<61x128xf32, #tpu.memory_space<vmem>>, vector<1x128xf32>
    %1473 = vector.broadcast %1472 : vector<1x128xf32> to vector<8x128xf32>
    %1474 = arith.mulf %1473, %1302 : vector<8x128xf32>
    %1475 = arith.addf %1471, %1474 : vector<8x128xf32>
    %1476 = arith.addf %1468, %1475 : vector<8x128xf32>
    %c20_699 = arith.constant 20 : index
    %c0_700 = arith.constant 0 : index
    %1477 = vector.load %arg1[%c20_699, %c0_700] : memref<61x128xf32, #tpu.memory_space<vmem>>, vector<1x128xf32>
    %1478 = vector.broadcast %1477 : vector<1x128xf32> to vector<8x128xf32>
    %1479 = arith.mulf %1478, %1303 : vector<8x128xf32>
    %c47_701 = arith.constant 47 : index
    %c0_702 = arith.constant 0 : index
    %1480 = vector.load %arg1[%c47_701, %c0_702] : memref<61x128xf32, #tpu.memory_space<vmem>>, vector<1x128xf32>
    %1481 = vector.broadcast %1480 : vector<1x128xf32> to vector<8x128xf32>
    %1482 = arith.mulf %1481, %1304 : vector<8x128xf32>
    %1483 = arith.addf %1479, %1482 : vector<8x128xf32>
    %1484 = arith.addf %1476, %1483 : vector<8x128xf32>
    %c21_703 = arith.constant 21 : index
    %c0_704 = arith.constant 0 : index
    %1485 = vector.load %arg1[%c21_703, %c0_704] : memref<61x128xf32, #tpu.memory_space<vmem>>, vector<1x128xf32>
    %1486 = vector.broadcast %1485 : vector<1x128xf32> to vector<8x128xf32>
    %1487 = arith.mulf %1486, %1305 : vector<8x128xf32>
    %c48_705 = arith.constant 48 : index
    %c0_706 = arith.constant 0 : index
    %1488 = vector.load %arg1[%c48_705, %c0_706] : memref<61x128xf32, #tpu.memory_space<vmem>>, vector<1x128xf32>
    %1489 = vector.broadcast %1488 : vector<1x128xf32> to vector<8x128xf32>
    %1490 = arith.mulf %1489, %1306 : vector<8x128xf32>
    %1491 = arith.addf %1487, %1490 : vector<8x128xf32>
    %1492 = arith.addf %1484, %1491 : vector<8x128xf32>
    %c22_707 = arith.constant 22 : index
    %c0_708 = arith.constant 0 : index
    %1493 = vector.load %arg1[%c22_707, %c0_708] : memref<61x128xf32, #tpu.memory_space<vmem>>, vector<1x128xf32>
    %1494 = vector.broadcast %1493 : vector<1x128xf32> to vector<8x128xf32>
    %1495 = arith.mulf %1494, %1298 : vector<8x128xf32>
    %c49_709 = arith.constant 49 : index
    %c0_710 = arith.constant 0 : index
    %1496 = vector.load %arg1[%c49_709, %c0_710] : memref<61x128xf32, #tpu.memory_space<vmem>>, vector<1x128xf32>
    %1497 = vector.broadcast %1496 : vector<1x128xf32> to vector<8x128xf32>
    %1498 = arith.mulf %1497, %1307 : vector<8x128xf32>
    %1499 = arith.addf %1495, %1498 : vector<8x128xf32>
    %1500 = arith.addf %1492, %1499 : vector<8x128xf32>
    %c23_711 = arith.constant 23 : index
    %c0_712 = arith.constant 0 : index
    %1501 = vector.load %arg1[%c23_711, %c0_712] : memref<61x128xf32, #tpu.memory_space<vmem>>, vector<1x128xf32>
    %1502 = vector.broadcast %1501 : vector<1x128xf32> to vector<8x128xf32>
    %1503 = arith.mulf %1502, %1308 : vector<8x128xf32>
    %c50_713 = arith.constant 50 : index
    %c0_714 = arith.constant 0 : index
    %1504 = vector.load %arg1[%c50_713, %c0_714] : memref<61x128xf32, #tpu.memory_space<vmem>>, vector<1x128xf32>
    %1505 = vector.broadcast %1504 : vector<1x128xf32> to vector<8x128xf32>
    %1506 = arith.mulf %1505, %1309 : vector<8x128xf32>
    %1507 = arith.addf %1503, %1506 : vector<8x128xf32>
    %1508 = arith.addf %1500, %1507 : vector<8x128xf32>
    %c24_715 = arith.constant 24 : index
    %c0_716 = arith.constant 0 : index
    %1509 = vector.load %arg1[%c24_715, %c0_716] : memref<61x128xf32, #tpu.memory_space<vmem>>, vector<1x128xf32>
    %1510 = vector.broadcast %1509 : vector<1x128xf32> to vector<8x128xf32>
    %1511 = arith.mulf %1510, %1310 : vector<8x128xf32>
    %c51_717 = arith.constant 51 : index
    %c0_718 = arith.constant 0 : index
    %1512 = vector.load %arg1[%c51_717, %c0_718] : memref<61x128xf32, #tpu.memory_space<vmem>>, vector<1x128xf32>
    %1513 = vector.broadcast %1512 : vector<1x128xf32> to vector<8x128xf32>
    %1514 = arith.mulf %1513, %1311 : vector<8x128xf32>
    %1515 = arith.addf %1511, %1514 : vector<8x128xf32>
    %1516 = arith.addf %1508, %1515 : vector<8x128xf32>
    %c25_719 = arith.constant 25 : index
    %c0_720 = arith.constant 0 : index
    %1517 = vector.load %arg1[%c25_719, %c0_720] : memref<61x128xf32, #tpu.memory_space<vmem>>, vector<1x128xf32>
    %1518 = vector.broadcast %1517 : vector<1x128xf32> to vector<8x128xf32>
    %1519 = arith.mulf %1518, %1312 : vector<8x128xf32>
    %c52_721 = arith.constant 52 : index
    %c0_722 = arith.constant 0 : index
    %1520 = vector.load %arg1[%c52_721, %c0_722] : memref<61x128xf32, #tpu.memory_space<vmem>>, vector<1x128xf32>
    %1521 = vector.broadcast %1520 : vector<1x128xf32> to vector<8x128xf32>
    %1522 = arith.mulf %1521, %1313 : vector<8x128xf32>
    %1523 = arith.addf %1519, %1522 : vector<8x128xf32>
    %1524 = arith.addf %1516, %1523 : vector<8x128xf32>
    %c26_723 = arith.constant 26 : index
    %c0_724 = arith.constant 0 : index
    %1525 = vector.load %arg1[%c26_723, %c0_724] : memref<61x128xf32, #tpu.memory_space<vmem>>, vector<1x128xf32>
    %1526 = vector.broadcast %1525 : vector<1x128xf32> to vector<8x128xf32>
    %1527 = arith.mulf %1526, %1314 : vector<8x128xf32>
    %c53_725 = arith.constant 53 : index
    %c0_726 = arith.constant 0 : index
    %1528 = vector.load %arg1[%c53_725, %c0_726] : memref<61x128xf32, #tpu.memory_space<vmem>>, vector<1x128xf32>
    %1529 = vector.broadcast %1528 : vector<1x128xf32> to vector<8x128xf32>
    %1530 = arith.mulf %1529, %1315 : vector<8x128xf32>
    %1531 = arith.addf %1527, %1530 : vector<8x128xf32>
    %1532 = arith.addf %1524, %1531 : vector<8x128xf32>
    %cst_727 = arith.constant 0.000000e+00 : f32
    %1533 = vector.broadcast %cst_727 : f32 to vector<1x128xf32>
    %1534 = vector.extract_strided_slice %1532 {offsets = [1, 0], sizes = [7, 128], strides = [1, 1]} : vector<8x128xf32> to vector<7x128xf32>
    %1535 = tpu.concatenate %1534, %1533 in 0 : vector<7x128xf32>, vector<1x128xf32> -> vector<8x128xf32>
    %1536 = arith.addf %1461, %1535 : vector<8x128xf32>
    %c54_728 = arith.constant 54 : index
    %c0_729 = arith.constant 0 : index
    %1537 = vector.load %arg1[%c54_728, %c0_729] : memref<61x128xf32, #tpu.memory_space<vmem>>, vector<1x128xf32>
    %1538 = vector.broadcast %1537 : vector<1x128xf32> to vector<8x128xf32>
    %1539 = arith.addf %1536, %1538 : vector<8x128xf32>
    %1540 = arith.subf %1539, %1298 : vector<8x128xf32>
    %1541 = arith.mulf %1295, %1540 : vector<8x128xf32>
    %1542 = arith.addf %1298, %1541 : vector<8x128xf32>
    %c9_i32_730 = arith.constant 9 : i32
    %1543 = tpu.dynamic_rotate %1542 by %c9_i32_730 dim 1 : vector<8x128xf32>, i32 -> vector<8x128xf32>
    %c73_i32_731 = arith.constant 73 : i32
    %1544 = tpu.dynamic_rotate %1542 by %c73_i32_731 dim 1 : vector<8x128xf32>, i32 -> vector<8x128xf32>
    %c8_i32_732 = arith.constant 8 : i32
    %1545 = tpu.dynamic_rotate %1542 by %c8_i32_732 dim 1 : vector<8x128xf32>, i32 -> vector<8x128xf32>
    %c72_i32_733 = arith.constant 72 : i32
    %1546 = tpu.dynamic_rotate %1542 by %c72_i32_733 dim 1 : vector<8x128xf32>, i32 -> vector<8x128xf32>
    %c7_i32_734 = arith.constant 7 : i32
    %1547 = tpu.dynamic_rotate %1542 by %c7_i32_734 dim 1 : vector<8x128xf32>, i32 -> vector<8x128xf32>
    %c71_i32_735 = arith.constant 71 : i32
    %1548 = tpu.dynamic_rotate %1542 by %c71_i32_735 dim 1 : vector<8x128xf32>, i32 -> vector<8x128xf32>
    %c1_i32_736 = arith.constant 1 : i32
    %1549 = tpu.dynamic_rotate %1542 by %c1_i32_736 dim 1 : vector<8x128xf32>, i32 -> vector<8x128xf32>
    %c65_i32_737 = arith.constant 65 : i32
    %1550 = tpu.dynamic_rotate %1542 by %c65_i32_737 dim 1 : vector<8x128xf32>, i32 -> vector<8x128xf32>
    %c64_i32_738 = arith.constant 64 : i32
    %1551 = tpu.dynamic_rotate %1542 by %c64_i32_738 dim 1 : vector<8x128xf32>, i32 -> vector<8x128xf32>
    %c127_i32_739 = arith.constant 127 : i32
    %1552 = tpu.dynamic_rotate %1542 by %c127_i32_739 dim 1 : vector<8x128xf32>, i32 -> vector<8x128xf32>
    %c63_i32_740 = arith.constant 63 : i32
    %1553 = tpu.dynamic_rotate %1542 by %c63_i32_740 dim 1 : vector<8x128xf32>, i32 -> vector<8x128xf32>
    %c121_i32_741 = arith.constant 121 : i32
    %1554 = tpu.dynamic_rotate %1542 by %c121_i32_741 dim 1 : vector<8x128xf32>, i32 -> vector<8x128xf32>
    %c57_i32_742 = arith.constant 57 : i32
    %1555 = tpu.dynamic_rotate %1542 by %c57_i32_742 dim 1 : vector<8x128xf32>, i32 -> vector<8x128xf32>
    %c120_i32_743 = arith.constant 120 : i32
    %1556 = tpu.dynamic_rotate %1542 by %c120_i32_743 dim 1 : vector<8x128xf32>, i32 -> vector<8x128xf32>
    %c56_i32_744 = arith.constant 56 : i32
    %1557 = tpu.dynamic_rotate %1542 by %c56_i32_744 dim 1 : vector<8x128xf32>, i32 -> vector<8x128xf32>
    %c119_i32_745 = arith.constant 119 : i32
    %1558 = tpu.dynamic_rotate %1542 by %c119_i32_745 dim 1 : vector<8x128xf32>, i32 -> vector<8x128xf32>
    %c55_i32_746 = arith.constant 55 : i32
    %1559 = tpu.dynamic_rotate %1542 by %c55_i32_746 dim 1 : vector<8x128xf32>, i32 -> vector<8x128xf32>
    %c0_747 = arith.constant 0 : index
    %c0_748 = arith.constant 0 : index
    %1560 = vector.load %arg1[%c0_747, %c0_748] : memref<61x128xf32, #tpu.memory_space<vmem>>, vector<1x128xf32>
    %1561 = vector.broadcast %1560 : vector<1x128xf32> to vector<8x128xf32>
    %1562 = arith.mulf %1561, %1543 : vector<8x128xf32>
    %c27_749 = arith.constant 27 : index
    %c0_750 = arith.constant 0 : index
    %1563 = vector.load %arg1[%c27_749, %c0_750] : memref<61x128xf32, #tpu.memory_space<vmem>>, vector<1x128xf32>
    %1564 = vector.broadcast %1563 : vector<1x128xf32> to vector<8x128xf32>
    %1565 = arith.mulf %1564, %1544 : vector<8x128xf32>
    %1566 = arith.addf %1562, %1565 : vector<8x128xf32>
    %c1_751 = arith.constant 1 : index
    %c0_752 = arith.constant 0 : index
    %1567 = vector.load %arg1[%c1_751, %c0_752] : memref<61x128xf32, #tpu.memory_space<vmem>>, vector<1x128xf32>
    %1568 = vector.broadcast %1567 : vector<1x128xf32> to vector<8x128xf32>
    %1569 = arith.mulf %1568, %1545 : vector<8x128xf32>
    %c28_753 = arith.constant 28 : index
    %c0_754 = arith.constant 0 : index
    %1570 = vector.load %arg1[%c28_753, %c0_754] : memref<61x128xf32, #tpu.memory_space<vmem>>, vector<1x128xf32>
    %1571 = vector.broadcast %1570 : vector<1x128xf32> to vector<8x128xf32>
    %1572 = arith.mulf %1571, %1546 : vector<8x128xf32>
    %1573 = arith.addf %1569, %1572 : vector<8x128xf32>
    %1574 = arith.addf %1566, %1573 : vector<8x128xf32>
    %c2_755 = arith.constant 2 : index
    %c0_756 = arith.constant 0 : index
    %1575 = vector.load %arg1[%c2_755, %c0_756] : memref<61x128xf32, #tpu.memory_space<vmem>>, vector<1x128xf32>
    %1576 = vector.broadcast %1575 : vector<1x128xf32> to vector<8x128xf32>
    %1577 = arith.mulf %1576, %1547 : vector<8x128xf32>
    %c29_757 = arith.constant 29 : index
    %c0_758 = arith.constant 0 : index
    %1578 = vector.load %arg1[%c29_757, %c0_758] : memref<61x128xf32, #tpu.memory_space<vmem>>, vector<1x128xf32>
    %1579 = vector.broadcast %1578 : vector<1x128xf32> to vector<8x128xf32>
    %1580 = arith.mulf %1579, %1548 : vector<8x128xf32>
    %1581 = arith.addf %1577, %1580 : vector<8x128xf32>
    %1582 = arith.addf %1574, %1581 : vector<8x128xf32>
    %c3_759 = arith.constant 3 : index
    %c0_760 = arith.constant 0 : index
    %1583 = vector.load %arg1[%c3_759, %c0_760] : memref<61x128xf32, #tpu.memory_space<vmem>>, vector<1x128xf32>
    %1584 = vector.broadcast %1583 : vector<1x128xf32> to vector<8x128xf32>
    %1585 = arith.mulf %1584, %1549 : vector<8x128xf32>
    %c30_761 = arith.constant 30 : index
    %c0_762 = arith.constant 0 : index
    %1586 = vector.load %arg1[%c30_761, %c0_762] : memref<61x128xf32, #tpu.memory_space<vmem>>, vector<1x128xf32>
    %1587 = vector.broadcast %1586 : vector<1x128xf32> to vector<8x128xf32>
    %1588 = arith.mulf %1587, %1550 : vector<8x128xf32>
    %1589 = arith.addf %1585, %1588 : vector<8x128xf32>
    %1590 = arith.addf %1582, %1589 : vector<8x128xf32>
    %c4_763 = arith.constant 4 : index
    %c0_764 = arith.constant 0 : index
    %1591 = vector.load %arg1[%c4_763, %c0_764] : memref<61x128xf32, #tpu.memory_space<vmem>>, vector<1x128xf32>
    %1592 = vector.broadcast %1591 : vector<1x128xf32> to vector<8x128xf32>
    %1593 = arith.mulf %1592, %1542 : vector<8x128xf32>
    %c31_765 = arith.constant 31 : index
    %c0_766 = arith.constant 0 : index
    %1594 = vector.load %arg1[%c31_765, %c0_766] : memref<61x128xf32, #tpu.memory_space<vmem>>, vector<1x128xf32>
    %1595 = vector.broadcast %1594 : vector<1x128xf32> to vector<8x128xf32>
    %1596 = arith.mulf %1595, %1551 : vector<8x128xf32>
    %1597 = arith.addf %1593, %1596 : vector<8x128xf32>
    %1598 = arith.addf %1590, %1597 : vector<8x128xf32>
    %c5_767 = arith.constant 5 : index
    %c0_768 = arith.constant 0 : index
    %1599 = vector.load %arg1[%c5_767, %c0_768] : memref<61x128xf32, #tpu.memory_space<vmem>>, vector<1x128xf32>
    %1600 = vector.broadcast %1599 : vector<1x128xf32> to vector<8x128xf32>
    %1601 = arith.mulf %1600, %1552 : vector<8x128xf32>
    %c32_769 = arith.constant 32 : index
    %c0_770 = arith.constant 0 : index
    %1602 = vector.load %arg1[%c32_769, %c0_770] : memref<61x128xf32, #tpu.memory_space<vmem>>, vector<1x128xf32>
    %1603 = vector.broadcast %1602 : vector<1x128xf32> to vector<8x128xf32>
    %1604 = arith.mulf %1603, %1553 : vector<8x128xf32>
    %1605 = arith.addf %1601, %1604 : vector<8x128xf32>
    %1606 = arith.addf %1598, %1605 : vector<8x128xf32>
    %c6_771 = arith.constant 6 : index
    %c0_772 = arith.constant 0 : index
    %1607 = vector.load %arg1[%c6_771, %c0_772] : memref<61x128xf32, #tpu.memory_space<vmem>>, vector<1x128xf32>
    %1608 = vector.broadcast %1607 : vector<1x128xf32> to vector<8x128xf32>
    %1609 = arith.mulf %1608, %1554 : vector<8x128xf32>
    %c33_773 = arith.constant 33 : index
    %c0_774 = arith.constant 0 : index
    %1610 = vector.load %arg1[%c33_773, %c0_774] : memref<61x128xf32, #tpu.memory_space<vmem>>, vector<1x128xf32>
    %1611 = vector.broadcast %1610 : vector<1x128xf32> to vector<8x128xf32>
    %1612 = arith.mulf %1611, %1555 : vector<8x128xf32>
    %1613 = arith.addf %1609, %1612 : vector<8x128xf32>
    %1614 = arith.addf %1606, %1613 : vector<8x128xf32>
    %c7_775 = arith.constant 7 : index
    %c0_776 = arith.constant 0 : index
    %1615 = vector.load %arg1[%c7_775, %c0_776] : memref<61x128xf32, #tpu.memory_space<vmem>>, vector<1x128xf32>
    %1616 = vector.broadcast %1615 : vector<1x128xf32> to vector<8x128xf32>
    %1617 = arith.mulf %1616, %1556 : vector<8x128xf32>
    %c34_777 = arith.constant 34 : index
    %c0_778 = arith.constant 0 : index
    %1618 = vector.load %arg1[%c34_777, %c0_778] : memref<61x128xf32, #tpu.memory_space<vmem>>, vector<1x128xf32>
    %1619 = vector.broadcast %1618 : vector<1x128xf32> to vector<8x128xf32>
    %1620 = arith.mulf %1619, %1557 : vector<8x128xf32>
    %1621 = arith.addf %1617, %1620 : vector<8x128xf32>
    %1622 = arith.addf %1614, %1621 : vector<8x128xf32>
    %c8_779 = arith.constant 8 : index
    %c0_780 = arith.constant 0 : index
    %1623 = vector.load %arg1[%c8_779, %c0_780] : memref<61x128xf32, #tpu.memory_space<vmem>>, vector<1x128xf32>
    %1624 = vector.broadcast %1623 : vector<1x128xf32> to vector<8x128xf32>
    %1625 = arith.mulf %1624, %1558 : vector<8x128xf32>
    %c35_781 = arith.constant 35 : index
    %c0_782 = arith.constant 0 : index
    %1626 = vector.load %arg1[%c35_781, %c0_782] : memref<61x128xf32, #tpu.memory_space<vmem>>, vector<1x128xf32>
    %1627 = vector.broadcast %1626 : vector<1x128xf32> to vector<8x128xf32>
    %1628 = arith.mulf %1627, %1559 : vector<8x128xf32>
    %1629 = arith.addf %1625, %1628 : vector<8x128xf32>
    %1630 = arith.addf %1622, %1629 : vector<8x128xf32>
    %cst_783 = arith.constant 0.000000e+00 : f32
    %1631 = vector.broadcast %cst_783 : f32 to vector<1x128xf32>
    %1632 = vector.extract_strided_slice %1630 {offsets = [0, 0], sizes = [7, 128], strides = [1, 1]} : vector<8x128xf32> to vector<7x128xf32>
    %1633 = tpu.concatenate %1631, %1632 in 0 : vector<1x128xf32>, vector<7x128xf32> -> vector<8x128xf32>
    %c9_784 = arith.constant 9 : index
    %c0_785 = arith.constant 0 : index
    %1634 = vector.load %arg1[%c9_784, %c0_785] : memref<61x128xf32, #tpu.memory_space<vmem>>, vector<1x128xf32>
    %1635 = vector.broadcast %1634 : vector<1x128xf32> to vector<8x128xf32>
    %1636 = arith.mulf %1635, %1543 : vector<8x128xf32>
    %c36_786 = arith.constant 36 : index
    %c0_787 = arith.constant 0 : index
    %1637 = vector.load %arg1[%c36_786, %c0_787] : memref<61x128xf32, #tpu.memory_space<vmem>>, vector<1x128xf32>
    %1638 = vector.broadcast %1637 : vector<1x128xf32> to vector<8x128xf32>
    %1639 = arith.mulf %1638, %1544 : vector<8x128xf32>
    %1640 = arith.addf %1636, %1639 : vector<8x128xf32>
    %c10_788 = arith.constant 10 : index
    %c0_789 = arith.constant 0 : index
    %1641 = vector.load %arg1[%c10_788, %c0_789] : memref<61x128xf32, #tpu.memory_space<vmem>>, vector<1x128xf32>
    %1642 = vector.broadcast %1641 : vector<1x128xf32> to vector<8x128xf32>
    %1643 = arith.mulf %1642, %1545 : vector<8x128xf32>
    %c37_790 = arith.constant 37 : index
    %c0_791 = arith.constant 0 : index
    %1644 = vector.load %arg1[%c37_790, %c0_791] : memref<61x128xf32, #tpu.memory_space<vmem>>, vector<1x128xf32>
    %1645 = vector.broadcast %1644 : vector<1x128xf32> to vector<8x128xf32>
    %1646 = arith.mulf %1645, %1546 : vector<8x128xf32>
    %1647 = arith.addf %1643, %1646 : vector<8x128xf32>
    %1648 = arith.addf %1640, %1647 : vector<8x128xf32>
    %c11_792 = arith.constant 11 : index
    %c0_793 = arith.constant 0 : index
    %1649 = vector.load %arg1[%c11_792, %c0_793] : memref<61x128xf32, #tpu.memory_space<vmem>>, vector<1x128xf32>
    %1650 = vector.broadcast %1649 : vector<1x128xf32> to vector<8x128xf32>
    %1651 = arith.mulf %1650, %1547 : vector<8x128xf32>
    %c38_794 = arith.constant 38 : index
    %c0_795 = arith.constant 0 : index
    %1652 = vector.load %arg1[%c38_794, %c0_795] : memref<61x128xf32, #tpu.memory_space<vmem>>, vector<1x128xf32>
    %1653 = vector.broadcast %1652 : vector<1x128xf32> to vector<8x128xf32>
    %1654 = arith.mulf %1653, %1548 : vector<8x128xf32>
    %1655 = arith.addf %1651, %1654 : vector<8x128xf32>
    %1656 = arith.addf %1648, %1655 : vector<8x128xf32>
    %c12_796 = arith.constant 12 : index
    %c0_797 = arith.constant 0 : index
    %1657 = vector.load %arg1[%c12_796, %c0_797] : memref<61x128xf32, #tpu.memory_space<vmem>>, vector<1x128xf32>
    %1658 = vector.broadcast %1657 : vector<1x128xf32> to vector<8x128xf32>
    %1659 = arith.mulf %1658, %1549 : vector<8x128xf32>
    %c39_798 = arith.constant 39 : index
    %c0_799 = arith.constant 0 : index
    %1660 = vector.load %arg1[%c39_798, %c0_799] : memref<61x128xf32, #tpu.memory_space<vmem>>, vector<1x128xf32>
    %1661 = vector.broadcast %1660 : vector<1x128xf32> to vector<8x128xf32>
    %1662 = arith.mulf %1661, %1550 : vector<8x128xf32>
    %1663 = arith.addf %1659, %1662 : vector<8x128xf32>
    %1664 = arith.addf %1656, %1663 : vector<8x128xf32>
    %c13_800 = arith.constant 13 : index
    %c0_801 = arith.constant 0 : index
    %1665 = vector.load %arg1[%c13_800, %c0_801] : memref<61x128xf32, #tpu.memory_space<vmem>>, vector<1x128xf32>
    %1666 = vector.broadcast %1665 : vector<1x128xf32> to vector<8x128xf32>
    %1667 = arith.mulf %1666, %1542 : vector<8x128xf32>
    %c40_802 = arith.constant 40 : index
    %c0_803 = arith.constant 0 : index
    %1668 = vector.load %arg1[%c40_802, %c0_803] : memref<61x128xf32, #tpu.memory_space<vmem>>, vector<1x128xf32>
    %1669 = vector.broadcast %1668 : vector<1x128xf32> to vector<8x128xf32>
    %1670 = arith.mulf %1669, %1551 : vector<8x128xf32>
    %1671 = arith.addf %1667, %1670 : vector<8x128xf32>
    %1672 = arith.addf %1664, %1671 : vector<8x128xf32>
    %c14_804 = arith.constant 14 : index
    %c0_805 = arith.constant 0 : index
    %1673 = vector.load %arg1[%c14_804, %c0_805] : memref<61x128xf32, #tpu.memory_space<vmem>>, vector<1x128xf32>
    %1674 = vector.broadcast %1673 : vector<1x128xf32> to vector<8x128xf32>
    %1675 = arith.mulf %1674, %1552 : vector<8x128xf32>
    %c41_806 = arith.constant 41 : index
    %c0_807 = arith.constant 0 : index
    %1676 = vector.load %arg1[%c41_806, %c0_807] : memref<61x128xf32, #tpu.memory_space<vmem>>, vector<1x128xf32>
    %1677 = vector.broadcast %1676 : vector<1x128xf32> to vector<8x128xf32>
    %1678 = arith.mulf %1677, %1553 : vector<8x128xf32>
    %1679 = arith.addf %1675, %1678 : vector<8x128xf32>
    %1680 = arith.addf %1672, %1679 : vector<8x128xf32>
    %c15_808 = arith.constant 15 : index
    %c0_809 = arith.constant 0 : index
    %1681 = vector.load %arg1[%c15_808, %c0_809] : memref<61x128xf32, #tpu.memory_space<vmem>>, vector<1x128xf32>
    %1682 = vector.broadcast %1681 : vector<1x128xf32> to vector<8x128xf32>
    %1683 = arith.mulf %1682, %1554 : vector<8x128xf32>
    %c42_810 = arith.constant 42 : index
    %c0_811 = arith.constant 0 : index
    %1684 = vector.load %arg1[%c42_810, %c0_811] : memref<61x128xf32, #tpu.memory_space<vmem>>, vector<1x128xf32>
    %1685 = vector.broadcast %1684 : vector<1x128xf32> to vector<8x128xf32>
    %1686 = arith.mulf %1685, %1555 : vector<8x128xf32>
    %1687 = arith.addf %1683, %1686 : vector<8x128xf32>
    %1688 = arith.addf %1680, %1687 : vector<8x128xf32>
    %c16_812 = arith.constant 16 : index
    %c0_813 = arith.constant 0 : index
    %1689 = vector.load %arg1[%c16_812, %c0_813] : memref<61x128xf32, #tpu.memory_space<vmem>>, vector<1x128xf32>
    %1690 = vector.broadcast %1689 : vector<1x128xf32> to vector<8x128xf32>
    %1691 = arith.mulf %1690, %1556 : vector<8x128xf32>
    %c43_814 = arith.constant 43 : index
    %c0_815 = arith.constant 0 : index
    %1692 = vector.load %arg1[%c43_814, %c0_815] : memref<61x128xf32, #tpu.memory_space<vmem>>, vector<1x128xf32>
    %1693 = vector.broadcast %1692 : vector<1x128xf32> to vector<8x128xf32>
    %1694 = arith.mulf %1693, %1557 : vector<8x128xf32>
    %1695 = arith.addf %1691, %1694 : vector<8x128xf32>
    %1696 = arith.addf %1688, %1695 : vector<8x128xf32>
    %c17_816 = arith.constant 17 : index
    %c0_817 = arith.constant 0 : index
    %1697 = vector.load %arg1[%c17_816, %c0_817] : memref<61x128xf32, #tpu.memory_space<vmem>>, vector<1x128xf32>
    %1698 = vector.broadcast %1697 : vector<1x128xf32> to vector<8x128xf32>
    %1699 = arith.mulf %1698, %1558 : vector<8x128xf32>
    %c44_818 = arith.constant 44 : index
    %c0_819 = arith.constant 0 : index
    %1700 = vector.load %arg1[%c44_818, %c0_819] : memref<61x128xf32, #tpu.memory_space<vmem>>, vector<1x128xf32>
    %1701 = vector.broadcast %1700 : vector<1x128xf32> to vector<8x128xf32>
    %1702 = arith.mulf %1701, %1559 : vector<8x128xf32>
    %1703 = arith.addf %1699, %1702 : vector<8x128xf32>
    %1704 = arith.addf %1696, %1703 : vector<8x128xf32>
    %1705 = arith.addf %1633, %1704 : vector<8x128xf32>
    %c18_820 = arith.constant 18 : index
    %c0_821 = arith.constant 0 : index
    %1706 = vector.load %arg1[%c18_820, %c0_821] : memref<61x128xf32, #tpu.memory_space<vmem>>, vector<1x128xf32>
    %1707 = vector.broadcast %1706 : vector<1x128xf32> to vector<8x128xf32>
    %1708 = arith.mulf %1707, %1543 : vector<8x128xf32>
    %c45_822 = arith.constant 45 : index
    %c0_823 = arith.constant 0 : index
    %1709 = vector.load %arg1[%c45_822, %c0_823] : memref<61x128xf32, #tpu.memory_space<vmem>>, vector<1x128xf32>
    %1710 = vector.broadcast %1709 : vector<1x128xf32> to vector<8x128xf32>
    %1711 = arith.mulf %1710, %1544 : vector<8x128xf32>
    %1712 = arith.addf %1708, %1711 : vector<8x128xf32>
    %c19_824 = arith.constant 19 : index
    %c0_825 = arith.constant 0 : index
    %1713 = vector.load %arg1[%c19_824, %c0_825] : memref<61x128xf32, #tpu.memory_space<vmem>>, vector<1x128xf32>
    %1714 = vector.broadcast %1713 : vector<1x128xf32> to vector<8x128xf32>
    %1715 = arith.mulf %1714, %1545 : vector<8x128xf32>
    %c46_826 = arith.constant 46 : index
    %c0_827 = arith.constant 0 : index
    %1716 = vector.load %arg1[%c46_826, %c0_827] : memref<61x128xf32, #tpu.memory_space<vmem>>, vector<1x128xf32>
    %1717 = vector.broadcast %1716 : vector<1x128xf32> to vector<8x128xf32>
    %1718 = arith.mulf %1717, %1546 : vector<8x128xf32>
    %1719 = arith.addf %1715, %1718 : vector<8x128xf32>
    %1720 = arith.addf %1712, %1719 : vector<8x128xf32>
    %c20_828 = arith.constant 20 : index
    %c0_829 = arith.constant 0 : index
    %1721 = vector.load %arg1[%c20_828, %c0_829] : memref<61x128xf32, #tpu.memory_space<vmem>>, vector<1x128xf32>
    %1722 = vector.broadcast %1721 : vector<1x128xf32> to vector<8x128xf32>
    %1723 = arith.mulf %1722, %1547 : vector<8x128xf32>
    %c47_830 = arith.constant 47 : index
    %c0_831 = arith.constant 0 : index
    %1724 = vector.load %arg1[%c47_830, %c0_831] : memref<61x128xf32, #tpu.memory_space<vmem>>, vector<1x128xf32>
    %1725 = vector.broadcast %1724 : vector<1x128xf32> to vector<8x128xf32>
    %1726 = arith.mulf %1725, %1548 : vector<8x128xf32>
    %1727 = arith.addf %1723, %1726 : vector<8x128xf32>
    %1728 = arith.addf %1720, %1727 : vector<8x128xf32>
    %c21_832 = arith.constant 21 : index
    %c0_833 = arith.constant 0 : index
    %1729 = vector.load %arg1[%c21_832, %c0_833] : memref<61x128xf32, #tpu.memory_space<vmem>>, vector<1x128xf32>
    %1730 = vector.broadcast %1729 : vector<1x128xf32> to vector<8x128xf32>
    %1731 = arith.mulf %1730, %1549 : vector<8x128xf32>
    %c48_834 = arith.constant 48 : index
    %c0_835 = arith.constant 0 : index
    %1732 = vector.load %arg1[%c48_834, %c0_835] : memref<61x128xf32, #tpu.memory_space<vmem>>, vector<1x128xf32>
    %1733 = vector.broadcast %1732 : vector<1x128xf32> to vector<8x128xf32>
    %1734 = arith.mulf %1733, %1550 : vector<8x128xf32>
    %1735 = arith.addf %1731, %1734 : vector<8x128xf32>
    %1736 = arith.addf %1728, %1735 : vector<8x128xf32>
    %c22_836 = arith.constant 22 : index
    %c0_837 = arith.constant 0 : index
    %1737 = vector.load %arg1[%c22_836, %c0_837] : memref<61x128xf32, #tpu.memory_space<vmem>>, vector<1x128xf32>
    %1738 = vector.broadcast %1737 : vector<1x128xf32> to vector<8x128xf32>
    %1739 = arith.mulf %1738, %1542 : vector<8x128xf32>
    %c49_838 = arith.constant 49 : index
    %c0_839 = arith.constant 0 : index
    %1740 = vector.load %arg1[%c49_838, %c0_839] : memref<61x128xf32, #tpu.memory_space<vmem>>, vector<1x128xf32>
    %1741 = vector.broadcast %1740 : vector<1x128xf32> to vector<8x128xf32>
    %1742 = arith.mulf %1741, %1551 : vector<8x128xf32>
    %1743 = arith.addf %1739, %1742 : vector<8x128xf32>
    %1744 = arith.addf %1736, %1743 : vector<8x128xf32>
    %c23_840 = arith.constant 23 : index
    %c0_841 = arith.constant 0 : index
    %1745 = vector.load %arg1[%c23_840, %c0_841] : memref<61x128xf32, #tpu.memory_space<vmem>>, vector<1x128xf32>
    %1746 = vector.broadcast %1745 : vector<1x128xf32> to vector<8x128xf32>
    %1747 = arith.mulf %1746, %1552 : vector<8x128xf32>
    %c50_842 = arith.constant 50 : index
    %c0_843 = arith.constant 0 : index
    %1748 = vector.load %arg1[%c50_842, %c0_843] : memref<61x128xf32, #tpu.memory_space<vmem>>, vector<1x128xf32>
    %1749 = vector.broadcast %1748 : vector<1x128xf32> to vector<8x128xf32>
    %1750 = arith.mulf %1749, %1553 : vector<8x128xf32>
    %1751 = arith.addf %1747, %1750 : vector<8x128xf32>
    %1752 = arith.addf %1744, %1751 : vector<8x128xf32>
    %c24_844 = arith.constant 24 : index
    %c0_845 = arith.constant 0 : index
    %1753 = vector.load %arg1[%c24_844, %c0_845] : memref<61x128xf32, #tpu.memory_space<vmem>>, vector<1x128xf32>
    %1754 = vector.broadcast %1753 : vector<1x128xf32> to vector<8x128xf32>
    %1755 = arith.mulf %1754, %1554 : vector<8x128xf32>
    %c51_846 = arith.constant 51 : index
    %c0_847 = arith.constant 0 : index
    %1756 = vector.load %arg1[%c51_846, %c0_847] : memref<61x128xf32, #tpu.memory_space<vmem>>, vector<1x128xf32>
    %1757 = vector.broadcast %1756 : vector<1x128xf32> to vector<8x128xf32>
    %1758 = arith.mulf %1757, %1555 : vector<8x128xf32>
    %1759 = arith.addf %1755, %1758 : vector<8x128xf32>
    %1760 = arith.addf %1752, %1759 : vector<8x128xf32>
    %c25_848 = arith.constant 25 : index
    %c0_849 = arith.constant 0 : index
    %1761 = vector.load %arg1[%c25_848, %c0_849] : memref<61x128xf32, #tpu.memory_space<vmem>>, vector<1x128xf32>
    %1762 = vector.broadcast %1761 : vector<1x128xf32> to vector<8x128xf32>
    %1763 = arith.mulf %1762, %1556 : vector<8x128xf32>
    %c52_850 = arith.constant 52 : index
    %c0_851 = arith.constant 0 : index
    %1764 = vector.load %arg1[%c52_850, %c0_851] : memref<61x128xf32, #tpu.memory_space<vmem>>, vector<1x128xf32>
    %1765 = vector.broadcast %1764 : vector<1x128xf32> to vector<8x128xf32>
    %1766 = arith.mulf %1765, %1557 : vector<8x128xf32>
    %1767 = arith.addf %1763, %1766 : vector<8x128xf32>
    %1768 = arith.addf %1760, %1767 : vector<8x128xf32>
    %c26_852 = arith.constant 26 : index
    %c0_853 = arith.constant 0 : index
    %1769 = vector.load %arg1[%c26_852, %c0_853] : memref<61x128xf32, #tpu.memory_space<vmem>>, vector<1x128xf32>
    %1770 = vector.broadcast %1769 : vector<1x128xf32> to vector<8x128xf32>
    %1771 = arith.mulf %1770, %1558 : vector<8x128xf32>
    %c53_854 = arith.constant 53 : index
    %c0_855 = arith.constant 0 : index
    %1772 = vector.load %arg1[%c53_854, %c0_855] : memref<61x128xf32, #tpu.memory_space<vmem>>, vector<1x128xf32>
    %1773 = vector.broadcast %1772 : vector<1x128xf32> to vector<8x128xf32>
    %1774 = arith.mulf %1773, %1559 : vector<8x128xf32>
    %1775 = arith.addf %1771, %1774 : vector<8x128xf32>
    %1776 = arith.addf %1768, %1775 : vector<8x128xf32>
    %cst_856 = arith.constant 0.000000e+00 : f32
    %1777 = vector.broadcast %cst_856 : f32 to vector<1x128xf32>
    %1778 = vector.extract_strided_slice %1776 {offsets = [1, 0], sizes = [7, 128], strides = [1, 1]} : vector<8x128xf32> to vector<7x128xf32>
    %1779 = tpu.concatenate %1778, %1777 in 0 : vector<7x128xf32>, vector<1x128xf32> -> vector<8x128xf32>
    %1780 = arith.addf %1705, %1779 : vector<8x128xf32>
    %c54_857 = arith.constant 54 : index
    %c0_858 = arith.constant 0 : index
    %1781 = vector.load %arg1[%c54_857, %c0_858] : memref<61x128xf32, #tpu.memory_space<vmem>>, vector<1x128xf32>
    %1782 = vector.broadcast %1781 : vector<1x128xf32> to vector<8x128xf32>
    %1783 = arith.addf %1780, %1782 : vector<8x128xf32>
    %c64_i32_859 = arith.constant 64 : i32
    %1784 = tpu.dynamic_rotate %1783 by %c64_i32_859 dim 1 : vector<8x128xf32>, i32 -> vector<8x128xf32>
    %1785 = arith.subf %1783, %1784 : vector<8x128xf32>
    %cst_860 = arith.constant 5.000000e-01 : f32
    %1786 = vector.broadcast %cst_860 : f32 to vector<8x128xf32>
    %1787 = arith.mulf %1786, %1785 : vector<8x128xf32>
    %1788 = math.tanh %1787 : vector<8x128xf32>
    %cst_861 = arith.constant 1.000000e+00 : f32
    %1789 = vector.broadcast %cst_861 : f32 to vector<8x128xf32>
    %1790 = arith.addf %1788, %1789 : vector<8x128xf32>
    %cst_862 = arith.constant 5.000000e-01 : f32
    %1791 = vector.broadcast %cst_862 : f32 to vector<8x128xf32>
    %1792 = arith.mulf %1791, %1790 : vector<8x128xf32>
    %c9_i32_863 = arith.constant 9 : i32
    %1793 = tpu.dynamic_rotate %1792 by %c9_i32_863 dim 1 : vector<8x128xf32>, i32 -> vector<8x128xf32>
    %c73_i32_864 = arith.constant 73 : i32
    %1794 = tpu.dynamic_rotate %1792 by %c73_i32_864 dim 1 : vector<8x128xf32>, i32 -> vector<8x128xf32>
    %c8_i32_865 = arith.constant 8 : i32
    %1795 = tpu.dynamic_rotate %1792 by %c8_i32_865 dim 1 : vector<8x128xf32>, i32 -> vector<8x128xf32>
    %c72_i32_866 = arith.constant 72 : i32
    %1796 = tpu.dynamic_rotate %1792 by %c72_i32_866 dim 1 : vector<8x128xf32>, i32 -> vector<8x128xf32>
    %c7_i32_867 = arith.constant 7 : i32
    %1797 = tpu.dynamic_rotate %1792 by %c7_i32_867 dim 1 : vector<8x128xf32>, i32 -> vector<8x128xf32>
    %c71_i32_868 = arith.constant 71 : i32
    %1798 = tpu.dynamic_rotate %1792 by %c71_i32_868 dim 1 : vector<8x128xf32>, i32 -> vector<8x128xf32>
    %c1_i32_869 = arith.constant 1 : i32
    %1799 = tpu.dynamic_rotate %1792 by %c1_i32_869 dim 1 : vector<8x128xf32>, i32 -> vector<8x128xf32>
    %c65_i32_870 = arith.constant 65 : i32
    %1800 = tpu.dynamic_rotate %1792 by %c65_i32_870 dim 1 : vector<8x128xf32>, i32 -> vector<8x128xf32>
    %c64_i32_871 = arith.constant 64 : i32
    %1801 = tpu.dynamic_rotate %1792 by %c64_i32_871 dim 1 : vector<8x128xf32>, i32 -> vector<8x128xf32>
    %c127_i32_872 = arith.constant 127 : i32
    %1802 = tpu.dynamic_rotate %1792 by %c127_i32_872 dim 1 : vector<8x128xf32>, i32 -> vector<8x128xf32>
    %c63_i32_873 = arith.constant 63 : i32
    %1803 = tpu.dynamic_rotate %1792 by %c63_i32_873 dim 1 : vector<8x128xf32>, i32 -> vector<8x128xf32>
    %c121_i32_874 = arith.constant 121 : i32
    %1804 = tpu.dynamic_rotate %1792 by %c121_i32_874 dim 1 : vector<8x128xf32>, i32 -> vector<8x128xf32>
    %c57_i32_875 = arith.constant 57 : i32
    %1805 = tpu.dynamic_rotate %1792 by %c57_i32_875 dim 1 : vector<8x128xf32>, i32 -> vector<8x128xf32>
    %c120_i32_876 = arith.constant 120 : i32
    %1806 = tpu.dynamic_rotate %1792 by %c120_i32_876 dim 1 : vector<8x128xf32>, i32 -> vector<8x128xf32>
    %c56_i32_877 = arith.constant 56 : i32
    %1807 = tpu.dynamic_rotate %1792 by %c56_i32_877 dim 1 : vector<8x128xf32>, i32 -> vector<8x128xf32>
    %c119_i32_878 = arith.constant 119 : i32
    %1808 = tpu.dynamic_rotate %1792 by %c119_i32_878 dim 1 : vector<8x128xf32>, i32 -> vector<8x128xf32>
    %c55_i32_879 = arith.constant 55 : i32
    %1809 = tpu.dynamic_rotate %1792 by %c55_i32_879 dim 1 : vector<8x128xf32>, i32 -> vector<8x128xf32>
    %c0_880 = arith.constant 0 : index
    %c0_881 = arith.constant 0 : index
    %1810 = vector.load %arg1[%c0_880, %c0_881] : memref<61x128xf32, #tpu.memory_space<vmem>>, vector<1x128xf32>
    %1811 = vector.broadcast %1810 : vector<1x128xf32> to vector<8x128xf32>
    %1812 = arith.mulf %1811, %1793 : vector<8x128xf32>
    %c27_882 = arith.constant 27 : index
    %c0_883 = arith.constant 0 : index
    %1813 = vector.load %arg1[%c27_882, %c0_883] : memref<61x128xf32, #tpu.memory_space<vmem>>, vector<1x128xf32>
    %1814 = vector.broadcast %1813 : vector<1x128xf32> to vector<8x128xf32>
    %1815 = arith.mulf %1814, %1794 : vector<8x128xf32>
    %1816 = arith.addf %1812, %1815 : vector<8x128xf32>
    %c1_884 = arith.constant 1 : index
    %c0_885 = arith.constant 0 : index
    %1817 = vector.load %arg1[%c1_884, %c0_885] : memref<61x128xf32, #tpu.memory_space<vmem>>, vector<1x128xf32>
    %1818 = vector.broadcast %1817 : vector<1x128xf32> to vector<8x128xf32>
    %1819 = arith.mulf %1818, %1795 : vector<8x128xf32>
    %c28_886 = arith.constant 28 : index
    %c0_887 = arith.constant 0 : index
    %1820 = vector.load %arg1[%c28_886, %c0_887] : memref<61x128xf32, #tpu.memory_space<vmem>>, vector<1x128xf32>
    %1821 = vector.broadcast %1820 : vector<1x128xf32> to vector<8x128xf32>
    %1822 = arith.mulf %1821, %1796 : vector<8x128xf32>
    %1823 = arith.addf %1819, %1822 : vector<8x128xf32>
    %1824 = arith.addf %1816, %1823 : vector<8x128xf32>
    %c2_888 = arith.constant 2 : index
    %c0_889 = arith.constant 0 : index
    %1825 = vector.load %arg1[%c2_888, %c0_889] : memref<61x128xf32, #tpu.memory_space<vmem>>, vector<1x128xf32>
    %1826 = vector.broadcast %1825 : vector<1x128xf32> to vector<8x128xf32>
    %1827 = arith.mulf %1826, %1797 : vector<8x128xf32>
    %c29_890 = arith.constant 29 : index
    %c0_891 = arith.constant 0 : index
    %1828 = vector.load %arg1[%c29_890, %c0_891] : memref<61x128xf32, #tpu.memory_space<vmem>>, vector<1x128xf32>
    %1829 = vector.broadcast %1828 : vector<1x128xf32> to vector<8x128xf32>
    %1830 = arith.mulf %1829, %1798 : vector<8x128xf32>
    %1831 = arith.addf %1827, %1830 : vector<8x128xf32>
    %1832 = arith.addf %1824, %1831 : vector<8x128xf32>
    %c3_892 = arith.constant 3 : index
    %c0_893 = arith.constant 0 : index
    %1833 = vector.load %arg1[%c3_892, %c0_893] : memref<61x128xf32, #tpu.memory_space<vmem>>, vector<1x128xf32>
    %1834 = vector.broadcast %1833 : vector<1x128xf32> to vector<8x128xf32>
    %1835 = arith.mulf %1834, %1799 : vector<8x128xf32>
    %c30_894 = arith.constant 30 : index
    %c0_895 = arith.constant 0 : index
    %1836 = vector.load %arg1[%c30_894, %c0_895] : memref<61x128xf32, #tpu.memory_space<vmem>>, vector<1x128xf32>
    %1837 = vector.broadcast %1836 : vector<1x128xf32> to vector<8x128xf32>
    %1838 = arith.mulf %1837, %1800 : vector<8x128xf32>
    %1839 = arith.addf %1835, %1838 : vector<8x128xf32>
    %1840 = arith.addf %1832, %1839 : vector<8x128xf32>
    %c4_896 = arith.constant 4 : index
    %c0_897 = arith.constant 0 : index
    %1841 = vector.load %arg1[%c4_896, %c0_897] : memref<61x128xf32, #tpu.memory_space<vmem>>, vector<1x128xf32>
    %1842 = vector.broadcast %1841 : vector<1x128xf32> to vector<8x128xf32>
    %1843 = arith.mulf %1842, %1792 : vector<8x128xf32>
    %c31_898 = arith.constant 31 : index
    %c0_899 = arith.constant 0 : index
    %1844 = vector.load %arg1[%c31_898, %c0_899] : memref<61x128xf32, #tpu.memory_space<vmem>>, vector<1x128xf32>
    %1845 = vector.broadcast %1844 : vector<1x128xf32> to vector<8x128xf32>
    %1846 = arith.mulf %1845, %1801 : vector<8x128xf32>
    %1847 = arith.addf %1843, %1846 : vector<8x128xf32>
    %1848 = arith.addf %1840, %1847 : vector<8x128xf32>
    %c5_900 = arith.constant 5 : index
    %c0_901 = arith.constant 0 : index
    %1849 = vector.load %arg1[%c5_900, %c0_901] : memref<61x128xf32, #tpu.memory_space<vmem>>, vector<1x128xf32>
    %1850 = vector.broadcast %1849 : vector<1x128xf32> to vector<8x128xf32>
    %1851 = arith.mulf %1850, %1802 : vector<8x128xf32>
    %c32_902 = arith.constant 32 : index
    %c0_903 = arith.constant 0 : index
    %1852 = vector.load %arg1[%c32_902, %c0_903] : memref<61x128xf32, #tpu.memory_space<vmem>>, vector<1x128xf32>
    %1853 = vector.broadcast %1852 : vector<1x128xf32> to vector<8x128xf32>
    %1854 = arith.mulf %1853, %1803 : vector<8x128xf32>
    %1855 = arith.addf %1851, %1854 : vector<8x128xf32>
    %1856 = arith.addf %1848, %1855 : vector<8x128xf32>
    %c6_904 = arith.constant 6 : index
    %c0_905 = arith.constant 0 : index
    %1857 = vector.load %arg1[%c6_904, %c0_905] : memref<61x128xf32, #tpu.memory_space<vmem>>, vector<1x128xf32>
    %1858 = vector.broadcast %1857 : vector<1x128xf32> to vector<8x128xf32>
    %1859 = arith.mulf %1858, %1804 : vector<8x128xf32>
    %c33_906 = arith.constant 33 : index
    %c0_907 = arith.constant 0 : index
    %1860 = vector.load %arg1[%c33_906, %c0_907] : memref<61x128xf32, #tpu.memory_space<vmem>>, vector<1x128xf32>
    %1861 = vector.broadcast %1860 : vector<1x128xf32> to vector<8x128xf32>
    %1862 = arith.mulf %1861, %1805 : vector<8x128xf32>
    %1863 = arith.addf %1859, %1862 : vector<8x128xf32>
    %1864 = arith.addf %1856, %1863 : vector<8x128xf32>
    %c7_908 = arith.constant 7 : index
    %c0_909 = arith.constant 0 : index
    %1865 = vector.load %arg1[%c7_908, %c0_909] : memref<61x128xf32, #tpu.memory_space<vmem>>, vector<1x128xf32>
    %1866 = vector.broadcast %1865 : vector<1x128xf32> to vector<8x128xf32>
    %1867 = arith.mulf %1866, %1806 : vector<8x128xf32>
    %c34_910 = arith.constant 34 : index
    %c0_911 = arith.constant 0 : index
    %1868 = vector.load %arg1[%c34_910, %c0_911] : memref<61x128xf32, #tpu.memory_space<vmem>>, vector<1x128xf32>
    %1869 = vector.broadcast %1868 : vector<1x128xf32> to vector<8x128xf32>
    %1870 = arith.mulf %1869, %1807 : vector<8x128xf32>
    %1871 = arith.addf %1867, %1870 : vector<8x128xf32>
    %1872 = arith.addf %1864, %1871 : vector<8x128xf32>
    %c8_912 = arith.constant 8 : index
    %c0_913 = arith.constant 0 : index
    %1873 = vector.load %arg1[%c8_912, %c0_913] : memref<61x128xf32, #tpu.memory_space<vmem>>, vector<1x128xf32>
    %1874 = vector.broadcast %1873 : vector<1x128xf32> to vector<8x128xf32>
    %1875 = arith.mulf %1874, %1808 : vector<8x128xf32>
    %c35_914 = arith.constant 35 : index
    %c0_915 = arith.constant 0 : index
    %1876 = vector.load %arg1[%c35_914, %c0_915] : memref<61x128xf32, #tpu.memory_space<vmem>>, vector<1x128xf32>
    %1877 = vector.broadcast %1876 : vector<1x128xf32> to vector<8x128xf32>
    %1878 = arith.mulf %1877, %1809 : vector<8x128xf32>
    %1879 = arith.addf %1875, %1878 : vector<8x128xf32>
    %1880 = arith.addf %1872, %1879 : vector<8x128xf32>
    %cst_916 = arith.constant 0.000000e+00 : f32
    %1881 = vector.broadcast %cst_916 : f32 to vector<1x128xf32>
    %1882 = vector.extract_strided_slice %1880 {offsets = [0, 0], sizes = [7, 128], strides = [1, 1]} : vector<8x128xf32> to vector<7x128xf32>
    %1883 = tpu.concatenate %1881, %1882 in 0 : vector<1x128xf32>, vector<7x128xf32> -> vector<8x128xf32>
    %c9_917 = arith.constant 9 : index
    %c0_918 = arith.constant 0 : index
    %1884 = vector.load %arg1[%c9_917, %c0_918] : memref<61x128xf32, #tpu.memory_space<vmem>>, vector<1x128xf32>
    %1885 = vector.broadcast %1884 : vector<1x128xf32> to vector<8x128xf32>
    %1886 = arith.mulf %1885, %1793 : vector<8x128xf32>
    %c36_919 = arith.constant 36 : index
    %c0_920 = arith.constant 0 : index
    %1887 = vector.load %arg1[%c36_919, %c0_920] : memref<61x128xf32, #tpu.memory_space<vmem>>, vector<1x128xf32>
    %1888 = vector.broadcast %1887 : vector<1x128xf32> to vector<8x128xf32>
    %1889 = arith.mulf %1888, %1794 : vector<8x128xf32>
    %1890 = arith.addf %1886, %1889 : vector<8x128xf32>
    %c10_921 = arith.constant 10 : index
    %c0_922 = arith.constant 0 : index
    %1891 = vector.load %arg1[%c10_921, %c0_922] : memref<61x128xf32, #tpu.memory_space<vmem>>, vector<1x128xf32>
    %1892 = vector.broadcast %1891 : vector<1x128xf32> to vector<8x128xf32>
    %1893 = arith.mulf %1892, %1795 : vector<8x128xf32>
    %c37_923 = arith.constant 37 : index
    %c0_924 = arith.constant 0 : index
    %1894 = vector.load %arg1[%c37_923, %c0_924] : memref<61x128xf32, #tpu.memory_space<vmem>>, vector<1x128xf32>
    %1895 = vector.broadcast %1894 : vector<1x128xf32> to vector<8x128xf32>
    %1896 = arith.mulf %1895, %1796 : vector<8x128xf32>
    %1897 = arith.addf %1893, %1896 : vector<8x128xf32>
    %1898 = arith.addf %1890, %1897 : vector<8x128xf32>
    %c11_925 = arith.constant 11 : index
    %c0_926 = arith.constant 0 : index
    %1899 = vector.load %arg1[%c11_925, %c0_926] : memref<61x128xf32, #tpu.memory_space<vmem>>, vector<1x128xf32>
    %1900 = vector.broadcast %1899 : vector<1x128xf32> to vector<8x128xf32>
    %1901 = arith.mulf %1900, %1797 : vector<8x128xf32>
    %c38_927 = arith.constant 38 : index
    %c0_928 = arith.constant 0 : index
    %1902 = vector.load %arg1[%c38_927, %c0_928] : memref<61x128xf32, #tpu.memory_space<vmem>>, vector<1x128xf32>
    %1903 = vector.broadcast %1902 : vector<1x128xf32> to vector<8x128xf32>
    %1904 = arith.mulf %1903, %1798 : vector<8x128xf32>
    %1905 = arith.addf %1901, %1904 : vector<8x128xf32>
    %1906 = arith.addf %1898, %1905 : vector<8x128xf32>
    %c12_929 = arith.constant 12 : index
    %c0_930 = arith.constant 0 : index
    %1907 = vector.load %arg1[%c12_929, %c0_930] : memref<61x128xf32, #tpu.memory_space<vmem>>, vector<1x128xf32>
    %1908 = vector.broadcast %1907 : vector<1x128xf32> to vector<8x128xf32>
    %1909 = arith.mulf %1908, %1799 : vector<8x128xf32>
    %c39_931 = arith.constant 39 : index
    %c0_932 = arith.constant 0 : index
    %1910 = vector.load %arg1[%c39_931, %c0_932] : memref<61x128xf32, #tpu.memory_space<vmem>>, vector<1x128xf32>
    %1911 = vector.broadcast %1910 : vector<1x128xf32> to vector<8x128xf32>
    %1912 = arith.mulf %1911, %1800 : vector<8x128xf32>
    %1913 = arith.addf %1909, %1912 : vector<8x128xf32>
    %1914 = arith.addf %1906, %1913 : vector<8x128xf32>
    %c13_933 = arith.constant 13 : index
    %c0_934 = arith.constant 0 : index
    %1915 = vector.load %arg1[%c13_933, %c0_934] : memref<61x128xf32, #tpu.memory_space<vmem>>, vector<1x128xf32>
    %1916 = vector.broadcast %1915 : vector<1x128xf32> to vector<8x128xf32>
    %1917 = arith.mulf %1916, %1792 : vector<8x128xf32>
    %c40_935 = arith.constant 40 : index
    %c0_936 = arith.constant 0 : index
    %1918 = vector.load %arg1[%c40_935, %c0_936] : memref<61x128xf32, #tpu.memory_space<vmem>>, vector<1x128xf32>
    %1919 = vector.broadcast %1918 : vector<1x128xf32> to vector<8x128xf32>
    %1920 = arith.mulf %1919, %1801 : vector<8x128xf32>
    %1921 = arith.addf %1917, %1920 : vector<8x128xf32>
    %1922 = arith.addf %1914, %1921 : vector<8x128xf32>
    %c14_937 = arith.constant 14 : index
    %c0_938 = arith.constant 0 : index
    %1923 = vector.load %arg1[%c14_937, %c0_938] : memref<61x128xf32, #tpu.memory_space<vmem>>, vector<1x128xf32>
    %1924 = vector.broadcast %1923 : vector<1x128xf32> to vector<8x128xf32>
    %1925 = arith.mulf %1924, %1802 : vector<8x128xf32>
    %c41_939 = arith.constant 41 : index
    %c0_940 = arith.constant 0 : index
    %1926 = vector.load %arg1[%c41_939, %c0_940] : memref<61x128xf32, #tpu.memory_space<vmem>>, vector<1x128xf32>
    %1927 = vector.broadcast %1926 : vector<1x128xf32> to vector<8x128xf32>
    %1928 = arith.mulf %1927, %1803 : vector<8x128xf32>
    %1929 = arith.addf %1925, %1928 : vector<8x128xf32>
    %1930 = arith.addf %1922, %1929 : vector<8x128xf32>
    %c15_941 = arith.constant 15 : index
    %c0_942 = arith.constant 0 : index
    %1931 = vector.load %arg1[%c15_941, %c0_942] : memref<61x128xf32, #tpu.memory_space<vmem>>, vector<1x128xf32>
    %1932 = vector.broadcast %1931 : vector<1x128xf32> to vector<8x128xf32>
    %1933 = arith.mulf %1932, %1804 : vector<8x128xf32>
    %c42_943 = arith.constant 42 : index
    %c0_944 = arith.constant 0 : index
    %1934 = vector.load %arg1[%c42_943, %c0_944] : memref<61x128xf32, #tpu.memory_space<vmem>>, vector<1x128xf32>
    %1935 = vector.broadcast %1934 : vector<1x128xf32> to vector<8x128xf32>
    %1936 = arith.mulf %1935, %1805 : vector<8x128xf32>
    %1937 = arith.addf %1933, %1936 : vector<8x128xf32>
    %1938 = arith.addf %1930, %1937 : vector<8x128xf32>
    %c16_945 = arith.constant 16 : index
    %c0_946 = arith.constant 0 : index
    %1939 = vector.load %arg1[%c16_945, %c0_946] : memref<61x128xf32, #tpu.memory_space<vmem>>, vector<1x128xf32>
    %1940 = vector.broadcast %1939 : vector<1x128xf32> to vector<8x128xf32>
    %1941 = arith.mulf %1940, %1806 : vector<8x128xf32>
    %c43_947 = arith.constant 43 : index
    %c0_948 = arith.constant 0 : index
    %1942 = vector.load %arg1[%c43_947, %c0_948] : memref<61x128xf32, #tpu.memory_space<vmem>>, vector<1x128xf32>
    %1943 = vector.broadcast %1942 : vector<1x128xf32> to vector<8x128xf32>
    %1944 = arith.mulf %1943, %1807 : vector<8x128xf32>
    %1945 = arith.addf %1941, %1944 : vector<8x128xf32>
    %1946 = arith.addf %1938, %1945 : vector<8x128xf32>
    %c17_949 = arith.constant 17 : index
    %c0_950 = arith.constant 0 : index
    %1947 = vector.load %arg1[%c17_949, %c0_950] : memref<61x128xf32, #tpu.memory_space<vmem>>, vector<1x128xf32>
    %1948 = vector.broadcast %1947 : vector<1x128xf32> to vector<8x128xf32>
    %1949 = arith.mulf %1948, %1808 : vector<8x128xf32>
    %c44_951 = arith.constant 44 : index
    %c0_952 = arith.constant 0 : index
    %1950 = vector.load %arg1[%c44_951, %c0_952] : memref<61x128xf32, #tpu.memory_space<vmem>>, vector<1x128xf32>
    %1951 = vector.broadcast %1950 : vector<1x128xf32> to vector<8x128xf32>
    %1952 = arith.mulf %1951, %1809 : vector<8x128xf32>
    %1953 = arith.addf %1949, %1952 : vector<8x128xf32>
    %1954 = arith.addf %1946, %1953 : vector<8x128xf32>
    %1955 = arith.addf %1883, %1954 : vector<8x128xf32>
    %c18_953 = arith.constant 18 : index
    %c0_954 = arith.constant 0 : index
    %1956 = vector.load %arg1[%c18_953, %c0_954] : memref<61x128xf32, #tpu.memory_space<vmem>>, vector<1x128xf32>
    %1957 = vector.broadcast %1956 : vector<1x128xf32> to vector<8x128xf32>
    %1958 = arith.mulf %1957, %1793 : vector<8x128xf32>
    %c45_955 = arith.constant 45 : index
    %c0_956 = arith.constant 0 : index
    %1959 = vector.load %arg1[%c45_955, %c0_956] : memref<61x128xf32, #tpu.memory_space<vmem>>, vector<1x128xf32>
    %1960 = vector.broadcast %1959 : vector<1x128xf32> to vector<8x128xf32>
    %1961 = arith.mulf %1960, %1794 : vector<8x128xf32>
    %1962 = arith.addf %1958, %1961 : vector<8x128xf32>
    %c19_957 = arith.constant 19 : index
    %c0_958 = arith.constant 0 : index
    %1963 = vector.load %arg1[%c19_957, %c0_958] : memref<61x128xf32, #tpu.memory_space<vmem>>, vector<1x128xf32>
    %1964 = vector.broadcast %1963 : vector<1x128xf32> to vector<8x128xf32>
    %1965 = arith.mulf %1964, %1795 : vector<8x128xf32>
    %c46_959 = arith.constant 46 : index
    %c0_960 = arith.constant 0 : index
    %1966 = vector.load %arg1[%c46_959, %c0_960] : memref<61x128xf32, #tpu.memory_space<vmem>>, vector<1x128xf32>
    %1967 = vector.broadcast %1966 : vector<1x128xf32> to vector<8x128xf32>
    %1968 = arith.mulf %1967, %1796 : vector<8x128xf32>
    %1969 = arith.addf %1965, %1968 : vector<8x128xf32>
    %1970 = arith.addf %1962, %1969 : vector<8x128xf32>
    %c20_961 = arith.constant 20 : index
    %c0_962 = arith.constant 0 : index
    %1971 = vector.load %arg1[%c20_961, %c0_962] : memref<61x128xf32, #tpu.memory_space<vmem>>, vector<1x128xf32>
    %1972 = vector.broadcast %1971 : vector<1x128xf32> to vector<8x128xf32>
    %1973 = arith.mulf %1972, %1797 : vector<8x128xf32>
    %c47_963 = arith.constant 47 : index
    %c0_964 = arith.constant 0 : index
    %1974 = vector.load %arg1[%c47_963, %c0_964] : memref<61x128xf32, #tpu.memory_space<vmem>>, vector<1x128xf32>
    %1975 = vector.broadcast %1974 : vector<1x128xf32> to vector<8x128xf32>
    %1976 = arith.mulf %1975, %1798 : vector<8x128xf32>
    %1977 = arith.addf %1973, %1976 : vector<8x128xf32>
    %1978 = arith.addf %1970, %1977 : vector<8x128xf32>
    %c21_965 = arith.constant 21 : index
    %c0_966 = arith.constant 0 : index
    %1979 = vector.load %arg1[%c21_965, %c0_966] : memref<61x128xf32, #tpu.memory_space<vmem>>, vector<1x128xf32>
    %1980 = vector.broadcast %1979 : vector<1x128xf32> to vector<8x128xf32>
    %1981 = arith.mulf %1980, %1799 : vector<8x128xf32>
    %c48_967 = arith.constant 48 : index
    %c0_968 = arith.constant 0 : index
    %1982 = vector.load %arg1[%c48_967, %c0_968] : memref<61x128xf32, #tpu.memory_space<vmem>>, vector<1x128xf32>
    %1983 = vector.broadcast %1982 : vector<1x128xf32> to vector<8x128xf32>
    %1984 = arith.mulf %1983, %1800 : vector<8x128xf32>
    %1985 = arith.addf %1981, %1984 : vector<8x128xf32>
    %1986 = arith.addf %1978, %1985 : vector<8x128xf32>
    %c22_969 = arith.constant 22 : index
    %c0_970 = arith.constant 0 : index
    %1987 = vector.load %arg1[%c22_969, %c0_970] : memref<61x128xf32, #tpu.memory_space<vmem>>, vector<1x128xf32>
    %1988 = vector.broadcast %1987 : vector<1x128xf32> to vector<8x128xf32>
    %1989 = arith.mulf %1988, %1792 : vector<8x128xf32>
    %c49_971 = arith.constant 49 : index
    %c0_972 = arith.constant 0 : index
    %1990 = vector.load %arg1[%c49_971, %c0_972] : memref<61x128xf32, #tpu.memory_space<vmem>>, vector<1x128xf32>
    %1991 = vector.broadcast %1990 : vector<1x128xf32> to vector<8x128xf32>
    %1992 = arith.mulf %1991, %1801 : vector<8x128xf32>
    %1993 = arith.addf %1989, %1992 : vector<8x128xf32>
    %1994 = arith.addf %1986, %1993 : vector<8x128xf32>
    %c23_973 = arith.constant 23 : index
    %c0_974 = arith.constant 0 : index
    %1995 = vector.load %arg1[%c23_973, %c0_974] : memref<61x128xf32, #tpu.memory_space<vmem>>, vector<1x128xf32>
    %1996 = vector.broadcast %1995 : vector<1x128xf32> to vector<8x128xf32>
    %1997 = arith.mulf %1996, %1802 : vector<8x128xf32>
    %c50_975 = arith.constant 50 : index
    %c0_976 = arith.constant 0 : index
    %1998 = vector.load %arg1[%c50_975, %c0_976] : memref<61x128xf32, #tpu.memory_space<vmem>>, vector<1x128xf32>
    %1999 = vector.broadcast %1998 : vector<1x128xf32> to vector<8x128xf32>
    %2000 = arith.mulf %1999, %1803 : vector<8x128xf32>
    %2001 = arith.addf %1997, %2000 : vector<8x128xf32>
    %2002 = arith.addf %1994, %2001 : vector<8x128xf32>
    %c24_977 = arith.constant 24 : index
    %c0_978 = arith.constant 0 : index
    %2003 = vector.load %arg1[%c24_977, %c0_978] : memref<61x128xf32, #tpu.memory_space<vmem>>, vector<1x128xf32>
    %2004 = vector.broadcast %2003 : vector<1x128xf32> to vector<8x128xf32>
    %2005 = arith.mulf %2004, %1804 : vector<8x128xf32>
    %c51_979 = arith.constant 51 : index
    %c0_980 = arith.constant 0 : index
    %2006 = vector.load %arg1[%c51_979, %c0_980] : memref<61x128xf32, #tpu.memory_space<vmem>>, vector<1x128xf32>
    %2007 = vector.broadcast %2006 : vector<1x128xf32> to vector<8x128xf32>
    %2008 = arith.mulf %2007, %1805 : vector<8x128xf32>
    %2009 = arith.addf %2005, %2008 : vector<8x128xf32>
    %2010 = arith.addf %2002, %2009 : vector<8x128xf32>
    %c25_981 = arith.constant 25 : index
    %c0_982 = arith.constant 0 : index
    %2011 = vector.load %arg1[%c25_981, %c0_982] : memref<61x128xf32, #tpu.memory_space<vmem>>, vector<1x128xf32>
    %2012 = vector.broadcast %2011 : vector<1x128xf32> to vector<8x128xf32>
    %2013 = arith.mulf %2012, %1806 : vector<8x128xf32>
    %c52_983 = arith.constant 52 : index
    %c0_984 = arith.constant 0 : index
    %2014 = vector.load %arg1[%c52_983, %c0_984] : memref<61x128xf32, #tpu.memory_space<vmem>>, vector<1x128xf32>
    %2015 = vector.broadcast %2014 : vector<1x128xf32> to vector<8x128xf32>
    %2016 = arith.mulf %2015, %1807 : vector<8x128xf32>
    %2017 = arith.addf %2013, %2016 : vector<8x128xf32>
    %2018 = arith.addf %2010, %2017 : vector<8x128xf32>
    %c26_985 = arith.constant 26 : index
    %c0_986 = arith.constant 0 : index
    %2019 = vector.load %arg1[%c26_985, %c0_986] : memref<61x128xf32, #tpu.memory_space<vmem>>, vector<1x128xf32>
    %2020 = vector.broadcast %2019 : vector<1x128xf32> to vector<8x128xf32>
    %2021 = arith.mulf %2020, %1808 : vector<8x128xf32>
    %c53_987 = arith.constant 53 : index
    %c0_988 = arith.constant 0 : index
    %2022 = vector.load %arg1[%c53_987, %c0_988] : memref<61x128xf32, #tpu.memory_space<vmem>>, vector<1x128xf32>
    %2023 = vector.broadcast %2022 : vector<1x128xf32> to vector<8x128xf32>
    %2024 = arith.mulf %2023, %1809 : vector<8x128xf32>
    %2025 = arith.addf %2021, %2024 : vector<8x128xf32>
    %2026 = arith.addf %2018, %2025 : vector<8x128xf32>
    %cst_989 = arith.constant 0.000000e+00 : f32
    %2027 = vector.broadcast %cst_989 : f32 to vector<1x128xf32>
    %2028 = vector.extract_strided_slice %2026 {offsets = [1, 0], sizes = [7, 128], strides = [1, 1]} : vector<8x128xf32> to vector<7x128xf32>
    %2029 = tpu.concatenate %2028, %2027 in 0 : vector<7x128xf32>, vector<1x128xf32> -> vector<8x128xf32>
    %2030 = arith.addf %1955, %2029 : vector<8x128xf32>
    %c54_990 = arith.constant 54 : index
    %c0_991 = arith.constant 0 : index
    %2031 = vector.load %arg1[%c54_990, %c0_991] : memref<61x128xf32, #tpu.memory_space<vmem>>, vector<1x128xf32>
    %2032 = vector.broadcast %2031 : vector<1x128xf32> to vector<8x128xf32>
    %2033 = arith.addf %2030, %2032 : vector<8x128xf32>
    %2034 = arith.addf %310, %2033 : vector<8x128xf32>
    %2035 = math.tanh %2034 : vector<8x128xf32>
    %2036 = arith.subf %310, %69 : vector<8x128xf32>
    %2037 = arith.mulf %2035, %2036 : vector<8x128xf32>
    %2038 = arith.addf %69, %2037 : vector<8x128xf32>
    %c9_i32_992 = arith.constant 9 : i32
    %2039 = tpu.dynamic_rotate %2038 by %c9_i32_992 dim 1 : vector<8x128xf32>, i32 -> vector<8x128xf32>
    %c73_i32_993 = arith.constant 73 : i32
    %2040 = tpu.dynamic_rotate %2038 by %c73_i32_993 dim 1 : vector<8x128xf32>, i32 -> vector<8x128xf32>
    %c8_i32_994 = arith.constant 8 : i32
    %2041 = tpu.dynamic_rotate %2038 by %c8_i32_994 dim 1 : vector<8x128xf32>, i32 -> vector<8x128xf32>
    %c72_i32_995 = arith.constant 72 : i32
    %2042 = tpu.dynamic_rotate %2038 by %c72_i32_995 dim 1 : vector<8x128xf32>, i32 -> vector<8x128xf32>
    %c7_i32_996 = arith.constant 7 : i32
    %2043 = tpu.dynamic_rotate %2038 by %c7_i32_996 dim 1 : vector<8x128xf32>, i32 -> vector<8x128xf32>
    %c71_i32_997 = arith.constant 71 : i32
    %2044 = tpu.dynamic_rotate %2038 by %c71_i32_997 dim 1 : vector<8x128xf32>, i32 -> vector<8x128xf32>
    %c1_i32_998 = arith.constant 1 : i32
    %2045 = tpu.dynamic_rotate %2038 by %c1_i32_998 dim 1 : vector<8x128xf32>, i32 -> vector<8x128xf32>
    %c65_i32_999 = arith.constant 65 : i32
    %2046 = tpu.dynamic_rotate %2038 by %c65_i32_999 dim 1 : vector<8x128xf32>, i32 -> vector<8x128xf32>
    %c64_i32_1000 = arith.constant 64 : i32
    %2047 = tpu.dynamic_rotate %2038 by %c64_i32_1000 dim 1 : vector<8x128xf32>, i32 -> vector<8x128xf32>
    %c127_i32_1001 = arith.constant 127 : i32
    %2048 = tpu.dynamic_rotate %2038 by %c127_i32_1001 dim 1 : vector<8x128xf32>, i32 -> vector<8x128xf32>
    %c63_i32_1002 = arith.constant 63 : i32
    %2049 = tpu.dynamic_rotate %2038 by %c63_i32_1002 dim 1 : vector<8x128xf32>, i32 -> vector<8x128xf32>
    %c121_i32_1003 = arith.constant 121 : i32
    %2050 = tpu.dynamic_rotate %2038 by %c121_i32_1003 dim 1 : vector<8x128xf32>, i32 -> vector<8x128xf32>
    %c57_i32_1004 = arith.constant 57 : i32
    %2051 = tpu.dynamic_rotate %2038 by %c57_i32_1004 dim 1 : vector<8x128xf32>, i32 -> vector<8x128xf32>
    %c120_i32_1005 = arith.constant 120 : i32
    %2052 = tpu.dynamic_rotate %2038 by %c120_i32_1005 dim 1 : vector<8x128xf32>, i32 -> vector<8x128xf32>
    %c56_i32_1006 = arith.constant 56 : i32
    %2053 = tpu.dynamic_rotate %2038 by %c56_i32_1006 dim 1 : vector<8x128xf32>, i32 -> vector<8x128xf32>
    %c119_i32_1007 = arith.constant 119 : i32
    %2054 = tpu.dynamic_rotate %2038 by %c119_i32_1007 dim 1 : vector<8x128xf32>, i32 -> vector<8x128xf32>
    %c55_i32_1008 = arith.constant 55 : i32
    %2055 = tpu.dynamic_rotate %2038 by %c55_i32_1008 dim 1 : vector<8x128xf32>, i32 -> vector<8x128xf32>
    %c0_1009 = arith.constant 0 : index
    %c0_1010 = arith.constant 0 : index
    %2056 = vector.load %arg1[%c0_1009, %c0_1010] : memref<61x128xf32, #tpu.memory_space<vmem>>, vector<1x128xf32>
    %2057 = vector.broadcast %2056 : vector<1x128xf32> to vector<8x128xf32>
    %2058 = arith.mulf %2057, %2039 : vector<8x128xf32>
    %c27_1011 = arith.constant 27 : index
    %c0_1012 = arith.constant 0 : index
    %2059 = vector.load %arg1[%c27_1011, %c0_1012] : memref<61x128xf32, #tpu.memory_space<vmem>>, vector<1x128xf32>
    %2060 = vector.broadcast %2059 : vector<1x128xf32> to vector<8x128xf32>
    %2061 = arith.mulf %2060, %2040 : vector<8x128xf32>
    %2062 = arith.addf %2058, %2061 : vector<8x128xf32>
    %c1_1013 = arith.constant 1 : index
    %c0_1014 = arith.constant 0 : index
    %2063 = vector.load %arg1[%c1_1013, %c0_1014] : memref<61x128xf32, #tpu.memory_space<vmem>>, vector<1x128xf32>
    %2064 = vector.broadcast %2063 : vector<1x128xf32> to vector<8x128xf32>
    %2065 = arith.mulf %2064, %2041 : vector<8x128xf32>
    %c28_1015 = arith.constant 28 : index
    %c0_1016 = arith.constant 0 : index
    %2066 = vector.load %arg1[%c28_1015, %c0_1016] : memref<61x128xf32, #tpu.memory_space<vmem>>, vector<1x128xf32>
    %2067 = vector.broadcast %2066 : vector<1x128xf32> to vector<8x128xf32>
    %2068 = arith.mulf %2067, %2042 : vector<8x128xf32>
    %2069 = arith.addf %2065, %2068 : vector<8x128xf32>
    %2070 = arith.addf %2062, %2069 : vector<8x128xf32>
    %c2_1017 = arith.constant 2 : index
    %c0_1018 = arith.constant 0 : index
    %2071 = vector.load %arg1[%c2_1017, %c0_1018] : memref<61x128xf32, #tpu.memory_space<vmem>>, vector<1x128xf32>
    %2072 = vector.broadcast %2071 : vector<1x128xf32> to vector<8x128xf32>
    %2073 = arith.mulf %2072, %2043 : vector<8x128xf32>
    %c29_1019 = arith.constant 29 : index
    %c0_1020 = arith.constant 0 : index
    %2074 = vector.load %arg1[%c29_1019, %c0_1020] : memref<61x128xf32, #tpu.memory_space<vmem>>, vector<1x128xf32>
    %2075 = vector.broadcast %2074 : vector<1x128xf32> to vector<8x128xf32>
    %2076 = arith.mulf %2075, %2044 : vector<8x128xf32>
    %2077 = arith.addf %2073, %2076 : vector<8x128xf32>
    %2078 = arith.addf %2070, %2077 : vector<8x128xf32>
    %c3_1021 = arith.constant 3 : index
    %c0_1022 = arith.constant 0 : index
    %2079 = vector.load %arg1[%c3_1021, %c0_1022] : memref<61x128xf32, #tpu.memory_space<vmem>>, vector<1x128xf32>
    %2080 = vector.broadcast %2079 : vector<1x128xf32> to vector<8x128xf32>
    %2081 = arith.mulf %2080, %2045 : vector<8x128xf32>
    %c30_1023 = arith.constant 30 : index
    %c0_1024 = arith.constant 0 : index
    %2082 = vector.load %arg1[%c30_1023, %c0_1024] : memref<61x128xf32, #tpu.memory_space<vmem>>, vector<1x128xf32>
    %2083 = vector.broadcast %2082 : vector<1x128xf32> to vector<8x128xf32>
    %2084 = arith.mulf %2083, %2046 : vector<8x128xf32>
    %2085 = arith.addf %2081, %2084 : vector<8x128xf32>
    %2086 = arith.addf %2078, %2085 : vector<8x128xf32>
    %c4_1025 = arith.constant 4 : index
    %c0_1026 = arith.constant 0 : index
    %2087 = vector.load %arg1[%c4_1025, %c0_1026] : memref<61x128xf32, #tpu.memory_space<vmem>>, vector<1x128xf32>
    %2088 = vector.broadcast %2087 : vector<1x128xf32> to vector<8x128xf32>
    %2089 = arith.mulf %2088, %2038 : vector<8x128xf32>
    %c31_1027 = arith.constant 31 : index
    %c0_1028 = arith.constant 0 : index
    %2090 = vector.load %arg1[%c31_1027, %c0_1028] : memref<61x128xf32, #tpu.memory_space<vmem>>, vector<1x128xf32>
    %2091 = vector.broadcast %2090 : vector<1x128xf32> to vector<8x128xf32>
    %2092 = arith.mulf %2091, %2047 : vector<8x128xf32>
    %2093 = arith.addf %2089, %2092 : vector<8x128xf32>
    %2094 = arith.addf %2086, %2093 : vector<8x128xf32>
    %c5_1029 = arith.constant 5 : index
    %c0_1030 = arith.constant 0 : index
    %2095 = vector.load %arg1[%c5_1029, %c0_1030] : memref<61x128xf32, #tpu.memory_space<vmem>>, vector<1x128xf32>
    %2096 = vector.broadcast %2095 : vector<1x128xf32> to vector<8x128xf32>
    %2097 = arith.mulf %2096, %2048 : vector<8x128xf32>
    %c32_1031 = arith.constant 32 : index
    %c0_1032 = arith.constant 0 : index
    %2098 = vector.load %arg1[%c32_1031, %c0_1032] : memref<61x128xf32, #tpu.memory_space<vmem>>, vector<1x128xf32>
    %2099 = vector.broadcast %2098 : vector<1x128xf32> to vector<8x128xf32>
    %2100 = arith.mulf %2099, %2049 : vector<8x128xf32>
    %2101 = arith.addf %2097, %2100 : vector<8x128xf32>
    %2102 = arith.addf %2094, %2101 : vector<8x128xf32>
    %c6_1033 = arith.constant 6 : index
    %c0_1034 = arith.constant 0 : index
    %2103 = vector.load %arg1[%c6_1033, %c0_1034] : memref<61x128xf32, #tpu.memory_space<vmem>>, vector<1x128xf32>
    %2104 = vector.broadcast %2103 : vector<1x128xf32> to vector<8x128xf32>
    %2105 = arith.mulf %2104, %2050 : vector<8x128xf32>
    %c33_1035 = arith.constant 33 : index
    %c0_1036 = arith.constant 0 : index
    %2106 = vector.load %arg1[%c33_1035, %c0_1036] : memref<61x128xf32, #tpu.memory_space<vmem>>, vector<1x128xf32>
    %2107 = vector.broadcast %2106 : vector<1x128xf32> to vector<8x128xf32>
    %2108 = arith.mulf %2107, %2051 : vector<8x128xf32>
    %2109 = arith.addf %2105, %2108 : vector<8x128xf32>
    %2110 = arith.addf %2102, %2109 : vector<8x128xf32>
    %c7_1037 = arith.constant 7 : index
    %c0_1038 = arith.constant 0 : index
    %2111 = vector.load %arg1[%c7_1037, %c0_1038] : memref<61x128xf32, #tpu.memory_space<vmem>>, vector<1x128xf32>
    %2112 = vector.broadcast %2111 : vector<1x128xf32> to vector<8x128xf32>
    %2113 = arith.mulf %2112, %2052 : vector<8x128xf32>
    %c34_1039 = arith.constant 34 : index
    %c0_1040 = arith.constant 0 : index
    %2114 = vector.load %arg1[%c34_1039, %c0_1040] : memref<61x128xf32, #tpu.memory_space<vmem>>, vector<1x128xf32>
    %2115 = vector.broadcast %2114 : vector<1x128xf32> to vector<8x128xf32>
    %2116 = arith.mulf %2115, %2053 : vector<8x128xf32>
    %2117 = arith.addf %2113, %2116 : vector<8x128xf32>
    %2118 = arith.addf %2110, %2117 : vector<8x128xf32>
    %c8_1041 = arith.constant 8 : index
    %c0_1042 = arith.constant 0 : index
    %2119 = vector.load %arg1[%c8_1041, %c0_1042] : memref<61x128xf32, #tpu.memory_space<vmem>>, vector<1x128xf32>
    %2120 = vector.broadcast %2119 : vector<1x128xf32> to vector<8x128xf32>
    %2121 = arith.mulf %2120, %2054 : vector<8x128xf32>
    %c35_1043 = arith.constant 35 : index
    %c0_1044 = arith.constant 0 : index
    %2122 = vector.load %arg1[%c35_1043, %c0_1044] : memref<61x128xf32, #tpu.memory_space<vmem>>, vector<1x128xf32>
    %2123 = vector.broadcast %2122 : vector<1x128xf32> to vector<8x128xf32>
    %2124 = arith.mulf %2123, %2055 : vector<8x128xf32>
    %2125 = arith.addf %2121, %2124 : vector<8x128xf32>
    %2126 = arith.addf %2118, %2125 : vector<8x128xf32>
    %cst_1045 = arith.constant 0.000000e+00 : f32
    %2127 = vector.broadcast %cst_1045 : f32 to vector<1x128xf32>
    %2128 = vector.extract_strided_slice %2126 {offsets = [0, 0], sizes = [7, 128], strides = [1, 1]} : vector<8x128xf32> to vector<7x128xf32>
    %2129 = tpu.concatenate %2127, %2128 in 0 : vector<1x128xf32>, vector<7x128xf32> -> vector<8x128xf32>
    %c9_1046 = arith.constant 9 : index
    %c0_1047 = arith.constant 0 : index
    %2130 = vector.load %arg1[%c9_1046, %c0_1047] : memref<61x128xf32, #tpu.memory_space<vmem>>, vector<1x128xf32>
    %2131 = vector.broadcast %2130 : vector<1x128xf32> to vector<8x128xf32>
    %2132 = arith.mulf %2131, %2039 : vector<8x128xf32>
    %c36_1048 = arith.constant 36 : index
    %c0_1049 = arith.constant 0 : index
    %2133 = vector.load %arg1[%c36_1048, %c0_1049] : memref<61x128xf32, #tpu.memory_space<vmem>>, vector<1x128xf32>
    %2134 = vector.broadcast %2133 : vector<1x128xf32> to vector<8x128xf32>
    %2135 = arith.mulf %2134, %2040 : vector<8x128xf32>
    %2136 = arith.addf %2132, %2135 : vector<8x128xf32>
    %c10_1050 = arith.constant 10 : index
    %c0_1051 = arith.constant 0 : index
    %2137 = vector.load %arg1[%c10_1050, %c0_1051] : memref<61x128xf32, #tpu.memory_space<vmem>>, vector<1x128xf32>
    %2138 = vector.broadcast %2137 : vector<1x128xf32> to vector<8x128xf32>
    %2139 = arith.mulf %2138, %2041 : vector<8x128xf32>
    %c37_1052 = arith.constant 37 : index
    %c0_1053 = arith.constant 0 : index
    %2140 = vector.load %arg1[%c37_1052, %c0_1053] : memref<61x128xf32, #tpu.memory_space<vmem>>, vector<1x128xf32>
    %2141 = vector.broadcast %2140 : vector<1x128xf32> to vector<8x128xf32>
    %2142 = arith.mulf %2141, %2042 : vector<8x128xf32>
    %2143 = arith.addf %2139, %2142 : vector<8x128xf32>
    %2144 = arith.addf %2136, %2143 : vector<8x128xf32>
    %c11_1054 = arith.constant 11 : index
    %c0_1055 = arith.constant 0 : index
    %2145 = vector.load %arg1[%c11_1054, %c0_1055] : memref<61x128xf32, #tpu.memory_space<vmem>>, vector<1x128xf32>
    %2146 = vector.broadcast %2145 : vector<1x128xf32> to vector<8x128xf32>
    %2147 = arith.mulf %2146, %2043 : vector<8x128xf32>
    %c38_1056 = arith.constant 38 : index
    %c0_1057 = arith.constant 0 : index
    %2148 = vector.load %arg1[%c38_1056, %c0_1057] : memref<61x128xf32, #tpu.memory_space<vmem>>, vector<1x128xf32>
    %2149 = vector.broadcast %2148 : vector<1x128xf32> to vector<8x128xf32>
    %2150 = arith.mulf %2149, %2044 : vector<8x128xf32>
    %2151 = arith.addf %2147, %2150 : vector<8x128xf32>
    %2152 = arith.addf %2144, %2151 : vector<8x128xf32>
    %c12_1058 = arith.constant 12 : index
    %c0_1059 = arith.constant 0 : index
    %2153 = vector.load %arg1[%c12_1058, %c0_1059] : memref<61x128xf32, #tpu.memory_space<vmem>>, vector<1x128xf32>
    %2154 = vector.broadcast %2153 : vector<1x128xf32> to vector<8x128xf32>
    %2155 = arith.mulf %2154, %2045 : vector<8x128xf32>
    %c39_1060 = arith.constant 39 : index
    %c0_1061 = arith.constant 0 : index
    %2156 = vector.load %arg1[%c39_1060, %c0_1061] : memref<61x128xf32, #tpu.memory_space<vmem>>, vector<1x128xf32>
    %2157 = vector.broadcast %2156 : vector<1x128xf32> to vector<8x128xf32>
    %2158 = arith.mulf %2157, %2046 : vector<8x128xf32>
    %2159 = arith.addf %2155, %2158 : vector<8x128xf32>
    %2160 = arith.addf %2152, %2159 : vector<8x128xf32>
    %c13_1062 = arith.constant 13 : index
    %c0_1063 = arith.constant 0 : index
    %2161 = vector.load %arg1[%c13_1062, %c0_1063] : memref<61x128xf32, #tpu.memory_space<vmem>>, vector<1x128xf32>
    %2162 = vector.broadcast %2161 : vector<1x128xf32> to vector<8x128xf32>
    %2163 = arith.mulf %2162, %2038 : vector<8x128xf32>
    %c40_1064 = arith.constant 40 : index
    %c0_1065 = arith.constant 0 : index
    %2164 = vector.load %arg1[%c40_1064, %c0_1065] : memref<61x128xf32, #tpu.memory_space<vmem>>, vector<1x128xf32>
    %2165 = vector.broadcast %2164 : vector<1x128xf32> to vector<8x128xf32>
    %2166 = arith.mulf %2165, %2047 : vector<8x128xf32>
    %2167 = arith.addf %2163, %2166 : vector<8x128xf32>
    %2168 = arith.addf %2160, %2167 : vector<8x128xf32>
    %c14_1066 = arith.constant 14 : index
    %c0_1067 = arith.constant 0 : index
    %2169 = vector.load %arg1[%c14_1066, %c0_1067] : memref<61x128xf32, #tpu.memory_space<vmem>>, vector<1x128xf32>
    %2170 = vector.broadcast %2169 : vector<1x128xf32> to vector<8x128xf32>
    %2171 = arith.mulf %2170, %2048 : vector<8x128xf32>
    %c41_1068 = arith.constant 41 : index
    %c0_1069 = arith.constant 0 : index
    %2172 = vector.load %arg1[%c41_1068, %c0_1069] : memref<61x128xf32, #tpu.memory_space<vmem>>, vector<1x128xf32>
    %2173 = vector.broadcast %2172 : vector<1x128xf32> to vector<8x128xf32>
    %2174 = arith.mulf %2173, %2049 : vector<8x128xf32>
    %2175 = arith.addf %2171, %2174 : vector<8x128xf32>
    %2176 = arith.addf %2168, %2175 : vector<8x128xf32>
    %c15_1070 = arith.constant 15 : index
    %c0_1071 = arith.constant 0 : index
    %2177 = vector.load %arg1[%c15_1070, %c0_1071] : memref<61x128xf32, #tpu.memory_space<vmem>>, vector<1x128xf32>
    %2178 = vector.broadcast %2177 : vector<1x128xf32> to vector<8x128xf32>
    %2179 = arith.mulf %2178, %2050 : vector<8x128xf32>
    %c42_1072 = arith.constant 42 : index
    %c0_1073 = arith.constant 0 : index
    %2180 = vector.load %arg1[%c42_1072, %c0_1073] : memref<61x128xf32, #tpu.memory_space<vmem>>, vector<1x128xf32>
    %2181 = vector.broadcast %2180 : vector<1x128xf32> to vector<8x128xf32>
    %2182 = arith.mulf %2181, %2051 : vector<8x128xf32>
    %2183 = arith.addf %2179, %2182 : vector<8x128xf32>
    %2184 = arith.addf %2176, %2183 : vector<8x128xf32>
    %c16_1074 = arith.constant 16 : index
    %c0_1075 = arith.constant 0 : index
    %2185 = vector.load %arg1[%c16_1074, %c0_1075] : memref<61x128xf32, #tpu.memory_space<vmem>>, vector<1x128xf32>
    %2186 = vector.broadcast %2185 : vector<1x128xf32> to vector<8x128xf32>
    %2187 = arith.mulf %2186, %2052 : vector<8x128xf32>
    %c43_1076 = arith.constant 43 : index
    %c0_1077 = arith.constant 0 : index
    %2188 = vector.load %arg1[%c43_1076, %c0_1077] : memref<61x128xf32, #tpu.memory_space<vmem>>, vector<1x128xf32>
    %2189 = vector.broadcast %2188 : vector<1x128xf32> to vector<8x128xf32>
    %2190 = arith.mulf %2189, %2053 : vector<8x128xf32>
    %2191 = arith.addf %2187, %2190 : vector<8x128xf32>
    %2192 = arith.addf %2184, %2191 : vector<8x128xf32>
    %c17_1078 = arith.constant 17 : index
    %c0_1079 = arith.constant 0 : index
    %2193 = vector.load %arg1[%c17_1078, %c0_1079] : memref<61x128xf32, #tpu.memory_space<vmem>>, vector<1x128xf32>
    %2194 = vector.broadcast %2193 : vector<1x128xf32> to vector<8x128xf32>
    %2195 = arith.mulf %2194, %2054 : vector<8x128xf32>
    %c44_1080 = arith.constant 44 : index
    %c0_1081 = arith.constant 0 : index
    %2196 = vector.load %arg1[%c44_1080, %c0_1081] : memref<61x128xf32, #tpu.memory_space<vmem>>, vector<1x128xf32>
    %2197 = vector.broadcast %2196 : vector<1x128xf32> to vector<8x128xf32>
    %2198 = arith.mulf %2197, %2055 : vector<8x128xf32>
    %2199 = arith.addf %2195, %2198 : vector<8x128xf32>
    %2200 = arith.addf %2192, %2199 : vector<8x128xf32>
    %2201 = arith.addf %2129, %2200 : vector<8x128xf32>
    %c18_1082 = arith.constant 18 : index
    %c0_1083 = arith.constant 0 : index
    %2202 = vector.load %arg1[%c18_1082, %c0_1083] : memref<61x128xf32, #tpu.memory_space<vmem>>, vector<1x128xf32>
    %2203 = vector.broadcast %2202 : vector<1x128xf32> to vector<8x128xf32>
    %2204 = arith.mulf %2203, %2039 : vector<8x128xf32>
    %c45_1084 = arith.constant 45 : index
    %c0_1085 = arith.constant 0 : index
    %2205 = vector.load %arg1[%c45_1084, %c0_1085] : memref<61x128xf32, #tpu.memory_space<vmem>>, vector<1x128xf32>
    %2206 = vector.broadcast %2205 : vector<1x128xf32> to vector<8x128xf32>
    %2207 = arith.mulf %2206, %2040 : vector<8x128xf32>
    %2208 = arith.addf %2204, %2207 : vector<8x128xf32>
    %c19_1086 = arith.constant 19 : index
    %c0_1087 = arith.constant 0 : index
    %2209 = vector.load %arg1[%c19_1086, %c0_1087] : memref<61x128xf32, #tpu.memory_space<vmem>>, vector<1x128xf32>
    %2210 = vector.broadcast %2209 : vector<1x128xf32> to vector<8x128xf32>
    %2211 = arith.mulf %2210, %2041 : vector<8x128xf32>
    %c46_1088 = arith.constant 46 : index
    %c0_1089 = arith.constant 0 : index
    %2212 = vector.load %arg1[%c46_1088, %c0_1089] : memref<61x128xf32, #tpu.memory_space<vmem>>, vector<1x128xf32>
    %2213 = vector.broadcast %2212 : vector<1x128xf32> to vector<8x128xf32>
    %2214 = arith.mulf %2213, %2042 : vector<8x128xf32>
    %2215 = arith.addf %2211, %2214 : vector<8x128xf32>
    %2216 = arith.addf %2208, %2215 : vector<8x128xf32>
    %c20_1090 = arith.constant 20 : index
    %c0_1091 = arith.constant 0 : index
    %2217 = vector.load %arg1[%c20_1090, %c0_1091] : memref<61x128xf32, #tpu.memory_space<vmem>>, vector<1x128xf32>
    %2218 = vector.broadcast %2217 : vector<1x128xf32> to vector<8x128xf32>
    %2219 = arith.mulf %2218, %2043 : vector<8x128xf32>
    %c47_1092 = arith.constant 47 : index
    %c0_1093 = arith.constant 0 : index
    %2220 = vector.load %arg1[%c47_1092, %c0_1093] : memref<61x128xf32, #tpu.memory_space<vmem>>, vector<1x128xf32>
    %2221 = vector.broadcast %2220 : vector<1x128xf32> to vector<8x128xf32>
    %2222 = arith.mulf %2221, %2044 : vector<8x128xf32>
    %2223 = arith.addf %2219, %2222 : vector<8x128xf32>
    %2224 = arith.addf %2216, %2223 : vector<8x128xf32>
    %c21_1094 = arith.constant 21 : index
    %c0_1095 = arith.constant 0 : index
    %2225 = vector.load %arg1[%c21_1094, %c0_1095] : memref<61x128xf32, #tpu.memory_space<vmem>>, vector<1x128xf32>
    %2226 = vector.broadcast %2225 : vector<1x128xf32> to vector<8x128xf32>
    %2227 = arith.mulf %2226, %2045 : vector<8x128xf32>
    %c48_1096 = arith.constant 48 : index
    %c0_1097 = arith.constant 0 : index
    %2228 = vector.load %arg1[%c48_1096, %c0_1097] : memref<61x128xf32, #tpu.memory_space<vmem>>, vector<1x128xf32>
    %2229 = vector.broadcast %2228 : vector<1x128xf32> to vector<8x128xf32>
    %2230 = arith.mulf %2229, %2046 : vector<8x128xf32>
    %2231 = arith.addf %2227, %2230 : vector<8x128xf32>
    %2232 = arith.addf %2224, %2231 : vector<8x128xf32>
    %c22_1098 = arith.constant 22 : index
    %c0_1099 = arith.constant 0 : index
    %2233 = vector.load %arg1[%c22_1098, %c0_1099] : memref<61x128xf32, #tpu.memory_space<vmem>>, vector<1x128xf32>
    %2234 = vector.broadcast %2233 : vector<1x128xf32> to vector<8x128xf32>
    %2235 = arith.mulf %2234, %2038 : vector<8x128xf32>
    %c49_1100 = arith.constant 49 : index
    %c0_1101 = arith.constant 0 : index
    %2236 = vector.load %arg1[%c49_1100, %c0_1101] : memref<61x128xf32, #tpu.memory_space<vmem>>, vector<1x128xf32>
    %2237 = vector.broadcast %2236 : vector<1x128xf32> to vector<8x128xf32>
    %2238 = arith.mulf %2237, %2047 : vector<8x128xf32>
    %2239 = arith.addf %2235, %2238 : vector<8x128xf32>
    %2240 = arith.addf %2232, %2239 : vector<8x128xf32>
    %c23_1102 = arith.constant 23 : index
    %c0_1103 = arith.constant 0 : index
    %2241 = vector.load %arg1[%c23_1102, %c0_1103] : memref<61x128xf32, #tpu.memory_space<vmem>>, vector<1x128xf32>
    %2242 = vector.broadcast %2241 : vector<1x128xf32> to vector<8x128xf32>
    %2243 = arith.mulf %2242, %2048 : vector<8x128xf32>
    %c50_1104 = arith.constant 50 : index
    %c0_1105 = arith.constant 0 : index
    %2244 = vector.load %arg1[%c50_1104, %c0_1105] : memref<61x128xf32, #tpu.memory_space<vmem>>, vector<1x128xf32>
    %2245 = vector.broadcast %2244 : vector<1x128xf32> to vector<8x128xf32>
    %2246 = arith.mulf %2245, %2049 : vector<8x128xf32>
    %2247 = arith.addf %2243, %2246 : vector<8x128xf32>
    %2248 = arith.addf %2240, %2247 : vector<8x128xf32>
    %c24_1106 = arith.constant 24 : index
    %c0_1107 = arith.constant 0 : index
    %2249 = vector.load %arg1[%c24_1106, %c0_1107] : memref<61x128xf32, #tpu.memory_space<vmem>>, vector<1x128xf32>
    %2250 = vector.broadcast %2249 : vector<1x128xf32> to vector<8x128xf32>
    %2251 = arith.mulf %2250, %2050 : vector<8x128xf32>
    %c51_1108 = arith.constant 51 : index
    %c0_1109 = arith.constant 0 : index
    %2252 = vector.load %arg1[%c51_1108, %c0_1109] : memref<61x128xf32, #tpu.memory_space<vmem>>, vector<1x128xf32>
    %2253 = vector.broadcast %2252 : vector<1x128xf32> to vector<8x128xf32>
    %2254 = arith.mulf %2253, %2051 : vector<8x128xf32>
    %2255 = arith.addf %2251, %2254 : vector<8x128xf32>
    %2256 = arith.addf %2248, %2255 : vector<8x128xf32>
    %c25_1110 = arith.constant 25 : index
    %c0_1111 = arith.constant 0 : index
    %2257 = vector.load %arg1[%c25_1110, %c0_1111] : memref<61x128xf32, #tpu.memory_space<vmem>>, vector<1x128xf32>
    %2258 = vector.broadcast %2257 : vector<1x128xf32> to vector<8x128xf32>
    %2259 = arith.mulf %2258, %2052 : vector<8x128xf32>
    %c52_1112 = arith.constant 52 : index
    %c0_1113 = arith.constant 0 : index
    %2260 = vector.load %arg1[%c52_1112, %c0_1113] : memref<61x128xf32, #tpu.memory_space<vmem>>, vector<1x128xf32>
    %2261 = vector.broadcast %2260 : vector<1x128xf32> to vector<8x128xf32>
    %2262 = arith.mulf %2261, %2053 : vector<8x128xf32>
    %2263 = arith.addf %2259, %2262 : vector<8x128xf32>
    %2264 = arith.addf %2256, %2263 : vector<8x128xf32>
    %c26_1114 = arith.constant 26 : index
    %c0_1115 = arith.constant 0 : index
    %2265 = vector.load %arg1[%c26_1114, %c0_1115] : memref<61x128xf32, #tpu.memory_space<vmem>>, vector<1x128xf32>
    %2266 = vector.broadcast %2265 : vector<1x128xf32> to vector<8x128xf32>
    %2267 = arith.mulf %2266, %2054 : vector<8x128xf32>
    %c53_1116 = arith.constant 53 : index
    %c0_1117 = arith.constant 0 : index
    %2268 = vector.load %arg1[%c53_1116, %c0_1117] : memref<61x128xf32, #tpu.memory_space<vmem>>, vector<1x128xf32>
    %2269 = vector.broadcast %2268 : vector<1x128xf32> to vector<8x128xf32>
    %2270 = arith.mulf %2269, %2055 : vector<8x128xf32>
    %2271 = arith.addf %2267, %2270 : vector<8x128xf32>
    %2272 = arith.addf %2264, %2271 : vector<8x128xf32>
    %cst_1118 = arith.constant 0.000000e+00 : f32
    %2273 = vector.broadcast %cst_1118 : f32 to vector<1x128xf32>
    %2274 = vector.extract_strided_slice %2272 {offsets = [1, 0], sizes = [7, 128], strides = [1, 1]} : vector<8x128xf32> to vector<7x128xf32>
    %2275 = tpu.concatenate %2274, %2273 in 0 : vector<7x128xf32>, vector<1x128xf32> -> vector<8x128xf32>
    %2276 = arith.addf %2201, %2275 : vector<8x128xf32>
    %c54_1119 = arith.constant 54 : index
    %c0_1120 = arith.constant 0 : index
    %2277 = vector.load %arg1[%c54_1119, %c0_1120] : memref<61x128xf32, #tpu.memory_space<vmem>>, vector<1x128xf32>
    %2278 = vector.broadcast %2277 : vector<1x128xf32> to vector<8x128xf32>
    %2279 = arith.addf %2276, %2278 : vector<8x128xf32>
    %2280 = arith.subf %2279, %2038 : vector<8x128xf32>
    %2281 = arith.mulf %2035, %2280 : vector<8x128xf32>
    %2282 = arith.addf %2038, %2281 : vector<8x128xf32>
    %c9_i32_1121 = arith.constant 9 : i32
    %2283 = tpu.dynamic_rotate %2282 by %c9_i32_1121 dim 1 : vector<8x128xf32>, i32 -> vector<8x128xf32>
    %c73_i32_1122 = arith.constant 73 : i32
    %2284 = tpu.dynamic_rotate %2282 by %c73_i32_1122 dim 1 : vector<8x128xf32>, i32 -> vector<8x128xf32>
    %c8_i32_1123 = arith.constant 8 : i32
    %2285 = tpu.dynamic_rotate %2282 by %c8_i32_1123 dim 1 : vector<8x128xf32>, i32 -> vector<8x128xf32>
    %c72_i32_1124 = arith.constant 72 : i32
    %2286 = tpu.dynamic_rotate %2282 by %c72_i32_1124 dim 1 : vector<8x128xf32>, i32 -> vector<8x128xf32>
    %c7_i32_1125 = arith.constant 7 : i32
    %2287 = tpu.dynamic_rotate %2282 by %c7_i32_1125 dim 1 : vector<8x128xf32>, i32 -> vector<8x128xf32>
    %c71_i32_1126 = arith.constant 71 : i32
    %2288 = tpu.dynamic_rotate %2282 by %c71_i32_1126 dim 1 : vector<8x128xf32>, i32 -> vector<8x128xf32>
    %c1_i32_1127 = arith.constant 1 : i32
    %2289 = tpu.dynamic_rotate %2282 by %c1_i32_1127 dim 1 : vector<8x128xf32>, i32 -> vector<8x128xf32>
    %c65_i32_1128 = arith.constant 65 : i32
    %2290 = tpu.dynamic_rotate %2282 by %c65_i32_1128 dim 1 : vector<8x128xf32>, i32 -> vector<8x128xf32>
    %c64_i32_1129 = arith.constant 64 : i32
    %2291 = tpu.dynamic_rotate %2282 by %c64_i32_1129 dim 1 : vector<8x128xf32>, i32 -> vector<8x128xf32>
    %c127_i32_1130 = arith.constant 127 : i32
    %2292 = tpu.dynamic_rotate %2282 by %c127_i32_1130 dim 1 : vector<8x128xf32>, i32 -> vector<8x128xf32>
    %c63_i32_1131 = arith.constant 63 : i32
    %2293 = tpu.dynamic_rotate %2282 by %c63_i32_1131 dim 1 : vector<8x128xf32>, i32 -> vector<8x128xf32>
    %c121_i32_1132 = arith.constant 121 : i32
    %2294 = tpu.dynamic_rotate %2282 by %c121_i32_1132 dim 1 : vector<8x128xf32>, i32 -> vector<8x128xf32>
    %c57_i32_1133 = arith.constant 57 : i32
    %2295 = tpu.dynamic_rotate %2282 by %c57_i32_1133 dim 1 : vector<8x128xf32>, i32 -> vector<8x128xf32>
    %c120_i32_1134 = arith.constant 120 : i32
    %2296 = tpu.dynamic_rotate %2282 by %c120_i32_1134 dim 1 : vector<8x128xf32>, i32 -> vector<8x128xf32>
    %c56_i32_1135 = arith.constant 56 : i32
    %2297 = tpu.dynamic_rotate %2282 by %c56_i32_1135 dim 1 : vector<8x128xf32>, i32 -> vector<8x128xf32>
    %c119_i32_1136 = arith.constant 119 : i32
    %2298 = tpu.dynamic_rotate %2282 by %c119_i32_1136 dim 1 : vector<8x128xf32>, i32 -> vector<8x128xf32>
    %c55_i32_1137 = arith.constant 55 : i32
    %2299 = tpu.dynamic_rotate %2282 by %c55_i32_1137 dim 1 : vector<8x128xf32>, i32 -> vector<8x128xf32>
    %c0_1138 = arith.constant 0 : index
    %c0_1139 = arith.constant 0 : index
    %2300 = vector.load %arg1[%c0_1138, %c0_1139] : memref<61x128xf32, #tpu.memory_space<vmem>>, vector<1x128xf32>
    %2301 = vector.broadcast %2300 : vector<1x128xf32> to vector<8x128xf32>
    %2302 = arith.mulf %2301, %2283 : vector<8x128xf32>
    %c27_1140 = arith.constant 27 : index
    %c0_1141 = arith.constant 0 : index
    %2303 = vector.load %arg1[%c27_1140, %c0_1141] : memref<61x128xf32, #tpu.memory_space<vmem>>, vector<1x128xf32>
    %2304 = vector.broadcast %2303 : vector<1x128xf32> to vector<8x128xf32>
    %2305 = arith.mulf %2304, %2284 : vector<8x128xf32>
    %2306 = arith.addf %2302, %2305 : vector<8x128xf32>
    %c1_1142 = arith.constant 1 : index
    %c0_1143 = arith.constant 0 : index
    %2307 = vector.load %arg1[%c1_1142, %c0_1143] : memref<61x128xf32, #tpu.memory_space<vmem>>, vector<1x128xf32>
    %2308 = vector.broadcast %2307 : vector<1x128xf32> to vector<8x128xf32>
    %2309 = arith.mulf %2308, %2285 : vector<8x128xf32>
    %c28_1144 = arith.constant 28 : index
    %c0_1145 = arith.constant 0 : index
    %2310 = vector.load %arg1[%c28_1144, %c0_1145] : memref<61x128xf32, #tpu.memory_space<vmem>>, vector<1x128xf32>
    %2311 = vector.broadcast %2310 : vector<1x128xf32> to vector<8x128xf32>
    %2312 = arith.mulf %2311, %2286 : vector<8x128xf32>
    %2313 = arith.addf %2309, %2312 : vector<8x128xf32>
    %2314 = arith.addf %2306, %2313 : vector<8x128xf32>
    %c2_1146 = arith.constant 2 : index
    %c0_1147 = arith.constant 0 : index
    %2315 = vector.load %arg1[%c2_1146, %c0_1147] : memref<61x128xf32, #tpu.memory_space<vmem>>, vector<1x128xf32>
    %2316 = vector.broadcast %2315 : vector<1x128xf32> to vector<8x128xf32>
    %2317 = arith.mulf %2316, %2287 : vector<8x128xf32>
    %c29_1148 = arith.constant 29 : index
    %c0_1149 = arith.constant 0 : index
    %2318 = vector.load %arg1[%c29_1148, %c0_1149] : memref<61x128xf32, #tpu.memory_space<vmem>>, vector<1x128xf32>
    %2319 = vector.broadcast %2318 : vector<1x128xf32> to vector<8x128xf32>
    %2320 = arith.mulf %2319, %2288 : vector<8x128xf32>
    %2321 = arith.addf %2317, %2320 : vector<8x128xf32>
    %2322 = arith.addf %2314, %2321 : vector<8x128xf32>
    %c3_1150 = arith.constant 3 : index
    %c0_1151 = arith.constant 0 : index
    %2323 = vector.load %arg1[%c3_1150, %c0_1151] : memref<61x128xf32, #tpu.memory_space<vmem>>, vector<1x128xf32>
    %2324 = vector.broadcast %2323 : vector<1x128xf32> to vector<8x128xf32>
    %2325 = arith.mulf %2324, %2289 : vector<8x128xf32>
    %c30_1152 = arith.constant 30 : index
    %c0_1153 = arith.constant 0 : index
    %2326 = vector.load %arg1[%c30_1152, %c0_1153] : memref<61x128xf32, #tpu.memory_space<vmem>>, vector<1x128xf32>
    %2327 = vector.broadcast %2326 : vector<1x128xf32> to vector<8x128xf32>
    %2328 = arith.mulf %2327, %2290 : vector<8x128xf32>
    %2329 = arith.addf %2325, %2328 : vector<8x128xf32>
    %2330 = arith.addf %2322, %2329 : vector<8x128xf32>
    %c4_1154 = arith.constant 4 : index
    %c0_1155 = arith.constant 0 : index
    %2331 = vector.load %arg1[%c4_1154, %c0_1155] : memref<61x128xf32, #tpu.memory_space<vmem>>, vector<1x128xf32>
    %2332 = vector.broadcast %2331 : vector<1x128xf32> to vector<8x128xf32>
    %2333 = arith.mulf %2332, %2282 : vector<8x128xf32>
    %c31_1156 = arith.constant 31 : index
    %c0_1157 = arith.constant 0 : index
    %2334 = vector.load %arg1[%c31_1156, %c0_1157] : memref<61x128xf32, #tpu.memory_space<vmem>>, vector<1x128xf32>
    %2335 = vector.broadcast %2334 : vector<1x128xf32> to vector<8x128xf32>
    %2336 = arith.mulf %2335, %2291 : vector<8x128xf32>
    %2337 = arith.addf %2333, %2336 : vector<8x128xf32>
    %2338 = arith.addf %2330, %2337 : vector<8x128xf32>
    %c5_1158 = arith.constant 5 : index
    %c0_1159 = arith.constant 0 : index
    %2339 = vector.load %arg1[%c5_1158, %c0_1159] : memref<61x128xf32, #tpu.memory_space<vmem>>, vector<1x128xf32>
    %2340 = vector.broadcast %2339 : vector<1x128xf32> to vector<8x128xf32>
    %2341 = arith.mulf %2340, %2292 : vector<8x128xf32>
    %c32_1160 = arith.constant 32 : index
    %c0_1161 = arith.constant 0 : index
    %2342 = vector.load %arg1[%c32_1160, %c0_1161] : memref<61x128xf32, #tpu.memory_space<vmem>>, vector<1x128xf32>
    %2343 = vector.broadcast %2342 : vector<1x128xf32> to vector<8x128xf32>
    %2344 = arith.mulf %2343, %2293 : vector<8x128xf32>
    %2345 = arith.addf %2341, %2344 : vector<8x128xf32>
    %2346 = arith.addf %2338, %2345 : vector<8x128xf32>
    %c6_1162 = arith.constant 6 : index
    %c0_1163 = arith.constant 0 : index
    %2347 = vector.load %arg1[%c6_1162, %c0_1163] : memref<61x128xf32, #tpu.memory_space<vmem>>, vector<1x128xf32>
    %2348 = vector.broadcast %2347 : vector<1x128xf32> to vector<8x128xf32>
    %2349 = arith.mulf %2348, %2294 : vector<8x128xf32>
    %c33_1164 = arith.constant 33 : index
    %c0_1165 = arith.constant 0 : index
    %2350 = vector.load %arg1[%c33_1164, %c0_1165] : memref<61x128xf32, #tpu.memory_space<vmem>>, vector<1x128xf32>
    %2351 = vector.broadcast %2350 : vector<1x128xf32> to vector<8x128xf32>
    %2352 = arith.mulf %2351, %2295 : vector<8x128xf32>
    %2353 = arith.addf %2349, %2352 : vector<8x128xf32>
    %2354 = arith.addf %2346, %2353 : vector<8x128xf32>
    %c7_1166 = arith.constant 7 : index
    %c0_1167 = arith.constant 0 : index
    %2355 = vector.load %arg1[%c7_1166, %c0_1167] : memref<61x128xf32, #tpu.memory_space<vmem>>, vector<1x128xf32>
    %2356 = vector.broadcast %2355 : vector<1x128xf32> to vector<8x128xf32>
    %2357 = arith.mulf %2356, %2296 : vector<8x128xf32>
    %c34_1168 = arith.constant 34 : index
    %c0_1169 = arith.constant 0 : index
    %2358 = vector.load %arg1[%c34_1168, %c0_1169] : memref<61x128xf32, #tpu.memory_space<vmem>>, vector<1x128xf32>
    %2359 = vector.broadcast %2358 : vector<1x128xf32> to vector<8x128xf32>
    %2360 = arith.mulf %2359, %2297 : vector<8x128xf32>
    %2361 = arith.addf %2357, %2360 : vector<8x128xf32>
    %2362 = arith.addf %2354, %2361 : vector<8x128xf32>
    %c8_1170 = arith.constant 8 : index
    %c0_1171 = arith.constant 0 : index
    %2363 = vector.load %arg1[%c8_1170, %c0_1171] : memref<61x128xf32, #tpu.memory_space<vmem>>, vector<1x128xf32>
    %2364 = vector.broadcast %2363 : vector<1x128xf32> to vector<8x128xf32>
    %2365 = arith.mulf %2364, %2298 : vector<8x128xf32>
    %c35_1172 = arith.constant 35 : index
    %c0_1173 = arith.constant 0 : index
    %2366 = vector.load %arg1[%c35_1172, %c0_1173] : memref<61x128xf32, #tpu.memory_space<vmem>>, vector<1x128xf32>
    %2367 = vector.broadcast %2366 : vector<1x128xf32> to vector<8x128xf32>
    %2368 = arith.mulf %2367, %2299 : vector<8x128xf32>
    %2369 = arith.addf %2365, %2368 : vector<8x128xf32>
    %2370 = arith.addf %2362, %2369 : vector<8x128xf32>
    %cst_1174 = arith.constant 0.000000e+00 : f32
    %2371 = vector.broadcast %cst_1174 : f32 to vector<1x128xf32>
    %2372 = vector.extract_strided_slice %2370 {offsets = [0, 0], sizes = [7, 128], strides = [1, 1]} : vector<8x128xf32> to vector<7x128xf32>
    %2373 = tpu.concatenate %2371, %2372 in 0 : vector<1x128xf32>, vector<7x128xf32> -> vector<8x128xf32>
    %c9_1175 = arith.constant 9 : index
    %c0_1176 = arith.constant 0 : index
    %2374 = vector.load %arg1[%c9_1175, %c0_1176] : memref<61x128xf32, #tpu.memory_space<vmem>>, vector<1x128xf32>
    %2375 = vector.broadcast %2374 : vector<1x128xf32> to vector<8x128xf32>
    %2376 = arith.mulf %2375, %2283 : vector<8x128xf32>
    %c36_1177 = arith.constant 36 : index
    %c0_1178 = arith.constant 0 : index
    %2377 = vector.load %arg1[%c36_1177, %c0_1178] : memref<61x128xf32, #tpu.memory_space<vmem>>, vector<1x128xf32>
    %2378 = vector.broadcast %2377 : vector<1x128xf32> to vector<8x128xf32>
    %2379 = arith.mulf %2378, %2284 : vector<8x128xf32>
    %2380 = arith.addf %2376, %2379 : vector<8x128xf32>
    %c10_1179 = arith.constant 10 : index
    %c0_1180 = arith.constant 0 : index
    %2381 = vector.load %arg1[%c10_1179, %c0_1180] : memref<61x128xf32, #tpu.memory_space<vmem>>, vector<1x128xf32>
    %2382 = vector.broadcast %2381 : vector<1x128xf32> to vector<8x128xf32>
    %2383 = arith.mulf %2382, %2285 : vector<8x128xf32>
    %c37_1181 = arith.constant 37 : index
    %c0_1182 = arith.constant 0 : index
    %2384 = vector.load %arg1[%c37_1181, %c0_1182] : memref<61x128xf32, #tpu.memory_space<vmem>>, vector<1x128xf32>
    %2385 = vector.broadcast %2384 : vector<1x128xf32> to vector<8x128xf32>
    %2386 = arith.mulf %2385, %2286 : vector<8x128xf32>
    %2387 = arith.addf %2383, %2386 : vector<8x128xf32>
    %2388 = arith.addf %2380, %2387 : vector<8x128xf32>
    %c11_1183 = arith.constant 11 : index
    %c0_1184 = arith.constant 0 : index
    %2389 = vector.load %arg1[%c11_1183, %c0_1184] : memref<61x128xf32, #tpu.memory_space<vmem>>, vector<1x128xf32>
    %2390 = vector.broadcast %2389 : vector<1x128xf32> to vector<8x128xf32>
    %2391 = arith.mulf %2390, %2287 : vector<8x128xf32>
    %c38_1185 = arith.constant 38 : index
    %c0_1186 = arith.constant 0 : index
    %2392 = vector.load %arg1[%c38_1185, %c0_1186] : memref<61x128xf32, #tpu.memory_space<vmem>>, vector<1x128xf32>
    %2393 = vector.broadcast %2392 : vector<1x128xf32> to vector<8x128xf32>
    %2394 = arith.mulf %2393, %2288 : vector<8x128xf32>
    %2395 = arith.addf %2391, %2394 : vector<8x128xf32>
    %2396 = arith.addf %2388, %2395 : vector<8x128xf32>
    %c12_1187 = arith.constant 12 : index
    %c0_1188 = arith.constant 0 : index
    %2397 = vector.load %arg1[%c12_1187, %c0_1188] : memref<61x128xf32, #tpu.memory_space<vmem>>, vector<1x128xf32>
    %2398 = vector.broadcast %2397 : vector<1x128xf32> to vector<8x128xf32>
    %2399 = arith.mulf %2398, %2289 : vector<8x128xf32>
    %c39_1189 = arith.constant 39 : index
    %c0_1190 = arith.constant 0 : index
    %2400 = vector.load %arg1[%c39_1189, %c0_1190] : memref<61x128xf32, #tpu.memory_space<vmem>>, vector<1x128xf32>
    %2401 = vector.broadcast %2400 : vector<1x128xf32> to vector<8x128xf32>
    %2402 = arith.mulf %2401, %2290 : vector<8x128xf32>
    %2403 = arith.addf %2399, %2402 : vector<8x128xf32>
    %2404 = arith.addf %2396, %2403 : vector<8x128xf32>
    %c13_1191 = arith.constant 13 : index
    %c0_1192 = arith.constant 0 : index
    %2405 = vector.load %arg1[%c13_1191, %c0_1192] : memref<61x128xf32, #tpu.memory_space<vmem>>, vector<1x128xf32>
    %2406 = vector.broadcast %2405 : vector<1x128xf32> to vector<8x128xf32>
    %2407 = arith.mulf %2406, %2282 : vector<8x128xf32>
    %c40_1193 = arith.constant 40 : index
    %c0_1194 = arith.constant 0 : index
    %2408 = vector.load %arg1[%c40_1193, %c0_1194] : memref<61x128xf32, #tpu.memory_space<vmem>>, vector<1x128xf32>
    %2409 = vector.broadcast %2408 : vector<1x128xf32> to vector<8x128xf32>
    %2410 = arith.mulf %2409, %2291 : vector<8x128xf32>
    %2411 = arith.addf %2407, %2410 : vector<8x128xf32>
    %2412 = arith.addf %2404, %2411 : vector<8x128xf32>
    %c14_1195 = arith.constant 14 : index
    %c0_1196 = arith.constant 0 : index
    %2413 = vector.load %arg1[%c14_1195, %c0_1196] : memref<61x128xf32, #tpu.memory_space<vmem>>, vector<1x128xf32>
    %2414 = vector.broadcast %2413 : vector<1x128xf32> to vector<8x128xf32>
    %2415 = arith.mulf %2414, %2292 : vector<8x128xf32>
    %c41_1197 = arith.constant 41 : index
    %c0_1198 = arith.constant 0 : index
    %2416 = vector.load %arg1[%c41_1197, %c0_1198] : memref<61x128xf32, #tpu.memory_space<vmem>>, vector<1x128xf32>
    %2417 = vector.broadcast %2416 : vector<1x128xf32> to vector<8x128xf32>
    %2418 = arith.mulf %2417, %2293 : vector<8x128xf32>
    %2419 = arith.addf %2415, %2418 : vector<8x128xf32>
    %2420 = arith.addf %2412, %2419 : vector<8x128xf32>
    %c15_1199 = arith.constant 15 : index
    %c0_1200 = arith.constant 0 : index
    %2421 = vector.load %arg1[%c15_1199, %c0_1200] : memref<61x128xf32, #tpu.memory_space<vmem>>, vector<1x128xf32>
    %2422 = vector.broadcast %2421 : vector<1x128xf32> to vector<8x128xf32>
    %2423 = arith.mulf %2422, %2294 : vector<8x128xf32>
    %c42_1201 = arith.constant 42 : index
    %c0_1202 = arith.constant 0 : index
    %2424 = vector.load %arg1[%c42_1201, %c0_1202] : memref<61x128xf32, #tpu.memory_space<vmem>>, vector<1x128xf32>
    %2425 = vector.broadcast %2424 : vector<1x128xf32> to vector<8x128xf32>
    %2426 = arith.mulf %2425, %2295 : vector<8x128xf32>
    %2427 = arith.addf %2423, %2426 : vector<8x128xf32>
    %2428 = arith.addf %2420, %2427 : vector<8x128xf32>
    %c16_1203 = arith.constant 16 : index
    %c0_1204 = arith.constant 0 : index
    %2429 = vector.load %arg1[%c16_1203, %c0_1204] : memref<61x128xf32, #tpu.memory_space<vmem>>, vector<1x128xf32>
    %2430 = vector.broadcast %2429 : vector<1x128xf32> to vector<8x128xf32>
    %2431 = arith.mulf %2430, %2296 : vector<8x128xf32>
    %c43_1205 = arith.constant 43 : index
    %c0_1206 = arith.constant 0 : index
    %2432 = vector.load %arg1[%c43_1205, %c0_1206] : memref<61x128xf32, #tpu.memory_space<vmem>>, vector<1x128xf32>
    %2433 = vector.broadcast %2432 : vector<1x128xf32> to vector<8x128xf32>
    %2434 = arith.mulf %2433, %2297 : vector<8x128xf32>
    %2435 = arith.addf %2431, %2434 : vector<8x128xf32>
    %2436 = arith.addf %2428, %2435 : vector<8x128xf32>
    %c17_1207 = arith.constant 17 : index
    %c0_1208 = arith.constant 0 : index
    %2437 = vector.load %arg1[%c17_1207, %c0_1208] : memref<61x128xf32, #tpu.memory_space<vmem>>, vector<1x128xf32>
    %2438 = vector.broadcast %2437 : vector<1x128xf32> to vector<8x128xf32>
    %2439 = arith.mulf %2438, %2298 : vector<8x128xf32>
    %c44_1209 = arith.constant 44 : index
    %c0_1210 = arith.constant 0 : index
    %2440 = vector.load %arg1[%c44_1209, %c0_1210] : memref<61x128xf32, #tpu.memory_space<vmem>>, vector<1x128xf32>
    %2441 = vector.broadcast %2440 : vector<1x128xf32> to vector<8x128xf32>
    %2442 = arith.mulf %2441, %2299 : vector<8x128xf32>
    %2443 = arith.addf %2439, %2442 : vector<8x128xf32>
    %2444 = arith.addf %2436, %2443 : vector<8x128xf32>
    %2445 = arith.addf %2373, %2444 : vector<8x128xf32>
    %c18_1211 = arith.constant 18 : index
    %c0_1212 = arith.constant 0 : index
    %2446 = vector.load %arg1[%c18_1211, %c0_1212] : memref<61x128xf32, #tpu.memory_space<vmem>>, vector<1x128xf32>
    %2447 = vector.broadcast %2446 : vector<1x128xf32> to vector<8x128xf32>
    %2448 = arith.mulf %2447, %2283 : vector<8x128xf32>
    %c45_1213 = arith.constant 45 : index
    %c0_1214 = arith.constant 0 : index
    %2449 = vector.load %arg1[%c45_1213, %c0_1214] : memref<61x128xf32, #tpu.memory_space<vmem>>, vector<1x128xf32>
    %2450 = vector.broadcast %2449 : vector<1x128xf32> to vector<8x128xf32>
    %2451 = arith.mulf %2450, %2284 : vector<8x128xf32>
    %2452 = arith.addf %2448, %2451 : vector<8x128xf32>
    %c19_1215 = arith.constant 19 : index
    %c0_1216 = arith.constant 0 : index
    %2453 = vector.load %arg1[%c19_1215, %c0_1216] : memref<61x128xf32, #tpu.memory_space<vmem>>, vector<1x128xf32>
    %2454 = vector.broadcast %2453 : vector<1x128xf32> to vector<8x128xf32>
    %2455 = arith.mulf %2454, %2285 : vector<8x128xf32>
    %c46_1217 = arith.constant 46 : index
    %c0_1218 = arith.constant 0 : index
    %2456 = vector.load %arg1[%c46_1217, %c0_1218] : memref<61x128xf32, #tpu.memory_space<vmem>>, vector<1x128xf32>
    %2457 = vector.broadcast %2456 : vector<1x128xf32> to vector<8x128xf32>
    %2458 = arith.mulf %2457, %2286 : vector<8x128xf32>
    %2459 = arith.addf %2455, %2458 : vector<8x128xf32>
    %2460 = arith.addf %2452, %2459 : vector<8x128xf32>
    %c20_1219 = arith.constant 20 : index
    %c0_1220 = arith.constant 0 : index
    %2461 = vector.load %arg1[%c20_1219, %c0_1220] : memref<61x128xf32, #tpu.memory_space<vmem>>, vector<1x128xf32>
    %2462 = vector.broadcast %2461 : vector<1x128xf32> to vector<8x128xf32>
    %2463 = arith.mulf %2462, %2287 : vector<8x128xf32>
    %c47_1221 = arith.constant 47 : index
    %c0_1222 = arith.constant 0 : index
    %2464 = vector.load %arg1[%c47_1221, %c0_1222] : memref<61x128xf32, #tpu.memory_space<vmem>>, vector<1x128xf32>
    %2465 = vector.broadcast %2464 : vector<1x128xf32> to vector<8x128xf32>
    %2466 = arith.mulf %2465, %2288 : vector<8x128xf32>
    %2467 = arith.addf %2463, %2466 : vector<8x128xf32>
    %2468 = arith.addf %2460, %2467 : vector<8x128xf32>
    %c21_1223 = arith.constant 21 : index
    %c0_1224 = arith.constant 0 : index
    %2469 = vector.load %arg1[%c21_1223, %c0_1224] : memref<61x128xf32, #tpu.memory_space<vmem>>, vector<1x128xf32>
    %2470 = vector.broadcast %2469 : vector<1x128xf32> to vector<8x128xf32>
    %2471 = arith.mulf %2470, %2289 : vector<8x128xf32>
    %c48_1225 = arith.constant 48 : index
    %c0_1226 = arith.constant 0 : index
    %2472 = vector.load %arg1[%c48_1225, %c0_1226] : memref<61x128xf32, #tpu.memory_space<vmem>>, vector<1x128xf32>
    %2473 = vector.broadcast %2472 : vector<1x128xf32> to vector<8x128xf32>
    %2474 = arith.mulf %2473, %2290 : vector<8x128xf32>
    %2475 = arith.addf %2471, %2474 : vector<8x128xf32>
    %2476 = arith.addf %2468, %2475 : vector<8x128xf32>
    %c22_1227 = arith.constant 22 : index
    %c0_1228 = arith.constant 0 : index
    %2477 = vector.load %arg1[%c22_1227, %c0_1228] : memref<61x128xf32, #tpu.memory_space<vmem>>, vector<1x128xf32>
    %2478 = vector.broadcast %2477 : vector<1x128xf32> to vector<8x128xf32>
    %2479 = arith.mulf %2478, %2282 : vector<8x128xf32>
    %c49_1229 = arith.constant 49 : index
    %c0_1230 = arith.constant 0 : index
    %2480 = vector.load %arg1[%c49_1229, %c0_1230] : memref<61x128xf32, #tpu.memory_space<vmem>>, vector<1x128xf32>
    %2481 = vector.broadcast %2480 : vector<1x128xf32> to vector<8x128xf32>
    %2482 = arith.mulf %2481, %2291 : vector<8x128xf32>
    %2483 = arith.addf %2479, %2482 : vector<8x128xf32>
    %2484 = arith.addf %2476, %2483 : vector<8x128xf32>
    %c23_1231 = arith.constant 23 : index
    %c0_1232 = arith.constant 0 : index
    %2485 = vector.load %arg1[%c23_1231, %c0_1232] : memref<61x128xf32, #tpu.memory_space<vmem>>, vector<1x128xf32>
    %2486 = vector.broadcast %2485 : vector<1x128xf32> to vector<8x128xf32>
    %2487 = arith.mulf %2486, %2292 : vector<8x128xf32>
    %c50_1233 = arith.constant 50 : index
    %c0_1234 = arith.constant 0 : index
    %2488 = vector.load %arg1[%c50_1233, %c0_1234] : memref<61x128xf32, #tpu.memory_space<vmem>>, vector<1x128xf32>
    %2489 = vector.broadcast %2488 : vector<1x128xf32> to vector<8x128xf32>
    %2490 = arith.mulf %2489, %2293 : vector<8x128xf32>
    %2491 = arith.addf %2487, %2490 : vector<8x128xf32>
    %2492 = arith.addf %2484, %2491 : vector<8x128xf32>
    %c24_1235 = arith.constant 24 : index
    %c0_1236 = arith.constant 0 : index
    %2493 = vector.load %arg1[%c24_1235, %c0_1236] : memref<61x128xf32, #tpu.memory_space<vmem>>, vector<1x128xf32>
    %2494 = vector.broadcast %2493 : vector<1x128xf32> to vector<8x128xf32>
    %2495 = arith.mulf %2494, %2294 : vector<8x128xf32>
    %c51_1237 = arith.constant 51 : index
    %c0_1238 = arith.constant 0 : index
    %2496 = vector.load %arg1[%c51_1237, %c0_1238] : memref<61x128xf32, #tpu.memory_space<vmem>>, vector<1x128xf32>
    %2497 = vector.broadcast %2496 : vector<1x128xf32> to vector<8x128xf32>
    %2498 = arith.mulf %2497, %2295 : vector<8x128xf32>
    %2499 = arith.addf %2495, %2498 : vector<8x128xf32>
    %2500 = arith.addf %2492, %2499 : vector<8x128xf32>
    %c25_1239 = arith.constant 25 : index
    %c0_1240 = arith.constant 0 : index
    %2501 = vector.load %arg1[%c25_1239, %c0_1240] : memref<61x128xf32, #tpu.memory_space<vmem>>, vector<1x128xf32>
    %2502 = vector.broadcast %2501 : vector<1x128xf32> to vector<8x128xf32>
    %2503 = arith.mulf %2502, %2296 : vector<8x128xf32>
    %c52_1241 = arith.constant 52 : index
    %c0_1242 = arith.constant 0 : index
    %2504 = vector.load %arg1[%c52_1241, %c0_1242] : memref<61x128xf32, #tpu.memory_space<vmem>>, vector<1x128xf32>
    %2505 = vector.broadcast %2504 : vector<1x128xf32> to vector<8x128xf32>
    %2506 = arith.mulf %2505, %2297 : vector<8x128xf32>
    %2507 = arith.addf %2503, %2506 : vector<8x128xf32>
    %2508 = arith.addf %2500, %2507 : vector<8x128xf32>
    %c26_1243 = arith.constant 26 : index
    %c0_1244 = arith.constant 0 : index
    %2509 = vector.load %arg1[%c26_1243, %c0_1244] : memref<61x128xf32, #tpu.memory_space<vmem>>, vector<1x128xf32>
    %2510 = vector.broadcast %2509 : vector<1x128xf32> to vector<8x128xf32>
    %2511 = arith.mulf %2510, %2298 : vector<8x128xf32>
    %c53_1245 = arith.constant 53 : index
    %c0_1246 = arith.constant 0 : index
    %2512 = vector.load %arg1[%c53_1245, %c0_1246] : memref<61x128xf32, #tpu.memory_space<vmem>>, vector<1x128xf32>
    %2513 = vector.broadcast %2512 : vector<1x128xf32> to vector<8x128xf32>
    %2514 = arith.mulf %2513, %2299 : vector<8x128xf32>
    %2515 = arith.addf %2511, %2514 : vector<8x128xf32>
    %2516 = arith.addf %2508, %2515 : vector<8x128xf32>
    %cst_1247 = arith.constant 0.000000e+00 : f32
    %2517 = vector.broadcast %cst_1247 : f32 to vector<1x128xf32>
    %2518 = vector.extract_strided_slice %2516 {offsets = [1, 0], sizes = [7, 128], strides = [1, 1]} : vector<8x128xf32> to vector<7x128xf32>
    %2519 = tpu.concatenate %2518, %2517 in 0 : vector<7x128xf32>, vector<1x128xf32> -> vector<8x128xf32>
    %2520 = arith.addf %2445, %2519 : vector<8x128xf32>
    %c54_1248 = arith.constant 54 : index
    %c0_1249 = arith.constant 0 : index
    %2521 = vector.load %arg1[%c54_1248, %c0_1249] : memref<61x128xf32, #tpu.memory_space<vmem>>, vector<1x128xf32>
    %2522 = vector.broadcast %2521 : vector<1x128xf32> to vector<8x128xf32>
    %2523 = arith.addf %2520, %2522 : vector<8x128xf32>
    %c64_i32_1250 = arith.constant 64 : i32
    %2524 = tpu.dynamic_rotate %2523 by %c64_i32_1250 dim 1 : vector<8x128xf32>, i32 -> vector<8x128xf32>
    %2525 = arith.subf %2523, %2524 : vector<8x128xf32>
    %cst_1251 = arith.constant 5.000000e-01 : f32
    %2526 = vector.broadcast %cst_1251 : f32 to vector<8x128xf32>
    %2527 = arith.mulf %2526, %2525 : vector<8x128xf32>
    %2528 = math.tanh %2527 : vector<8x128xf32>
    %cst_1252 = arith.constant 1.000000e+00 : f32
    %2529 = vector.broadcast %cst_1252 : f32 to vector<8x128xf32>
    %2530 = arith.addf %2528, %2529 : vector<8x128xf32>
    %cst_1253 = arith.constant 5.000000e-01 : f32
    %2531 = vector.broadcast %cst_1253 : f32 to vector<8x128xf32>
    %2532 = arith.mulf %2531, %2530 : vector<8x128xf32>
    %c9_i32_1254 = arith.constant 9 : i32
    %2533 = tpu.dynamic_rotate %2532 by %c9_i32_1254 dim 1 : vector<8x128xf32>, i32 -> vector<8x128xf32>
    %c73_i32_1255 = arith.constant 73 : i32
    %2534 = tpu.dynamic_rotate %2532 by %c73_i32_1255 dim 1 : vector<8x128xf32>, i32 -> vector<8x128xf32>
    %c8_i32_1256 = arith.constant 8 : i32
    %2535 = tpu.dynamic_rotate %2532 by %c8_i32_1256 dim 1 : vector<8x128xf32>, i32 -> vector<8x128xf32>
    %c72_i32_1257 = arith.constant 72 : i32
    %2536 = tpu.dynamic_rotate %2532 by %c72_i32_1257 dim 1 : vector<8x128xf32>, i32 -> vector<8x128xf32>
    %c7_i32_1258 = arith.constant 7 : i32
    %2537 = tpu.dynamic_rotate %2532 by %c7_i32_1258 dim 1 : vector<8x128xf32>, i32 -> vector<8x128xf32>
    %c71_i32_1259 = arith.constant 71 : i32
    %2538 = tpu.dynamic_rotate %2532 by %c71_i32_1259 dim 1 : vector<8x128xf32>, i32 -> vector<8x128xf32>
    %c1_i32_1260 = arith.constant 1 : i32
    %2539 = tpu.dynamic_rotate %2532 by %c1_i32_1260 dim 1 : vector<8x128xf32>, i32 -> vector<8x128xf32>
    %c65_i32_1261 = arith.constant 65 : i32
    %2540 = tpu.dynamic_rotate %2532 by %c65_i32_1261 dim 1 : vector<8x128xf32>, i32 -> vector<8x128xf32>
    %c64_i32_1262 = arith.constant 64 : i32
    %2541 = tpu.dynamic_rotate %2532 by %c64_i32_1262 dim 1 : vector<8x128xf32>, i32 -> vector<8x128xf32>
    %c127_i32_1263 = arith.constant 127 : i32
    %2542 = tpu.dynamic_rotate %2532 by %c127_i32_1263 dim 1 : vector<8x128xf32>, i32 -> vector<8x128xf32>
    %c63_i32_1264 = arith.constant 63 : i32
    %2543 = tpu.dynamic_rotate %2532 by %c63_i32_1264 dim 1 : vector<8x128xf32>, i32 -> vector<8x128xf32>
    %c121_i32_1265 = arith.constant 121 : i32
    %2544 = tpu.dynamic_rotate %2532 by %c121_i32_1265 dim 1 : vector<8x128xf32>, i32 -> vector<8x128xf32>
    %c57_i32_1266 = arith.constant 57 : i32
    %2545 = tpu.dynamic_rotate %2532 by %c57_i32_1266 dim 1 : vector<8x128xf32>, i32 -> vector<8x128xf32>
    %c120_i32_1267 = arith.constant 120 : i32
    %2546 = tpu.dynamic_rotate %2532 by %c120_i32_1267 dim 1 : vector<8x128xf32>, i32 -> vector<8x128xf32>
    %c56_i32_1268 = arith.constant 56 : i32
    %2547 = tpu.dynamic_rotate %2532 by %c56_i32_1268 dim 1 : vector<8x128xf32>, i32 -> vector<8x128xf32>
    %c119_i32_1269 = arith.constant 119 : i32
    %2548 = tpu.dynamic_rotate %2532 by %c119_i32_1269 dim 1 : vector<8x128xf32>, i32 -> vector<8x128xf32>
    %c55_i32_1270 = arith.constant 55 : i32
    %2549 = tpu.dynamic_rotate %2532 by %c55_i32_1270 dim 1 : vector<8x128xf32>, i32 -> vector<8x128xf32>
    %c0_1271 = arith.constant 0 : index
    %c0_1272 = arith.constant 0 : index
    %2550 = vector.load %arg1[%c0_1271, %c0_1272] : memref<61x128xf32, #tpu.memory_space<vmem>>, vector<1x128xf32>
    %2551 = vector.broadcast %2550 : vector<1x128xf32> to vector<8x128xf32>
    %2552 = arith.mulf %2551, %2533 : vector<8x128xf32>
    %c27_1273 = arith.constant 27 : index
    %c0_1274 = arith.constant 0 : index
    %2553 = vector.load %arg1[%c27_1273, %c0_1274] : memref<61x128xf32, #tpu.memory_space<vmem>>, vector<1x128xf32>
    %2554 = vector.broadcast %2553 : vector<1x128xf32> to vector<8x128xf32>
    %2555 = arith.mulf %2554, %2534 : vector<8x128xf32>
    %2556 = arith.addf %2552, %2555 : vector<8x128xf32>
    %c1_1275 = arith.constant 1 : index
    %c0_1276 = arith.constant 0 : index
    %2557 = vector.load %arg1[%c1_1275, %c0_1276] : memref<61x128xf32, #tpu.memory_space<vmem>>, vector<1x128xf32>
    %2558 = vector.broadcast %2557 : vector<1x128xf32> to vector<8x128xf32>
    %2559 = arith.mulf %2558, %2535 : vector<8x128xf32>
    %c28_1277 = arith.constant 28 : index
    %c0_1278 = arith.constant 0 : index
    %2560 = vector.load %arg1[%c28_1277, %c0_1278] : memref<61x128xf32, #tpu.memory_space<vmem>>, vector<1x128xf32>
    %2561 = vector.broadcast %2560 : vector<1x128xf32> to vector<8x128xf32>
    %2562 = arith.mulf %2561, %2536 : vector<8x128xf32>
    %2563 = arith.addf %2559, %2562 : vector<8x128xf32>
    %2564 = arith.addf %2556, %2563 : vector<8x128xf32>
    %c2_1279 = arith.constant 2 : index
    %c0_1280 = arith.constant 0 : index
    %2565 = vector.load %arg1[%c2_1279, %c0_1280] : memref<61x128xf32, #tpu.memory_space<vmem>>, vector<1x128xf32>
    %2566 = vector.broadcast %2565 : vector<1x128xf32> to vector<8x128xf32>
    %2567 = arith.mulf %2566, %2537 : vector<8x128xf32>
    %c29_1281 = arith.constant 29 : index
    %c0_1282 = arith.constant 0 : index
    %2568 = vector.load %arg1[%c29_1281, %c0_1282] : memref<61x128xf32, #tpu.memory_space<vmem>>, vector<1x128xf32>
    %2569 = vector.broadcast %2568 : vector<1x128xf32> to vector<8x128xf32>
    %2570 = arith.mulf %2569, %2538 : vector<8x128xf32>
    %2571 = arith.addf %2567, %2570 : vector<8x128xf32>
    %2572 = arith.addf %2564, %2571 : vector<8x128xf32>
    %c3_1283 = arith.constant 3 : index
    %c0_1284 = arith.constant 0 : index
    %2573 = vector.load %arg1[%c3_1283, %c0_1284] : memref<61x128xf32, #tpu.memory_space<vmem>>, vector<1x128xf32>
    %2574 = vector.broadcast %2573 : vector<1x128xf32> to vector<8x128xf32>
    %2575 = arith.mulf %2574, %2539 : vector<8x128xf32>
    %c30_1285 = arith.constant 30 : index
    %c0_1286 = arith.constant 0 : index
    %2576 = vector.load %arg1[%c30_1285, %c0_1286] : memref<61x128xf32, #tpu.memory_space<vmem>>, vector<1x128xf32>
    %2577 = vector.broadcast %2576 : vector<1x128xf32> to vector<8x128xf32>
    %2578 = arith.mulf %2577, %2540 : vector<8x128xf32>
    %2579 = arith.addf %2575, %2578 : vector<8x128xf32>
    %2580 = arith.addf %2572, %2579 : vector<8x128xf32>
    %c4_1287 = arith.constant 4 : index
    %c0_1288 = arith.constant 0 : index
    %2581 = vector.load %arg1[%c4_1287, %c0_1288] : memref<61x128xf32, #tpu.memory_space<vmem>>, vector<1x128xf32>
    %2582 = vector.broadcast %2581 : vector<1x128xf32> to vector<8x128xf32>
    %2583 = arith.mulf %2582, %2532 : vector<8x128xf32>
    %c31_1289 = arith.constant 31 : index
    %c0_1290 = arith.constant 0 : index
    %2584 = vector.load %arg1[%c31_1289, %c0_1290] : memref<61x128xf32, #tpu.memory_space<vmem>>, vector<1x128xf32>
    %2585 = vector.broadcast %2584 : vector<1x128xf32> to vector<8x128xf32>
    %2586 = arith.mulf %2585, %2541 : vector<8x128xf32>
    %2587 = arith.addf %2583, %2586 : vector<8x128xf32>
    %2588 = arith.addf %2580, %2587 : vector<8x128xf32>
    %c5_1291 = arith.constant 5 : index
    %c0_1292 = arith.constant 0 : index
    %2589 = vector.load %arg1[%c5_1291, %c0_1292] : memref<61x128xf32, #tpu.memory_space<vmem>>, vector<1x128xf32>
    %2590 = vector.broadcast %2589 : vector<1x128xf32> to vector<8x128xf32>
    %2591 = arith.mulf %2590, %2542 : vector<8x128xf32>
    %c32_1293 = arith.constant 32 : index
    %c0_1294 = arith.constant 0 : index
    %2592 = vector.load %arg1[%c32_1293, %c0_1294] : memref<61x128xf32, #tpu.memory_space<vmem>>, vector<1x128xf32>
    %2593 = vector.broadcast %2592 : vector<1x128xf32> to vector<8x128xf32>
    %2594 = arith.mulf %2593, %2543 : vector<8x128xf32>
    %2595 = arith.addf %2591, %2594 : vector<8x128xf32>
    %2596 = arith.addf %2588, %2595 : vector<8x128xf32>
    %c6_1295 = arith.constant 6 : index
    %c0_1296 = arith.constant 0 : index
    %2597 = vector.load %arg1[%c6_1295, %c0_1296] : memref<61x128xf32, #tpu.memory_space<vmem>>, vector<1x128xf32>
    %2598 = vector.broadcast %2597 : vector<1x128xf32> to vector<8x128xf32>
    %2599 = arith.mulf %2598, %2544 : vector<8x128xf32>
    %c33_1297 = arith.constant 33 : index
    %c0_1298 = arith.constant 0 : index
    %2600 = vector.load %arg1[%c33_1297, %c0_1298] : memref<61x128xf32, #tpu.memory_space<vmem>>, vector<1x128xf32>
    %2601 = vector.broadcast %2600 : vector<1x128xf32> to vector<8x128xf32>
    %2602 = arith.mulf %2601, %2545 : vector<8x128xf32>
    %2603 = arith.addf %2599, %2602 : vector<8x128xf32>
    %2604 = arith.addf %2596, %2603 : vector<8x128xf32>
    %c7_1299 = arith.constant 7 : index
    %c0_1300 = arith.constant 0 : index
    %2605 = vector.load %arg1[%c7_1299, %c0_1300] : memref<61x128xf32, #tpu.memory_space<vmem>>, vector<1x128xf32>
    %2606 = vector.broadcast %2605 : vector<1x128xf32> to vector<8x128xf32>
    %2607 = arith.mulf %2606, %2546 : vector<8x128xf32>
    %c34_1301 = arith.constant 34 : index
    %c0_1302 = arith.constant 0 : index
    %2608 = vector.load %arg1[%c34_1301, %c0_1302] : memref<61x128xf32, #tpu.memory_space<vmem>>, vector<1x128xf32>
    %2609 = vector.broadcast %2608 : vector<1x128xf32> to vector<8x128xf32>
    %2610 = arith.mulf %2609, %2547 : vector<8x128xf32>
    %2611 = arith.addf %2607, %2610 : vector<8x128xf32>
    %2612 = arith.addf %2604, %2611 : vector<8x128xf32>
    %c8_1303 = arith.constant 8 : index
    %c0_1304 = arith.constant 0 : index
    %2613 = vector.load %arg1[%c8_1303, %c0_1304] : memref<61x128xf32, #tpu.memory_space<vmem>>, vector<1x128xf32>
    %2614 = vector.broadcast %2613 : vector<1x128xf32> to vector<8x128xf32>
    %2615 = arith.mulf %2614, %2548 : vector<8x128xf32>
    %c35_1305 = arith.constant 35 : index
    %c0_1306 = arith.constant 0 : index
    %2616 = vector.load %arg1[%c35_1305, %c0_1306] : memref<61x128xf32, #tpu.memory_space<vmem>>, vector<1x128xf32>
    %2617 = vector.broadcast %2616 : vector<1x128xf32> to vector<8x128xf32>
    %2618 = arith.mulf %2617, %2549 : vector<8x128xf32>
    %2619 = arith.addf %2615, %2618 : vector<8x128xf32>
    %2620 = arith.addf %2612, %2619 : vector<8x128xf32>
    %cst_1307 = arith.constant 0.000000e+00 : f32
    %2621 = vector.broadcast %cst_1307 : f32 to vector<1x128xf32>
    %2622 = vector.extract_strided_slice %2620 {offsets = [0, 0], sizes = [7, 128], strides = [1, 1]} : vector<8x128xf32> to vector<7x128xf32>
    %2623 = tpu.concatenate %2621, %2622 in 0 : vector<1x128xf32>, vector<7x128xf32> -> vector<8x128xf32>
    %c9_1308 = arith.constant 9 : index
    %c0_1309 = arith.constant 0 : index
    %2624 = vector.load %arg1[%c9_1308, %c0_1309] : memref<61x128xf32, #tpu.memory_space<vmem>>, vector<1x128xf32>
    %2625 = vector.broadcast %2624 : vector<1x128xf32> to vector<8x128xf32>
    %2626 = arith.mulf %2625, %2533 : vector<8x128xf32>
    %c36_1310 = arith.constant 36 : index
    %c0_1311 = arith.constant 0 : index
    %2627 = vector.load %arg1[%c36_1310, %c0_1311] : memref<61x128xf32, #tpu.memory_space<vmem>>, vector<1x128xf32>
    %2628 = vector.broadcast %2627 : vector<1x128xf32> to vector<8x128xf32>
    %2629 = arith.mulf %2628, %2534 : vector<8x128xf32>
    %2630 = arith.addf %2626, %2629 : vector<8x128xf32>
    %c10_1312 = arith.constant 10 : index
    %c0_1313 = arith.constant 0 : index
    %2631 = vector.load %arg1[%c10_1312, %c0_1313] : memref<61x128xf32, #tpu.memory_space<vmem>>, vector<1x128xf32>
    %2632 = vector.broadcast %2631 : vector<1x128xf32> to vector<8x128xf32>
    %2633 = arith.mulf %2632, %2535 : vector<8x128xf32>
    %c37_1314 = arith.constant 37 : index
    %c0_1315 = arith.constant 0 : index
    %2634 = vector.load %arg1[%c37_1314, %c0_1315] : memref<61x128xf32, #tpu.memory_space<vmem>>, vector<1x128xf32>
    %2635 = vector.broadcast %2634 : vector<1x128xf32> to vector<8x128xf32>
    %2636 = arith.mulf %2635, %2536 : vector<8x128xf32>
    %2637 = arith.addf %2633, %2636 : vector<8x128xf32>
    %2638 = arith.addf %2630, %2637 : vector<8x128xf32>
    %c11_1316 = arith.constant 11 : index
    %c0_1317 = arith.constant 0 : index
    %2639 = vector.load %arg1[%c11_1316, %c0_1317] : memref<61x128xf32, #tpu.memory_space<vmem>>, vector<1x128xf32>
    %2640 = vector.broadcast %2639 : vector<1x128xf32> to vector<8x128xf32>
    %2641 = arith.mulf %2640, %2537 : vector<8x128xf32>
    %c38_1318 = arith.constant 38 : index
    %c0_1319 = arith.constant 0 : index
    %2642 = vector.load %arg1[%c38_1318, %c0_1319] : memref<61x128xf32, #tpu.memory_space<vmem>>, vector<1x128xf32>
    %2643 = vector.broadcast %2642 : vector<1x128xf32> to vector<8x128xf32>
    %2644 = arith.mulf %2643, %2538 : vector<8x128xf32>
    %2645 = arith.addf %2641, %2644 : vector<8x128xf32>
    %2646 = arith.addf %2638, %2645 : vector<8x128xf32>
    %c12_1320 = arith.constant 12 : index
    %c0_1321 = arith.constant 0 : index
    %2647 = vector.load %arg1[%c12_1320, %c0_1321] : memref<61x128xf32, #tpu.memory_space<vmem>>, vector<1x128xf32>
    %2648 = vector.broadcast %2647 : vector<1x128xf32> to vector<8x128xf32>
    %2649 = arith.mulf %2648, %2539 : vector<8x128xf32>
    %c39_1322 = arith.constant 39 : index
    %c0_1323 = arith.constant 0 : index
    %2650 = vector.load %arg1[%c39_1322, %c0_1323] : memref<61x128xf32, #tpu.memory_space<vmem>>, vector<1x128xf32>
    %2651 = vector.broadcast %2650 : vector<1x128xf32> to vector<8x128xf32>
    %2652 = arith.mulf %2651, %2540 : vector<8x128xf32>
    %2653 = arith.addf %2649, %2652 : vector<8x128xf32>
    %2654 = arith.addf %2646, %2653 : vector<8x128xf32>
    %c13_1324 = arith.constant 13 : index
    %c0_1325 = arith.constant 0 : index
    %2655 = vector.load %arg1[%c13_1324, %c0_1325] : memref<61x128xf32, #tpu.memory_space<vmem>>, vector<1x128xf32>
    %2656 = vector.broadcast %2655 : vector<1x128xf32> to vector<8x128xf32>
    %2657 = arith.mulf %2656, %2532 : vector<8x128xf32>
    %c40_1326 = arith.constant 40 : index
    %c0_1327 = arith.constant 0 : index
    %2658 = vector.load %arg1[%c40_1326, %c0_1327] : memref<61x128xf32, #tpu.memory_space<vmem>>, vector<1x128xf32>
    %2659 = vector.broadcast %2658 : vector<1x128xf32> to vector<8x128xf32>
    %2660 = arith.mulf %2659, %2541 : vector<8x128xf32>
    %2661 = arith.addf %2657, %2660 : vector<8x128xf32>
    %2662 = arith.addf %2654, %2661 : vector<8x128xf32>
    %c14_1328 = arith.constant 14 : index
    %c0_1329 = arith.constant 0 : index
    %2663 = vector.load %arg1[%c14_1328, %c0_1329] : memref<61x128xf32, #tpu.memory_space<vmem>>, vector<1x128xf32>
    %2664 = vector.broadcast %2663 : vector<1x128xf32> to vector<8x128xf32>
    %2665 = arith.mulf %2664, %2542 : vector<8x128xf32>
    %c41_1330 = arith.constant 41 : index
    %c0_1331 = arith.constant 0 : index
    %2666 = vector.load %arg1[%c41_1330, %c0_1331] : memref<61x128xf32, #tpu.memory_space<vmem>>, vector<1x128xf32>
    %2667 = vector.broadcast %2666 : vector<1x128xf32> to vector<8x128xf32>
    %2668 = arith.mulf %2667, %2543 : vector<8x128xf32>
    %2669 = arith.addf %2665, %2668 : vector<8x128xf32>
    %2670 = arith.addf %2662, %2669 : vector<8x128xf32>
    %c15_1332 = arith.constant 15 : index
    %c0_1333 = arith.constant 0 : index
    %2671 = vector.load %arg1[%c15_1332, %c0_1333] : memref<61x128xf32, #tpu.memory_space<vmem>>, vector<1x128xf32>
    %2672 = vector.broadcast %2671 : vector<1x128xf32> to vector<8x128xf32>
    %2673 = arith.mulf %2672, %2544 : vector<8x128xf32>
    %c42_1334 = arith.constant 42 : index
    %c0_1335 = arith.constant 0 : index
    %2674 = vector.load %arg1[%c42_1334, %c0_1335] : memref<61x128xf32, #tpu.memory_space<vmem>>, vector<1x128xf32>
    %2675 = vector.broadcast %2674 : vector<1x128xf32> to vector<8x128xf32>
    %2676 = arith.mulf %2675, %2545 : vector<8x128xf32>
    %2677 = arith.addf %2673, %2676 : vector<8x128xf32>
    %2678 = arith.addf %2670, %2677 : vector<8x128xf32>
    %c16_1336 = arith.constant 16 : index
    %c0_1337 = arith.constant 0 : index
    %2679 = vector.load %arg1[%c16_1336, %c0_1337] : memref<61x128xf32, #tpu.memory_space<vmem>>, vector<1x128xf32>
    %2680 = vector.broadcast %2679 : vector<1x128xf32> to vector<8x128xf32>
    %2681 = arith.mulf %2680, %2546 : vector<8x128xf32>
    %c43_1338 = arith.constant 43 : index
    %c0_1339 = arith.constant 0 : index
    %2682 = vector.load %arg1[%c43_1338, %c0_1339] : memref<61x128xf32, #tpu.memory_space<vmem>>, vector<1x128xf32>
    %2683 = vector.broadcast %2682 : vector<1x128xf32> to vector<8x128xf32>
    %2684 = arith.mulf %2683, %2547 : vector<8x128xf32>
    %2685 = arith.addf %2681, %2684 : vector<8x128xf32>
    %2686 = arith.addf %2678, %2685 : vector<8x128xf32>
    %c17_1340 = arith.constant 17 : index
    %c0_1341 = arith.constant 0 : index
    %2687 = vector.load %arg1[%c17_1340, %c0_1341] : memref<61x128xf32, #tpu.memory_space<vmem>>, vector<1x128xf32>
    %2688 = vector.broadcast %2687 : vector<1x128xf32> to vector<8x128xf32>
    %2689 = arith.mulf %2688, %2548 : vector<8x128xf32>
    %c44_1342 = arith.constant 44 : index
    %c0_1343 = arith.constant 0 : index
    %2690 = vector.load %arg1[%c44_1342, %c0_1343] : memref<61x128xf32, #tpu.memory_space<vmem>>, vector<1x128xf32>
    %2691 = vector.broadcast %2690 : vector<1x128xf32> to vector<8x128xf32>
    %2692 = arith.mulf %2691, %2549 : vector<8x128xf32>
    %2693 = arith.addf %2689, %2692 : vector<8x128xf32>
    %2694 = arith.addf %2686, %2693 : vector<8x128xf32>
    %2695 = arith.addf %2623, %2694 : vector<8x128xf32>
    %c18_1344 = arith.constant 18 : index
    %c0_1345 = arith.constant 0 : index
    %2696 = vector.load %arg1[%c18_1344, %c0_1345] : memref<61x128xf32, #tpu.memory_space<vmem>>, vector<1x128xf32>
    %2697 = vector.broadcast %2696 : vector<1x128xf32> to vector<8x128xf32>
    %2698 = arith.mulf %2697, %2533 : vector<8x128xf32>
    %c45_1346 = arith.constant 45 : index
    %c0_1347 = arith.constant 0 : index
    %2699 = vector.load %arg1[%c45_1346, %c0_1347] : memref<61x128xf32, #tpu.memory_space<vmem>>, vector<1x128xf32>
    %2700 = vector.broadcast %2699 : vector<1x128xf32> to vector<8x128xf32>
    %2701 = arith.mulf %2700, %2534 : vector<8x128xf32>
    %2702 = arith.addf %2698, %2701 : vector<8x128xf32>
    %c19_1348 = arith.constant 19 : index
    %c0_1349 = arith.constant 0 : index
    %2703 = vector.load %arg1[%c19_1348, %c0_1349] : memref<61x128xf32, #tpu.memory_space<vmem>>, vector<1x128xf32>
    %2704 = vector.broadcast %2703 : vector<1x128xf32> to vector<8x128xf32>
    %2705 = arith.mulf %2704, %2535 : vector<8x128xf32>
    %c46_1350 = arith.constant 46 : index
    %c0_1351 = arith.constant 0 : index
    %2706 = vector.load %arg1[%c46_1350, %c0_1351] : memref<61x128xf32, #tpu.memory_space<vmem>>, vector<1x128xf32>
    %2707 = vector.broadcast %2706 : vector<1x128xf32> to vector<8x128xf32>
    %2708 = arith.mulf %2707, %2536 : vector<8x128xf32>
    %2709 = arith.addf %2705, %2708 : vector<8x128xf32>
    %2710 = arith.addf %2702, %2709 : vector<8x128xf32>
    %c20_1352 = arith.constant 20 : index
    %c0_1353 = arith.constant 0 : index
    %2711 = vector.load %arg1[%c20_1352, %c0_1353] : memref<61x128xf32, #tpu.memory_space<vmem>>, vector<1x128xf32>
    %2712 = vector.broadcast %2711 : vector<1x128xf32> to vector<8x128xf32>
    %2713 = arith.mulf %2712, %2537 : vector<8x128xf32>
    %c47_1354 = arith.constant 47 : index
    %c0_1355 = arith.constant 0 : index
    %2714 = vector.load %arg1[%c47_1354, %c0_1355] : memref<61x128xf32, #tpu.memory_space<vmem>>, vector<1x128xf32>
    %2715 = vector.broadcast %2714 : vector<1x128xf32> to vector<8x128xf32>
    %2716 = arith.mulf %2715, %2538 : vector<8x128xf32>
    %2717 = arith.addf %2713, %2716 : vector<8x128xf32>
    %2718 = arith.addf %2710, %2717 : vector<8x128xf32>
    %c21_1356 = arith.constant 21 : index
    %c0_1357 = arith.constant 0 : index
    %2719 = vector.load %arg1[%c21_1356, %c0_1357] : memref<61x128xf32, #tpu.memory_space<vmem>>, vector<1x128xf32>
    %2720 = vector.broadcast %2719 : vector<1x128xf32> to vector<8x128xf32>
    %2721 = arith.mulf %2720, %2539 : vector<8x128xf32>
    %c48_1358 = arith.constant 48 : index
    %c0_1359 = arith.constant 0 : index
    %2722 = vector.load %arg1[%c48_1358, %c0_1359] : memref<61x128xf32, #tpu.memory_space<vmem>>, vector<1x128xf32>
    %2723 = vector.broadcast %2722 : vector<1x128xf32> to vector<8x128xf32>
    %2724 = arith.mulf %2723, %2540 : vector<8x128xf32>
    %2725 = arith.addf %2721, %2724 : vector<8x128xf32>
    %2726 = arith.addf %2718, %2725 : vector<8x128xf32>
    %c22_1360 = arith.constant 22 : index
    %c0_1361 = arith.constant 0 : index
    %2727 = vector.load %arg1[%c22_1360, %c0_1361] : memref<61x128xf32, #tpu.memory_space<vmem>>, vector<1x128xf32>
    %2728 = vector.broadcast %2727 : vector<1x128xf32> to vector<8x128xf32>
    %2729 = arith.mulf %2728, %2532 : vector<8x128xf32>
    %c49_1362 = arith.constant 49 : index
    %c0_1363 = arith.constant 0 : index
    %2730 = vector.load %arg1[%c49_1362, %c0_1363] : memref<61x128xf32, #tpu.memory_space<vmem>>, vector<1x128xf32>
    %2731 = vector.broadcast %2730 : vector<1x128xf32> to vector<8x128xf32>
    %2732 = arith.mulf %2731, %2541 : vector<8x128xf32>
    %2733 = arith.addf %2729, %2732 : vector<8x128xf32>
    %2734 = arith.addf %2726, %2733 : vector<8x128xf32>
    %c23_1364 = arith.constant 23 : index
    %c0_1365 = arith.constant 0 : index
    %2735 = vector.load %arg1[%c23_1364, %c0_1365] : memref<61x128xf32, #tpu.memory_space<vmem>>, vector<1x128xf32>
    %2736 = vector.broadcast %2735 : vector<1x128xf32> to vector<8x128xf32>
    %2737 = arith.mulf %2736, %2542 : vector<8x128xf32>
    %c50_1366 = arith.constant 50 : index
    %c0_1367 = arith.constant 0 : index
    %2738 = vector.load %arg1[%c50_1366, %c0_1367] : memref<61x128xf32, #tpu.memory_space<vmem>>, vector<1x128xf32>
    %2739 = vector.broadcast %2738 : vector<1x128xf32> to vector<8x128xf32>
    %2740 = arith.mulf %2739, %2543 : vector<8x128xf32>
    %2741 = arith.addf %2737, %2740 : vector<8x128xf32>
    %2742 = arith.addf %2734, %2741 : vector<8x128xf32>
    %c24_1368 = arith.constant 24 : index
    %c0_1369 = arith.constant 0 : index
    %2743 = vector.load %arg1[%c24_1368, %c0_1369] : memref<61x128xf32, #tpu.memory_space<vmem>>, vector<1x128xf32>
    %2744 = vector.broadcast %2743 : vector<1x128xf32> to vector<8x128xf32>
    %2745 = arith.mulf %2744, %2544 : vector<8x128xf32>
    %c51_1370 = arith.constant 51 : index
    %c0_1371 = arith.constant 0 : index
    %2746 = vector.load %arg1[%c51_1370, %c0_1371] : memref<61x128xf32, #tpu.memory_space<vmem>>, vector<1x128xf32>
    %2747 = vector.broadcast %2746 : vector<1x128xf32> to vector<8x128xf32>
    %2748 = arith.mulf %2747, %2545 : vector<8x128xf32>
    %2749 = arith.addf %2745, %2748 : vector<8x128xf32>
    %2750 = arith.addf %2742, %2749 : vector<8x128xf32>
    %c25_1372 = arith.constant 25 : index
    %c0_1373 = arith.constant 0 : index
    %2751 = vector.load %arg1[%c25_1372, %c0_1373] : memref<61x128xf32, #tpu.memory_space<vmem>>, vector<1x128xf32>
    %2752 = vector.broadcast %2751 : vector<1x128xf32> to vector<8x128xf32>
    %2753 = arith.mulf %2752, %2546 : vector<8x128xf32>
    %c52_1374 = arith.constant 52 : index
    %c0_1375 = arith.constant 0 : index
    %2754 = vector.load %arg1[%c52_1374, %c0_1375] : memref<61x128xf32, #tpu.memory_space<vmem>>, vector<1x128xf32>
    %2755 = vector.broadcast %2754 : vector<1x128xf32> to vector<8x128xf32>
    %2756 = arith.mulf %2755, %2547 : vector<8x128xf32>
    %2757 = arith.addf %2753, %2756 : vector<8x128xf32>
    %2758 = arith.addf %2750, %2757 : vector<8x128xf32>
    %c26_1376 = arith.constant 26 : index
    %c0_1377 = arith.constant 0 : index
    %2759 = vector.load %arg1[%c26_1376, %c0_1377] : memref<61x128xf32, #tpu.memory_space<vmem>>, vector<1x128xf32>
    %2760 = vector.broadcast %2759 : vector<1x128xf32> to vector<8x128xf32>
    %2761 = arith.mulf %2760, %2548 : vector<8x128xf32>
    %c53_1378 = arith.constant 53 : index
    %c0_1379 = arith.constant 0 : index
    %2762 = vector.load %arg1[%c53_1378, %c0_1379] : memref<61x128xf32, #tpu.memory_space<vmem>>, vector<1x128xf32>
    %2763 = vector.broadcast %2762 : vector<1x128xf32> to vector<8x128xf32>
    %2764 = arith.mulf %2763, %2549 : vector<8x128xf32>
    %2765 = arith.addf %2761, %2764 : vector<8x128xf32>
    %2766 = arith.addf %2758, %2765 : vector<8x128xf32>
    %cst_1380 = arith.constant 0.000000e+00 : f32
    %2767 = vector.broadcast %cst_1380 : f32 to vector<1x128xf32>
    %2768 = vector.extract_strided_slice %2766 {offsets = [1, 0], sizes = [7, 128], strides = [1, 1]} : vector<8x128xf32> to vector<7x128xf32>
    %2769 = tpu.concatenate %2768, %2767 in 0 : vector<7x128xf32>, vector<1x128xf32> -> vector<8x128xf32>
    %2770 = arith.addf %2695, %2769 : vector<8x128xf32>
    %c54_1381 = arith.constant 54 : index
    %c0_1382 = arith.constant 0 : index
    %2771 = vector.load %arg1[%c54_1381, %c0_1382] : memref<61x128xf32, #tpu.memory_space<vmem>>, vector<1x128xf32>
    %2772 = vector.broadcast %2771 : vector<1x128xf32> to vector<8x128xf32>
    %2773 = arith.addf %2770, %2772 : vector<8x128xf32>
    %2774 = arith.addf %310, %2773 : vector<8x128xf32>
    %2775 = math.tanh %2774 : vector<8x128xf32>
    %2776 = arith.subf %310, %69 : vector<8x128xf32>
    %2777 = arith.mulf %2775, %2776 : vector<8x128xf32>
    %2778 = arith.addf %69, %2777 : vector<8x128xf32>
    %c9_i32_1383 = arith.constant 9 : i32
    %2779 = tpu.dynamic_rotate %2778 by %c9_i32_1383 dim 1 : vector<8x128xf32>, i32 -> vector<8x128xf32>
    %c73_i32_1384 = arith.constant 73 : i32
    %2780 = tpu.dynamic_rotate %2778 by %c73_i32_1384 dim 1 : vector<8x128xf32>, i32 -> vector<8x128xf32>
    %c8_i32_1385 = arith.constant 8 : i32
    %2781 = tpu.dynamic_rotate %2778 by %c8_i32_1385 dim 1 : vector<8x128xf32>, i32 -> vector<8x128xf32>
    %c72_i32_1386 = arith.constant 72 : i32
    %2782 = tpu.dynamic_rotate %2778 by %c72_i32_1386 dim 1 : vector<8x128xf32>, i32 -> vector<8x128xf32>
    %c7_i32_1387 = arith.constant 7 : i32
    %2783 = tpu.dynamic_rotate %2778 by %c7_i32_1387 dim 1 : vector<8x128xf32>, i32 -> vector<8x128xf32>
    %c71_i32_1388 = arith.constant 71 : i32
    %2784 = tpu.dynamic_rotate %2778 by %c71_i32_1388 dim 1 : vector<8x128xf32>, i32 -> vector<8x128xf32>
    %c1_i32_1389 = arith.constant 1 : i32
    %2785 = tpu.dynamic_rotate %2778 by %c1_i32_1389 dim 1 : vector<8x128xf32>, i32 -> vector<8x128xf32>
    %c65_i32_1390 = arith.constant 65 : i32
    %2786 = tpu.dynamic_rotate %2778 by %c65_i32_1390 dim 1 : vector<8x128xf32>, i32 -> vector<8x128xf32>
    %c64_i32_1391 = arith.constant 64 : i32
    %2787 = tpu.dynamic_rotate %2778 by %c64_i32_1391 dim 1 : vector<8x128xf32>, i32 -> vector<8x128xf32>
    %c127_i32_1392 = arith.constant 127 : i32
    %2788 = tpu.dynamic_rotate %2778 by %c127_i32_1392 dim 1 : vector<8x128xf32>, i32 -> vector<8x128xf32>
    %c63_i32_1393 = arith.constant 63 : i32
    %2789 = tpu.dynamic_rotate %2778 by %c63_i32_1393 dim 1 : vector<8x128xf32>, i32 -> vector<8x128xf32>
    %c121_i32_1394 = arith.constant 121 : i32
    %2790 = tpu.dynamic_rotate %2778 by %c121_i32_1394 dim 1 : vector<8x128xf32>, i32 -> vector<8x128xf32>
    %c57_i32_1395 = arith.constant 57 : i32
    %2791 = tpu.dynamic_rotate %2778 by %c57_i32_1395 dim 1 : vector<8x128xf32>, i32 -> vector<8x128xf32>
    %c120_i32_1396 = arith.constant 120 : i32
    %2792 = tpu.dynamic_rotate %2778 by %c120_i32_1396 dim 1 : vector<8x128xf32>, i32 -> vector<8x128xf32>
    %c56_i32_1397 = arith.constant 56 : i32
    %2793 = tpu.dynamic_rotate %2778 by %c56_i32_1397 dim 1 : vector<8x128xf32>, i32 -> vector<8x128xf32>
    %c119_i32_1398 = arith.constant 119 : i32
    %2794 = tpu.dynamic_rotate %2778 by %c119_i32_1398 dim 1 : vector<8x128xf32>, i32 -> vector<8x128xf32>
    %c55_i32_1399 = arith.constant 55 : i32
    %2795 = tpu.dynamic_rotate %2778 by %c55_i32_1399 dim 1 : vector<8x128xf32>, i32 -> vector<8x128xf32>
    %c0_1400 = arith.constant 0 : index
    %c0_1401 = arith.constant 0 : index
    %2796 = vector.load %arg1[%c0_1400, %c0_1401] : memref<61x128xf32, #tpu.memory_space<vmem>>, vector<1x128xf32>
    %2797 = vector.broadcast %2796 : vector<1x128xf32> to vector<8x128xf32>
    %2798 = arith.mulf %2797, %2779 : vector<8x128xf32>
    %c27_1402 = arith.constant 27 : index
    %c0_1403 = arith.constant 0 : index
    %2799 = vector.load %arg1[%c27_1402, %c0_1403] : memref<61x128xf32, #tpu.memory_space<vmem>>, vector<1x128xf32>
    %2800 = vector.broadcast %2799 : vector<1x128xf32> to vector<8x128xf32>
    %2801 = arith.mulf %2800, %2780 : vector<8x128xf32>
    %2802 = arith.addf %2798, %2801 : vector<8x128xf32>
    %c1_1404 = arith.constant 1 : index
    %c0_1405 = arith.constant 0 : index
    %2803 = vector.load %arg1[%c1_1404, %c0_1405] : memref<61x128xf32, #tpu.memory_space<vmem>>, vector<1x128xf32>
    %2804 = vector.broadcast %2803 : vector<1x128xf32> to vector<8x128xf32>
    %2805 = arith.mulf %2804, %2781 : vector<8x128xf32>
    %c28_1406 = arith.constant 28 : index
    %c0_1407 = arith.constant 0 : index
    %2806 = vector.load %arg1[%c28_1406, %c0_1407] : memref<61x128xf32, #tpu.memory_space<vmem>>, vector<1x128xf32>
    %2807 = vector.broadcast %2806 : vector<1x128xf32> to vector<8x128xf32>
    %2808 = arith.mulf %2807, %2782 : vector<8x128xf32>
    %2809 = arith.addf %2805, %2808 : vector<8x128xf32>
    %2810 = arith.addf %2802, %2809 : vector<8x128xf32>
    %c2_1408 = arith.constant 2 : index
    %c0_1409 = arith.constant 0 : index
    %2811 = vector.load %arg1[%c2_1408, %c0_1409] : memref<61x128xf32, #tpu.memory_space<vmem>>, vector<1x128xf32>
    %2812 = vector.broadcast %2811 : vector<1x128xf32> to vector<8x128xf32>
    %2813 = arith.mulf %2812, %2783 : vector<8x128xf32>
    %c29_1410 = arith.constant 29 : index
    %c0_1411 = arith.constant 0 : index
    %2814 = vector.load %arg1[%c29_1410, %c0_1411] : memref<61x128xf32, #tpu.memory_space<vmem>>, vector<1x128xf32>
    %2815 = vector.broadcast %2814 : vector<1x128xf32> to vector<8x128xf32>
    %2816 = arith.mulf %2815, %2784 : vector<8x128xf32>
    %2817 = arith.addf %2813, %2816 : vector<8x128xf32>
    %2818 = arith.addf %2810, %2817 : vector<8x128xf32>
    %c3_1412 = arith.constant 3 : index
    %c0_1413 = arith.constant 0 : index
    %2819 = vector.load %arg1[%c3_1412, %c0_1413] : memref<61x128xf32, #tpu.memory_space<vmem>>, vector<1x128xf32>
    %2820 = vector.broadcast %2819 : vector<1x128xf32> to vector<8x128xf32>
    %2821 = arith.mulf %2820, %2785 : vector<8x128xf32>
    %c30_1414 = arith.constant 30 : index
    %c0_1415 = arith.constant 0 : index
    %2822 = vector.load %arg1[%c30_1414, %c0_1415] : memref<61x128xf32, #tpu.memory_space<vmem>>, vector<1x128xf32>
    %2823 = vector.broadcast %2822 : vector<1x128xf32> to vector<8x128xf32>
    %2824 = arith.mulf %2823, %2786 : vector<8x128xf32>
    %2825 = arith.addf %2821, %2824 : vector<8x128xf32>
    %2826 = arith.addf %2818, %2825 : vector<8x128xf32>
    %c4_1416 = arith.constant 4 : index
    %c0_1417 = arith.constant 0 : index
    %2827 = vector.load %arg1[%c4_1416, %c0_1417] : memref<61x128xf32, #tpu.memory_space<vmem>>, vector<1x128xf32>
    %2828 = vector.broadcast %2827 : vector<1x128xf32> to vector<8x128xf32>
    %2829 = arith.mulf %2828, %2778 : vector<8x128xf32>
    %c31_1418 = arith.constant 31 : index
    %c0_1419 = arith.constant 0 : index
    %2830 = vector.load %arg1[%c31_1418, %c0_1419] : memref<61x128xf32, #tpu.memory_space<vmem>>, vector<1x128xf32>
    %2831 = vector.broadcast %2830 : vector<1x128xf32> to vector<8x128xf32>
    %2832 = arith.mulf %2831, %2787 : vector<8x128xf32>
    %2833 = arith.addf %2829, %2832 : vector<8x128xf32>
    %2834 = arith.addf %2826, %2833 : vector<8x128xf32>
    %c5_1420 = arith.constant 5 : index
    %c0_1421 = arith.constant 0 : index
    %2835 = vector.load %arg1[%c5_1420, %c0_1421] : memref<61x128xf32, #tpu.memory_space<vmem>>, vector<1x128xf32>
    %2836 = vector.broadcast %2835 : vector<1x128xf32> to vector<8x128xf32>
    %2837 = arith.mulf %2836, %2788 : vector<8x128xf32>
    %c32_1422 = arith.constant 32 : index
    %c0_1423 = arith.constant 0 : index
    %2838 = vector.load %arg1[%c32_1422, %c0_1423] : memref<61x128xf32, #tpu.memory_space<vmem>>, vector<1x128xf32>
    %2839 = vector.broadcast %2838 : vector<1x128xf32> to vector<8x128xf32>
    %2840 = arith.mulf %2839, %2789 : vector<8x128xf32>
    %2841 = arith.addf %2837, %2840 : vector<8x128xf32>
    %2842 = arith.addf %2834, %2841 : vector<8x128xf32>
    %c6_1424 = arith.constant 6 : index
    %c0_1425 = arith.constant 0 : index
    %2843 = vector.load %arg1[%c6_1424, %c0_1425] : memref<61x128xf32, #tpu.memory_space<vmem>>, vector<1x128xf32>
    %2844 = vector.broadcast %2843 : vector<1x128xf32> to vector<8x128xf32>
    %2845 = arith.mulf %2844, %2790 : vector<8x128xf32>
    %c33_1426 = arith.constant 33 : index
    %c0_1427 = arith.constant 0 : index
    %2846 = vector.load %arg1[%c33_1426, %c0_1427] : memref<61x128xf32, #tpu.memory_space<vmem>>, vector<1x128xf32>
    %2847 = vector.broadcast %2846 : vector<1x128xf32> to vector<8x128xf32>
    %2848 = arith.mulf %2847, %2791 : vector<8x128xf32>
    %2849 = arith.addf %2845, %2848 : vector<8x128xf32>
    %2850 = arith.addf %2842, %2849 : vector<8x128xf32>
    %c7_1428 = arith.constant 7 : index
    %c0_1429 = arith.constant 0 : index
    %2851 = vector.load %arg1[%c7_1428, %c0_1429] : memref<61x128xf32, #tpu.memory_space<vmem>>, vector<1x128xf32>
    %2852 = vector.broadcast %2851 : vector<1x128xf32> to vector<8x128xf32>
    %2853 = arith.mulf %2852, %2792 : vector<8x128xf32>
    %c34_1430 = arith.constant 34 : index
    %c0_1431 = arith.constant 0 : index
    %2854 = vector.load %arg1[%c34_1430, %c0_1431] : memref<61x128xf32, #tpu.memory_space<vmem>>, vector<1x128xf32>
    %2855 = vector.broadcast %2854 : vector<1x128xf32> to vector<8x128xf32>
    %2856 = arith.mulf %2855, %2793 : vector<8x128xf32>
    %2857 = arith.addf %2853, %2856 : vector<8x128xf32>
    %2858 = arith.addf %2850, %2857 : vector<8x128xf32>
    %c8_1432 = arith.constant 8 : index
    %c0_1433 = arith.constant 0 : index
    %2859 = vector.load %arg1[%c8_1432, %c0_1433] : memref<61x128xf32, #tpu.memory_space<vmem>>, vector<1x128xf32>
    %2860 = vector.broadcast %2859 : vector<1x128xf32> to vector<8x128xf32>
    %2861 = arith.mulf %2860, %2794 : vector<8x128xf32>
    %c35_1434 = arith.constant 35 : index
    %c0_1435 = arith.constant 0 : index
    %2862 = vector.load %arg1[%c35_1434, %c0_1435] : memref<61x128xf32, #tpu.memory_space<vmem>>, vector<1x128xf32>
    %2863 = vector.broadcast %2862 : vector<1x128xf32> to vector<8x128xf32>
    %2864 = arith.mulf %2863, %2795 : vector<8x128xf32>
    %2865 = arith.addf %2861, %2864 : vector<8x128xf32>
    %2866 = arith.addf %2858, %2865 : vector<8x128xf32>
    %cst_1436 = arith.constant 0.000000e+00 : f32
    %2867 = vector.broadcast %cst_1436 : f32 to vector<1x128xf32>
    %2868 = vector.extract_strided_slice %2866 {offsets = [0, 0], sizes = [7, 128], strides = [1, 1]} : vector<8x128xf32> to vector<7x128xf32>
    %2869 = tpu.concatenate %2867, %2868 in 0 : vector<1x128xf32>, vector<7x128xf32> -> vector<8x128xf32>
    %c9_1437 = arith.constant 9 : index
    %c0_1438 = arith.constant 0 : index
    %2870 = vector.load %arg1[%c9_1437, %c0_1438] : memref<61x128xf32, #tpu.memory_space<vmem>>, vector<1x128xf32>
    %2871 = vector.broadcast %2870 : vector<1x128xf32> to vector<8x128xf32>
    %2872 = arith.mulf %2871, %2779 : vector<8x128xf32>
    %c36_1439 = arith.constant 36 : index
    %c0_1440 = arith.constant 0 : index
    %2873 = vector.load %arg1[%c36_1439, %c0_1440] : memref<61x128xf32, #tpu.memory_space<vmem>>, vector<1x128xf32>
    %2874 = vector.broadcast %2873 : vector<1x128xf32> to vector<8x128xf32>
    %2875 = arith.mulf %2874, %2780 : vector<8x128xf32>
    %2876 = arith.addf %2872, %2875 : vector<8x128xf32>
    %c10_1441 = arith.constant 10 : index
    %c0_1442 = arith.constant 0 : index
    %2877 = vector.load %arg1[%c10_1441, %c0_1442] : memref<61x128xf32, #tpu.memory_space<vmem>>, vector<1x128xf32>
    %2878 = vector.broadcast %2877 : vector<1x128xf32> to vector<8x128xf32>
    %2879 = arith.mulf %2878, %2781 : vector<8x128xf32>
    %c37_1443 = arith.constant 37 : index
    %c0_1444 = arith.constant 0 : index
    %2880 = vector.load %arg1[%c37_1443, %c0_1444] : memref<61x128xf32, #tpu.memory_space<vmem>>, vector<1x128xf32>
    %2881 = vector.broadcast %2880 : vector<1x128xf32> to vector<8x128xf32>
    %2882 = arith.mulf %2881, %2782 : vector<8x128xf32>
    %2883 = arith.addf %2879, %2882 : vector<8x128xf32>
    %2884 = arith.addf %2876, %2883 : vector<8x128xf32>
    %c11_1445 = arith.constant 11 : index
    %c0_1446 = arith.constant 0 : index
    %2885 = vector.load %arg1[%c11_1445, %c0_1446] : memref<61x128xf32, #tpu.memory_space<vmem>>, vector<1x128xf32>
    %2886 = vector.broadcast %2885 : vector<1x128xf32> to vector<8x128xf32>
    %2887 = arith.mulf %2886, %2783 : vector<8x128xf32>
    %c38_1447 = arith.constant 38 : index
    %c0_1448 = arith.constant 0 : index
    %2888 = vector.load %arg1[%c38_1447, %c0_1448] : memref<61x128xf32, #tpu.memory_space<vmem>>, vector<1x128xf32>
    %2889 = vector.broadcast %2888 : vector<1x128xf32> to vector<8x128xf32>
    %2890 = arith.mulf %2889, %2784 : vector<8x128xf32>
    %2891 = arith.addf %2887, %2890 : vector<8x128xf32>
    %2892 = arith.addf %2884, %2891 : vector<8x128xf32>
    %c12_1449 = arith.constant 12 : index
    %c0_1450 = arith.constant 0 : index
    %2893 = vector.load %arg1[%c12_1449, %c0_1450] : memref<61x128xf32, #tpu.memory_space<vmem>>, vector<1x128xf32>
    %2894 = vector.broadcast %2893 : vector<1x128xf32> to vector<8x128xf32>
    %2895 = arith.mulf %2894, %2785 : vector<8x128xf32>
    %c39_1451 = arith.constant 39 : index
    %c0_1452 = arith.constant 0 : index
    %2896 = vector.load %arg1[%c39_1451, %c0_1452] : memref<61x128xf32, #tpu.memory_space<vmem>>, vector<1x128xf32>
    %2897 = vector.broadcast %2896 : vector<1x128xf32> to vector<8x128xf32>
    %2898 = arith.mulf %2897, %2786 : vector<8x128xf32>
    %2899 = arith.addf %2895, %2898 : vector<8x128xf32>
    %2900 = arith.addf %2892, %2899 : vector<8x128xf32>
    %c13_1453 = arith.constant 13 : index
    %c0_1454 = arith.constant 0 : index
    %2901 = vector.load %arg1[%c13_1453, %c0_1454] : memref<61x128xf32, #tpu.memory_space<vmem>>, vector<1x128xf32>
    %2902 = vector.broadcast %2901 : vector<1x128xf32> to vector<8x128xf32>
    %2903 = arith.mulf %2902, %2778 : vector<8x128xf32>
    %c40_1455 = arith.constant 40 : index
    %c0_1456 = arith.constant 0 : index
    %2904 = vector.load %arg1[%c40_1455, %c0_1456] : memref<61x128xf32, #tpu.memory_space<vmem>>, vector<1x128xf32>
    %2905 = vector.broadcast %2904 : vector<1x128xf32> to vector<8x128xf32>
    %2906 = arith.mulf %2905, %2787 : vector<8x128xf32>
    %2907 = arith.addf %2903, %2906 : vector<8x128xf32>
    %2908 = arith.addf %2900, %2907 : vector<8x128xf32>
    %c14_1457 = arith.constant 14 : index
    %c0_1458 = arith.constant 0 : index
    %2909 = vector.load %arg1[%c14_1457, %c0_1458] : memref<61x128xf32, #tpu.memory_space<vmem>>, vector<1x128xf32>
    %2910 = vector.broadcast %2909 : vector<1x128xf32> to vector<8x128xf32>
    %2911 = arith.mulf %2910, %2788 : vector<8x128xf32>
    %c41_1459 = arith.constant 41 : index
    %c0_1460 = arith.constant 0 : index
    %2912 = vector.load %arg1[%c41_1459, %c0_1460] : memref<61x128xf32, #tpu.memory_space<vmem>>, vector<1x128xf32>
    %2913 = vector.broadcast %2912 : vector<1x128xf32> to vector<8x128xf32>
    %2914 = arith.mulf %2913, %2789 : vector<8x128xf32>
    %2915 = arith.addf %2911, %2914 : vector<8x128xf32>
    %2916 = arith.addf %2908, %2915 : vector<8x128xf32>
    %c15_1461 = arith.constant 15 : index
    %c0_1462 = arith.constant 0 : index
    %2917 = vector.load %arg1[%c15_1461, %c0_1462] : memref<61x128xf32, #tpu.memory_space<vmem>>, vector<1x128xf32>
    %2918 = vector.broadcast %2917 : vector<1x128xf32> to vector<8x128xf32>
    %2919 = arith.mulf %2918, %2790 : vector<8x128xf32>
    %c42_1463 = arith.constant 42 : index
    %c0_1464 = arith.constant 0 : index
    %2920 = vector.load %arg1[%c42_1463, %c0_1464] : memref<61x128xf32, #tpu.memory_space<vmem>>, vector<1x128xf32>
    %2921 = vector.broadcast %2920 : vector<1x128xf32> to vector<8x128xf32>
    %2922 = arith.mulf %2921, %2791 : vector<8x128xf32>
    %2923 = arith.addf %2919, %2922 : vector<8x128xf32>
    %2924 = arith.addf %2916, %2923 : vector<8x128xf32>
    %c16_1465 = arith.constant 16 : index
    %c0_1466 = arith.constant 0 : index
    %2925 = vector.load %arg1[%c16_1465, %c0_1466] : memref<61x128xf32, #tpu.memory_space<vmem>>, vector<1x128xf32>
    %2926 = vector.broadcast %2925 : vector<1x128xf32> to vector<8x128xf32>
    %2927 = arith.mulf %2926, %2792 : vector<8x128xf32>
    %c43_1467 = arith.constant 43 : index
    %c0_1468 = arith.constant 0 : index
    %2928 = vector.load %arg1[%c43_1467, %c0_1468] : memref<61x128xf32, #tpu.memory_space<vmem>>, vector<1x128xf32>
    %2929 = vector.broadcast %2928 : vector<1x128xf32> to vector<8x128xf32>
    %2930 = arith.mulf %2929, %2793 : vector<8x128xf32>
    %2931 = arith.addf %2927, %2930 : vector<8x128xf32>
    %2932 = arith.addf %2924, %2931 : vector<8x128xf32>
    %c17_1469 = arith.constant 17 : index
    %c0_1470 = arith.constant 0 : index
    %2933 = vector.load %arg1[%c17_1469, %c0_1470] : memref<61x128xf32, #tpu.memory_space<vmem>>, vector<1x128xf32>
    %2934 = vector.broadcast %2933 : vector<1x128xf32> to vector<8x128xf32>
    %2935 = arith.mulf %2934, %2794 : vector<8x128xf32>
    %c44_1471 = arith.constant 44 : index
    %c0_1472 = arith.constant 0 : index
    %2936 = vector.load %arg1[%c44_1471, %c0_1472] : memref<61x128xf32, #tpu.memory_space<vmem>>, vector<1x128xf32>
    %2937 = vector.broadcast %2936 : vector<1x128xf32> to vector<8x128xf32>
    %2938 = arith.mulf %2937, %2795 : vector<8x128xf32>
    %2939 = arith.addf %2935, %2938 : vector<8x128xf32>
    %2940 = arith.addf %2932, %2939 : vector<8x128xf32>
    %2941 = arith.addf %2869, %2940 : vector<8x128xf32>
    %c18_1473 = arith.constant 18 : index
    %c0_1474 = arith.constant 0 : index
    %2942 = vector.load %arg1[%c18_1473, %c0_1474] : memref<61x128xf32, #tpu.memory_space<vmem>>, vector<1x128xf32>
    %2943 = vector.broadcast %2942 : vector<1x128xf32> to vector<8x128xf32>
    %2944 = arith.mulf %2943, %2779 : vector<8x128xf32>
    %c45_1475 = arith.constant 45 : index
    %c0_1476 = arith.constant 0 : index
    %2945 = vector.load %arg1[%c45_1475, %c0_1476] : memref<61x128xf32, #tpu.memory_space<vmem>>, vector<1x128xf32>
    %2946 = vector.broadcast %2945 : vector<1x128xf32> to vector<8x128xf32>
    %2947 = arith.mulf %2946, %2780 : vector<8x128xf32>
    %2948 = arith.addf %2944, %2947 : vector<8x128xf32>
    %c19_1477 = arith.constant 19 : index
    %c0_1478 = arith.constant 0 : index
    %2949 = vector.load %arg1[%c19_1477, %c0_1478] : memref<61x128xf32, #tpu.memory_space<vmem>>, vector<1x128xf32>
    %2950 = vector.broadcast %2949 : vector<1x128xf32> to vector<8x128xf32>
    %2951 = arith.mulf %2950, %2781 : vector<8x128xf32>
    %c46_1479 = arith.constant 46 : index
    %c0_1480 = arith.constant 0 : index
    %2952 = vector.load %arg1[%c46_1479, %c0_1480] : memref<61x128xf32, #tpu.memory_space<vmem>>, vector<1x128xf32>
    %2953 = vector.broadcast %2952 : vector<1x128xf32> to vector<8x128xf32>
    %2954 = arith.mulf %2953, %2782 : vector<8x128xf32>
    %2955 = arith.addf %2951, %2954 : vector<8x128xf32>
    %2956 = arith.addf %2948, %2955 : vector<8x128xf32>
    %c20_1481 = arith.constant 20 : index
    %c0_1482 = arith.constant 0 : index
    %2957 = vector.load %arg1[%c20_1481, %c0_1482] : memref<61x128xf32, #tpu.memory_space<vmem>>, vector<1x128xf32>
    %2958 = vector.broadcast %2957 : vector<1x128xf32> to vector<8x128xf32>
    %2959 = arith.mulf %2958, %2783 : vector<8x128xf32>
    %c47_1483 = arith.constant 47 : index
    %c0_1484 = arith.constant 0 : index
    %2960 = vector.load %arg1[%c47_1483, %c0_1484] : memref<61x128xf32, #tpu.memory_space<vmem>>, vector<1x128xf32>
    %2961 = vector.broadcast %2960 : vector<1x128xf32> to vector<8x128xf32>
    %2962 = arith.mulf %2961, %2784 : vector<8x128xf32>
    %2963 = arith.addf %2959, %2962 : vector<8x128xf32>
    %2964 = arith.addf %2956, %2963 : vector<8x128xf32>
    %c21_1485 = arith.constant 21 : index
    %c0_1486 = arith.constant 0 : index
    %2965 = vector.load %arg1[%c21_1485, %c0_1486] : memref<61x128xf32, #tpu.memory_space<vmem>>, vector<1x128xf32>
    %2966 = vector.broadcast %2965 : vector<1x128xf32> to vector<8x128xf32>
    %2967 = arith.mulf %2966, %2785 : vector<8x128xf32>
    %c48_1487 = arith.constant 48 : index
    %c0_1488 = arith.constant 0 : index
    %2968 = vector.load %arg1[%c48_1487, %c0_1488] : memref<61x128xf32, #tpu.memory_space<vmem>>, vector<1x128xf32>
    %2969 = vector.broadcast %2968 : vector<1x128xf32> to vector<8x128xf32>
    %2970 = arith.mulf %2969, %2786 : vector<8x128xf32>
    %2971 = arith.addf %2967, %2970 : vector<8x128xf32>
    %2972 = arith.addf %2964, %2971 : vector<8x128xf32>
    %c22_1489 = arith.constant 22 : index
    %c0_1490 = arith.constant 0 : index
    %2973 = vector.load %arg1[%c22_1489, %c0_1490] : memref<61x128xf32, #tpu.memory_space<vmem>>, vector<1x128xf32>
    %2974 = vector.broadcast %2973 : vector<1x128xf32> to vector<8x128xf32>
    %2975 = arith.mulf %2974, %2778 : vector<8x128xf32>
    %c49_1491 = arith.constant 49 : index
    %c0_1492 = arith.constant 0 : index
    %2976 = vector.load %arg1[%c49_1491, %c0_1492] : memref<61x128xf32, #tpu.memory_space<vmem>>, vector<1x128xf32>
    %2977 = vector.broadcast %2976 : vector<1x128xf32> to vector<8x128xf32>
    %2978 = arith.mulf %2977, %2787 : vector<8x128xf32>
    %2979 = arith.addf %2975, %2978 : vector<8x128xf32>
    %2980 = arith.addf %2972, %2979 : vector<8x128xf32>
    %c23_1493 = arith.constant 23 : index
    %c0_1494 = arith.constant 0 : index
    %2981 = vector.load %arg1[%c23_1493, %c0_1494] : memref<61x128xf32, #tpu.memory_space<vmem>>, vector<1x128xf32>
    %2982 = vector.broadcast %2981 : vector<1x128xf32> to vector<8x128xf32>
    %2983 = arith.mulf %2982, %2788 : vector<8x128xf32>
    %c50_1495 = arith.constant 50 : index
    %c0_1496 = arith.constant 0 : index
    %2984 = vector.load %arg1[%c50_1495, %c0_1496] : memref<61x128xf32, #tpu.memory_space<vmem>>, vector<1x128xf32>
    %2985 = vector.broadcast %2984 : vector<1x128xf32> to vector<8x128xf32>
    %2986 = arith.mulf %2985, %2789 : vector<8x128xf32>
    %2987 = arith.addf %2983, %2986 : vector<8x128xf32>
    %2988 = arith.addf %2980, %2987 : vector<8x128xf32>
    %c24_1497 = arith.constant 24 : index
    %c0_1498 = arith.constant 0 : index
    %2989 = vector.load %arg1[%c24_1497, %c0_1498] : memref<61x128xf32, #tpu.memory_space<vmem>>, vector<1x128xf32>
    %2990 = vector.broadcast %2989 : vector<1x128xf32> to vector<8x128xf32>
    %2991 = arith.mulf %2990, %2790 : vector<8x128xf32>
    %c51_1499 = arith.constant 51 : index
    %c0_1500 = arith.constant 0 : index
    %2992 = vector.load %arg1[%c51_1499, %c0_1500] : memref<61x128xf32, #tpu.memory_space<vmem>>, vector<1x128xf32>
    %2993 = vector.broadcast %2992 : vector<1x128xf32> to vector<8x128xf32>
    %2994 = arith.mulf %2993, %2791 : vector<8x128xf32>
    %2995 = arith.addf %2991, %2994 : vector<8x128xf32>
    %2996 = arith.addf %2988, %2995 : vector<8x128xf32>
    %c25_1501 = arith.constant 25 : index
    %c0_1502 = arith.constant 0 : index
    %2997 = vector.load %arg1[%c25_1501, %c0_1502] : memref<61x128xf32, #tpu.memory_space<vmem>>, vector<1x128xf32>
    %2998 = vector.broadcast %2997 : vector<1x128xf32> to vector<8x128xf32>
    %2999 = arith.mulf %2998, %2792 : vector<8x128xf32>
    %c52_1503 = arith.constant 52 : index
    %c0_1504 = arith.constant 0 : index
    %3000 = vector.load %arg1[%c52_1503, %c0_1504] : memref<61x128xf32, #tpu.memory_space<vmem>>, vector<1x128xf32>
    %3001 = vector.broadcast %3000 : vector<1x128xf32> to vector<8x128xf32>
    %3002 = arith.mulf %3001, %2793 : vector<8x128xf32>
    %3003 = arith.addf %2999, %3002 : vector<8x128xf32>
    %3004 = arith.addf %2996, %3003 : vector<8x128xf32>
    %c26_1505 = arith.constant 26 : index
    %c0_1506 = arith.constant 0 : index
    %3005 = vector.load %arg1[%c26_1505, %c0_1506] : memref<61x128xf32, #tpu.memory_space<vmem>>, vector<1x128xf32>
    %3006 = vector.broadcast %3005 : vector<1x128xf32> to vector<8x128xf32>
    %3007 = arith.mulf %3006, %2794 : vector<8x128xf32>
    %c53_1507 = arith.constant 53 : index
    %c0_1508 = arith.constant 0 : index
    %3008 = vector.load %arg1[%c53_1507, %c0_1508] : memref<61x128xf32, #tpu.memory_space<vmem>>, vector<1x128xf32>
    %3009 = vector.broadcast %3008 : vector<1x128xf32> to vector<8x128xf32>
    %3010 = arith.mulf %3009, %2795 : vector<8x128xf32>
    %3011 = arith.addf %3007, %3010 : vector<8x128xf32>
    %3012 = arith.addf %3004, %3011 : vector<8x128xf32>
    %cst_1509 = arith.constant 0.000000e+00 : f32
    %3013 = vector.broadcast %cst_1509 : f32 to vector<1x128xf32>
    %3014 = vector.extract_strided_slice %3012 {offsets = [1, 0], sizes = [7, 128], strides = [1, 1]} : vector<8x128xf32> to vector<7x128xf32>
    %3015 = tpu.concatenate %3014, %3013 in 0 : vector<7x128xf32>, vector<1x128xf32> -> vector<8x128xf32>
    %3016 = arith.addf %2941, %3015 : vector<8x128xf32>
    %c54_1510 = arith.constant 54 : index
    %c0_1511 = arith.constant 0 : index
    %3017 = vector.load %arg1[%c54_1510, %c0_1511] : memref<61x128xf32, #tpu.memory_space<vmem>>, vector<1x128xf32>
    %3018 = vector.broadcast %3017 : vector<1x128xf32> to vector<8x128xf32>
    %3019 = arith.addf %3016, %3018 : vector<8x128xf32>
    %3020 = arith.subf %3019, %2778 : vector<8x128xf32>
    %3021 = arith.mulf %2775, %3020 : vector<8x128xf32>
    %3022 = arith.addf %2778, %3021 : vector<8x128xf32>
    %c9_i32_1512 = arith.constant 9 : i32
    %3023 = tpu.dynamic_rotate %3022 by %c9_i32_1512 dim 1 : vector<8x128xf32>, i32 -> vector<8x128xf32>
    %c73_i32_1513 = arith.constant 73 : i32
    %3024 = tpu.dynamic_rotate %3022 by %c73_i32_1513 dim 1 : vector<8x128xf32>, i32 -> vector<8x128xf32>
    %c8_i32_1514 = arith.constant 8 : i32
    %3025 = tpu.dynamic_rotate %3022 by %c8_i32_1514 dim 1 : vector<8x128xf32>, i32 -> vector<8x128xf32>
    %c72_i32_1515 = arith.constant 72 : i32
    %3026 = tpu.dynamic_rotate %3022 by %c72_i32_1515 dim 1 : vector<8x128xf32>, i32 -> vector<8x128xf32>
    %c7_i32_1516 = arith.constant 7 : i32
    %3027 = tpu.dynamic_rotate %3022 by %c7_i32_1516 dim 1 : vector<8x128xf32>, i32 -> vector<8x128xf32>
    %c71_i32_1517 = arith.constant 71 : i32
    %3028 = tpu.dynamic_rotate %3022 by %c71_i32_1517 dim 1 : vector<8x128xf32>, i32 -> vector<8x128xf32>
    %c1_i32_1518 = arith.constant 1 : i32
    %3029 = tpu.dynamic_rotate %3022 by %c1_i32_1518 dim 1 : vector<8x128xf32>, i32 -> vector<8x128xf32>
    %c65_i32_1519 = arith.constant 65 : i32
    %3030 = tpu.dynamic_rotate %3022 by %c65_i32_1519 dim 1 : vector<8x128xf32>, i32 -> vector<8x128xf32>
    %c64_i32_1520 = arith.constant 64 : i32
    %3031 = tpu.dynamic_rotate %3022 by %c64_i32_1520 dim 1 : vector<8x128xf32>, i32 -> vector<8x128xf32>
    %c127_i32_1521 = arith.constant 127 : i32
    %3032 = tpu.dynamic_rotate %3022 by %c127_i32_1521 dim 1 : vector<8x128xf32>, i32 -> vector<8x128xf32>
    %c63_i32_1522 = arith.constant 63 : i32
    %3033 = tpu.dynamic_rotate %3022 by %c63_i32_1522 dim 1 : vector<8x128xf32>, i32 -> vector<8x128xf32>
    %c121_i32_1523 = arith.constant 121 : i32
    %3034 = tpu.dynamic_rotate %3022 by %c121_i32_1523 dim 1 : vector<8x128xf32>, i32 -> vector<8x128xf32>
    %c57_i32_1524 = arith.constant 57 : i32
    %3035 = tpu.dynamic_rotate %3022 by %c57_i32_1524 dim 1 : vector<8x128xf32>, i32 -> vector<8x128xf32>
    %c120_i32_1525 = arith.constant 120 : i32
    %3036 = tpu.dynamic_rotate %3022 by %c120_i32_1525 dim 1 : vector<8x128xf32>, i32 -> vector<8x128xf32>
    %c56_i32_1526 = arith.constant 56 : i32
    %3037 = tpu.dynamic_rotate %3022 by %c56_i32_1526 dim 1 : vector<8x128xf32>, i32 -> vector<8x128xf32>
    %c119_i32_1527 = arith.constant 119 : i32
    %3038 = tpu.dynamic_rotate %3022 by %c119_i32_1527 dim 1 : vector<8x128xf32>, i32 -> vector<8x128xf32>
    %c55_i32_1528 = arith.constant 55 : i32
    %3039 = tpu.dynamic_rotate %3022 by %c55_i32_1528 dim 1 : vector<8x128xf32>, i32 -> vector<8x128xf32>
    %c0_1529 = arith.constant 0 : index
    %c0_1530 = arith.constant 0 : index
    %3040 = vector.load %arg1[%c0_1529, %c0_1530] : memref<61x128xf32, #tpu.memory_space<vmem>>, vector<1x128xf32>
    %3041 = vector.broadcast %3040 : vector<1x128xf32> to vector<8x128xf32>
    %3042 = arith.mulf %3041, %3023 : vector<8x128xf32>
    %c27_1531 = arith.constant 27 : index
    %c0_1532 = arith.constant 0 : index
    %3043 = vector.load %arg1[%c27_1531, %c0_1532] : memref<61x128xf32, #tpu.memory_space<vmem>>, vector<1x128xf32>
    %3044 = vector.broadcast %3043 : vector<1x128xf32> to vector<8x128xf32>
    %3045 = arith.mulf %3044, %3024 : vector<8x128xf32>
    %3046 = arith.addf %3042, %3045 : vector<8x128xf32>
    %c1_1533 = arith.constant 1 : index
    %c0_1534 = arith.constant 0 : index
    %3047 = vector.load %arg1[%c1_1533, %c0_1534] : memref<61x128xf32, #tpu.memory_space<vmem>>, vector<1x128xf32>
    %3048 = vector.broadcast %3047 : vector<1x128xf32> to vector<8x128xf32>
    %3049 = arith.mulf %3048, %3025 : vector<8x128xf32>
    %c28_1535 = arith.constant 28 : index
    %c0_1536 = arith.constant 0 : index
    %3050 = vector.load %arg1[%c28_1535, %c0_1536] : memref<61x128xf32, #tpu.memory_space<vmem>>, vector<1x128xf32>
    %3051 = vector.broadcast %3050 : vector<1x128xf32> to vector<8x128xf32>
    %3052 = arith.mulf %3051, %3026 : vector<8x128xf32>
    %3053 = arith.addf %3049, %3052 : vector<8x128xf32>
    %3054 = arith.addf %3046, %3053 : vector<8x128xf32>
    %c2_1537 = arith.constant 2 : index
    %c0_1538 = arith.constant 0 : index
    %3055 = vector.load %arg1[%c2_1537, %c0_1538] : memref<61x128xf32, #tpu.memory_space<vmem>>, vector<1x128xf32>
    %3056 = vector.broadcast %3055 : vector<1x128xf32> to vector<8x128xf32>
    %3057 = arith.mulf %3056, %3027 : vector<8x128xf32>
    %c29_1539 = arith.constant 29 : index
    %c0_1540 = arith.constant 0 : index
    %3058 = vector.load %arg1[%c29_1539, %c0_1540] : memref<61x128xf32, #tpu.memory_space<vmem>>, vector<1x128xf32>
    %3059 = vector.broadcast %3058 : vector<1x128xf32> to vector<8x128xf32>
    %3060 = arith.mulf %3059, %3028 : vector<8x128xf32>
    %3061 = arith.addf %3057, %3060 : vector<8x128xf32>
    %3062 = arith.addf %3054, %3061 : vector<8x128xf32>
    %c3_1541 = arith.constant 3 : index
    %c0_1542 = arith.constant 0 : index
    %3063 = vector.load %arg1[%c3_1541, %c0_1542] : memref<61x128xf32, #tpu.memory_space<vmem>>, vector<1x128xf32>
    %3064 = vector.broadcast %3063 : vector<1x128xf32> to vector<8x128xf32>
    %3065 = arith.mulf %3064, %3029 : vector<8x128xf32>
    %c30_1543 = arith.constant 30 : index
    %c0_1544 = arith.constant 0 : index
    %3066 = vector.load %arg1[%c30_1543, %c0_1544] : memref<61x128xf32, #tpu.memory_space<vmem>>, vector<1x128xf32>
    %3067 = vector.broadcast %3066 : vector<1x128xf32> to vector<8x128xf32>
    %3068 = arith.mulf %3067, %3030 : vector<8x128xf32>
    %3069 = arith.addf %3065, %3068 : vector<8x128xf32>
    %3070 = arith.addf %3062, %3069 : vector<8x128xf32>
    %c4_1545 = arith.constant 4 : index
    %c0_1546 = arith.constant 0 : index
    %3071 = vector.load %arg1[%c4_1545, %c0_1546] : memref<61x128xf32, #tpu.memory_space<vmem>>, vector<1x128xf32>
    %3072 = vector.broadcast %3071 : vector<1x128xf32> to vector<8x128xf32>
    %3073 = arith.mulf %3072, %3022 : vector<8x128xf32>
    %c31_1547 = arith.constant 31 : index
    %c0_1548 = arith.constant 0 : index
    %3074 = vector.load %arg1[%c31_1547, %c0_1548] : memref<61x128xf32, #tpu.memory_space<vmem>>, vector<1x128xf32>
    %3075 = vector.broadcast %3074 : vector<1x128xf32> to vector<8x128xf32>
    %3076 = arith.mulf %3075, %3031 : vector<8x128xf32>
    %3077 = arith.addf %3073, %3076 : vector<8x128xf32>
    %3078 = arith.addf %3070, %3077 : vector<8x128xf32>
    %c5_1549 = arith.constant 5 : index
    %c0_1550 = arith.constant 0 : index
    %3079 = vector.load %arg1[%c5_1549, %c0_1550] : memref<61x128xf32, #tpu.memory_space<vmem>>, vector<1x128xf32>
    %3080 = vector.broadcast %3079 : vector<1x128xf32> to vector<8x128xf32>
    %3081 = arith.mulf %3080, %3032 : vector<8x128xf32>
    %c32_1551 = arith.constant 32 : index
    %c0_1552 = arith.constant 0 : index
    %3082 = vector.load %arg1[%c32_1551, %c0_1552] : memref<61x128xf32, #tpu.memory_space<vmem>>, vector<1x128xf32>
    %3083 = vector.broadcast %3082 : vector<1x128xf32> to vector<8x128xf32>
    %3084 = arith.mulf %3083, %3033 : vector<8x128xf32>
    %3085 = arith.addf %3081, %3084 : vector<8x128xf32>
    %3086 = arith.addf %3078, %3085 : vector<8x128xf32>
    %c6_1553 = arith.constant 6 : index
    %c0_1554 = arith.constant 0 : index
    %3087 = vector.load %arg1[%c6_1553, %c0_1554] : memref<61x128xf32, #tpu.memory_space<vmem>>, vector<1x128xf32>
    %3088 = vector.broadcast %3087 : vector<1x128xf32> to vector<8x128xf32>
    %3089 = arith.mulf %3088, %3034 : vector<8x128xf32>
    %c33_1555 = arith.constant 33 : index
    %c0_1556 = arith.constant 0 : index
    %3090 = vector.load %arg1[%c33_1555, %c0_1556] : memref<61x128xf32, #tpu.memory_space<vmem>>, vector<1x128xf32>
    %3091 = vector.broadcast %3090 : vector<1x128xf32> to vector<8x128xf32>
    %3092 = arith.mulf %3091, %3035 : vector<8x128xf32>
    %3093 = arith.addf %3089, %3092 : vector<8x128xf32>
    %3094 = arith.addf %3086, %3093 : vector<8x128xf32>
    %c7_1557 = arith.constant 7 : index
    %c0_1558 = arith.constant 0 : index
    %3095 = vector.load %arg1[%c7_1557, %c0_1558] : memref<61x128xf32, #tpu.memory_space<vmem>>, vector<1x128xf32>
    %3096 = vector.broadcast %3095 : vector<1x128xf32> to vector<8x128xf32>
    %3097 = arith.mulf %3096, %3036 : vector<8x128xf32>
    %c34_1559 = arith.constant 34 : index
    %c0_1560 = arith.constant 0 : index
    %3098 = vector.load %arg1[%c34_1559, %c0_1560] : memref<61x128xf32, #tpu.memory_space<vmem>>, vector<1x128xf32>
    %3099 = vector.broadcast %3098 : vector<1x128xf32> to vector<8x128xf32>
    %3100 = arith.mulf %3099, %3037 : vector<8x128xf32>
    %3101 = arith.addf %3097, %3100 : vector<8x128xf32>
    %3102 = arith.addf %3094, %3101 : vector<8x128xf32>
    %c8_1561 = arith.constant 8 : index
    %c0_1562 = arith.constant 0 : index
    %3103 = vector.load %arg1[%c8_1561, %c0_1562] : memref<61x128xf32, #tpu.memory_space<vmem>>, vector<1x128xf32>
    %3104 = vector.broadcast %3103 : vector<1x128xf32> to vector<8x128xf32>
    %3105 = arith.mulf %3104, %3038 : vector<8x128xf32>
    %c35_1563 = arith.constant 35 : index
    %c0_1564 = arith.constant 0 : index
    %3106 = vector.load %arg1[%c35_1563, %c0_1564] : memref<61x128xf32, #tpu.memory_space<vmem>>, vector<1x128xf32>
    %3107 = vector.broadcast %3106 : vector<1x128xf32> to vector<8x128xf32>
    %3108 = arith.mulf %3107, %3039 : vector<8x128xf32>
    %3109 = arith.addf %3105, %3108 : vector<8x128xf32>
    %3110 = arith.addf %3102, %3109 : vector<8x128xf32>
    %cst_1565 = arith.constant 0.000000e+00 : f32
    %3111 = vector.broadcast %cst_1565 : f32 to vector<1x128xf32>
    %3112 = vector.extract_strided_slice %3110 {offsets = [0, 0], sizes = [7, 128], strides = [1, 1]} : vector<8x128xf32> to vector<7x128xf32>
    %3113 = tpu.concatenate %3111, %3112 in 0 : vector<1x128xf32>, vector<7x128xf32> -> vector<8x128xf32>
    %c9_1566 = arith.constant 9 : index
    %c0_1567 = arith.constant 0 : index
    %3114 = vector.load %arg1[%c9_1566, %c0_1567] : memref<61x128xf32, #tpu.memory_space<vmem>>, vector<1x128xf32>
    %3115 = vector.broadcast %3114 : vector<1x128xf32> to vector<8x128xf32>
    %3116 = arith.mulf %3115, %3023 : vector<8x128xf32>
    %c36_1568 = arith.constant 36 : index
    %c0_1569 = arith.constant 0 : index
    %3117 = vector.load %arg1[%c36_1568, %c0_1569] : memref<61x128xf32, #tpu.memory_space<vmem>>, vector<1x128xf32>
    %3118 = vector.broadcast %3117 : vector<1x128xf32> to vector<8x128xf32>
    %3119 = arith.mulf %3118, %3024 : vector<8x128xf32>
    %3120 = arith.addf %3116, %3119 : vector<8x128xf32>
    %c10_1570 = arith.constant 10 : index
    %c0_1571 = arith.constant 0 : index
    %3121 = vector.load %arg1[%c10_1570, %c0_1571] : memref<61x128xf32, #tpu.memory_space<vmem>>, vector<1x128xf32>
    %3122 = vector.broadcast %3121 : vector<1x128xf32> to vector<8x128xf32>
    %3123 = arith.mulf %3122, %3025 : vector<8x128xf32>
    %c37_1572 = arith.constant 37 : index
    %c0_1573 = arith.constant 0 : index
    %3124 = vector.load %arg1[%c37_1572, %c0_1573] : memref<61x128xf32, #tpu.memory_space<vmem>>, vector<1x128xf32>
    %3125 = vector.broadcast %3124 : vector<1x128xf32> to vector<8x128xf32>
    %3126 = arith.mulf %3125, %3026 : vector<8x128xf32>
    %3127 = arith.addf %3123, %3126 : vector<8x128xf32>
    %3128 = arith.addf %3120, %3127 : vector<8x128xf32>
    %c11_1574 = arith.constant 11 : index
    %c0_1575 = arith.constant 0 : index
    %3129 = vector.load %arg1[%c11_1574, %c0_1575] : memref<61x128xf32, #tpu.memory_space<vmem>>, vector<1x128xf32>
    %3130 = vector.broadcast %3129 : vector<1x128xf32> to vector<8x128xf32>
    %3131 = arith.mulf %3130, %3027 : vector<8x128xf32>
    %c38_1576 = arith.constant 38 : index
    %c0_1577 = arith.constant 0 : index
    %3132 = vector.load %arg1[%c38_1576, %c0_1577] : memref<61x128xf32, #tpu.memory_space<vmem>>, vector<1x128xf32>
    %3133 = vector.broadcast %3132 : vector<1x128xf32> to vector<8x128xf32>
    %3134 = arith.mulf %3133, %3028 : vector<8x128xf32>
    %3135 = arith.addf %3131, %3134 : vector<8x128xf32>
    %3136 = arith.addf %3128, %3135 : vector<8x128xf32>
    %c12_1578 = arith.constant 12 : index
    %c0_1579 = arith.constant 0 : index
    %3137 = vector.load %arg1[%c12_1578, %c0_1579] : memref<61x128xf32, #tpu.memory_space<vmem>>, vector<1x128xf32>
    %3138 = vector.broadcast %3137 : vector<1x128xf32> to vector<8x128xf32>
    %3139 = arith.mulf %3138, %3029 : vector<8x128xf32>
    %c39_1580 = arith.constant 39 : index
    %c0_1581 = arith.constant 0 : index
    %3140 = vector.load %arg1[%c39_1580, %c0_1581] : memref<61x128xf32, #tpu.memory_space<vmem>>, vector<1x128xf32>
    %3141 = vector.broadcast %3140 : vector<1x128xf32> to vector<8x128xf32>
    %3142 = arith.mulf %3141, %3030 : vector<8x128xf32>
    %3143 = arith.addf %3139, %3142 : vector<8x128xf32>
    %3144 = arith.addf %3136, %3143 : vector<8x128xf32>
    %c13_1582 = arith.constant 13 : index
    %c0_1583 = arith.constant 0 : index
    %3145 = vector.load %arg1[%c13_1582, %c0_1583] : memref<61x128xf32, #tpu.memory_space<vmem>>, vector<1x128xf32>
    %3146 = vector.broadcast %3145 : vector<1x128xf32> to vector<8x128xf32>
    %3147 = arith.mulf %3146, %3022 : vector<8x128xf32>
    %c40_1584 = arith.constant 40 : index
    %c0_1585 = arith.constant 0 : index
    %3148 = vector.load %arg1[%c40_1584, %c0_1585] : memref<61x128xf32, #tpu.memory_space<vmem>>, vector<1x128xf32>
    %3149 = vector.broadcast %3148 : vector<1x128xf32> to vector<8x128xf32>
    %3150 = arith.mulf %3149, %3031 : vector<8x128xf32>
    %3151 = arith.addf %3147, %3150 : vector<8x128xf32>
    %3152 = arith.addf %3144, %3151 : vector<8x128xf32>
    %c14_1586 = arith.constant 14 : index
    %c0_1587 = arith.constant 0 : index
    %3153 = vector.load %arg1[%c14_1586, %c0_1587] : memref<61x128xf32, #tpu.memory_space<vmem>>, vector<1x128xf32>
    %3154 = vector.broadcast %3153 : vector<1x128xf32> to vector<8x128xf32>
    %3155 = arith.mulf %3154, %3032 : vector<8x128xf32>
    %c41_1588 = arith.constant 41 : index
    %c0_1589 = arith.constant 0 : index
    %3156 = vector.load %arg1[%c41_1588, %c0_1589] : memref<61x128xf32, #tpu.memory_space<vmem>>, vector<1x128xf32>
    %3157 = vector.broadcast %3156 : vector<1x128xf32> to vector<8x128xf32>
    %3158 = arith.mulf %3157, %3033 : vector<8x128xf32>
    %3159 = arith.addf %3155, %3158 : vector<8x128xf32>
    %3160 = arith.addf %3152, %3159 : vector<8x128xf32>
    %c15_1590 = arith.constant 15 : index
    %c0_1591 = arith.constant 0 : index
    %3161 = vector.load %arg1[%c15_1590, %c0_1591] : memref<61x128xf32, #tpu.memory_space<vmem>>, vector<1x128xf32>
    %3162 = vector.broadcast %3161 : vector<1x128xf32> to vector<8x128xf32>
    %3163 = arith.mulf %3162, %3034 : vector<8x128xf32>
    %c42_1592 = arith.constant 42 : index
    %c0_1593 = arith.constant 0 : index
    %3164 = vector.load %arg1[%c42_1592, %c0_1593] : memref<61x128xf32, #tpu.memory_space<vmem>>, vector<1x128xf32>
    %3165 = vector.broadcast %3164 : vector<1x128xf32> to vector<8x128xf32>
    %3166 = arith.mulf %3165, %3035 : vector<8x128xf32>
    %3167 = arith.addf %3163, %3166 : vector<8x128xf32>
    %3168 = arith.addf %3160, %3167 : vector<8x128xf32>
    %c16_1594 = arith.constant 16 : index
    %c0_1595 = arith.constant 0 : index
    %3169 = vector.load %arg1[%c16_1594, %c0_1595] : memref<61x128xf32, #tpu.memory_space<vmem>>, vector<1x128xf32>
    %3170 = vector.broadcast %3169 : vector<1x128xf32> to vector<8x128xf32>
    %3171 = arith.mulf %3170, %3036 : vector<8x128xf32>
    %c43_1596 = arith.constant 43 : index
    %c0_1597 = arith.constant 0 : index
    %3172 = vector.load %arg1[%c43_1596, %c0_1597] : memref<61x128xf32, #tpu.memory_space<vmem>>, vector<1x128xf32>
    %3173 = vector.broadcast %3172 : vector<1x128xf32> to vector<8x128xf32>
    %3174 = arith.mulf %3173, %3037 : vector<8x128xf32>
    %3175 = arith.addf %3171, %3174 : vector<8x128xf32>
    %3176 = arith.addf %3168, %3175 : vector<8x128xf32>
    %c17_1598 = arith.constant 17 : index
    %c0_1599 = arith.constant 0 : index
    %3177 = vector.load %arg1[%c17_1598, %c0_1599] : memref<61x128xf32, #tpu.memory_space<vmem>>, vector<1x128xf32>
    %3178 = vector.broadcast %3177 : vector<1x128xf32> to vector<8x128xf32>
    %3179 = arith.mulf %3178, %3038 : vector<8x128xf32>
    %c44_1600 = arith.constant 44 : index
    %c0_1601 = arith.constant 0 : index
    %3180 = vector.load %arg1[%c44_1600, %c0_1601] : memref<61x128xf32, #tpu.memory_space<vmem>>, vector<1x128xf32>
    %3181 = vector.broadcast %3180 : vector<1x128xf32> to vector<8x128xf32>
    %3182 = arith.mulf %3181, %3039 : vector<8x128xf32>
    %3183 = arith.addf %3179, %3182 : vector<8x128xf32>
    %3184 = arith.addf %3176, %3183 : vector<8x128xf32>
    %3185 = arith.addf %3113, %3184 : vector<8x128xf32>
    %c18_1602 = arith.constant 18 : index
    %c0_1603 = arith.constant 0 : index
    %3186 = vector.load %arg1[%c18_1602, %c0_1603] : memref<61x128xf32, #tpu.memory_space<vmem>>, vector<1x128xf32>
    %3187 = vector.broadcast %3186 : vector<1x128xf32> to vector<8x128xf32>
    %3188 = arith.mulf %3187, %3023 : vector<8x128xf32>
    %c45_1604 = arith.constant 45 : index
    %c0_1605 = arith.constant 0 : index
    %3189 = vector.load %arg1[%c45_1604, %c0_1605] : memref<61x128xf32, #tpu.memory_space<vmem>>, vector<1x128xf32>
    %3190 = vector.broadcast %3189 : vector<1x128xf32> to vector<8x128xf32>
    %3191 = arith.mulf %3190, %3024 : vector<8x128xf32>
    %3192 = arith.addf %3188, %3191 : vector<8x128xf32>
    %c19_1606 = arith.constant 19 : index
    %c0_1607 = arith.constant 0 : index
    %3193 = vector.load %arg1[%c19_1606, %c0_1607] : memref<61x128xf32, #tpu.memory_space<vmem>>, vector<1x128xf32>
    %3194 = vector.broadcast %3193 : vector<1x128xf32> to vector<8x128xf32>
    %3195 = arith.mulf %3194, %3025 : vector<8x128xf32>
    %c46_1608 = arith.constant 46 : index
    %c0_1609 = arith.constant 0 : index
    %3196 = vector.load %arg1[%c46_1608, %c0_1609] : memref<61x128xf32, #tpu.memory_space<vmem>>, vector<1x128xf32>
    %3197 = vector.broadcast %3196 : vector<1x128xf32> to vector<8x128xf32>
    %3198 = arith.mulf %3197, %3026 : vector<8x128xf32>
    %3199 = arith.addf %3195, %3198 : vector<8x128xf32>
    %3200 = arith.addf %3192, %3199 : vector<8x128xf32>
    %c20_1610 = arith.constant 20 : index
    %c0_1611 = arith.constant 0 : index
    %3201 = vector.load %arg1[%c20_1610, %c0_1611] : memref<61x128xf32, #tpu.memory_space<vmem>>, vector<1x128xf32>
    %3202 = vector.broadcast %3201 : vector<1x128xf32> to vector<8x128xf32>
    %3203 = arith.mulf %3202, %3027 : vector<8x128xf32>
    %c47_1612 = arith.constant 47 : index
    %c0_1613 = arith.constant 0 : index
    %3204 = vector.load %arg1[%c47_1612, %c0_1613] : memref<61x128xf32, #tpu.memory_space<vmem>>, vector<1x128xf32>
    %3205 = vector.broadcast %3204 : vector<1x128xf32> to vector<8x128xf32>
    %3206 = arith.mulf %3205, %3028 : vector<8x128xf32>
    %3207 = arith.addf %3203, %3206 : vector<8x128xf32>
    %3208 = arith.addf %3200, %3207 : vector<8x128xf32>
    %c21_1614 = arith.constant 21 : index
    %c0_1615 = arith.constant 0 : index
    %3209 = vector.load %arg1[%c21_1614, %c0_1615] : memref<61x128xf32, #tpu.memory_space<vmem>>, vector<1x128xf32>
    %3210 = vector.broadcast %3209 : vector<1x128xf32> to vector<8x128xf32>
    %3211 = arith.mulf %3210, %3029 : vector<8x128xf32>
    %c48_1616 = arith.constant 48 : index
    %c0_1617 = arith.constant 0 : index
    %3212 = vector.load %arg1[%c48_1616, %c0_1617] : memref<61x128xf32, #tpu.memory_space<vmem>>, vector<1x128xf32>
    %3213 = vector.broadcast %3212 : vector<1x128xf32> to vector<8x128xf32>
    %3214 = arith.mulf %3213, %3030 : vector<8x128xf32>
    %3215 = arith.addf %3211, %3214 : vector<8x128xf32>
    %3216 = arith.addf %3208, %3215 : vector<8x128xf32>
    %c22_1618 = arith.constant 22 : index
    %c0_1619 = arith.constant 0 : index
    %3217 = vector.load %arg1[%c22_1618, %c0_1619] : memref<61x128xf32, #tpu.memory_space<vmem>>, vector<1x128xf32>
    %3218 = vector.broadcast %3217 : vector<1x128xf32> to vector<8x128xf32>
    %3219 = arith.mulf %3218, %3022 : vector<8x128xf32>
    %c49_1620 = arith.constant 49 : index
    %c0_1621 = arith.constant 0 : index
    %3220 = vector.load %arg1[%c49_1620, %c0_1621] : memref<61x128xf32, #tpu.memory_space<vmem>>, vector<1x128xf32>
    %3221 = vector.broadcast %3220 : vector<1x128xf32> to vector<8x128xf32>
    %3222 = arith.mulf %3221, %3031 : vector<8x128xf32>
    %3223 = arith.addf %3219, %3222 : vector<8x128xf32>
    %3224 = arith.addf %3216, %3223 : vector<8x128xf32>
    %c23_1622 = arith.constant 23 : index
    %c0_1623 = arith.constant 0 : index
    %3225 = vector.load %arg1[%c23_1622, %c0_1623] : memref<61x128xf32, #tpu.memory_space<vmem>>, vector<1x128xf32>
    %3226 = vector.broadcast %3225 : vector<1x128xf32> to vector<8x128xf32>
    %3227 = arith.mulf %3226, %3032 : vector<8x128xf32>
    %c50_1624 = arith.constant 50 : index
    %c0_1625 = arith.constant 0 : index
    %3228 = vector.load %arg1[%c50_1624, %c0_1625] : memref<61x128xf32, #tpu.memory_space<vmem>>, vector<1x128xf32>
    %3229 = vector.broadcast %3228 : vector<1x128xf32> to vector<8x128xf32>
    %3230 = arith.mulf %3229, %3033 : vector<8x128xf32>
    %3231 = arith.addf %3227, %3230 : vector<8x128xf32>
    %3232 = arith.addf %3224, %3231 : vector<8x128xf32>
    %c24_1626 = arith.constant 24 : index
    %c0_1627 = arith.constant 0 : index
    %3233 = vector.load %arg1[%c24_1626, %c0_1627] : memref<61x128xf32, #tpu.memory_space<vmem>>, vector<1x128xf32>
    %3234 = vector.broadcast %3233 : vector<1x128xf32> to vector<8x128xf32>
    %3235 = arith.mulf %3234, %3034 : vector<8x128xf32>
    %c51_1628 = arith.constant 51 : index
    %c0_1629 = arith.constant 0 : index
    %3236 = vector.load %arg1[%c51_1628, %c0_1629] : memref<61x128xf32, #tpu.memory_space<vmem>>, vector<1x128xf32>
    %3237 = vector.broadcast %3236 : vector<1x128xf32> to vector<8x128xf32>
    %3238 = arith.mulf %3237, %3035 : vector<8x128xf32>
    %3239 = arith.addf %3235, %3238 : vector<8x128xf32>
    %3240 = arith.addf %3232, %3239 : vector<8x128xf32>
    %c25_1630 = arith.constant 25 : index
    %c0_1631 = arith.constant 0 : index
    %3241 = vector.load %arg1[%c25_1630, %c0_1631] : memref<61x128xf32, #tpu.memory_space<vmem>>, vector<1x128xf32>
    %3242 = vector.broadcast %3241 : vector<1x128xf32> to vector<8x128xf32>
    %3243 = arith.mulf %3242, %3036 : vector<8x128xf32>
    %c52_1632 = arith.constant 52 : index
    %c0_1633 = arith.constant 0 : index
    %3244 = vector.load %arg1[%c52_1632, %c0_1633] : memref<61x128xf32, #tpu.memory_space<vmem>>, vector<1x128xf32>
    %3245 = vector.broadcast %3244 : vector<1x128xf32> to vector<8x128xf32>
    %3246 = arith.mulf %3245, %3037 : vector<8x128xf32>
    %3247 = arith.addf %3243, %3246 : vector<8x128xf32>
    %3248 = arith.addf %3240, %3247 : vector<8x128xf32>
    %c26_1634 = arith.constant 26 : index
    %c0_1635 = arith.constant 0 : index
    %3249 = vector.load %arg1[%c26_1634, %c0_1635] : memref<61x128xf32, #tpu.memory_space<vmem>>, vector<1x128xf32>
    %3250 = vector.broadcast %3249 : vector<1x128xf32> to vector<8x128xf32>
    %3251 = arith.mulf %3250, %3038 : vector<8x128xf32>
    %c53_1636 = arith.constant 53 : index
    %c0_1637 = arith.constant 0 : index
    %3252 = vector.load %arg1[%c53_1636, %c0_1637] : memref<61x128xf32, #tpu.memory_space<vmem>>, vector<1x128xf32>
    %3253 = vector.broadcast %3252 : vector<1x128xf32> to vector<8x128xf32>
    %3254 = arith.mulf %3253, %3039 : vector<8x128xf32>
    %3255 = arith.addf %3251, %3254 : vector<8x128xf32>
    %3256 = arith.addf %3248, %3255 : vector<8x128xf32>
    %cst_1638 = arith.constant 0.000000e+00 : f32
    %3257 = vector.broadcast %cst_1638 : f32 to vector<1x128xf32>
    %3258 = vector.extract_strided_slice %3256 {offsets = [1, 0], sizes = [7, 128], strides = [1, 1]} : vector<8x128xf32> to vector<7x128xf32>
    %3259 = tpu.concatenate %3258, %3257 in 0 : vector<7x128xf32>, vector<1x128xf32> -> vector<8x128xf32>
    %3260 = arith.addf %3185, %3259 : vector<8x128xf32>
    %c54_1639 = arith.constant 54 : index
    %c0_1640 = arith.constant 0 : index
    %3261 = vector.load %arg1[%c54_1639, %c0_1640] : memref<61x128xf32, #tpu.memory_space<vmem>>, vector<1x128xf32>
    %3262 = vector.broadcast %3261 : vector<1x128xf32> to vector<8x128xf32>
    %3263 = arith.addf %3260, %3262 : vector<8x128xf32>
    %c64_i32_1641 = arith.constant 64 : i32
    %3264 = tpu.dynamic_rotate %3263 by %c64_i32_1641 dim 1 : vector<8x128xf32>, i32 -> vector<8x128xf32>
    %3265 = arith.subf %3263, %3264 : vector<8x128xf32>
    %cst_1642 = arith.constant 5.000000e-01 : f32
    %3266 = vector.broadcast %cst_1642 : f32 to vector<8x128xf32>
    %3267 = arith.mulf %3266, %3265 : vector<8x128xf32>
    %3268 = math.tanh %3267 : vector<8x128xf32>
    %cst_1643 = arith.constant 1.000000e+00 : f32
    %3269 = vector.broadcast %cst_1643 : f32 to vector<8x128xf32>
    %3270 = arith.addf %3268, %3269 : vector<8x128xf32>
    %cst_1644 = arith.constant 5.000000e-01 : f32
    %3271 = vector.broadcast %cst_1644 : f32 to vector<8x128xf32>
    %3272 = arith.mulf %3271, %3270 : vector<8x128xf32>
    %c0_1645 = arith.constant 0 : index
    %c0_1646 = arith.constant 0 : index
    %c0_1647 = arith.constant 0 : index
    %3273 = vector.load %arg4[%c0_1645, %c0_1646, %c0_1647] : memref<1x8x128xf32, #tpu.memory_space<vmem>>, vector<1x8x128xf32>
    %3274 = vector.shape_cast %3273 : vector<1x8x128xf32> to vector<8x128xf32>
    %3275 = vector.shape_cast %3272 : vector<8x128xf32> to vector<1x8x128xf32>
    tpu.vector_store %arg4[%c0_1645, %c0_1646, %c0_1647], %3275 {strides = array<i32>} : memref<1x8x128xf32, #tpu.memory_space<vmem>>, vector<1x8x128xf32>,
    return
  }
  func.func @transform_0(%arg0: i32) -> (i32, i32) {
    %c0_i32 = arith.constant 0 : i32
    %c0_i32_0 = arith.constant 0 : i32
    %c0_i32_1 = arith.constant 0 : i32
    return %c0_i32, %c0_i32_0 : i32, i32
  }
  func.func @transform_1(%arg0: i32) -> (i32, i32, i32) {
    %c0_i32 = arith.constant 0 : i32
    %c0_i32_0 = arith.constant 0 : i32
    %c0_i32_1 = arith.constant 0 : i32
    return %arg0, %c0_i32, %c0_i32_0 : i32, i32, i32
  }
  func.func @transform_2(%arg0: i32) -> (i32, i32, i32) {
    %c0_i32 = arith.constant 0 : i32
    %c0_i32_0 = arith.constant 0 : i32
    %c0_i32_1 = arith.constant 0 : i32
    return %arg0, %c0_i32, %c0_i32_0 : i32, i32, i32
  }
  func.func @transform_3(%arg0: i32) -> (i32, i32, i32) {
    %c0_i32 = arith.constant 0 : i32
    %c0_i32_0 = arith.constant 0 : i32
    %c0_i32_1 = arith.constant 0 : i32
    return %arg0, %c0_i32, %c0_i32_0 : i32, i32, i32
  }
}

</mosaic_0001>

<llo_original>
// kernel: gru_model_forward.1
$region0: #{gru_model_forward.1}
  #allocation0 [shape = 'u32[]', space=smem, size = 0x4, offset = 0x4, fixed_abs, tag = 'smem constant byte address 0x4 - core index']
  #allocation1 [shape = 'u32[144,128]{1,0:T(1,128)}', space=vmem, size = 0x12000, scoped, tag = 'internal scratch']
  %s0 = inlined_call_operand.vmem [shape: f32[61,128], index: 0, kind: input, shape index: {}]
  %s1 = inlined_call_operand.vmem [shape: f32[2,8,128], index: 1, kind: input, shape index: {}]
  %s2 = inlined_call_operand.vmem [shape: f32[2,8,128], index: 2, kind: input, shape index: {}]
  %s3 = inlined_call_operand.vmem [shape: f32[2,8,128], index: 3, kind: output, shape index: {}]
  %s4 = sld [smem:[#allocation0]]
  $region45: #{gru_model_forward.1} parent=0
    _
  %s6 = ssub.s32 1, %s4
  %s7 = scalar_select 0, %s6, %s4
  loop: start=0, step=1, limit=4
  $region2: #{gru_model_forward.1} parent=0 // loop_pre_header
    _
  $region3: #{gru_model_forward.1} parent=0 // loop_header
    %s9 = sphi 0, %s13
    %p10 = scmp.ge.s32.totalorder %s9, 4
    %s17 = sphi 0, %s17
    %s19 = sphi 0, %s17
    %s20 = sphi 0, %s19
    %s34 = sphi 0, %s20
    %s40 = sphi 0, %s42
    %s43 = sphi 0, %s40
    %s44 = sphi 0, %s43
    %s60 = sphi 0, %s44
    %s66 = sphi 0, %s68
    %s69 = sphi 0, %s66
    %s70 = sphi 0, %s69
    %s86 = sphi 0, %s70
    %s92 = sphi 0, %s94
    %s95 = sphi 0, %s92
    %s96 = sphi 0, %s95
    %s112 = sphi 0, %s96
  $region4: #{gru_model_forward.1} parent=0 // loop_header_branch
    %12 = sbr.rel (%p10) target = $region8
  $region5: #{gru_model_forward.1} parent=0 // loop_body
    %s14 = ssub.s32 %s9, 1
    %s15 = ssub.s32 %s9, 2
    %s16 = sadd.s32 %s9, 1
    %s18 = sadd.s32 %s17, 1
    %p21 = scmp.eq.s32.totalorder %s9, 1
    %p22 = scmp.ne.s32.totalorder %s17, %s19
    %p23 = scmp.eq.s32.totalorder %s9, 0
    %p24 = por %p22, %p23
    %p25 = scmp.ne.s32.totalorder %s17, %s19
    %p26 = scmp.eq.s32.totalorder %s14, 1
    %p27 = por %p25, %p26
    %p28 = scmp.ne.s32.totalorder %s19, %s20
    %p29 = scmp.eq.s32.totalorder %s14, 0
    %p30 = por %p28, %p29
    %p31 = scmp.ne.s32.totalorder %s19, %s20
    %p32 = scmp.eq.s32.totalorder %s15, 1
    %p33 = por %p31, %p32
    %p35 = scmp.ne.s32.totalorder %s20, %s34
    %p36 = scmp.eq.s32.totalorder %s15, 0
    %p37 = por %p35, %p36
    %s38 = ssub.s32 %s9, %s16
    %p39 = scmp.eq.s32.totalorder %s38, 0
    %s41 = sadd.s32 %s40, 1
    %s42 = scalar_select %p39, %s40, %s41
    %p45 = pneg %p39
    %p46 = scmp.eq.s32.totalorder %s9, 1
    %p47 = por %p45, %p46
    %p48 = scmp.ne.s32.totalorder %s40, %s43
    %p49 = scmp.eq.s32.totalorder %s9, 0
    %p50 = por %p48, %p49
    %p51 = scmp.ne.s32.totalorder %s40, %s43
    %p52 = scmp.eq.s32.totalorder %s14, 1
    %p53 = por %p51, %p52
    %p54 = scmp.ne.s32.totalorder %s43, %s44
    %p55 = scmp.eq.s32.totalorder %s14, 0
    %p56 = por %p54, %p55
    %p57 = scmp.ne.s32.totalorder %s43, %s44
    %p58 = scmp.eq.s32.totalorder %s15, 1
    %p59 = por %p57, %p58
    %p61 = scmp.ne.s32.totalorder %s44, %s60
    %p62 = scmp.eq.s32.totalorder %s15, 0
    %p63 = por %p61, %p62
    %s64 = ssub.s32 %s9, %s16
    %p65 = scmp.eq.s32.totalorder %s64, 0
    %s67 = sadd.s32 %s66, 1
    %s68 = scalar_select %p65, %s66, %s67
    %p71 = pneg %p65
    %p72 = scmp.eq.s32.totalorder %s9, 1
    %p73 = por %p71, %p72
    %p74 = scmp.ne.s32.totalorder %s66, %s69
    %p75 = scmp.eq.s32.totalorder %s9, 0
    %p76 = por %p74, %p75
    %p77 = scmp.ne.s32.totalorder %s66, %s69
    %p78 = scmp.eq.s32.totalorder %s14, 1
    %p79 = por %p77, %p78
    %p80 = scmp.ne.s32.totalorder %s69, %s70
    %p81 = scmp.eq.s32.totalorder %s14, 0
    %p82 = por %p80, %p81
    %p83 = scmp.ne.s32.totalorder %s69, %s70
    %p84 = scmp.eq.s32.totalorder %s15, 1
    %p85 = por %p83, %p84
    %p87 = scmp.ne.s32.totalorder %s70, %s86
    %p88 = scmp.eq.s32.totalorder %s15, 0
    %p89 = por %p87, %p88
    %s90 = ssub.s32 %s9, %s16
    %p91 = scmp.eq.s32.totalorder %s90, 0
    %s93 = sadd.s32 %s92, 1
    %s94 = scalar_select %p91, %s92, %s93
    %p97 = pneg %p91
    %p98 = scmp.eq.s32.totalorder %s9, 1
    %p99 = por %p97, %p98
    %p100 = scmp.ne.s32.totalorder %s92, %s95
    %p101 = scmp.eq.s32.totalorder %s9, 0
    %p102 = por %p100, %p101
    %p103 = scmp.ne.s32.totalorder %s92, %s95
    %p104 = scmp.eq.s32.totalorder %s14, 1
    %p105 = por %p103, %p104
    %p106 = scmp.ne.s32.totalorder %s95, %s96
    %p107 = scmp.eq.s32.totalorder %s14, 0
    %p108 = por %p106, %p107
    %p109 = scmp.ne.s32.totalorder %s95, %s96
    %p110 = scmp.eq.s32.totalorder %s15, 1
    %p111 = por %p109, %p110
    %p113 = scmp.ne.s32.totalorder %s96, %s112
    %p114 = scmp.eq.s32.totalorder %s15, 0
    %p115 = por %p113, %p114
    %p116 = scmp.le.s32.totalorder 1, %s9
    %p117 = scmp.lt.s32.totalorder %s9, 3
    %p118 = pnand %p116, %p117
    %p119 = pneg %p118
    // Predicated region
    $region9: #{gru_model_forward.1} parent=5 // pred_check
      _
    $region10: #{gru_model_forward.1} parent=5 // pred_check_branch
      %121 = sbr.rel (%p118) target = $region12
    $region11: #{gru_model_forward.1} parent=5 // pred_region
      %s122 = ssub.s32 %s9, 1
      // Predicated region
      $region13: #{gru_model_forward.1} parent=11 // pred_check
        %p123 = pneg %p30
      $region14: #{gru_model_forward.1} parent=11 // pred_check_branch
        %125 = sbr.rel (%p123) target = $region16
      $region15: #{gru_model_forward.1} parent=11 // pred_region
        _
      $region16: #{gru_model_forward.1} parent=11 // pred_fallthru
        _
    $region12: #{gru_model_forward.1} parent=5 // pred_fallthru
      _
    %p126 = scmp.lt.s32.totalorder %s9, 2
    // Predicated region
    $region17: #{gru_model_forward.1} parent=5 // pred_check
      %p127 = pneg %p126
    $region18: #{gru_model_forward.1} parent=5 // pred_check_branch
      %129 = sbr.rel (%p127) target = $region20
    $region19: #{gru_model_forward.1} parent=5 // pred_region
      // Predicated region
      $region21: #{gru_model_forward.1} parent=19 // pred_check
        %p130 = pneg %p50
      $region22: #{gru_model_forward.1} parent=19 // pred_check_branch
        %132 = sbr.rel (%p130) target = $region24
      $region23: #{gru_model_forward.1} parent=19 // pred_region
        %p133 = scmp.lt.s32.totalorder %s9, 1
        %s134 = scalar_select %p133, %s9, 1
        %s135 = smul.addr %s134, 8
        %s136 = scalar_lea.vmem %s1, %s135
      $region24: #{gru_model_forward.1} parent=19 // pred_fallthru
        _
      // Predicated region
      $region25: #{gru_model_forward.1} parent=19 // pred_check
        %p137 = pneg %p76
      $region26: #{gru_model_forward.1} parent=19 // pred_check_branch
        %139 = sbr.rel (%p137) target = $region28
      $region27: #{gru_model_forward.1} parent=19 // pred_region
        %p140 = scmp.lt.s32.totalorder %s9, 1
        %s141 = scalar_select %p140, %s9, 1
        %s142 = smul.addr %s141, 8
        %s143 = scalar_lea.vmem %s2, %s142
      $region28: #{gru_model_forward.1} parent=19 // pred_fallthru
        _
    $region20: #{gru_model_forward.1} parent=5 // pred_fallthru
      _
    %p144 = scmp.le.s32.totalorder 1, %s9
    %p145 = scmp.lt.s32.totalorder %s9, 3
    %p146 = pnand %p144, %p145
    %p147 = pneg %p146
    // Predicated region
    $region29: #{gru_model_forward.1} parent=5 // pred_check
      _
    $region30: #{gru_model_forward.1} parent=5 // pred_check_branch
      %149 = sbr.rel (%p146) target = $region32
    $region31: #{gru_model_forward.1} parent=5 // pred_region
      %s150 = ssub.s32 %s9, 1
      %p151 = pneg %p30
      %p152 = pneg %p27
      %p153 = scmp.lt.s32.totalorder %s14, 1
      %s154 = scalar_select %p153, %s14, 1
      %s155 = smul.addr %s154, 8
      %s156 = scalar_lea.vmem %s1, %s155
      %p157 = pneg %p56
      %p158 = pneg %p53
      %p159 = scmp.lt.s32.totalorder %s14, 1
      %s160 = scalar_select %p159, %s14, 1
      %s161 = smul.addr %s160, 8
      %s162 = scalar_lea.vmem %s2, %s161
      %p163 = pneg %p82
      %p164 = pneg %p79
      %p165 = pneg %p108
      %p166 = pneg %p105
      %p167 = scmp.lt.s32.totalorder %s14, 1
      %s168 = scalar_select %p167, %s14, 1
      %s169 = smul.addr %s168, 8
      %s170 = scalar_lea.vmem %s3, %s169
      %p171 = scmp.lt.s32.totalorder %s14, 1
      %s172 = scalar_select %p171, %s14, 1
      %s173 = smul.addr %s172, 8
      %s174 = scalar_lea.vmem %s1, %s173
      %p175 = scmp.lt.s32.totalorder %s14, 1
      %s176 = scalar_select %p175, %s14, 1
      %s177 = smul.addr %s176, 8
      %s178 = scalar_lea.vmem %s2, %s177
      %p179 = scmp.lt.s32.totalorder %s14, 1
      %s180 = scalar_select %p179, %s14, 1
      %s181 = smul.addr %s180, 8
      %s182 = scalar_lea.vmem %s3, %s181
      %v183 = vld [vmem:[%s174] sm:$0xff]
      %v184 = vld [vmem:[%s0 + $0x37] sm:$0x1]
      %v185 = vlaneseq
      %v186 = vshrl.u32 %v185, 7
      %v187 = vsub.s32 0, %v186
      %v188 = vrot.slane %v184, %v187
      %v189 = vmul.f32 %v188, %v183
      %v190 = vld [vmem:[%s0 + $0x38] sm:$0x1]
      %v191 = vlaneseq
      %v192 = vshrl.u32 %v191, 7
      %v193 = vsub.s32 0, %v192
      %v194 = vrot.slane %v190, %v193
      %v195 = vadd.f32 %v189, %v194
      %v196 = vld [vmem:[%s0 + $0x3c] sm:$0x1]
      %197 = vadd.xlane.f32.xlu0 %v195
      %v198 = vpop.xlane.xlu0 %197
      %v199 = vrot.slane %v198, 4
      %v200 = vadd.f32 %v198, %v199
      %v201 = vrot.slane %v200, 2
      %v202 = vadd.f32 %v200, %v201
      %v203 = vrot.slane %v202, 1
      %v204 = vadd.f32 %v202, %v203
      %s205 = vtos %v204
      %v206 = vlaneseq
      %v207 = vshrl.u32 %v206, 7
      %v208 = vsub.s32 0, %v207
      %v209 = vrot.slane %v196, %v208
      %v210 = vmul.f32 %v195, %v209
      %211 = vadd.xlane.f32.xlu0 %v210
      %v212 = vpop.xlane.xlu0 %211
      %v213 = vrot.slane %v212, 4
      %v214 = vadd.f32 %v212, %v213
      %v215 = vrot.slane %v214, 2
      %v216 = vadd.f32 %v214, %v215
      %v217 = vrot.slane %v216, 1
      %v218 = vadd.f32 %v216, %v217
      %s219 = vtos %v218
      %s220 = smul.f32 %s219, 0.001953125
      %v221 = vstv %s220
      %v222 = vmul.f32 %v221, %v196
      %s223 = ssub.f32 %s205, %s219
      %s224 = smul.f32 %s223, 0.001953125
      %v225 = vsub.f32 1.0, %v196
      %v226 = vstv %s224
      %v227 = vmul.f32 %v226, %v225
      %v228 = vadd.f32 %v222, %v227
      %v229 = vlaneseq
      %v230 = vshrl.u32 %v229, 7
      %v231 = vsub.s32 0, %v230
      %v232 = vrot.slane %v228, %v231
      %v233 = vsub.f32 %v195, %v232
      %v234 = vmul.f32 %v233, %v233
      %235 = vadd.xlane.f32.xlu0 %v234
      %v236 = vpop.xlane.xlu0 %235
      %v237 = vrot.slane %v236, 4
      %v238 = vadd.f32 %v236, %v237
      %v239 = vrot.slane %v238, 2
      %v240 = vadd.f32 %v238, %v239
      %v241 = vrot.slane %v240, 1
      %v242 = vadd.f32 %v240, %v241
      %s243 = vtos %v242
      %v244 = vmul.f32 %v234, %v209
      %245 = vadd.xlane.f32.xlu0 %v244
      %v246 = vpop.xlane.xlu0 %245
      %v247 = vrot.slane %v246, 4
      %v248 = vadd.f32 %v246, %v247
      %v249 = vrot.slane %v248, 2
      %v250 = vadd.f32 %v248, %v249
      %v251 = vrot.slane %v250, 1
      %v252 = vadd.f32 %v250, %v251
      %s253 = vtos %v252
      %s254 = smul.f32 %s253, 0.001953125
      %v255 = vstv %s254
      %v256 = vmul.f32 %v255, %v196
      %s257 = ssub.f32 %s243, %s253
      %s258 = smul.f32 %s257, 0.001953125
      %v259 = vstv %s258
      %v260 = vmul.f32 %v259, %v225
      %v261 = vadd.f32 %v256, %v260
      %v262 = vadd.f32 %v261, 1e-05
      %v263 = vrsqrt.pop %v262
      %v264 = vlaneseq
      %v265 = vshrl.u32 %v264, 7
      %v266 = vsub.s32 0, %v265
      %v267 = vrot.slane %v263, %v266
      %v268 = vmul.f32 %v233, %v267
      %v269 = vmax.f32 %v268, 0.0
      %v270 = vld [vmem:[%s0 + $0x39] sm:$0x1]
      %v271 = vlaneseq
      %v272 = vshrl.u32 %v271, 7
      %v273 = vsub.s32 0, %v272
      %v274 = vrot.slane %v270, %v273
      %v275 = vmul.f32 %v274, %v269
      %v276 = vld [vmem:[%s0 + $0x3a] sm:$0x1]
      %277 = vrot.lane.b32.xlu0 %v269, 64
      %v278 = vpop.permute.xlu0 %277
      %v279 = vlaneseq
      %v280 = vshrl.u32 %v279, 7
      %v281 = vsub.s32 0, %v280
      %v282 = vrot.slane %v276, %v281
      %v283 = vmul.f32 %v282, %v278
      %v284 = vadd.f32 %v275, %v283
      %v285 = vld [vmem:[%s0 + $0x3b] sm:$0x1]
      %v286 = vlaneseq
      %v287 = vshrl.u32 %v286, 7
      %v288 = vsub.s32 0, %v287
      %v289 = vrot.slane %v285, %v288
      %v290 = vadd.f32 %v284, %v289
      %291 = vrot.lane.b32.xlu0 %v290, 9
      %v292 = vpop.permute.xlu0 %291
      %293 = vrot.lane.b32.xlu0 %v290, 73
      %v294 = vpop.permute.xlu0 %293
      %295 = vrot.lane.b32.xlu0 %v290, 8
      %v296 = vpop.permute.xlu0 %295
      %297 = vrot.lane.b32.xlu0 %v290, 72
      %v298 = vpop.permute.xlu0 %297
      %299 = vrot.lane.b32.xlu0 %v290, 7
      %v300 = vpop.permute.xlu0 %299
      %301 = vrot.lane.b32.xlu0 %v290, 71
      %v302 = vpop.permute.xlu0 %301
      %303 = vrot.lane.b32.xlu0 %v290, 1
      %v304 = vpop.permute.xlu0 %303
      %305 = vrot.lane.b32.xlu0 %v290, 65
      %v306 = vpop.permute.xlu0 %305
      %307 = vrot.lane.b32.xlu0 %v290, 64
      %v308 = vpop.permute.xlu0 %307
      %309 = vrot.lane.b32.xlu0 %v290, 127
      %v310 = vpop.permute.xlu0 %309
      %311 = vrot.lane.b32.xlu0 %v290, 63
      %v312 = vpop.permute.xlu0 %311
      %313 = vrot.lane.b32.xlu0 %v290, 121
      %v314 = vpop.permute.xlu0 %313
      %315 = vrot.lane.b32.xlu0 %v290, 57
      %v316 = vpop.permute.xlu0 %315
      %317 = vrot.lane.b32.xlu0 %v290, 120
      %v318 = vpop.permute.xlu0 %317
      %319 = vrot.lane.b32.xlu0 %v290, 56
      %v320 = vpop.permute.xlu0 %319
      %321 = vrot.lane.b32.xlu0 %v290, 119
      %v322 = vpop.permute.xlu0 %321
      %323 = vrot.lane.b32.xlu0 %v290, 55
      %v324 = vpop.permute.xlu0 %323
      %v325 = vld [vmem:[%s0] sm:$0x1]
      %v326 = vlaneseq
      %v327 = vshrl.u32 %v326, 7
      %v328 = vsub.s32 0, %v327
      %v329 = vrot.slane %v325, %v328
      %v330 = vmul.f32 %v329, %v292
      %v331 = vld [vmem:[%s0 + $0x1b] sm:$0x1]
      %v332 = vlaneseq
      %v333 = vshrl.u32 %v332, 7
      %v334 = vsub.s32 0, %v333
      %v335 = vrot.slane %v331, %v334
      %v336 = vmul.f32 %v335, %v294
      %v337 = vadd.f32 %v330, %v336
      %v338 = vld [vmem:[%s0 + $0x1] sm:$0x1]
      %v339 = vlaneseq
      %v340 = vshrl.u32 %v339, 7
      %v341 = vsub.s32 0, %v340
      %v342 = vrot.slane %v338, %v341
      %v343 = vmul.f32 %v342, %v296
      %v344 = vld [vmem:[%s0 + $0x1c] sm:$0x1]
      %v345 = vlaneseq
      %v346 = vshrl.u32 %v345, 7
      %v347 = vsub.s32 0, %v346
      %v348 = vrot.slane %v344, %v347
      %v349 = vmul.f32 %v348, %v298
      %v350 = vadd.f32 %v343, %v349
      %v351 = vadd.f32 %v337, %v350
      %v352 = vld [vmem:[%s0 + $0x2] sm:$0x1]
      %v353 = vlaneseq
      %v354 = vshrl.u32 %v353, 7
      %v355 = vsub.s32 0, %v354
      %v356 = vrot.slane %v352, %v355
      %v357 = vmul.f32 %v356, %v300
      %v358 = vld [vmem:[%s0 + $0x1d] sm:$0x1]
      %v359 = vlaneseq
      %v360 = vshrl.u32 %v359, 7
      %v361 = vsub.s32 0, %v360
      %v362 = vrot.slane %v358, %v361
      %v363 = vmul.f32 %v362, %v302
      %v364 = vadd.f32 %v357, %v363
      %v365 = vadd.f32 %v351, %v364
      %v366 = vld [vmem:[%s0 + $0x3] sm:$0x1]
      %v367 = vlaneseq
      %v368 = vshrl.u32 %v367, 7
      %v369 = vsub.s32 0, %v368
      %v370 = vrot.slane %v366, %v369
      %v371 = vmul.f32 %v370, %v304
      %v372 = vld [vmem:[%s0 + $0x1e] sm:$0x1]
      %v373 = vlaneseq
      %v374 = vshrl.u32 %v373, 7
      %v375 = vsub.s32 0, %v374
      %v376 = vrot.slane %v372, %v375
      %v377 = vmul.f32 %v376, %v306
      %v378 = vadd.f32 %v371, %v377
      %v379 = vadd.f32 %v365, %v378
      %v380 = vld [vmem:[%s0 + $0x4] sm:$0x1]
      %v381 = vlaneseq
      %v382 = vshrl.u32 %v381, 7
      %v383 = vsub.s32 0, %v382
      %v384 = vrot.slane %v380, %v383
      %v385 = vmul.f32 %v384, %v290
      %v386 = vld [vmem:[%s0 + $0x1f] sm:$0x1]
      %v387 = vlaneseq
      %v388 = vshrl.u32 %v387, 7
      %v389 = vsub.s32 0, %v388
      %v390 = vrot.slane %v386, %v389
      %v391 = vmul.f32 %v390, %v308
      %v392 = vadd.f32 %v385, %v391
      %v393 = vadd.f32 %v379, %v392
      %v394 = vld [vmem:[%s0 + $0x5] sm:$0x1]
      %v395 = vlaneseq
      %v396 = vshrl.u32 %v395, 7
      %v397 = vsub.s32 0, %v396
      %v398 = vrot.slane %v394, %v397
      %v399 = vmul.f32 %v398, %v310
      %v400 = vld [vmem:[%s0 + $0x20] sm:$0x1]
      %v401 = vlaneseq
      %v402 = vshrl.u32 %v401, 7
      %v403 = vsub.s32 0, %v402
      %v404 = vrot.slane %v400, %v403
      %v405 = vmul.f32 %v404, %v312
      %v406 = vadd.f32 %v399, %v405
      %v407 = vadd.f32 %v393, %v406
      %v408 = vld [vmem:[%s0 + $0x6] sm:$0x1]
      %v409 = vlaneseq
      %v410 = vshrl.u32 %v409, 7
      %v411 = vsub.s32 0, %v410
      %v412 = vrot.slane %v408, %v411
      %v413 = vmul.f32 %v412, %v314
      %v414 = vld [vmem:[%s0 + $0x21] sm:$0x1]
      %v415 = vlaneseq
      %v416 = vshrl.u32 %v415, 7
      %v417 = vsub.s32 0, %v416
      %v418 = vrot.slane %v414, %v417
      %v419 = vmul.f32 %v418, %v316
      %v420 = vadd.f32 %v413, %v419
      %v421 = vadd.f32 %v407, %v420
      %v422 = vld [vmem:[%s0 + $0x7] sm:$0x1]
      %v423 = vlaneseq
      %v424 = vshrl.u32 %v423, 7
      %v425 = vsub.s32 0, %v424
      %v426 = vrot.slane %v422, %v425
      %v427 = vmul.f32 %v426, %v318
      %v428 = vld [vmem:[%s0 + $0x22] sm:$0x1]
      %v429 = vlaneseq
      %v430 = vshrl.u32 %v429, 7
      %v431 = vsub.s32 0, %v430
      %v432 = vrot.slane %v428, %v431
      %v433 = vmul.f32 %v432, %v320
      %v434 = vadd.f32 %v427, %v433
      %v435 = vadd.f32 %v421, %v434
      %v436 = vld [vmem:[%s0 + $0x8] sm:$0x1]
      %v437 = vlaneseq
      %v438 = vshrl.u32 %v437, 7
      %v439 = vsub.s32 0, %v438
      %v440 = vrot.slane %v436, %v439
      %v441 = vmul.f32 %v440, %v322
      %v442 = vld [vmem:[%s0 + $0x23] sm:$0x1]
      %v443 = vlaneseq
      %v444 = vshrl.u32 %v443, 7
      %v445 = vsub.s32 0, %v444
      %v446 = vrot.slane %v442, %v445
      %v447 = vmul.f32 %v446, %v324
      %v448 = vadd.f32 %v441, %v447
      %v449 = vadd.f32 %v435, %v448
      %v451 = vrot.slane %v449, 7
      %vm453 = vcmask 1040384
      %v454 = vsel %vm453, 0.0, %v451
      %v455 = vld [vmem:[%s0 + $0x9] sm:$0x1]
      %v456 = vlaneseq
      %v457 = vshrl.u32 %v456, 7
      %v458 = vsub.s32 0, %v457
      %v459 = vrot.slane %v455, %v458
      %v460 = vmul.f32 %v459, %v292
      %v461 = vld [vmem:[%s0 + $0x24] sm:$0x1]
      %v462 = vlaneseq
      %v463 = vshrl.u32 %v462, 7
      %v464 = vsub.s32 0, %v463
      %v465 = vrot.slane %v461, %v464
      %v466 = vmul.f32 %v465, %v294
      %v467 = vadd.f32 %v460, %v466
      %v468 = vld [vmem:[%s0 + $0xa] sm:$0x1]
      %v469 = vlaneseq
      %v470 = vshrl.u32 %v469, 7
      %v471 = vsub.s32 0, %v470
      %v472 = vrot.slane %v468, %v471
      %v473 = vmul.f32 %v472, %v296
      %v474 = vld [vmem:[%s0 + $0x25] sm:$0x1]
      %v475 = vlaneseq
      %v476 = vshrl.u32 %v475, 7
      %v477 = vsub.s32 0, %v476
      %v478 = vrot.slane %v474, %v477
      %v479 = vmul.f32 %v478, %v298
      %v480 = vadd.f32 %v473, %v479
      %v481 = vadd.f32 %v467, %v480
      %v482 = vld [vmem:[%s0 + $0xb] sm:$0x1]
      %v483 = vlaneseq
      %v484 = vshrl.u32 %v483, 7
      %v485 = vsub.s32 0, %v484
      %v486 = vrot.slane %v482, %v485
      %v487 = vmul.f32 %v486, %v300
      %v488 = vld [vmem:[%s0 + $0x26] sm:$0x1]
      %v489 = vlaneseq
      %v490 = vshrl.u32 %v489, 7
      %v491 = vsub.s32 0, %v490
      %v492 = vrot.slane %v488, %v491
      %v493 = vmul.f32 %v492, %v302
      %v494 = vadd.f32 %v487, %v493
      %v495 = vadd.f32 %v481, %v494
      %v496 = vld [vmem:[%s0 + $0xc] sm:$0x1]
      %v497 = vlaneseq
      %v498 = vshrl.u32 %v497, 7
      %v499 = vsub.s32 0, %v498
      %v500 = vrot.slane %v496, %v499
      %v501 = vmul.f32 %v500, %v304
      %v502 = vld [vmem:[%s0 + $0x27] sm:$0x1]
      %v503 = vlaneseq
      %v504 = vshrl.u32 %v503, 7
      %v505 = vsub.s32 0, %v504
      %v506 = vrot.slane %v502, %v505
      %v507 = vmul.f32 %v506, %v306
      %v508 = vadd.f32 %v501, %v507
      %v509 = vadd.f32 %v495, %v508
      %v510 = vld [vmem:[%s0 + $0xd] sm:$0x1]
      %v511 = vlaneseq
      %v512 = vshrl.u32 %v511, 7
      %v513 = vsub.s32 0, %v512
      %v514 = vrot.slane %v510, %v513
      %v515 = vmul.f32 %v514, %v290
      %v516 = vld [vmem:[%s0 + $0x28] sm:$0x1]
      %v517 = vlaneseq
      %v518 = vshrl.u32 %v517, 7
      %v519 = vsub.s32 0, %v518
      %v520 = vrot.slane %v516, %v519
      %v521 = vmul.f32 %v520, %v308
      %v522 = vadd.f32 %v515, %v521
      %v523 = vadd.f32 %v509, %v522
      %v524 = vld [vmem:[%s0 + $0xe] sm:$0x1]
      %v525 = vlaneseq
      %v526 = vshrl.u32 %v525, 7
      %v527 = vsub.s32 0, %v526
      %v528 = vrot.slane %v524, %v527
      %v529 = vmul.f32 %v528, %v310
      %v530 = vld [vmem:[%s0 + $0x29] sm:$0x1]
      %v531 = vlaneseq
      %v532 = vshrl.u32 %v531, 7
      %v533 = vsub.s32 0, %v532
      %v534 = vrot.slane %v530, %v533
      %v535 = vmul.f32 %v534, %v312
      %v536 = vadd.f32 %v529, %v535
      %v537 = vadd.f32 %v523, %v536
      %v538 = vld [vmem:[%s0 + $0xf] sm:$0x1]
      %v539 = vlaneseq
      %v540 = vshrl.u32 %v539, 7
      %v541 = vsub.s32 0, %v540
      %v542 = vrot.slane %v538, %v541
      %v543 = vmul.f32 %v542, %v314
      %v544 = vld [vmem:[%s0 + $0x2a] sm:$0x1]
      %v545 = vlaneseq
      %v546 = vshrl.u32 %v545, 7
      %v547 = vsub.s32 0, %v546
      %v548 = vrot.slane %v544, %v547
      %v549 = vmul.f32 %v548, %v316
      %v550 = vadd.f32 %v543, %v549
      %v551 = vadd.f32 %v537, %v550
      %v552 = vld [vmem:[%s0 + $0x10] sm:$0x1]
      %v553 = vlaneseq
      %v554 = vshrl.u32 %v553, 7
      %v555 = vsub.s32 0, %v554
      %v556 = vrot.slane %v552, %v555
      %v557 = vmul.f32 %v556, %v318
      %v558 = vld [vmem:[%s0 + $0x2b] sm:$0x1]
      %v559 = vlaneseq
      %v560 = vshrl.u32 %v559, 7
      %v561 = vsub.s32 0, %v560
      %v562 = vrot.slane %v558, %v561
      %v563 = vmul.f32 %v562, %v320
      %v564 = vadd.f32 %v557, %v563
      %v565 = vadd.f32 %v551, %v564
      %v566 = vld [vmem:[%s0 + $0x11] sm:$0x1]
      %v567 = vlaneseq
      %v568 = vshrl.u32 %v567, 7
      %v569 = vsub.s32 0, %v568
      %v570 = vrot.slane %v566, %v569
      %v571 = vmul.f32 %v570, %v322
      %v572 = vld [vmem:[%s0 + $0x2c] sm:$0x1]
      %v573 = vlaneseq
      %v574 = vshrl.u32 %v573, 7
      %v575 = vsub.s32 0, %v574
      %v576 = vrot.slane %v572, %v575
      %v577 = vmul.f32 %v576, %v324
      %v578 = vadd.f32 %v571, %v577
      %v579 = vadd.f32 %v565, %v578
      %v580 = vadd.f32 %v454, %v579
      %v581 = vld [vmem:[%s0 + $0x12] sm:$0x1]
      %v582 = vlaneseq
      %v583 = vshrl.u32 %v582, 7
      %v584 = vsub.s32 0, %v583
      %v585 = vrot.slane %v581, %v584
      %v586 = vmul.f32 %v585, %v292
      %v587 = vld [vmem:[%s0 + $0x2d] sm:$0x1]
      %v588 = vlaneseq
      %v589 = vshrl.u32 %v588, 7
      %v590 = vsub.s32 0, %v589
      %v591 = vrot.slane %v587, %v590
      %v592 = vmul.f32 %v591, %v294
      %v593 = vadd.f32 %v586, %v592
      %v594 = vld [vmem:[%s0 + $0x13] sm:$0x1]
      %v595 = vlaneseq
      %v596 = vshrl.u32 %v595, 7
      %v597 = vsub.s32 0, %v596
      %v598 = vrot.slane %v594, %v597
      %v599 = vmul.f32 %v598, %v296
      %v600 = vld [vmem:[%s0 + $0x2e] sm:$0x1]
      %v601 = vlaneseq
      %v602 = vshrl.u32 %v601, 7
      %v603 = vsub.s32 0, %v602
      %v604 = vrot.slane %v600, %v603
      %v605 = vmul.f32 %v604, %v298
      %v606 = vadd.f32 %v599, %v605
      %v607 = vadd.f32 %v593, %v606
      %v608 = vld [vmem:[%s0 + $0x14] sm:$0x1]
      %v609 = vlaneseq
      %v610 = vshrl.u32 %v609, 7
      %v611 = vsub.s32 0, %v610
      %v612 = vrot.slane %v608, %v611
      %v613 = vmul.f32 %v612, %v300
      %v614 = vld [vmem:[%s0 + $0x2f] sm:$0x1]
      %v615 = vlaneseq
      %v616 = vshrl.u32 %v615, 7
      %v617 = vsub.s32 0, %v616
      %v618 = vrot.slane %v614, %v617
      %v619 = vmul.f32 %v618, %v302
      %v620 = vadd.f32 %v613, %v619
      %v621 = vadd.f32 %v607, %v620
      %v622 = vld [vmem:[%s0 + $0x15] sm:$0x1]
      %v623 = vlaneseq
      %v624 = vshrl.u32 %v623, 7
      %v625 = vsub.s32 0, %v624
      %v626 = vrot.slane %v622, %v625
      %v627 = vmul.f32 %v626, %v304
      %v628 = vld [vmem:[%s0 + $0x30] sm:$0x1]
      %v629 = vlaneseq
      %v630 = vshrl.u32 %v629, 7
      %v631 = vsub.s32 0, %v630
      %v632 = vrot.slane %v628, %v631
      %v633 = vmul.f32 %v632, %v306
      %v634 = vadd.f32 %v627, %v633
      %v635 = vadd.f32 %v621, %v634
      %v636 = vld [vmem:[%s0 + $0x16] sm:$0x1]
      %v637 = vlaneseq
      %v638 = vshrl.u32 %v637, 7
      %v639 = vsub.s32 0, %v638
      %v640 = vrot.slane %v636, %v639
      %v641 = vmul.f32 %v640, %v290
      %v642 = vld [vmem:[%s0 + $0x31] sm:$0x1]
      %v643 = vlaneseq
      %v644 = vshrl.u32 %v643, 7
      %v645 = vsub.s32 0, %v644
      %v646 = vrot.slane %v642, %v645
      %v647 = vmul.f32 %v646, %v308
      %v648 = vadd.f32 %v641, %v647
      %v649 = vadd.f32 %v635, %v648
      %v650 = vld [vmem:[%s0 + $0x17] sm:$0x1]
      %v651 = vlaneseq
      %v652 = vshrl.u32 %v651, 7
      %v653 = vsub.s32 0, %v652
      %v654 = vrot.slane %v650, %v653
      %v655 = vmul.f32 %v654, %v310
      %v656 = vld [vmem:[%s0 + $0x32] sm:$0x1]
      %v657 = vlaneseq
      %v658 = vshrl.u32 %v657, 7
      %v659 = vsub.s32 0, %v658
      %v660 = vrot.slane %v656, %v659
      %v661 = vmul.f32 %v660, %v312
      %v662 = vadd.f32 %v655, %v661
      %v663 = vadd.f32 %v649, %v662
      %v664 = vld [vmem:[%s0 + $0x18] sm:$0x1]
      %v665 = vlaneseq
      %v666 = vshrl.u32 %v665, 7
      %v667 = vsub.s32 0, %v666
      %v668 = vrot.slane %v664, %v667
      %v669 = vmul.f32 %v668, %v314
      %v670 = vld [vmem:[%s0 + $0x33] sm:$0x1]
      %v671 = vlaneseq
      %v672 = vshrl.u32 %v671, 7
      %v673 = vsub.s32 0, %v672
      %v674 = vrot.slane %v670, %v673
      %v675 = vmul.f32 %v674, %v316
      %v676 = vadd.f32 %v669, %v675
      %v677 = vadd.f32 %v663, %v676
      %v678 = vld [vmem:[%s0 + $0x19] sm:$0x1]
      %v679 = vlaneseq
      %v680 = vshrl.u32 %v679, 7
      %v681 = vsub.s32 0, %v680
      %v682 = vrot.slane %v678, %v681
      %v683 = vmul.f32 %v682, %v318
      %v684 = vld [vmem:[%s0 + $0x34] sm:$0x1]
      %v685 = vlaneseq
      %v686 = vshrl.u32 %v685, 7
      %v687 = vsub.s32 0, %v686
      %v688 = vrot.slane %v684, %v687
      %v689 = vmul.f32 %v688, %v320
      %v690 = vadd.f32 %v683, %v689
      %v691 = vadd.f32 %v677, %v690
      %v692 = vld [vmem:[%s0 + $0x1a] sm:$0x1]
      %v693 = vlaneseq
      %v694 = vshrl.u32 %v693, 7
      %v695 = vsub.s32 0, %v694
      %v696 = vrot.slane %v692, %v695
      %v697 = vmul.f32 %v696, %v322
      %v698 = vld [vmem:[%s0 + $0x35] sm:$0x1]
      %v699 = vlaneseq
      %v700 = vshrl.u32 %v699, 7
      %v701 = vsub.s32 0, %v700
      %v702 = vrot.slane %v698, %v701
      %v703 = vmul.f32 %v702, %v324
      %v704 = vadd.f32 %v697, %v703
      %v705 = vadd.f32 %v691, %v704
      %v707 = vrot.slane %v705, 1
      %vm709 = vcmask 1046528
      %v710 = vsel %vm709, %v707, 0.0
      %v711 = vadd.f32 %v580, %v710
      %v712 = vld [vmem:[%s0 + $0x36] sm:$0x1]
      %v713 = vlaneseq
      %v714 = vshrl.u32 %v713, 7
      %v715 = vsub.s32 0, %v714
      %v716 = vrot.slane %v712, %v715
      %v717 = vadd.f32 %v711, %v716
      %v718 = vld [vmem:[%s178] sm:$0xff]
      %719 = vrot.lane.b32.xlu0 %v718, 9
      %v720 = vpop.permute.xlu0 %719
      %721 = vrot.lane.b32.xlu0 %v718, 73
      %v722 = vpop.permute.xlu0 %721
      %723 = vrot.lane.b32.xlu0 %v718, 8
      %v724 = vpop.permute.xlu0 %723
      %725 = vrot.lane.b32.xlu0 %v718, 72
      %v726 = vpop.permute.xlu0 %725
      %727 = vrot.lane.b32.xlu0 %v718, 7
      %v728 = vpop.permute.xlu0 %727
      %729 = vrot.lane.b32.xlu0 %v718, 71
      %v730 = vpop.permute.xlu0 %729
      %731 = vrot.lane.b32.xlu0 %v718, 1
      %v732 = vpop.permute.xlu0 %731
      %733 = vrot.lane.b32.xlu0 %v718, 65
      %v734 = vpop.permute.xlu0 %733
      %735 = vrot.lane.b32.xlu0 %v718, 64
      %v736 = vpop.permute.xlu0 %735
      %737 = vrot.lane.b32.xlu0 %v718, 127
      %v738 = vpop.permute.xlu0 %737
      %739 = vrot.lane.b32.xlu0 %v718, 63
      %v740 = vpop.permute.xlu0 %739
      %741 = vrot.lane.b32.xlu0 %v718, 121
      %v742 = vpop.permute.xlu0 %741
      %743 = vrot.lane.b32.xlu0 %v718, 57
      %v744 = vpop.permute.xlu0 %743
      %745 = vrot.lane.b32.xlu0 %v718, 120
      %v746 = vpop.permute.xlu0 %745
      %747 = vrot.lane.b32.xlu0 %v718, 56
      %v748 = vpop.permute.xlu0 %747
      %749 = vrot.lane.b32.xlu0 %v718, 119
      %v750 = vpop.permute.xlu0 %749
      %751 = vrot.lane.b32.xlu0 %v718, 55
      %v752 = vpop.permute.xlu0 %751
      %v753 = vmul.f32 %v329, %v720
      %v754 = vmul.f32 %v335, %v722
      %v755 = vadd.f32 %v753, %v754
      %v756 = vmul.f32 %v342, %v724
      %v757 = vmul.f32 %v348, %v726
      %v758 = vadd.f32 %v756, %v757
      %v759 = vadd.f32 %v755, %v758
      %v760 = vmul.f32 %v356, %v728
      %v761 = vmul.f32 %v362, %v730
      %v762 = vadd.f32 %v760, %v761
      %v763 = vadd.f32 %v759, %v762
      %v764 = vmul.f32 %v370, %v732
      %v765 = vmul.f32 %v376, %v734
      %v766 = vadd.f32 %v764, %v765
      %v767 = vadd.f32 %v763, %v766
      %v768 = vmul.f32 %v384, %v718
      %v769 = vmul.f32 %v390, %v736
      %v770 = vadd.f32 %v768, %v769
      %v771 = vadd.f32 %v767, %v770
      %v772 = vmul.f32 %v398, %v738
      %v773 = vmul.f32 %v404, %v740
      %v774 = vadd.f32 %v772, %v773
      %v775 = vadd.f32 %v771, %v774
      %v776 = vmul.f32 %v412, %v742
      %v777 = vmul.f32 %v418, %v744
      %v778 = vadd.f32 %v776, %v777
      %v779 = vadd.f32 %v775, %v778
      %v780 = vmul.f32 %v426, %v746
      %v781 = vmul.f32 %v432, %v748
      %v782 = vadd.f32 %v780, %v781
      %v783 = vadd.f32 %v779, %v782
      %v784 = vmul.f32 %v440, %v750
      %v785 = vmul.f32 %v446, %v752
      %v786 = vadd.f32 %v784, %v785
      %v787 = vadd.f32 %v783, %v786
      %v789 = vrot.slane %v787, 7
      %v791 = vsel %vm453, 0.0, %v789
      %v792 = vmul.f32 %v459, %v720
      %v793 = vmul.f32 %v465, %v722
      %v794 = vadd.f32 %v792, %v793
      %v795 = vmul.f32 %v472, %v724
      %v796 = vmul.f32 %v478, %v726
      %v797 = vadd.f32 %v795, %v796
      %v798 = vadd.f32 %v794, %v797
      %v799 = vmul.f32 %v486, %v728
      %v800 = vmul.f32 %v492, %v730
      %v801 = vadd.f32 %v799, %v800
      %v802 = vadd.f32 %v798, %v801
      %v803 = vmul.f32 %v500, %v732
      %v804 = vmul.f32 %v506, %v734
      %v805 = vadd.f32 %v803, %v804
      %v806 = vadd.f32 %v802, %v805
      %v807 = vmul.f32 %v514, %v718
      %v808 = vmul.f32 %v520, %v736
      %v809 = vadd.f32 %v807, %v808
      %v810 = vadd.f32 %v806, %v809
      %v811 = vmul.f32 %v528, %v738
      %v812 = vmul.f32 %v534, %v740
      %v813 = vadd.f32 %v811, %v812
      %v814 = vadd.f32 %v810, %v813
      %v815 = vmul.f32 %v542, %v742
      %v816 = vmul.f32 %v548, %v744
      %v817 = vadd.f32 %v815, %v816
      %v818 = vadd.f32 %v814, %v817
      %v819 = vmul.f32 %v556, %v746
      %v820 = vmul.f32 %v562, %v748
      %v821 = vadd.f32 %v819, %v820
      %v822 = vadd.f32 %v818, %v821
      %v823 = vmul.f32 %v570, %v750
      %v824 = vmul.f32 %v576, %v752
      %v825 = vadd.f32 %v823, %v824
      %v826 = vadd.f32 %v822, %v825
      %v827 = vadd.f32 %v791, %v826
      %v828 = vmul.f32 %v585, %v720
      %v829 = vmul.f32 %v591, %v722
      %v830 = vadd.f32 %v828, %v829
      %v831 = vmul.f32 %v598, %v724
      %v832 = vmul.f32 %v604, %v726
      %v833 = vadd.f32 %v831, %v832
      %v834 = vadd.f32 %v830, %v833
      %v835 = vmul.f32 %v612, %v728
      %v836 = vmul.f32 %v618, %v730
      %v837 = vadd.f32 %v835, %v836
      %v838 = vadd.f32 %v834, %v837
      %v839 = vmul.f32 %v626, %v732
      %v840 = vmul.f32 %v632, %v734
      %v841 = vadd.f32 %v839, %v840
      %v842 = vadd.f32 %v838, %v841
      %v843 = vmul.f32 %v640, %v718
      %v844 = vmul.f32 %v646, %v736
      %v845 = vadd.f32 %v843, %v844
      %v846 = vadd.f32 %v842, %v845
      %v847 = vmul.f32 %v654, %v738
      %v848 = vmul.f32 %v660, %v740
      %v849 = vadd.f32 %v847, %v848
      %v850 = vadd.f32 %v846, %v849
      %v851 = vmul.f32 %v668, %v742
      %v852 = vmul.f32 %v674, %v744
      %v853 = vadd.f32 %v851, %v852
      %v854 = vadd.f32 %v850, %v853
      %v855 = vmul.f32 %v682, %v746
      %v856 = vmul.f32 %v688, %v748
      %v857 = vadd.f32 %v855, %v856
      %v858 = vadd.f32 %v854, %v857
      %v859 = vmul.f32 %v696, %v750
      %v860 = vmul.f32 %v702, %v752
      %v861 = vadd.f32 %v859, %v860
      %v862 = vadd.f32 %v858, %v861
      %v864 = vrot.slane %v862, 1
      %v866 = vsel %vm709, %v864, 0.0
      %v867 = vadd.f32 %v827, %v866
      %v868 = vadd.f32 %v867, %v716
      %v869 = vadd.f32 %v717, %v868
      %v870 = vtanh.pop %v869
      %v871 = vsub.f32 %v717, %v290
      %v872 = vmul.f32 %v870, %v871
      %v873 = vadd.f32 %v290, %v872
      %874 = vrot.lane.b32.xlu0 %v873, 9
      %v875 = vpop.permute.xlu0 %874
      %876 = vrot.lane.b32.xlu0 %v873, 73
      %v877 = vpop.permute.xlu0 %876
      %878 = vrot.lane.b32.xlu0 %v873, 8
      %v879 = vpop.permute.xlu0 %878
      %880 = vrot.lane.b32.xlu0 %v873, 72
      %v881 = vpop.permute.xlu0 %880
      %882 = vrot.lane.b32.xlu0 %v873, 7
      %v883 = vpop.permute.xlu0 %882
      %884 = vrot.lane.b32.xlu0 %v873, 71
      %v885 = vpop.permute.xlu0 %884
      %886 = vrot.lane.b32.xlu0 %v873, 1
      %v887 = vpop.permute.xlu0 %886
      %888 = vrot.lane.b32.xlu0 %v873, 65
      %v889 = vpop.permute.xlu0 %888
      %890 = vrot.lane.b32.xlu0 %v873, 64
      %v891 = vpop.permute.xlu0 %890
      %892 = vrot.lane.b32.xlu0 %v873, 127
      %v893 = vpop.permute.xlu0 %892
      %894 = vrot.lane.b32.xlu0 %v873, 63
      %v895 = vpop.permute.xlu0 %894
      %896 = vrot.lane.b32.xlu0 %v873, 121
      %v897 = vpop.permute.xlu0 %896
      %898 = vrot.lane.b32.xlu0 %v873, 57
      %v899 = vpop.permute.xlu0 %898
      %900 = vrot.lane.b32.xlu0 %v873, 120
      %v901 = vpop.permute.xlu0 %900
      %902 = vrot.lane.b32.xlu0 %v873, 56
      %v903 = vpop.permute.xlu0 %902
      %904 = vrot.lane.b32.xlu0 %v873, 119
      %v905 = vpop.permute.xlu0 %904
      %906 = vrot.lane.b32.xlu0 %v873, 55
      %v907 = vpop.permute.xlu0 %906
      %v908 = vmul.f32 %v329, %v875
      %v909 = vmul.f32 %v335, %v877
      %v910 = vadd.f32 %v908, %v909
      %v911 = vmul.f32 %v342, %v879
      %v912 = vmul.f32 %v348, %v881
      %v913 = vadd.f32 %v911, %v912
      %v914 = vadd.f32 %v910, %v913
      %v915 = vmul.f32 %v356, %v883
      %v916 = vmul.f32 %v362, %v885
      %v917 = vadd.f32 %v915, %v916
      %v918 = vadd.f32 %v914, %v917
      %v919 = vmul.f32 %v370, %v887
      %v920 = vmul.f32 %v376, %v889
      %v921 = vadd.f32 %v919, %v920
      %v922 = vadd.f32 %v918, %v921
      %v923 = vmul.f32 %v384, %v873
      %v924 = vmul.f32 %v390, %v891
      %v925 = vadd.f32 %v923, %v924
      %v926 = vadd.f32 %v922, %v925
      %v927 = vmul.f32 %v398, %v893
      %v928 = vmul.f32 %v404, %v895
      %v929 = vadd.f32 %v927, %v928
      %v930 = vadd.f32 %v926, %v929
      %v931 = vmul.f32 %v412, %v897
      %v932 = vmul.f32 %v418, %v899
      %v933 = vadd.f32 %v931, %v932
      %v934 = vadd.f32 %v930, %v933
      %v935 = vmul.f32 %v426, %v901
      %v936 = vmul.f32 %v432, %v903
      %v937 = vadd.f32 %v935, %v936
      %v938 = vadd.f32 %v934, %v937
      %v939 = vmul.f32 %v440, %v905
      %v940 = vmul.f32 %v446, %v907
      %v941 = vadd.f32 %v939, %v940
      %v942 = vadd.f32 %v938, %v941
      %v944 = vrot.slane %v942, 7
      %v946 = vsel %vm453, 0.0, %v944
      %v947 = vmul.f32 %v459, %v875
      %v948 = vmul.f32 %v465, %v877
      %v949 = vadd.f32 %v947, %v948
      %v950 = vmul.f32 %v472, %v879
      %v951 = vmul.f32 %v478, %v881
      %v952 = vadd.f32 %v950, %v951
      %v953 = vadd.f32 %v949, %v952
      %v954 = vmul.f32 %v486, %v883
      %v955 = vmul.f32 %v492, %v885
      %v956 = vadd.f32 %v954, %v955
      %v957 = vadd.f32 %v953, %v956
      %v958 = vmul.f32 %v500, %v887
      %v959 = vmul.f32 %v506, %v889
      %v960 = vadd.f32 %v958, %v959
      %v961 = vadd.f32 %v957, %v960
      %v962 = vmul.f32 %v514, %v873
      %v963 = vmul.f32 %v520, %v891
      %v964 = vadd.f32 %v962, %v963
      %v965 = vadd.f32 %v961, %v964
      %v966 = vmul.f32 %v528, %v893
      %v967 = vmul.f32 %v534, %v895
      %v968 = vadd.f32 %v966, %v967
      %v969 = vadd.f32 %v965, %v968
      %v970 = vmul.f32 %v542, %v897
      %v971 = vmul.f32 %v548, %v899
      %v972 = vadd.f32 %v970, %v971
      %v973 = vadd.f32 %v969, %v972
      %v974 = vmul.f32 %v556, %v901
      %v975 = vmul.f32 %v562, %v903
      %v976 = vadd.f32 %v974, %v975
      %v977 = vadd.f32 %v973, %v976
      %v978 = vmul.f32 %v570, %v905
      %v979 = vmul.f32 %v576, %v907
      %v980 = vadd.f32 %v978, %v979
      %v981 = vadd.f32 %v977, %v980
      %v982 = vadd.f32 %v946, %v981
      %v983 = vmul.f32 %v585, %v875
      %v984 = vmul.f32 %v591, %v877
      %v985 = vadd.f32 %v983, %v984
      %v986 = vmul.f32 %v598, %v879
      %v987 = vmul.f32 %v604, %v881
      %v988 = vadd.f32 %v986, %v987
      %v989 = vadd.f32 %v985, %v988
      %v990 = vmul.f32 %v612, %v883
      %v991 = vmul.f32 %v618, %v885
      %v992 = vadd.f32 %v990, %v991
      %v993 = vadd.f32 %v989, %v992
      %v994 = vmul.f32 %v626, %v887
      %v995 = vmul.f32 %v632, %v889
      %v996 = vadd.f32 %v994, %v995
      %v997 = vadd.f32 %v993, %v996
      %v998 = vmul.f32 %v640, %v873
      %v999 = vmul.f32 %v646, %v891
      %v1000 = vadd.f32 %v998, %v999
      %v1001 = vadd.f32 %v997, %v1000
      %v1002 = vmul.f32 %v654, %v893
      %v1003 = vmul.f32 %v660, %v895
      %v1004 = vadd.f32 %v1002, %v1003
      %v1005 = vadd.f32 %v1001, %v1004
      %v1006 = vmul.f32 %v668, %v897
      %v1007 = vmul.f32 %v674, %v899
      %v1008 = vadd.f32 %v1006, %v1007
      %v1009 = vadd.f32 %v1005, %v1008
      %v1010 = vmul.f32 %v682, %v901
      %v1011 = vmul.f32 %v688, %v903
      %v1012 = vadd.f32 %v1010, %v1011
      %v1013 = vadd.f32 %v1009, %v1012
      %v1014 = vmul.f32 %v696, %v905
      %v1015 = vmul.f32 %v702, %v907
      %v1016 = vadd.f32 %v1014, %v1015
      %v1017 = vadd.f32 %v1013, %v1016
      %v1019 = vrot.slane %v1017, 1
      %v1021 = vsel %vm709, %v1019, 0.0
      %v1022 = vadd.f32 %v982, %v1021
      %v1023 = vadd.f32 %v1022, %v716
      %v1024 = vsub.f32 %v1023, %v873
      %v1025 = vmul.f32 %v870, %v1024
      %v1026 = vadd.f32 %v873, %v1025
      %1027 = vrot.lane.b32.xlu0 %v1026, 9
      %v1028 = vpop.permute.xlu0 %1027
      %1029 = vrot.lane.b32.xlu0 %v1026, 73
      %v1030 = vpop.permute.xlu0 %1029
      %1031 = vrot.lane.b32.xlu0 %v1026, 8
      %v1032 = vpop.permute.xlu0 %1031
      %1033 = vrot.lane.b32.xlu0 %v1026, 72
      %v1034 = vpop.permute.xlu0 %1033
      %1035 = vrot.lane.b32.xlu0 %v1026, 7
      %v1036 = vpop.permute.xlu0 %1035
      %1037 = vrot.lane.b32.xlu0 %v1026, 71
      %v1038 = vpop.permute.xlu0 %1037
      %1039 = vrot.lane.b32.xlu0 %v1026, 1
      %v1040 = vpop.permute.xlu0 %1039
      %1041 = vrot.lane.b32.xlu0 %v1026, 65
      %v1042 = vpop.permute.xlu0 %1041
      %1043 = vrot.lane.b32.xlu0 %v1026, 64
      %v1044 = vpop.permute.xlu0 %1043
      %1045 = vrot.lane.b32.xlu0 %v1026, 127
      %v1046 = vpop.permute.xlu0 %1045
      %1047 = vrot.lane.b32.xlu0 %v1026, 63
      %v1048 = vpop.permute.xlu0 %1047
      %1049 = vrot.lane.b32.xlu0 %v1026, 121
      %v1050 = vpop.permute.xlu0 %1049
      %1051 = vrot.lane.b32.xlu0 %v1026, 57
      %v1052 = vpop.permute.xlu0 %1051
      %1053 = vrot.lane.b32.xlu0 %v1026, 120
      %v1054 = vpop.permute.xlu0 %1053
      %1055 = vrot.lane.b32.xlu0 %v1026, 56
      %v1056 = vpop.permute.xlu0 %1055
      %1057 = vrot.lane.b32.xlu0 %v1026, 119
      %v1058 = vpop.permute.xlu0 %1057
      %1059 = vrot.lane.b32.xlu0 %v1026, 55
      %v1060 = vpop.permute.xlu0 %1059
      %v1061 = vmul.f32 %v329, %v1028
      %v1062 = vmul.f32 %v335, %v1030
      %v1063 = vadd.f32 %v1061, %v1062
      %v1064 = vmul.f32 %v342, %v1032
      %v1065 = vmul.f32 %v348, %v1034
      %v1066 = vadd.f32 %v1064, %v1065
      %v1067 = vadd.f32 %v1063, %v1066
      %v1068 = vmul.f32 %v356, %v1036
      %v1069 = vmul.f32 %v362, %v1038
      %v1070 = vadd.f32 %v1068, %v1069
      %v1071 = vadd.f32 %v1067, %v1070
      %v1072 = vmul.f32 %v370, %v1040
      %v1073 = vmul.f32 %v376, %v1042
      %v1074 = vadd.f32 %v1072, %v1073
      %v1075 = vadd.f32 %v1071, %v1074
      %v1076 = vmul.f32 %v384, %v1026
      %v1077 = vmul.f32 %v390, %v1044
      %v1078 = vadd.f32 %v1076, %v1077
      %v1079 = vadd.f32 %v1075, %v1078
      %v1080 = vmul.f32 %v398, %v1046
      %v1081 = vmul.f32 %v404, %v1048
      %v1082 = vadd.f32 %v1080, %v1081
      %v1083 = vadd.f32 %v1079, %v1082
      %v1084 = vmul.f32 %v412, %v1050
      %v1085 = vmul.f32 %v418, %v1052
      %v1086 = vadd.f32 %v1084, %v1085
      %v1087 = vadd.f32 %v1083, %v1086
      %v1088 = vmul.f32 %v426, %v1054
      %v1089 = vmul.f32 %v432, %v1056
      %v1090 = vadd.f32 %v1088, %v1089
      %v1091 = vadd.f32 %v1087, %v1090
      %v1092 = vmul.f32 %v440, %v1058
      %v1093 = vmul.f32 %v446, %v1060
      %v1094 = vadd.f32 %v1092, %v1093
      %v1095 = vadd.f32 %v1091, %v1094
      %v1097 = vrot.slane %v1095, 7
      %v1099 = vsel %vm453, 0.0, %v1097
      %v1100 = vmul.f32 %v459, %v1028
      %v1101 = vmul.f32 %v465, %v1030
      %v1102 = vadd.f32 %v1100, %v1101
      %v1103 = vmul.f32 %v472, %v1032
      %v1104 = vmul.f32 %v478, %v1034
      %v1105 = vadd.f32 %v1103, %v1104
      %v1106 = vadd.f32 %v1102, %v1105
      %v1107 = vmul.f32 %v486, %v1036
      %v1108 = vmul.f32 %v492, %v1038
      %v1109 = vadd.f32 %v1107, %v1108
      %v1110 = vadd.f32 %v1106, %v1109
      %v1111 = vmul.f32 %v500, %v1040
      %v1112 = vmul.f32 %v506, %v1042
      %v1113 = vadd.f32 %v1111, %v1112
      %v1114 = vadd.f32 %v1110, %v1113
      %v1115 = vmul.f32 %v514, %v1026
      %v1116 = vmul.f32 %v520, %v1044
      %v1117 = vadd.f32 %v1115, %v1116
      %v1118 = vadd.f32 %v1114, %v1117
      %v1119 = vmul.f32 %v528, %v1046
      %v1120 = vmul.f32 %v534, %v1048
      %v1121 = vadd.f32 %v1119, %v1120
      %v1122 = vadd.f32 %v1118, %v1121
      %v1123 = vmul.f32 %v542, %v1050
      %v1124 = vmul.f32 %v548, %v1052
      %v1125 = vadd.f32 %v1123, %v1124
      %v1126 = vadd.f32 %v1122, %v1125
      %v1127 = vmul.f32 %v556, %v1054
      %v1128 = vmul.f32 %v562, %v1056
      %v1129 = vadd.f32 %v1127, %v1128
      %v1130 = vadd.f32 %v1126, %v1129
      %v1131 = vmul.f32 %v570, %v1058
      %v1132 = vmul.f32 %v576, %v1060
      %v1133 = vadd.f32 %v1131, %v1132
      %v1134 = vadd.f32 %v1130, %v1133
      %v1135 = vadd.f32 %v1099, %v1134
      %v1136 = vmul.f32 %v585, %v1028
      %v1137 = vmul.f32 %v591, %v1030
      %v1138 = vadd.f32 %v1136, %v1137
      %v1139 = vmul.f32 %v598, %v1032
      %v1140 = vmul.f32 %v604, %v1034
      %v1141 = vadd.f32 %v1139, %v1140
      %v1142 = vadd.f32 %v1138, %v1141
      %v1143 = vmul.f32 %v612, %v1036
      %v1144 = vmul.f32 %v618, %v1038
      %v1145 = vadd.f32 %v1143, %v1144
      %v1146 = vadd.f32 %v1142, %v1145
      %v1147 = vmul.f32 %v626, %v1040
      %v1148 = vmul.f32 %v632, %v1042
      %v1149 = vadd.f32 %v1147, %v1148
      %v1150 = vadd.f32 %v1146, %v1149
      %v1151 = vmul.f32 %v640, %v1026
      %v1152 = vmul.f32 %v646, %v1044
      %v1153 = vadd.f32 %v1151, %v1152
      %v1154 = vadd.f32 %v1150, %v1153
      %v1155 = vmul.f32 %v654, %v1046
      %v1156 = vmul.f32 %v660, %v1048
      %v1157 = vadd.f32 %v1155, %v1156
      %v1158 = vadd.f32 %v1154, %v1157
      %v1159 = vmul.f32 %v668, %v1050
      %v1160 = vmul.f32 %v674, %v1052
      %v1161 = vadd.f32 %v1159, %v1160
      %v1162 = vadd.f32 %v1158, %v1161
      %v1163 = vmul.f32 %v682, %v1054
      %v1164 = vmul.f32 %v688, %v1056
      %v1165 = vadd.f32 %v1163, %v1164
      %v1166 = vadd.f32 %v1162, %v1165
      %v1167 = vmul.f32 %v696, %v1058
      %v1168 = vmul.f32 %v702, %v1060
      %v1169 = vadd.f32 %v1167, %v1168
      %v1170 = vadd.f32 %v1166, %v1169
      %v1172 = vrot.slane %v1170, 1
      %v1174 = vsel %vm709, %v1172, 0.0
      %v1175 = vadd.f32 %v1135, %v1174
      %v1176 = vadd.f32 %v1175, %v716
      %1177 = vrot.lane.b32.xlu0 %v1176, 64
      %v1178 = vpop.permute.xlu0 %1177
      %v1179 = vsub.f32 %v1176, %v1178
      %v1180 = vmul.f32 %v1179, 0.5
      %v1181 = vtanh.pop %v1180
      %v1182 = vadd.f32 %v1181, 1.0
      %v1183 = vmul.f32 %v1182, 0.5
      %1184 = vrot.lane.b32.xlu0 %v1183, 9
      %v1185 = vpop.permute.xlu0 %1184
      %1186 = vrot.lane.b32.xlu0 %v1183, 73
      %v1187 = vpop.permute.xlu0 %1186
      %1188 = vrot.lane.b32.xlu0 %v1183, 8
      %v1189 = vpop.permute.xlu0 %1188
      %1190 = vrot.lane.b32.xlu0 %v1183, 72
      %v1191 = vpop.permute.xlu0 %1190
      %1192 = vrot.lane.b32.xlu0 %v1183, 7
      %v1193 = vpop.permute.xlu0 %1192
      %1194 = vrot.lane.b32.xlu0 %v1183, 71
      %v1195 = vpop.permute.xlu0 %1194
      %1196 = vrot.lane.b32.xlu0 %v1183, 1
      %v1197 = vpop.permute.xlu0 %1196
      %1198 = vrot.lane.b32.xlu0 %v1183, 65
      %v1199 = vpop.permute.xlu0 %1198
      %1200 = vrot.lane.b32.xlu0 %v1183, 64
      %v1201 = vpop.permute.xlu0 %1200
      %1202 = vrot.lane.b32.xlu0 %v1183, 127
      %v1203 = vpop.permute.xlu0 %1202
      %1204 = vrot.lane.b32.xlu0 %v1183, 63
      %v1205 = vpop.permute.xlu0 %1204
      %1206 = vrot.lane.b32.xlu0 %v1183, 121
      %v1207 = vpop.permute.xlu0 %1206
      %1208 = vrot.lane.b32.xlu0 %v1183, 57
      %v1209 = vpop.permute.xlu0 %1208
      %1210 = vrot.lane.b32.xlu0 %v1183, 120
      %v1211 = vpop.permute.xlu0 %1210
      %1212 = vrot.lane.b32.xlu0 %v1183, 56
      %v1213 = vpop.permute.xlu0 %1212
      %1214 = vrot.lane.b32.xlu0 %v1183, 119
      %v1215 = vpop.permute.xlu0 %1214
      %1216 = vrot.lane.b32.xlu0 %v1183, 55
      %v1217 = vpop.permute.xlu0 %1216
      %v1218 = vmul.f32 %v329, %v1185
      %v1219 = vmul.f32 %v335, %v1187
      %v1220 = vadd.f32 %v1218, %v1219
      %v1221 = vmul.f32 %v342, %v1189
      %v1222 = vmul.f32 %v348, %v1191
      %v1223 = vadd.f32 %v1221, %v1222
      %v1224 = vadd.f32 %v1220, %v1223
      %v1225 = vmul.f32 %v356, %v1193
      %v1226 = vmul.f32 %v362, %v1195
      %v1227 = vadd.f32 %v1225, %v1226
      %v1228 = vadd.f32 %v1224, %v1227
      %v1229 = vmul.f32 %v370, %v1197
      %v1230 = vmul.f32 %v376, %v1199
      %v1231 = vadd.f32 %v1229, %v1230
      %v1232 = vadd.f32 %v1228, %v1231
      %v1233 = vmul.f32 %v384, %v1183
      %v1234 = vmul.f32 %v390, %v1201
      %v1235 = vadd.f32 %v1233, %v1234
      %v1236 = vadd.f32 %v1232, %v1235
      %v1237 = vmul.f32 %v398, %v1203
      %v1238 = vmul.f32 %v404, %v1205
      %v1239 = vadd.f32 %v1237, %v1238
      %v1240 = vadd.f32 %v1236, %v1239
      %v1241 = vmul.f32 %v412, %v1207
      %v1242 = vmul.f32 %v418, %v1209
      %v1243 = vadd.f32 %v1241, %v1242
      %v1244 = vadd.f32 %v1240, %v1243
      %v1245 = vmul.f32 %v426, %v1211
      %v1246 = vmul.f32 %v432, %v1213
      %v1247 = vadd.f32 %v1245, %v1246
      %v1248 = vadd.f32 %v1244, %v1247
      %v1249 = vmul.f32 %v440, %v1215
      %v1250 = vmul.f32 %v446, %v1217
      %v1251 = vadd.f32 %v1249, %v1250
      %v1252 = vadd.f32 %v1248, %v1251
      %v1254 = vrot.slane %v1252, 7
      %v1256 = vsel %vm453, 0.0, %v1254
      %v1257 = vmul.f32 %v459, %v1185
      %v1258 = vmul.f32 %v465, %v1187
      %v1259 = vadd.f32 %v1257, %v1258
      %v1260 = vmul.f32 %v472, %v1189
      %v1261 = vmul.f32 %v478, %v1191
      %v1262 = vadd.f32 %v1260, %v1261
      %v1263 = vadd.f32 %v1259, %v1262
      %v1264 = vmul.f32 %v486, %v1193
      %v1265 = vmul.f32 %v492, %v1195
      %v1266 = vadd.f32 %v1264, %v1265
      %v1267 = vadd.f32 %v1263, %v1266
      %v1268 = vmul.f32 %v500, %v1197
      %v1269 = vmul.f32 %v506, %v1199
      %v1270 = vadd.f32 %v1268, %v1269
      %v1271 = vadd.f32 %v1267, %v1270
      %v1272 = vmul.f32 %v514, %v1183
      %v1273 = vmul.f32 %v520, %v1201
      %v1274 = vadd.f32 %v1272, %v1273
      %v1275 = vadd.f32 %v1271, %v1274
      %v1276 = vmul.f32 %v528, %v1203
      %v1277 = vmul.f32 %v534, %v1205
      %v1278 = vadd.f32 %v1276, %v1277
      %v1279 = vadd.f32 %v1275, %v1278
      %v1280 = vmul.f32 %v542, %v1207
      %v1281 = vmul.f32 %v548, %v1209
      %v1282 = vadd.f32 %v1280, %v1281
      %v1283 = vadd.f32 %v1279, %v1282
      %v1284 = vmul.f32 %v556, %v1211
      %v1285 = vmul.f32 %v562, %v1213
      %v1286 = vadd.f32 %v1284, %v1285
      %v1287 = vadd.f32 %v1283, %v1286
      %v1288 = vmul.f32 %v570, %v1215
      %v1289 = vmul.f32 %v576, %v1217
      %v1290 = vadd.f32 %v1288, %v1289
      %v1291 = vadd.f32 %v1287, %v1290
      %v1292 = vadd.f32 %v1256, %v1291
      %v1293 = vmul.f32 %v585, %v1185
      %v1294 = vmul.f32 %v591, %v1187
      %v1295 = vadd.f32 %v1293, %v1294
      %v1296 = vmul.f32 %v598, %v1189
      %v1297 = vmul.f32 %v604, %v1191
      %v1298 = vadd.f32 %v1296, %v1297
      %v1299 = vadd.f32 %v1295, %v1298
      %v1300 = vmul.f32 %v612, %v1193
      %v1301 = vmul.f32 %v618, %v1195
      %v1302 = vadd.f32 %v1300, %v1301
      %v1303 = vadd.f32 %v1299, %v1302
      %v1304 = vmul.f32 %v626, %v1197
      %v1305 = vmul.f32 %v632, %v1199
      %v1306 = vadd.f32 %v1304, %v1305
      %v1307 = vadd.f32 %v1303, %v1306
      %v1308 = vmul.f32 %v640, %v1183
      %v1309 = vmul.f32 %v646, %v1201
      %v1310 = vadd.f32 %v1308, %v1309
      %v1311 = vadd.f32 %v1307, %v1310
      %v1312 = vmul.f32 %v654, %v1203
      %v1313 = vmul.f32 %v660, %v1205
      %v1314 = vadd.f32 %v1312, %v1313
      %v1315 = vadd.f32 %v1311, %v1314
      %v1316 = vmul.f32 %v668, %v1207
      %v1317 = vmul.f32 %v674, %v1209
      %v1318 = vadd.f32 %v1316, %v1317
      %v1319 = vadd.f32 %v1315, %v1318
      %v1320 = vmul.f32 %v682, %v1211
      %v1321 = vmul.f32 %v688, %v1213
      %v1322 = vadd.f32 %v1320, %v1321
      %v1323 = vadd.f32 %v1319, %v1322
      %v1324 = vmul.f32 %v696, %v1215
      %v1325 = vmul.f32 %v702, %v1217
      %v1326 = vadd.f32 %v1324, %v1325
      %v1327 = vadd.f32 %v1323, %v1326
      %v1329 = vrot.slane %v1327, 1
      %v1331 = vsel %vm709, %v1329, 0.0
      %v1332 = vadd.f32 %v1292, %v1331
      %v1333 = vadd.f32 %v1332, %v716
      %v1334 = vadd.f32 %v717, %v1333
      %v1335 = vtanh.pop %v1334
      %v1336 = vmul.f32 %v1335, %v871
      %v1337 = vadd.f32 %v290, %v1336
      %1338 = vrot.lane.b32.xlu0 %v1337, 9
      %v1339 = vpop.permute.xlu0 %1338
      %1340 = vrot.lane.b32.xlu0 %v1337, 73
      %v1341 = vpop.permute.xlu0 %1340
      %1342 = vrot.lane.b32.xlu0 %v1337, 8
      %v1343 = vpop.permute.xlu0 %1342
      %1344 = vrot.lane.b32.xlu0 %v1337, 72
      %v1345 = vpop.permute.xlu0 %1344
      %1346 = vrot.lane.b32.xlu0 %v1337, 7
      %v1347 = vpop.permute.xlu0 %1346
      %1348 = vrot.lane.b32.xlu0 %v1337, 71
      %v1349 = vpop.permute.xlu0 %1348
      %1350 = vrot.lane.b32.xlu0 %v1337, 1
      %v1351 = vpop.permute.xlu0 %1350
      %1352 = vrot.lane.b32.xlu0 %v1337, 65
      %v1353 = vpop.permute.xlu0 %1352
      %1354 = vrot.lane.b32.xlu0 %v1337, 64
      %v1355 = vpop.permute.xlu0 %1354
      %1356 = vrot.lane.b32.xlu0 %v1337, 127
      %v1357 = vpop.permute.xlu0 %1356
      %1358 = vrot.lane.b32.xlu0 %v1337, 63
      %v1359 = vpop.permute.xlu0 %1358
      %1360 = vrot.lane.b32.xlu0 %v1337, 121
      %v1361 = vpop.permute.xlu0 %1360
      %1362 = vrot.lane.b32.xlu0 %v1337, 57
      %v1363 = vpop.permute.xlu0 %1362
      %1364 = vrot.lane.b32.xlu0 %v1337, 120
      %v1365 = vpop.permute.xlu0 %1364
      %1366 = vrot.lane.b32.xlu0 %v1337, 56
      %v1367 = vpop.permute.xlu0 %1366
      %1368 = vrot.lane.b32.xlu0 %v1337, 119
      %v1369 = vpop.permute.xlu0 %1368
      %1370 = vrot.lane.b32.xlu0 %v1337, 55
      %v1371 = vpop.permute.xlu0 %1370
      %v1372 = vmul.f32 %v329, %v1339
      %v1373 = vmul.f32 %v335, %v1341
      %v1374 = vadd.f32 %v1372, %v1373
      %v1375 = vmul.f32 %v342, %v1343
      %v1376 = vmul.f32 %v348, %v1345
      %v1377 = vadd.f32 %v1375, %v1376
      %v1378 = vadd.f32 %v1374, %v1377
      %v1379 = vmul.f32 %v356, %v1347
      %v1380 = vmul.f32 %v362, %v1349
      %v1381 = vadd.f32 %v1379, %v1380
      %v1382 = vadd.f32 %v1378, %v1381
      %v1383 = vmul.f32 %v370, %v1351
      %v1384 = vmul.f32 %v376, %v1353
      %v1385 = vadd.f32 %v1383, %v1384
      %v1386 = vadd.f32 %v1382, %v1385
      %v1387 = vmul.f32 %v384, %v1337
      %v1388 = vmul.f32 %v390, %v1355
      %v1389 = vadd.f32 %v1387, %v1388
      %v1390 = vadd.f32 %v1386, %v1389
      %v1391 = vmul.f32 %v398, %v1357
      %v1392 = vmul.f32 %v404, %v1359
      %v1393 = vadd.f32 %v1391, %v1392
      %v1394 = vadd.f32 %v1390, %v1393
      %v1395 = vmul.f32 %v412, %v1361
      %v1396 = vmul.f32 %v418, %v1363
      %v1397 = vadd.f32 %v1395, %v1396
      %v1398 = vadd.f32 %v1394, %v1397
      %v1399 = vmul.f32 %v426, %v1365
      %v1400 = vmul.f32 %v432, %v1367
      %v1401 = vadd.f32 %v1399, %v1400
      %v1402 = vadd.f32 %v1398, %v1401
      %v1403 = vmul.f32 %v440, %v1369
      %v1404 = vmul.f32 %v446, %v1371
      %v1405 = vadd.f32 %v1403, %v1404
      %v1406 = vadd.f32 %v1402, %v1405
      %v1408 = vrot.slane %v1406, 7
      %v1410 = vsel %vm453, 0.0, %v1408
      %v1411 = vmul.f32 %v459, %v1339
      %v1412 = vmul.f32 %v465, %v1341
      %v1413 = vadd.f32 %v1411, %v1412
      %v1414 = vmul.f32 %v472, %v1343
      %v1415 = vmul.f32 %v478, %v1345
      %v1416 = vadd.f32 %v1414, %v1415
      %v1417 = vadd.f32 %v1413, %v1416
      %v1418 = vmul.f32 %v486, %v1347
      %v1419 = vmul.f32 %v492, %v1349
      %v1420 = vadd.f32 %v1418, %v1419
      %v1421 = vadd.f32 %v1417, %v1420
      %v1422 = vmul.f32 %v500, %v1351
      %v1423 = vmul.f32 %v506, %v1353
      %v1424 = vadd.f32 %v1422, %v1423
      %v1425 = vadd.f32 %v1421, %v1424
      %v1426 = vmul.f32 %v514, %v1337
      %v1427 = vmul.f32 %v520, %v1355
      %v1428 = vadd.f32 %v1426, %v1427
      %v1429 = vadd.f32 %v1425, %v1428
      %v1430 = vmul.f32 %v528, %v1357
      %v1431 = vmul.f32 %v534, %v1359
      %v1432 = vadd.f32 %v1430, %v1431
      %v1433 = vadd.f32 %v1429, %v1432
      %v1434 = vmul.f32 %v542, %v1361
      %v1435 = vmul.f32 %v548, %v1363
      %v1436 = vadd.f32 %v1434, %v1435
      %v1437 = vadd.f32 %v1433, %v1436
      %v1438 = vmul.f32 %v556, %v1365
      %v1439 = vmul.f32 %v562, %v1367
      %v1440 = vadd.f32 %v1438, %v1439
      %v1441 = vadd.f32 %v1437, %v1440
      %v1442 = vmul.f32 %v570, %v1369
      %v1443 = vmul.f32 %v576, %v1371
      %v1444 = vadd.f32 %v1442, %v1443
      %v1445 = vadd.f32 %v1441, %v1444
      %v1446 = vadd.f32 %v1410, %v1445
      %v1447 = vmul.f32 %v585, %v1339
      %v1448 = vmul.f32 %v591, %v1341
      %v1449 = vadd.f32 %v1447, %v1448
      %v1450 = vmul.f32 %v598, %v1343
      %v1451 = vmul.f32 %v604, %v1345
      %v1452 = vadd.f32 %v1450, %v1451
      %v1453 = vadd.f32 %v1449, %v1452
      %v1454 = vmul.f32 %v612, %v1347
      %v1455 = vmul.f32 %v618, %v1349
      %v1456 = vadd.f32 %v1454, %v1455
      %v1457 = vadd.f32 %v1453, %v1456
      %v1458 = vmul.f32 %v626, %v1351
      %v1459 = vmul.f32 %v632, %v1353
      %v1460 = vadd.f32 %v1458, %v1459
      %v1461 = vadd.f32 %v1457, %v1460
      %v1462 = vmul.f32 %v640, %v1337
      %v1463 = vmul.f32 %v646, %v1355
      %v1464 = vadd.f32 %v1462, %v1463
      %v1465 = vadd.f32 %v1461, %v1464
      %v1466 = vmul.f32 %v654, %v1357
      %v1467 = vmul.f32 %v660, %v1359
      %v1468 = vadd.f32 %v1466, %v1467
      %v1469 = vadd.f32 %v1465, %v1468
      %v1470 = vmul.f32 %v668, %v1361
      %v1471 = vmul.f32 %v674, %v1363
      %v1472 = vadd.f32 %v1470, %v1471
      %v1473 = vadd.f32 %v1469, %v1472
      %v1474 = vmul.f32 %v682, %v1365
      %v1475 = vmul.f32 %v688, %v1367
      %v1476 = vadd.f32 %v1474, %v1475
      %v1477 = vadd.f32 %v1473, %v1476
      %v1478 = vmul.f32 %v696, %v1369
      %v1479 = vmul.f32 %v702, %v1371
      %v1480 = vadd.f32 %v1478, %v1479
      %v1481 = vadd.f32 %v1477, %v1480
      %v1483 = vrot.slane %v1481, 1
      %v1485 = vsel %vm709, %v1483, 0.0
      %v1486 = vadd.f32 %v1446, %v1485
      %v1487 = vadd.f32 %v1486, %v716
      %v1488 = vsub.f32 %v1487, %v1337
      %v1489 = vmul.f32 %v1335, %v1488
      %v1490 = vadd.f32 %v1337, %v1489
      %1491 = vrot.lane.b32.xlu0 %v1490, 9
      %v1492 = vpop.permute.xlu0 %1491
      %1493 = vrot.lane.b32.xlu0 %v1490, 73
      %v1494 = vpop.permute.xlu0 %1493
      %1495 = vrot.lane.b32.xlu0 %v1490, 8
      %v1496 = vpop.permute.xlu0 %1495
      %1497 = vrot.lane.b32.xlu0 %v1490, 72
      %v1498 = vpop.permute.xlu0 %1497
      %1499 = vrot.lane.b32.xlu0 %v1490, 7
      %v1500 = vpop.permute.xlu0 %1499
      %1501 = vrot.lane.b32.xlu0 %v1490, 71
      %v1502 = vpop.permute.xlu0 %1501
      %1503 = vrot.lane.b32.xlu0 %v1490, 1
      %v1504 = vpop.permute.xlu0 %1503
      %1505 = vrot.lane.b32.xlu0 %v1490, 65
      %v1506 = vpop.permute.xlu0 %1505
      %1507 = vrot.lane.b32.xlu0 %v1490, 64
      %v1508 = vpop.permute.xlu0 %1507
      %1509 = vrot.lane.b32.xlu0 %v1490, 127
      %v1510 = vpop.permute.xlu0 %1509
      %1511 = vrot.lane.b32.xlu0 %v1490, 63
      %v1512 = vpop.permute.xlu0 %1511
      %1513 = vrot.lane.b32.xlu0 %v1490, 121
      %v1514 = vpop.permute.xlu0 %1513
      %1515 = vrot.lane.b32.xlu0 %v1490, 57
      %v1516 = vpop.permute.xlu0 %1515
      %1517 = vrot.lane.b32.xlu0 %v1490, 120
      %v1518 = vpop.permute.xlu0 %1517
      %1519 = vrot.lane.b32.xlu0 %v1490, 56
      %v1520 = vpop.permute.xlu0 %1519
      %1521 = vrot.lane.b32.xlu0 %v1490, 119
      %v1522 = vpop.permute.xlu0 %1521
      %1523 = vrot.lane.b32.xlu0 %v1490, 55
      %v1524 = vpop.permute.xlu0 %1523
      %v1525 = vmul.f32 %v329, %v1492
      %v1526 = vmul.f32 %v335, %v1494
      %v1527 = vadd.f32 %v1525, %v1526
      %v1528 = vmul.f32 %v342, %v1496
      %v1529 = vmul.f32 %v348, %v1498
      %v1530 = vadd.f32 %v1528, %v1529
      %v1531 = vadd.f32 %v1527, %v1530
      %v1532 = vmul.f32 %v356, %v1500
      %v1533 = vmul.f32 %v362, %v1502
      %v1534 = vadd.f32 %v1532, %v1533
      %v1535 = vadd.f32 %v1531, %v1534
      %v1536 = vmul.f32 %v370, %v1504
      %v1537 = vmul.f32 %v376, %v1506
      %v1538 = vadd.f32 %v1536, %v1537
      %v1539 = vadd.f32 %v1535, %v1538
      %v1540 = vmul.f32 %v384, %v1490
      %v1541 = vmul.f32 %v390, %v1508
      %v1542 = vadd.f32 %v1540, %v1541
      %v1543 = vadd.f32 %v1539, %v1542
      %v1544 = vmul.f32 %v398, %v1510
      %v1545 = vmul.f32 %v404, %v1512
      %v1546 = vadd.f32 %v1544, %v1545
      %v1547 = vadd.f32 %v1543, %v1546
      %v1548 = vmul.f32 %v412, %v1514
      %v1549 = vmul.f32 %v418, %v1516
      %v1550 = vadd.f32 %v1548, %v1549
      %v1551 = vadd.f32 %v1547, %v1550
      %v1552 = vmul.f32 %v426, %v1518
      %v1553 = vmul.f32 %v432, %v1520
      %v1554 = vadd.f32 %v1552, %v1553
      %v1555 = vadd.f32 %v1551, %v1554
      %v1556 = vmul.f32 %v440, %v1522
      %v1557 = vmul.f32 %v446, %v1524
      %v1558 = vadd.f32 %v1556, %v1557
      %v1559 = vadd.f32 %v1555, %v1558
      %v1561 = vrot.slane %v1559, 7
      %v1563 = vsel %vm453, 0.0, %v1561
      %v1564 = vmul.f32 %v459, %v1492
      %v1565 = vmul.f32 %v465, %v1494
      %v1566 = vadd.f32 %v1564, %v1565
      %v1567 = vmul.f32 %v472, %v1496
      %v1568 = vmul.f32 %v478, %v1498
      %v1569 = vadd.f32 %v1567, %v1568
      %v1570 = vadd.f32 %v1566, %v1569
      %v1571 = vmul.f32 %v486, %v1500
      %v1572 = vmul.f32 %v492, %v1502
      %v1573 = vadd.f32 %v1571, %v1572
      %v1574 = vadd.f32 %v1570, %v1573
      %v1575 = vmul.f32 %v500, %v1504
      %v1576 = vmul.f32 %v506, %v1506
      %v1577 = vadd.f32 %v1575, %v1576
      %v1578 = vadd.f32 %v1574, %v1577
      %v1579 = vmul.f32 %v514, %v1490
      %v1580 = vmul.f32 %v520, %v1508
      %v1581 = vadd.f32 %v1579, %v1580
      %v1582 = vadd.f32 %v1578, %v1581
      %v1583 = vmul.f32 %v528, %v1510
      %v1584 = vmul.f32 %v534, %v1512
      %v1585 = vadd.f32 %v1583, %v1584
      %v1586 = vadd.f32 %v1582, %v1585
      %v1587 = vmul.f32 %v542, %v1514
      %v1588 = vmul.f32 %v548, %v1516
      %v1589 = vadd.f32 %v1587, %v1588
      %v1590 = vadd.f32 %v1586, %v1589
      %v1591 = vmul.f32 %v556, %v1518
      %v1592 = vmul.f32 %v562, %v1520
      %v1593 = vadd.f32 %v1591, %v1592
      %v1594 = vadd.f32 %v1590, %v1593
      %v1595 = vmul.f32 %v570, %v1522
      %v1596 = vmul.f32 %v576, %v1524
      %v1597 = vadd.f32 %v1595, %v1596
      %v1598 = vadd.f32 %v1594, %v1597
      %v1599 = vadd.f32 %v1563, %v1598
      %v1600 = vmul.f32 %v585, %v1492
      %v1601 = vmul.f32 %v591, %v1494
      %v1602 = vadd.f32 %v1600, %v1601
      %v1603 = vmul.f32 %v598, %v1496
      %v1604 = vmul.f32 %v604, %v1498
      %v1605 = vadd.f32 %v1603, %v1604
      %v1606 = vadd.f32 %v1602, %v1605
      %v1607 = vmul.f32 %v612, %v1500
      %v1608 = vmul.f32 %v618, %v1502
      %v1609 = vadd.f32 %v1607, %v1608
      %v1610 = vadd.f32 %v1606, %v1609
      %v1611 = vmul.f32 %v626, %v1504
      %v1612 = vmul.f32 %v632, %v1506
      %v1613 = vadd.f32 %v1611, %v1612
      %v1614 = vadd.f32 %v1610, %v1613
      %v1615 = vmul.f32 %v640, %v1490
      %v1616 = vmul.f32 %v646, %v1508
      %v1617 = vadd.f32 %v1615, %v1616
      %v1618 = vadd.f32 %v1614, %v1617
      %v1619 = vmul.f32 %v654, %v1510
      %v1620 = vmul.f32 %v660, %v1512
      %v1621 = vadd.f32 %v1619, %v1620
      %v1622 = vadd.f32 %v1618, %v1621
      %v1623 = vmul.f32 %v668, %v1514
      %v1624 = vmul.f32 %v674, %v1516
      %v1625 = vadd.f32 %v1623, %v1624
      %v1626 = vadd.f32 %v1622, %v1625
      %v1627 = vmul.f32 %v682, %v1518
      %v1628 = vmul.f32 %v688, %v1520
      %v1629 = vadd.f32 %v1627, %v1628
      %v1630 = vadd.f32 %v1626, %v1629
      %v1631 = vmul.f32 %v696, %v1522
      %v1632 = vmul.f32 %v702, %v1524
      %v1633 = vadd.f32 %v1631, %v1632
      %v1634 = vadd.f32 %v1630, %v1633
      %v1636 = vrot.slane %v1634, 1
      %v1638 = vsel %vm709, %v1636, 0.0
      %v1639 = vadd.f32 %v1599, %v1638
      %v1640 = vadd.f32 %v1639, %v716
      %1641 = vrot.lane.b32.xlu0 %v1640, 64
      %v1642 = vpop.permute.xlu0 %1641
      %v1643 = vsub.f32 %v1640, %v1642
      %v1644 = vmul.f32 %v1643, 0.5
      %v1645 = vtanh.pop %v1644
      %v1646 = vadd.f32 %v1645, 1.0
      %v1647 = vmul.f32 %v1646, 0.5
      %1648 = vrot.lane.b32.xlu0 %v1647, 9
      %v1649 = vpop.permute.xlu0 %1648
      %1650 = vrot.lane.b32.xlu0 %v1647, 73
      %v1651 = vpop.permute.xlu0 %1650
      %1652 = vrot.lane.b32.xlu0 %v1647, 8
      %v1653 = vpop.permute.xlu0 %1652
      %1654 = vrot.lane.b32.xlu0 %v1647, 72
      %v1655 = vpop.permute.xlu0 %1654
      %1656 = vrot.lane.b32.xlu0 %v1647, 7
      %v1657 = vpop.permute.xlu0 %1656
      %1658 = vrot.lane.b32.xlu0 %v1647, 71
      %v1659 = vpop.permute.xlu0 %1658
      %1660 = vrot.lane.b32.xlu0 %v1647, 1
      %v1661 = vpop.permute.xlu0 %1660
      %1662 = vrot.lane.b32.xlu0 %v1647, 65
      %v1663 = vpop.permute.xlu0 %1662
      %1664 = vrot.lane.b32.xlu0 %v1647, 64
      %v1665 = vpop.permute.xlu0 %1664
      %1666 = vrot.lane.b32.xlu0 %v1647, 127
      %v1667 = vpop.permute.xlu0 %1666
      %1668 = vrot.lane.b32.xlu0 %v1647, 63
      %v1669 = vpop.permute.xlu0 %1668
      %1670 = vrot.lane.b32.xlu0 %v1647, 121
      %v1671 = vpop.permute.xlu0 %1670
      %1672 = vrot.lane.b32.xlu0 %v1647, 57
      %v1673 = vpop.permute.xlu0 %1672
      %1674 = vrot.lane.b32.xlu0 %v1647, 120
      %v1675 = vpop.permute.xlu0 %1674
      %1676 = vrot.lane.b32.xlu0 %v1647, 56
      %v1677 = vpop.permute.xlu0 %1676
      %1678 = vrot.lane.b32.xlu0 %v1647, 119
      %v1679 = vpop.permute.xlu0 %1678
      %1680 = vrot.lane.b32.xlu0 %v1647, 55
      %v1681 = vpop.permute.xlu0 %1680
      %v1682 = vmul.f32 %v329, %v1649
      %v1683 = vmul.f32 %v335, %v1651
      %v1684 = vadd.f32 %v1682, %v1683
      %v1685 = vmul.f32 %v342, %v1653
      %v1686 = vmul.f32 %v348, %v1655
      %v1687 = vadd.f32 %v1685, %v1686
      %v1688 = vadd.f32 %v1684, %v1687
      %v1689 = vmul.f32 %v356, %v1657
      %v1690 = vmul.f32 %v362, %v1659
      %v1691 = vadd.f32 %v1689, %v1690
      %v1692 = vadd.f32 %v1688, %v1691
      %v1693 = vmul.f32 %v370, %v1661
      %v1694 = vmul.f32 %v376, %v1663
      %v1695 = vadd.f32 %v1693, %v1694
      %v1696 = vadd.f32 %v1692, %v1695
      %v1697 = vmul.f32 %v384, %v1647
      %v1698 = vmul.f32 %v390, %v1665
      %v1699 = vadd.f32 %v1697, %v1698
      %v1700 = vadd.f32 %v1696, %v1699
      %v1701 = vmul.f32 %v398, %v1667
      %v1702 = vmul.f32 %v404, %v1669
      %v1703 = vadd.f32 %v1701, %v1702
      %v1704 = vadd.f32 %v1700, %v1703
      %v1705 = vmul.f32 %v412, %v1671
      %v1706 = vmul.f32 %v418, %v1673
      %v1707 = vadd.f32 %v1705, %v1706
      %v1708 = vadd.f32 %v1704, %v1707
      %v1709 = vmul.f32 %v426, %v1675
      %v1710 = vmul.f32 %v432, %v1677
      %v1711 = vadd.f32 %v1709, %v1710
      %v1712 = vadd.f32 %v1708, %v1711
      %v1713 = vmul.f32 %v440, %v1679
      %v1714 = vmul.f32 %v446, %v1681
      %v1715 = vadd.f32 %v1713, %v1714
      %v1716 = vadd.f32 %v1712, %v1715
      %v1718 = vrot.slane %v1716, 7
      %v1720 = vsel %vm453, 0.0, %v1718
      %v1721 = vmul.f32 %v459, %v1649
      %v1722 = vmul.f32 %v465, %v1651
      %v1723 = vadd.f32 %v1721, %v1722
      %v1724 = vmul.f32 %v472, %v1653
      %v1725 = vmul.f32 %v478, %v1655
      %v1726 = vadd.f32 %v1724, %v1725
      %v1727 = vadd.f32 %v1723, %v1726
      %v1728 = vmul.f32 %v486, %v1657
      %v1729 = vmul.f32 %v492, %v1659
      %v1730 = vadd.f32 %v1728, %v1729
      %v1731 = vadd.f32 %v1727, %v1730
      %v1732 = vmul.f32 %v500, %v1661
      %v1733 = vmul.f32 %v506, %v1663
      %v1734 = vadd.f32 %v1732, %v1733
      %v1735 = vadd.f32 %v1731, %v1734
      %v1736 = vmul.f32 %v514, %v1647
      %v1737 = vmul.f32 %v520, %v1665
      %v1738 = vadd.f32 %v1736, %v1737
      %v1739 = vadd.f32 %v1735, %v1738
      %v1740 = vmul.f32 %v528, %v1667
      %v1741 = vmul.f32 %v534, %v1669
      %v1742 = vadd.f32 %v1740, %v1741
      %v1743 = vadd.f32 %v1739, %v1742
      %v1744 = vmul.f32 %v542, %v1671
      %v1745 = vmul.f32 %v548, %v1673
      %v1746 = vadd.f32 %v1744, %v1745
      %v1747 = vadd.f32 %v1743, %v1746
      %v1748 = vmul.f32 %v556, %v1675
      %v1749 = vmul.f32 %v562, %v1677
      %v1750 = vadd.f32 %v1748, %v1749
      %v1751 = vadd.f32 %v1747, %v1750
      %v1752 = vmul.f32 %v570, %v1679
      %v1753 = vmul.f32 %v576, %v1681
      %v1754 = vadd.f32 %v1752, %v1753
      %v1755 = vadd.f32 %v1751, %v1754
      %v1756 = vadd.f32 %v1720, %v1755
      %v1757 = vmul.f32 %v585, %v1649
      %v1758 = vmul.f32 %v591, %v1651
      %v1759 = vadd.f32 %v1757, %v1758
      %v1760 = vmul.f32 %v598, %v1653
      %v1761 = vmul.f32 %v604, %v1655
      %v1762 = vadd.f32 %v1760, %v1761
      %v1763 = vadd.f32 %v1759, %v1762
      %v1764 = vmul.f32 %v612, %v1657
      %v1765 = vmul.f32 %v618, %v1659
      %v1766 = vadd.f32 %v1764, %v1765
      %v1767 = vadd.f32 %v1763, %v1766
      %v1768 = vmul.f32 %v626, %v1661
      %v1769 = vmul.f32 %v632, %v1663
      %v1770 = vadd.f32 %v1768, %v1769
      %v1771 = vadd.f32 %v1767, %v1770
      %v1772 = vmul.f32 %v640, %v1647
      %v1773 = vmul.f32 %v646, %v1665
      %v1774 = vadd.f32 %v1772, %v1773
      %v1775 = vadd.f32 %v1771, %v1774
      %v1776 = vmul.f32 %v654, %v1667
      %v1777 = vmul.f32 %v660, %v1669
      %v1778 = vadd.f32 %v1776, %v1777
      %v1779 = vadd.f32 %v1775, %v1778
      %v1780 = vmul.f32 %v668, %v1671
      %v1781 = vmul.f32 %v674, %v1673
      %v1782 = vadd.f32 %v1780, %v1781
      %v1783 = vadd.f32 %v1779, %v1782
      %v1784 = vmul.f32 %v682, %v1675
      %v1785 = vmul.f32 %v688, %v1677
      %v1786 = vadd.f32 %v1784, %v1785
      %v1787 = vadd.f32 %v1783, %v1786
      %v1788 = vmul.f32 %v696, %v1679
      %v1789 = vmul.f32 %v702, %v1681
      %v1790 = vadd.f32 %v1788, %v1789
      %v1791 = vadd.f32 %v1787, %v1790
      %v1793 = vrot.slane %v1791, 1
      %v1795 = vsel %vm709, %v1793, 0.0
      %v1796 = vadd.f32 %v1756, %v1795
      %v1797 = vadd.f32 %v1796, %v716
      %v1798 = vadd.f32 %v717, %v1797
      %v1799 = vtanh.pop %v1798
      %v1800 = vmul.f32 %v1799, %v871
      %v1801 = vadd.f32 %v290, %v1800
      %1802 = vrot.lane.b32.xlu0 %v1801, 9
      %v1803 = vpop.permute.xlu0 %1802
      %1804 = vrot.lane.b32.xlu0 %v1801, 73
      %v1805 = vpop.permute.xlu0 %1804
      %1806 = vrot.lane.b32.xlu0 %v1801, 8
      %v1807 = vpop.permute.xlu0 %1806
      %1808 = vrot.lane.b32.xlu0 %v1801, 72
      %v1809 = vpop.permute.xlu0 %1808
      %1810 = vrot.lane.b32.xlu0 %v1801, 7
      %v1811 = vpop.permute.xlu0 %1810
      %1812 = vrot.lane.b32.xlu0 %v1801, 71
      %v1813 = vpop.permute.xlu0 %1812
      %1814 = vrot.lane.b32.xlu0 %v1801, 1
      %v1815 = vpop.permute.xlu0 %1814
      %1816 = vrot.lane.b32.xlu0 %v1801, 65
      %v1817 = vpop.permute.xlu0 %1816
      %1818 = vrot.lane.b32.xlu0 %v1801, 64
      %v1819 = vpop.permute.xlu0 %1818
      %1820 = vrot.lane.b32.xlu0 %v1801, 127
      %v1821 = vpop.permute.xlu0 %1820
      %1822 = vrot.lane.b32.xlu0 %v1801, 63
      %v1823 = vpop.permute.xlu0 %1822
      %1824 = vrot.lane.b32.xlu0 %v1801, 121
      %v1825 = vpop.permute.xlu0 %1824
      %1826 = vrot.lane.b32.xlu0 %v1801, 57
      %v1827 = vpop.permute.xlu0 %1826
      %1828 = vrot.lane.b32.xlu0 %v1801, 120
      %v1829 = vpop.permute.xlu0 %1828
      %1830 = vrot.lane.b32.xlu0 %v1801, 56
      %v1831 = vpop.permute.xlu0 %1830
      %1832 = vrot.lane.b32.xlu0 %v1801, 119
      %v1833 = vpop.permute.xlu0 %1832
      %1834 = vrot.lane.b32.xlu0 %v1801, 55
      %v1835 = vpop.permute.xlu0 %1834
      %v1836 = vmul.f32 %v329, %v1803
      %v1837 = vmul.f32 %v335, %v1805
      %v1838 = vadd.f32 %v1836, %v1837
      %v1839 = vmul.f32 %v342, %v1807
      %v1840 = vmul.f32 %v348, %v1809
      %v1841 = vadd.f32 %v1839, %v1840
      %v1842 = vadd.f32 %v1838, %v1841
      %v1843 = vmul.f32 %v356, %v1811
      %v1844 = vmul.f32 %v362, %v1813
      %v1845 = vadd.f32 %v1843, %v1844
      %v1846 = vadd.f32 %v1842, %v1845
      %v1847 = vmul.f32 %v370, %v1815
      %v1848 = vmul.f32 %v376, %v1817
      %v1849 = vadd.f32 %v1847, %v1848
      %v1850 = vadd.f32 %v1846, %v1849
      %v1851 = vmul.f32 %v384, %v1801
      %v1852 = vmul.f32 %v390, %v1819
      %v1853 = vadd.f32 %v1851, %v1852
      %v1854 = vadd.f32 %v1850, %v1853
      %v1855 = vmul.f32 %v398, %v1821
      %v1856 = vmul.f32 %v404, %v1823
      %v1857 = vadd.f32 %v1855, %v1856
      %v1858 = vadd.f32 %v1854, %v1857
      %v1859 = vmul.f32 %v412, %v1825
      %v1860 = vmul.f32 %v418, %v1827
      %v1861 = vadd.f32 %v1859, %v1860
      %v1862 = vadd.f32 %v1858, %v1861
      %v1863 = vmul.f32 %v426, %v1829
      %v1864 = vmul.f32 %v432, %v1831
      %v1865 = vadd.f32 %v1863, %v1864
      %v1866 = vadd.f32 %v1862, %v1865
      %v1867 = vmul.f32 %v440, %v1833
      %v1868 = vmul.f32 %v446, %v1835
      %v1869 = vadd.f32 %v1867, %v1868
      %v1870 = vadd.f32 %v1866, %v1869
      %v1872 = vrot.slane %v1870, 7
      %v1874 = vsel %vm453, 0.0, %v1872
      %v1875 = vmul.f32 %v459, %v1803
      %v1876 = vmul.f32 %v465, %v1805
      %v1877 = vadd.f32 %v1875, %v1876
      %v1878 = vmul.f32 %v472, %v1807
      %v1879 = vmul.f32 %v478, %v1809
      %v1880 = vadd.f32 %v1878, %v1879
      %v1881 = vadd.f32 %v1877, %v1880
      %v1882 = vmul.f32 %v486, %v1811
      %v1883 = vmul.f32 %v492, %v1813
      %v1884 = vadd.f32 %v1882, %v1883
      %v1885 = vadd.f32 %v1881, %v1884
      %v1886 = vmul.f32 %v500, %v1815
      %v1887 = vmul.f32 %v506, %v1817
      %v1888 = vadd.f32 %v1886, %v1887
      %v1889 = vadd.f32 %v1885, %v1888
      %v1890 = vmul.f32 %v514, %v1801
      %v1891 = vmul.f32 %v520, %v1819
      %v1892 = vadd.f32 %v1890, %v1891
      %v1893 = vadd.f32 %v1889, %v1892
      %v1894 = vmul.f32 %v528, %v1821
      %v1895 = vmul.f32 %v534, %v1823
      %v1896 = vadd.f32 %v1894, %v1895
      %v1897 = vadd.f32 %v1893, %v1896
      %v1898 = vmul.f32 %v542, %v1825
      %v1899 = vmul.f32 %v548, %v1827
      %v1900 = vadd.f32 %v1898, %v1899
      %v1901 = vadd.f32 %v1897, %v1900
      %v1902 = vmul.f32 %v556, %v1829
      %v1903 = vmul.f32 %v562, %v1831
      %v1904 = vadd.f32 %v1902, %v1903
      %v1905 = vadd.f32 %v1901, %v1904
      %v1906 = vmul.f32 %v570, %v1833
      %v1907 = vmul.f32 %v576, %v1835
      %v1908 = vadd.f32 %v1906, %v1907
      %v1909 = vadd.f32 %v1905, %v1908
      %v1910 = vadd.f32 %v1874, %v1909
      %v1911 = vmul.f32 %v585, %v1803
      %v1912 = vmul.f32 %v591, %v1805
      %v1913 = vadd.f32 %v1911, %v1912
      %v1914 = vmul.f32 %v598, %v1807
      %v1915 = vmul.f32 %v604, %v1809
      %v1916 = vadd.f32 %v1914, %v1915
      %v1917 = vadd.f32 %v1913, %v1916
      %v1918 = vmul.f32 %v612, %v1811
      %v1919 = vmul.f32 %v618, %v1813
      %v1920 = vadd.f32 %v1918, %v1919
      %v1921 = vadd.f32 %v1917, %v1920
      %v1922 = vmul.f32 %v626, %v1815
      %v1923 = vmul.f32 %v632, %v1817
      %v1924 = vadd.f32 %v1922, %v1923
      %v1925 = vadd.f32 %v1921, %v1924
      %v1926 = vmul.f32 %v640, %v1801
      %v1927 = vmul.f32 %v646, %v1819
      %v1928 = vadd.f32 %v1926, %v1927
      %v1929 = vadd.f32 %v1925, %v1928
      %v1930 = vmul.f32 %v654, %v1821
      %v1931 = vmul.f32 %v660, %v1823
      %v1932 = vadd.f32 %v1930, %v1931
      %v1933 = vadd.f32 %v1929, %v1932
      %v1934 = vmul.f32 %v668, %v1825
      %v1935 = vmul.f32 %v674, %v1827
      %v1936 = vadd.f32 %v1934, %v1935
      %v1937 = vadd.f32 %v1933, %v1936
      %v1938 = vmul.f32 %v682, %v1829
      %v1939 = vmul.f32 %v688, %v1831
      %v1940 = vadd.f32 %v1938, %v1939
      %v1941 = vadd.f32 %v1937, %v1940
      %v1942 = vmul.f32 %v696, %v1833
      %v1943 = vmul.f32 %v702, %v1835
      %v1944 = vadd.f32 %v1942, %v1943
      %v1945 = vadd.f32 %v1941, %v1944
      %v1947 = vrot.slane %v1945, 1
      %v1949 = vsel %vm709, %v1947, 0.0
      %v1950 = vadd.f32 %v1910, %v1949
      %v1951 = vadd.f32 %v1950, %v716
      %v1952 = vsub.f32 %v1951, %v1801
      %v1953 = vmul.f32 %v1799, %v1952
      %v1954 = vadd.f32 %v1801, %v1953
      %1955 = vrot.lane.b32.xlu0 %v1954, 9
      %v1956 = vpop.permute.xlu0 %1955
      %1957 = vrot.lane.b32.xlu0 %v1954, 73
      %v1958 = vpop.permute.xlu0 %1957
      %1959 = vrot.lane.b32.xlu0 %v1954, 8
      %v1960 = vpop.permute.xlu0 %1959
      %1961 = vrot.lane.b32.xlu0 %v1954, 72
      %v1962 = vpop.permute.xlu0 %1961
      %1963 = vrot.lane.b32.xlu0 %v1954, 7
      %v1964 = vpop.permute.xlu0 %1963
      %1965 = vrot.lane.b32.xlu0 %v1954, 71
      %v1966 = vpop.permute.xlu0 %1965
      %1967 = vrot.lane.b32.xlu0 %v1954, 1
      %v1968 = vpop.permute.xlu0 %1967
      %1969 = vrot.lane.b32.xlu0 %v1954, 65
      %v1970 = vpop.permute.xlu0 %1969
      %1971 = vrot.lane.b32.xlu0 %v1954, 64
      %v1972 = vpop.permute.xlu0 %1971
      %1973 = vrot.lane.b32.xlu0 %v1954, 127
      %v1974 = vpop.permute.xlu0 %1973
      %1975 = vrot.lane.b32.xlu0 %v1954, 63
      %v1976 = vpop.permute.xlu0 %1975
      %1977 = vrot.lane.b32.xlu0 %v1954, 121
      %v1978 = vpop.permute.xlu0 %1977
      %1979 = vrot.lane.b32.xlu0 %v1954, 57
      %v1980 = vpop.permute.xlu0 %1979
      %1981 = vrot.lane.b32.xlu0 %v1954, 120
      %v1982 = vpop.permute.xlu0 %1981
      %1983 = vrot.lane.b32.xlu0 %v1954, 56
      %v1984 = vpop.permute.xlu0 %1983
      %1985 = vrot.lane.b32.xlu0 %v1954, 119
      %v1986 = vpop.permute.xlu0 %1985
      %1987 = vrot.lane.b32.xlu0 %v1954, 55
      %v1988 = vpop.permute.xlu0 %1987
      %v1989 = vmul.f32 %v329, %v1956
      %v1990 = vmul.f32 %v335, %v1958
      %v1991 = vadd.f32 %v1989, %v1990
      %v1992 = vmul.f32 %v342, %v1960
      %v1993 = vmul.f32 %v348, %v1962
      %v1994 = vadd.f32 %v1992, %v1993
      %v1995 = vadd.f32 %v1991, %v1994
      %v1996 = vmul.f32 %v356, %v1964
      %v1997 = vmul.f32 %v362, %v1966
      %v1998 = vadd.f32 %v1996, %v1997
      %v1999 = vadd.f32 %v1995, %v1998
      %v2000 = vmul.f32 %v370, %v1968
      %v2001 = vmul.f32 %v376, %v1970
      %v2002 = vadd.f32 %v2000, %v2001
      %v2003 = vadd.f32 %v1999, %v2002
      %v2004 = vmul.f32 %v384, %v1954
      %v2005 = vmul.f32 %v390, %v1972
      %v2006 = vadd.f32 %v2004, %v2005
      %v2007 = vadd.f32 %v2003, %v2006
      %v2008 = vmul.f32 %v398, %v1974
      %v2009 = vmul.f32 %v404, %v1976
      %v2010 = vadd.f32 %v2008, %v2009
      %v2011 = vadd.f32 %v2007, %v2010
      %v2012 = vmul.f32 %v412, %v1978
      %v2013 = vmul.f32 %v418, %v1980
      %v2014 = vadd.f32 %v2012, %v2013
      %v2015 = vadd.f32 %v2011, %v2014
      %v2016 = vmul.f32 %v426, %v1982
      %v2017 = vmul.f32 %v432, %v1984
      %v2018 = vadd.f32 %v2016, %v2017
      %v2019 = vadd.f32 %v2015, %v2018
      %v2020 = vmul.f32 %v440, %v1986
      %v2021 = vmul.f32 %v446, %v1988
      %v2022 = vadd.f32 %v2020, %v2021
      %v2023 = vadd.f32 %v2019, %v2022
      %v2025 = vrot.slane %v2023, 7
      %v2027 = vsel %vm453, 0.0, %v2025
      %v2028 = vmul.f32 %v459, %v1956
      %v2029 = vmul.f32 %v465, %v1958
      %v2030 = vadd.f32 %v2028, %v2029
      %v2031 = vmul.f32 %v472, %v1960
      %v2032 = vmul.f32 %v478, %v1962
      %v2033 = vadd.f32 %v2031, %v2032
      %v2034 = vadd.f32 %v2030, %v2033
      %v2035 = vmul.f32 %v486, %v1964
      %v2036 = vmul.f32 %v492, %v1966
      %v2037 = vadd.f32 %v2035, %v2036
      %v2038 = vadd.f32 %v2034, %v2037
      %v2039 = vmul.f32 %v500, %v1968
      %v2040 = vmul.f32 %v506, %v1970
      %v2041 = vadd.f32 %v2039, %v2040
      %v2042 = vadd.f32 %v2038, %v2041
      %v2043 = vmul.f32 %v514, %v1954
      %v2044 = vmul.f32 %v520, %v1972
      %v2045 = vadd.f32 %v2043, %v2044
      %v2046 = vadd.f32 %v2042, %v2045
      %v2047 = vmul.f32 %v528, %v1974
      %v2048 = vmul.f32 %v534, %v1976
      %v2049 = vadd.f32 %v2047, %v2048
      %v2050 = vadd.f32 %v2046, %v2049
      %v2051 = vmul.f32 %v542, %v1978
      %v2052 = vmul.f32 %v548, %v1980
      %v2053 = vadd.f32 %v2051, %v2052
      %v2054 = vadd.f32 %v2050, %v2053
      %v2055 = vmul.f32 %v556, %v1982
      %v2056 = vmul.f32 %v562, %v1984
      %v2057 = vadd.f32 %v2055, %v2056
      %v2058 = vadd.f32 %v2054, %v2057
      %v2059 = vmul.f32 %v570, %v1986
      %v2060 = vmul.f32 %v576, %v1988
      %v2061 = vadd.f32 %v2059, %v2060
      %v2062 = vadd.f32 %v2058, %v2061
      %v2063 = vadd.f32 %v2027, %v2062
      %v2064 = vmul.f32 %v585, %v1956
      %v2065 = vmul.f32 %v591, %v1958
      %v2066 = vadd.f32 %v2064, %v2065
      %v2067 = vmul.f32 %v598, %v1960
      %v2068 = vmul.f32 %v604, %v1962
      %v2069 = vadd.f32 %v2067, %v2068
      %v2070 = vadd.f32 %v2066, %v2069
      %v2071 = vmul.f32 %v612, %v1964
      %v2072 = vmul.f32 %v618, %v1966
      %v2073 = vadd.f32 %v2071, %v2072
      %v2074 = vadd.f32 %v2070, %v2073
      %v2075 = vmul.f32 %v626, %v1968
      %v2076 = vmul.f32 %v632, %v1970
      %v2077 = vadd.f32 %v2075, %v2076
      %v2078 = vadd.f32 %v2074, %v2077
      %v2079 = vmul.f32 %v640, %v1954
      %v2080 = vmul.f32 %v646, %v1972
      %v2081 = vadd.f32 %v2079, %v2080
      %v2082 = vadd.f32 %v2078, %v2081
      %v2083 = vmul.f32 %v654, %v1974
      %v2084 = vmul.f32 %v660, %v1976
      %v2085 = vadd.f32 %v2083, %v2084
      %v2086 = vadd.f32 %v2082, %v2085
      %v2087 = vmul.f32 %v668, %v1978
      %v2088 = vmul.f32 %v674, %v1980
      %v2089 = vadd.f32 %v2087, %v2088
      %v2090 = vadd.f32 %v2086, %v2089
      %v2091 = vmul.f32 %v682, %v1982
      %v2092 = vmul.f32 %v688, %v1984
      %v2093 = vadd.f32 %v2091, %v2092
      %v2094 = vadd.f32 %v2090, %v2093
      %v2095 = vmul.f32 %v696, %v1986
      %v2096 = vmul.f32 %v702, %v1988
      %v2097 = vadd.f32 %v2095, %v2096
      %v2098 = vadd.f32 %v2094, %v2097
      %v2100 = vrot.slane %v2098, 1
      %v2102 = vsel %vm709, %v2100, 0.0
      %v2103 = vadd.f32 %v2063, %v2102
      %v2104 = vadd.f32 %v2103, %v716
      %2105 = vrot.lane.b32.xlu0 %v2104, 64
      %v2106 = vpop.permute.xlu0 %2105
      %v2107 = vsub.f32 %v2104, %v2106
      %v2108 = vmul.f32 %v2107, 0.5
      %v2109 = vtanh.pop %v2108
      %v2110 = vadd.f32 %v2109, 1.0
      %v2111 = vmul.f32 %v2110, 0.5
      %2112 = vrot.lane.b32.xlu0 %v2111, 9
      %v2113 = vpop.permute.xlu0 %2112
      %2114 = vrot.lane.b32.xlu0 %v2111, 73
      %v2115 = vpop.permute.xlu0 %2114
      %2116 = vrot.lane.b32.xlu0 %v2111, 8
      %v2117 = vpop.permute.xlu0 %2116
      %2118 = vrot.lane.b32.xlu0 %v2111, 72
      %v2119 = vpop.permute.xlu0 %2118
      %2120 = vrot.lane.b32.xlu0 %v2111, 7
      %v2121 = vpop.permute.xlu0 %2120
      %2122 = vrot.lane.b32.xlu0 %v2111, 71
      %v2123 = vpop.permute.xlu0 %2122
      %2124 = vrot.lane.b32.xlu0 %v2111, 1
      %v2125 = vpop.permute.xlu0 %2124
      %2126 = vrot.lane.b32.xlu0 %v2111, 65
      %v2127 = vpop.permute.xlu0 %2126
      %2128 = vrot.lane.b32.xlu0 %v2111, 64
      %v2129 = vpop.permute.xlu0 %2128
      %2130 = vrot.lane.b32.xlu0 %v2111, 127
      %v2131 = vpop.permute.xlu0 %2130
      %2132 = vrot.lane.b32.xlu0 %v2111, 63
      %v2133 = vpop.permute.xlu0 %2132
      %2134 = vrot.lane.b32.xlu0 %v2111, 121
      %v2135 = vpop.permute.xlu0 %2134
      %2136 = vrot.lane.b32.xlu0 %v2111, 57
      %v2137 = vpop.permute.xlu0 %2136
      %2138 = vrot.lane.b32.xlu0 %v2111, 120
      %v2139 = vpop.permute.xlu0 %2138
      %2140 = vrot.lane.b32.xlu0 %v2111, 56
      %v2141 = vpop.permute.xlu0 %2140
      %2142 = vrot.lane.b32.xlu0 %v2111, 119
      %v2143 = vpop.permute.xlu0 %2142
      %2144 = vrot.lane.b32.xlu0 %v2111, 55
      %v2145 = vpop.permute.xlu0 %2144
      %v2146 = vmul.f32 %v329, %v2113
      %v2147 = vmul.f32 %v335, %v2115
      %v2148 = vadd.f32 %v2146, %v2147
      %v2149 = vmul.f32 %v342, %v2117
      %v2150 = vmul.f32 %v348, %v2119
      %v2151 = vadd.f32 %v2149, %v2150
      %v2152 = vadd.f32 %v2148, %v2151
      %v2153 = vmul.f32 %v356, %v2121
      %v2154 = vmul.f32 %v362, %v2123
      %v2155 = vadd.f32 %v2153, %v2154
      %v2156 = vadd.f32 %v2152, %v2155
      %v2157 = vmul.f32 %v370, %v2125
      %v2158 = vmul.f32 %v376, %v2127
      %v2159 = vadd.f32 %v2157, %v2158
      %v2160 = vadd.f32 %v2156, %v2159
      %v2161 = vmul.f32 %v384, %v2111
      %v2162 = vmul.f32 %v390, %v2129
      %v2163 = vadd.f32 %v2161, %v2162
      %v2164 = vadd.f32 %v2160, %v2163
      %v2165 = vmul.f32 %v398, %v2131
      %v2166 = vmul.f32 %v404, %v2133
      %v2167 = vadd.f32 %v2165, %v2166
      %v2168 = vadd.f32 %v2164, %v2167
      %v2169 = vmul.f32 %v412, %v2135
      %v2170 = vmul.f32 %v418, %v2137
      %v2171 = vadd.f32 %v2169, %v2170
      %v2172 = vadd.f32 %v2168, %v2171
      %v2173 = vmul.f32 %v426, %v2139
      %v2174 = vmul.f32 %v432, %v2141
      %v2175 = vadd.f32 %v2173, %v2174
      %v2176 = vadd.f32 %v2172, %v2175
      %v2177 = vmul.f32 %v440, %v2143
      %v2178 = vmul.f32 %v446, %v2145
      %v2179 = vadd.f32 %v2177, %v2178
      %v2180 = vadd.f32 %v2176, %v2179
      %v2182 = vrot.slane %v2180, 7
      %v2184 = vsel %vm453, 0.0, %v2182
      %v2185 = vmul.f32 %v459, %v2113
      %v2186 = vmul.f32 %v465, %v2115
      %v2187 = vadd.f32 %v2185, %v2186
      %v2188 = vmul.f32 %v472, %v2117
      %v2189 = vmul.f32 %v478, %v2119
      %v2190 = vadd.f32 %v2188, %v2189
      %v2191 = vadd.f32 %v2187, %v2190
      %v2192 = vmul.f32 %v486, %v2121
      %v2193 = vmul.f32 %v492, %v2123
      %v2194 = vadd.f32 %v2192, %v2193
      %v2195 = vadd.f32 %v2191, %v2194
      %v2196 = vmul.f32 %v500, %v2125
      %v2197 = vmul.f32 %v506, %v2127
      %v2198 = vadd.f32 %v2196, %v2197
      %v2199 = vadd.f32 %v2195, %v2198
      %v2200 = vmul.f32 %v514, %v2111
      %v2201 = vmul.f32 %v520, %v2129
      %v2202 = vadd.f32 %v2200, %v2201
      %v2203 = vadd.f32 %v2199, %v2202
      %v2204 = vmul.f32 %v528, %v2131
      %v2205 = vmul.f32 %v534, %v2133
      %v2206 = vadd.f32 %v2204, %v2205
      %v2207 = vadd.f32 %v2203, %v2206
      %v2208 = vmul.f32 %v542, %v2135
      %v2209 = vmul.f32 %v548, %v2137
      %v2210 = vadd.f32 %v2208, %v2209
      %v2211 = vadd.f32 %v2207, %v2210
      %v2212 = vmul.f32 %v556, %v2139
      %v2213 = vmul.f32 %v562, %v2141
      %v2214 = vadd.f32 %v2212, %v2213
      %v2215 = vadd.f32 %v2211, %v2214
      %v2216 = vmul.f32 %v570, %v2143
      %v2217 = vmul.f32 %v576, %v2145
      %v2218 = vadd.f32 %v2216, %v2217
      %v2219 = vadd.f32 %v2215, %v2218
      %v2220 = vadd.f32 %v2184, %v2219
      %v2221 = vmul.f32 %v585, %v2113
      %v2222 = vmul.f32 %v591, %v2115
      %v2223 = vadd.f32 %v2221, %v2222
      %v2224 = vmul.f32 %v598, %v2117
      %v2225 = vmul.f32 %v604, %v2119
      %v2226 = vadd.f32 %v2224, %v2225
      %v2227 = vadd.f32 %v2223, %v2226
      %v2228 = vmul.f32 %v612, %v2121
      %v2229 = vmul.f32 %v618, %v2123
      %v2230 = vadd.f32 %v2228, %v2229
      %v2231 = vadd.f32 %v2227, %v2230
      %v2232 = vmul.f32 %v626, %v2125
      %v2233 = vmul.f32 %v632, %v2127
      %v2234 = vadd.f32 %v2232, %v2233
      %v2235 = vadd.f32 %v2231, %v2234
      %v2236 = vmul.f32 %v640, %v2111
      %v2237 = vmul.f32 %v646, %v2129
      %v2238 = vadd.f32 %v2236, %v2237
      %v2239 = vadd.f32 %v2235, %v2238
      %v2240 = vmul.f32 %v654, %v2131
      %v2241 = vmul.f32 %v660, %v2133
      %v2242 = vadd.f32 %v2240, %v2241
      %v2243 = vadd.f32 %v2239, %v2242
      %v2244 = vmul.f32 %v668, %v2135
      %v2245 = vmul.f32 %v674, %v2137
      %v2246 = vadd.f32 %v2244, %v2245
      %v2247 = vadd.f32 %v2243, %v2246
      %v2248 = vmul.f32 %v682, %v2139
      %v2249 = vmul.f32 %v688, %v2141
      %v2250 = vadd.f32 %v2248, %v2249
      %v2251 = vadd.f32 %v2247, %v2250
      %v2252 = vmul.f32 %v696, %v2143
      %v2253 = vmul.f32 %v702, %v2145
      %v2254 = vadd.f32 %v2252, %v2253
      %v2255 = vadd.f32 %v2251, %v2254
      %v2257 = vrot.slane %v2255, 1
      %v2259 = vsel %vm709, %v2257, 0.0
      %v2260 = vadd.f32 %v2220, %v2259
      %v2261 = vadd.f32 %v2260, %v716
      %v2262 = vadd.f32 %v717, %v2261
      %v2263 = vtanh.pop %v2262
      %v2264 = vmul.f32 %v2263, %v871
      %v2265 = vadd.f32 %v290, %v2264
      %2266 = vrot.lane.b32.xlu0 %v2265, 9
      %v2267 = vpop.permute.xlu0 %2266
      %2268 = vrot.lane.b32.xlu0 %v2265, 73
      %v2269 = vpop.permute.xlu0 %2268
      %2270 = vrot.lane.b32.xlu0 %v2265, 8
      %v2271 = vpop.permute.xlu0 %2270
      %2272 = vrot.lane.b32.xlu0 %v2265, 72
      %v2273 = vpop.permute.xlu0 %2272
      %2274 = vrot.lane.b32.xlu0 %v2265, 7
      %v2275 = vpop.permute.xlu0 %2274
      %2276 = vrot.lane.b32.xlu0 %v2265, 71
      %v2277 = vpop.permute.xlu0 %2276
      %2278 = vrot.lane.b32.xlu0 %v2265, 1
      %v2279 = vpop.permute.xlu0 %2278
      %2280 = vrot.lane.b32.xlu0 %v2265, 65
      %v2281 = vpop.permute.xlu0 %2280
      %2282 = vrot.lane.b32.xlu0 %v2265, 64
      %v2283 = vpop.permute.xlu0 %2282
      %2284 = vrot.lane.b32.xlu0 %v2265, 127
      %v2285 = vpop.permute.xlu0 %2284
      %2286 = vrot.lane.b32.xlu0 %v2265, 63
      %v2287 = vpop.permute.xlu0 %2286
      %2288 = vrot.lane.b32.xlu0 %v2265, 121
      %v2289 = vpop.permute.xlu0 %2288
      %2290 = vrot.lane.b32.xlu0 %v2265, 57
      %v2291 = vpop.permute.xlu0 %2290
      %2292 = vrot.lane.b32.xlu0 %v2265, 120
      %v2293 = vpop.permute.xlu0 %2292
      %2294 = vrot.lane.b32.xlu0 %v2265, 56
      %v2295 = vpop.permute.xlu0 %2294
      %2296 = vrot.lane.b32.xlu0 %v2265, 119
      %v2297 = vpop.permute.xlu0 %2296
      %2298 = vrot.lane.b32.xlu0 %v2265, 55
      %v2299 = vpop.permute.xlu0 %2298
      %v2300 = vmul.f32 %v329, %v2267
      %v2301 = vmul.f32 %v335, %v2269
      %v2302 = vadd.f32 %v2300, %v2301
      %v2303 = vmul.f32 %v342, %v2271
      %v2304 = vmul.f32 %v348, %v2273
      %v2305 = vadd.f32 %v2303, %v2304
      %v2306 = vadd.f32 %v2302, %v2305
      %v2307 = vmul.f32 %v356, %v2275
      %v2308 = vmul.f32 %v362, %v2277
      %v2309 = vadd.f32 %v2307, %v2308
      %v2310 = vadd.f32 %v2306, %v2309
      %v2311 = vmul.f32 %v370, %v2279
      %v2312 = vmul.f32 %v376, %v2281
      %v2313 = vadd.f32 %v2311, %v2312
      %v2314 = vadd.f32 %v2310, %v2313
      %v2315 = vmul.f32 %v384, %v2265
      %v2316 = vmul.f32 %v390, %v2283
      %v2317 = vadd.f32 %v2315, %v2316
      %v2318 = vadd.f32 %v2314, %v2317
      %v2319 = vmul.f32 %v398, %v2285
      %v2320 = vmul.f32 %v404, %v2287
      %v2321 = vadd.f32 %v2319, %v2320
      %v2322 = vadd.f32 %v2318, %v2321
      %v2323 = vmul.f32 %v412, %v2289
      %v2324 = vmul.f32 %v418, %v2291
      %v2325 = vadd.f32 %v2323, %v2324
      %v2326 = vadd.f32 %v2322, %v2325
      %v2327 = vmul.f32 %v426, %v2293
      %v2328 = vmul.f32 %v432, %v2295
      %v2329 = vadd.f32 %v2327, %v2328
      %v2330 = vadd.f32 %v2326, %v2329
      %v2331 = vmul.f32 %v440, %v2297
      %v2332 = vmul.f32 %v446, %v2299
      %v2333 = vadd.f32 %v2331, %v2332
      %v2334 = vadd.f32 %v2330, %v2333
      %v2336 = vrot.slane %v2334, 7
      %v2338 = vsel %vm453, 0.0, %v2336
      %v2339 = vmul.f32 %v459, %v2267
      %v2340 = vmul.f32 %v465, %v2269
      %v2341 = vadd.f32 %v2339, %v2340
      %v2342 = vmul.f32 %v472, %v2271
      %v2343 = vmul.f32 %v478, %v2273
      %v2344 = vadd.f32 %v2342, %v2343
      %v2345 = vadd.f32 %v2341, %v2344
      %v2346 = vmul.f32 %v486, %v2275
      %v2347 = vmul.f32 %v492, %v2277
      %v2348 = vadd.f32 %v2346, %v2347
      %v2349 = vadd.f32 %v2345, %v2348
      %v2350 = vmul.f32 %v500, %v2279
      %v2351 = vmul.f32 %v506, %v2281
      %v2352 = vadd.f32 %v2350, %v2351
      %v2353 = vadd.f32 %v2349, %v2352
      %v2354 = vmul.f32 %v514, %v2265
      %v2355 = vmul.f32 %v520, %v2283
      %v2356 = vadd.f32 %v2354, %v2355
      %v2357 = vadd.f32 %v2353, %v2356
      %v2358 = vmul.f32 %v528, %v2285
      %v2359 = vmul.f32 %v534, %v2287
      %v2360 = vadd.f32 %v2358, %v2359
      %v2361 = vadd.f32 %v2357, %v2360
      %v2362 = vmul.f32 %v542, %v2289
      %v2363 = vmul.f32 %v548, %v2291
      %v2364 = vadd.f32 %v2362, %v2363
      %v2365 = vadd.f32 %v2361, %v2364
      %v2366 = vmul.f32 %v556, %v2293
      %v2367 = vmul.f32 %v562, %v2295
      %v2368 = vadd.f32 %v2366, %v2367
      %v2369 = vadd.f32 %v2365, %v2368
      %v2370 = vmul.f32 %v570, %v2297
      %v2371 = vmul.f32 %v576, %v2299
      %v2372 = vadd.f32 %v2370, %v2371
      %v2373 = vadd.f32 %v2369, %v2372
      %v2374 = vadd.f32 %v2338, %v2373
      %v2375 = vmul.f32 %v585, %v2267
      %v2376 = vmul.f32 %v591, %v2269
      %v2377 = vadd.f32 %v2375, %v2376
      %v2378 = vmul.f32 %v598, %v2271
      %v2379 = vmul.f32 %v604, %v2273
      %v2380 = vadd.f32 %v2378, %v2379
      %v2381 = vadd.f32 %v2377, %v2380
      %v2382 = vmul.f32 %v612, %v2275
      %v2383 = vmul.f32 %v618, %v2277
      %v2384 = vadd.f32 %v2382, %v2383
      %v2385 = vadd.f32 %v2381, %v2384
      %v2386 = vmul.f32 %v626, %v2279
      %v2387 = vmul.f32 %v632, %v2281
      %v2388 = vadd.f32 %v2386, %v2387
      %v2389 = vadd.f32 %v2385, %v2388
      %v2390 = vmul.f32 %v640, %v2265
      %v2391 = vmul.f32 %v646, %v2283
      %v2392 = vadd.f32 %v2390, %v2391
      %v2393 = vadd.f32 %v2389, %v2392
      %v2394 = vmul.f32 %v654, %v2285
      %v2395 = vmul.f32 %v660, %v2287
      %v2396 = vadd.f32 %v2394, %v2395
      %v2397 = vadd.f32 %v2393, %v2396
      %v2398 = vmul.f32 %v668, %v2289
      %v2399 = vmul.f32 %v674, %v2291
      %v2400 = vadd.f32 %v2398, %v2399
      %v2401 = vadd.f32 %v2397, %v2400
      %v2402 = vmul.f32 %v682, %v2293
      %v2403 = vmul.f32 %v688, %v2295
      %v2404 = vadd.f32 %v2402, %v2403
      %v2405 = vadd.f32 %v2401, %v2404
      %v2406 = vmul.f32 %v696, %v2297
      %v2407 = vmul.f32 %v702, %v2299
      %v2408 = vadd.f32 %v2406, %v2407
      %v2409 = vadd.f32 %v2405, %v2408
      %v2411 = vrot.slane %v2409, 1
      %v2413 = vsel %vm709, %v2411, 0.0
      %v2414 = vadd.f32 %v2374, %v2413
      %v2415 = vadd.f32 %v2414, %v716
      %v2416 = vsub.f32 %v2415, %v2265
      %v2417 = vmul.f32 %v2263, %v2416
      %v2418 = vadd.f32 %v2265, %v2417
      %2419 = vrot.lane.b32.xlu0 %v2418, 9
      %v2420 = vpop.permute.xlu0 %2419
      %2421 = vrot.lane.b32.xlu0 %v2418, 73
      %v2422 = vpop.permute.xlu0 %2421
      %2423 = vrot.lane.b32.xlu0 %v2418, 8
      %v2424 = vpop.permute.xlu0 %2423
      %2425 = vrot.lane.b32.xlu0 %v2418, 72
      %v2426 = vpop.permute.xlu0 %2425
      %2427 = vrot.lane.b32.xlu0 %v2418, 7
      %v2428 = vpop.permute.xlu0 %2427
      %2429 = vrot.lane.b32.xlu0 %v2418, 71
      %v2430 = vpop.permute.xlu0 %2429
      %2431 = vrot.lane.b32.xlu0 %v2418, 1
      %v2432 = vpop.permute.xlu0 %2431
      %2433 = vrot.lane.b32.xlu0 %v2418, 65
      %v2434 = vpop.permute.xlu0 %2433
      %2435 = vrot.lane.b32.xlu0 %v2418, 64
      %v2436 = vpop.permute.xlu0 %2435
      %2437 = vrot.lane.b32.xlu0 %v2418, 127
      %v2438 = vpop.permute.xlu0 %2437
      %2439 = vrot.lane.b32.xlu0 %v2418, 63
      %v2440 = vpop.permute.xlu0 %2439
      %2441 = vrot.lane.b32.xlu0 %v2418, 121
      %v2442 = vpop.permute.xlu0 %2441
      %2443 = vrot.lane.b32.xlu0 %v2418, 57
      %v2444 = vpop.permute.xlu0 %2443
      %2445 = vrot.lane.b32.xlu0 %v2418, 120
      %v2446 = vpop.permute.xlu0 %2445
      %2447 = vrot.lane.b32.xlu0 %v2418, 56
      %v2448 = vpop.permute.xlu0 %2447
      %2449 = vrot.lane.b32.xlu0 %v2418, 119
      %v2450 = vpop.permute.xlu0 %2449
      %2451 = vrot.lane.b32.xlu0 %v2418, 55
      %v2452 = vpop.permute.xlu0 %2451
      %v2453 = vmul.f32 %v329, %v2420
      %v2454 = vmul.f32 %v335, %v2422
      %v2455 = vadd.f32 %v2453, %v2454
      %v2456 = vmul.f32 %v342, %v2424
      %v2457 = vmul.f32 %v348, %v2426
      %v2458 = vadd.f32 %v2456, %v2457
      %v2459 = vadd.f32 %v2455, %v2458
      %v2460 = vmul.f32 %v356, %v2428
      %v2461 = vmul.f32 %v362, %v2430
      %v2462 = vadd.f32 %v2460, %v2461
      %v2463 = vadd.f32 %v2459, %v2462
      %v2464 = vmul.f32 %v370, %v2432
      %v2465 = vmul.f32 %v376, %v2434
      %v2466 = vadd.f32 %v2464, %v2465
      %v2467 = vadd.f32 %v2463, %v2466
      %v2468 = vmul.f32 %v384, %v2418
      %v2469 = vmul.f32 %v390, %v2436
      %v2470 = vadd.f32 %v2468, %v2469
      %v2471 = vadd.f32 %v2467, %v2470
      %v2472 = vmul.f32 %v398, %v2438
      %v2473 = vmul.f32 %v404, %v2440
      %v2474 = vadd.f32 %v2472, %v2473
      %v2475 = vadd.f32 %v2471, %v2474
      %v2476 = vmul.f32 %v412, %v2442
      %v2477 = vmul.f32 %v418, %v2444
      %v2478 = vadd.f32 %v2476, %v2477
      %v2479 = vadd.f32 %v2475, %v2478
      %v2480 = vmul.f32 %v426, %v2446
      %v2481 = vmul.f32 %v432, %v2448
      %v2482 = vadd.f32 %v2480, %v2481
      %v2483 = vadd.f32 %v2479, %v2482
      %v2484 = vmul.f32 %v440, %v2450
      %v2485 = vmul.f32 %v446, %v2452
      %v2486 = vadd.f32 %v2484, %v2485
      %v2487 = vadd.f32 %v2483, %v2486
      %v2489 = vrot.slane %v2487, 7
      %v2491 = vsel %vm453, 0.0, %v2489
      %v2492 = vmul.f32 %v459, %v2420
      %v2493 = vmul.f32 %v465, %v2422
      %v2494 = vadd.f32 %v2492, %v2493
      %v2495 = vmul.f32 %v472, %v2424
      %v2496 = vmul.f32 %v478, %v2426
      %v2497 = vadd.f32 %v2495, %v2496
      %v2498 = vadd.f32 %v2494, %v2497
      %v2499 = vmul.f32 %v486, %v2428
      %v2500 = vmul.f32 %v492, %v2430
      %v2501 = vadd.f32 %v2499, %v2500
      %v2502 = vadd.f32 %v2498, %v2501
      %v2503 = vmul.f32 %v500, %v2432
      %v2504 = vmul.f32 %v506, %v2434
      %v2505 = vadd.f32 %v2503, %v2504
      %v2506 = vadd.f32 %v2502, %v2505
      %v2507 = vmul.f32 %v514, %v2418
      %v2508 = vmul.f32 %v520, %v2436
      %v2509 = vadd.f32 %v2507, %v2508
      %v2510 = vadd.f32 %v2506, %v2509
      %v2511 = vmul.f32 %v528, %v2438
      %v2512 = vmul.f32 %v534, %v2440
      %v2513 = vadd.f32 %v2511, %v2512
      %v2514 = vadd.f32 %v2510, %v2513
      %v2515 = vmul.f32 %v542, %v2442
      %v2516 = vmul.f32 %v548, %v2444
      %v2517 = vadd.f32 %v2515, %v2516
      %v2518 = vadd.f32 %v2514, %v2517
      %v2519 = vmul.f32 %v556, %v2446
      %v2520 = vmul.f32 %v562, %v2448
      %v2521 = vadd.f32 %v2519, %v2520
      %v2522 = vadd.f32 %v2518, %v2521
      %v2523 = vmul.f32 %v570, %v2450
      %v2524 = vmul.f32 %v576, %v2452
      %v2525 = vadd.f32 %v2523, %v2524
      %v2526 = vadd.f32 %v2522, %v2525
      %v2527 = vadd.f32 %v2491, %v2526
      %v2528 = vmul.f32 %v585, %v2420
      %v2529 = vmul.f32 %v591, %v2422
      %v2530 = vadd.f32 %v2528, %v2529
      %v2531 = vmul.f32 %v598, %v2424
      %v2532 = vmul.f32 %v604, %v2426
      %v2533 = vadd.f32 %v2531, %v2532
      %v2534 = vadd.f32 %v2530, %v2533
      %v2535 = vmul.f32 %v612, %v2428
      %v2536 = vmul.f32 %v618, %v2430
      %v2537 = vadd.f32 %v2535, %v2536
      %v2538 = vadd.f32 %v2534, %v2537
      %v2539 = vmul.f32 %v626, %v2432
      %v2540 = vmul.f32 %v632, %v2434
      %v2541 = vadd.f32 %v2539, %v2540
      %v2542 = vadd.f32 %v2538, %v2541
      %v2543 = vmul.f32 %v640, %v2418
      %v2544 = vmul.f32 %v646, %v2436
      %v2545 = vadd.f32 %v2543, %v2544
      %v2546 = vadd.f32 %v2542, %v2545
      %v2547 = vmul.f32 %v654, %v2438
      %v2548 = vmul.f32 %v660, %v2440
      %v2549 = vadd.f32 %v2547, %v2548
      %v2550 = vadd.f32 %v2546, %v2549
      %v2551 = vmul.f32 %v668, %v2442
      %v2552 = vmul.f32 %v674, %v2444
      %v2553 = vadd.f32 %v2551, %v2552
      %v2554 = vadd.f32 %v2550, %v2553
      %v2555 = vmul.f32 %v682, %v2446
      %v2556 = vmul.f32 %v688, %v2448
      %v2557 = vadd.f32 %v2555, %v2556
      %v2558 = vadd.f32 %v2554, %v2557
      %v2559 = vmul.f32 %v696, %v2450
      %v2560 = vmul.f32 %v702, %v2452
      %v2561 = vadd.f32 %v2559, %v2560
      %v2562 = vadd.f32 %v2558, %v2561
      %v2564 = vrot.slane %v2562, 1
      %v2566 = vsel %vm709, %v2564, 0.0
      %v2567 = vadd.f32 %v2527, %v2566
      %v2568 = vadd.f32 %v2567, %v716
      %2569 = vrot.lane.b32.xlu0 %v2568, 64
      %v2570 = vpop.permute.xlu0 %2569
      %v2571 = vsub.f32 %v2568, %v2570
      %v2572 = vmul.f32 %v2571, 0.5
      %v2573 = vtanh.pop %v2572
      %v2574 = vadd.f32 %v2573, 1.0
      %v2575 = vmul.f32 %v2574, 0.5
      %2576 = vst [vmem:[%s182] sm:$0xff] %v2575
      %p2577 = scmp.lt.s32.totalorder %s14, 1
      %s2578 = scalar_select %p2577, %s14, 1
      %s2579 = smul.addr %s2578, 8
      %s2580 = scalar_lea.vmem %s3, %s2579
      // Predicated region
      $region33: #{gru_model_forward.1} parent=31 // pred_check
        %p2581 = pneg %p105
      $region34: #{gru_model_forward.1} parent=31 // pred_check_branch
        %2583 = sbr.rel (%p2581) target = $region36
      $region35: #{gru_model_forward.1} parent=31 // pred_region
        _
      $region36: #{gru_model_forward.1} parent=31 // pred_fallthru
        _
    $region32: #{gru_model_forward.1} parent=5 // pred_fallthru
      _
    %p2584 = scmp.le.s32.totalorder 2, %s9
    // Predicated region
    $region37: #{gru_model_forward.1} parent=5 // pred_check
      %p2585 = pneg %p2584
    $region38: #{gru_model_forward.1} parent=5 // pred_check_branch
      %2587 = sbr.rel (%p2585) target = $region40
    $region39: #{gru_model_forward.1} parent=5 // pred_region
      %s2588 = ssub.s32 %s9, 2
      // Predicated region
      $region41: #{gru_model_forward.1} parent=39 // pred_check
        %p2589 = pneg %p111
      $region42: #{gru_model_forward.1} parent=39 // pred_check_branch
        %2591 = sbr.rel (%p2589) target = $region44
      $region43: #{gru_model_forward.1} parent=39 // pred_region
        %p2592 = scmp.lt.s32.totalorder %s15, 1
        %s2593 = scalar_select %p2592, %s15, 1
        %s2594 = smul.addr %s2593, 8
        %s2595 = scalar_lea.vmem %s3, %s2594
      $region44: #{gru_model_forward.1} parent=39 // pred_fallthru
        _
    $region40: #{gru_model_forward.1} parent=5 // pred_fallthru
      _
  $region6: #{gru_model_forward.1} parent=0 // loop_footer
    %s13 = sadd.s32 1, %s9
  $region7: #{gru_model_forward.1} parent=0 // loop_footer_branch
    %8 = sbr.rel target = $region3
  $region8: #{gru_model_forward.1} parent=0 // loop_exit
    _

</llo_original>
